<compile_context>
chip_gen: v7x
topology: tpu7x:2x2x1
jax: 0.10.0
libtpu: 0.0.40
codegen_flags: <defaults>
</compile_context>

<pallas_src>
import math

import jax
import jax.numpy as jnp
from jax import lax
from jax.experimental import pallas as pl
from jax.experimental.pallas import tpu as pltpu


_COMPUTE_DTYPE = jnp.bfloat16
_VMEM_LIMIT_BYTES = 40 * 1024 * 1024  # explicit headroom; safe on v7x (64 MiB phys)


# ----------------------------------------------------------------------------
# Tile selection (generation aware: smaller tiles on v7x's 64 MiB VMEM)
# ----------------------------------------------------------------------------
def _vmem_capacity_bytes():
    try:
        info = pltpu.get_tpu_info()
        cap = getattr(info, "vmem_capacity_bytes", None)
        if cap:
            return int(cap)
    except Exception:
        pass
    return 128 * 1024 * 1024


def _pick_m_tile(M, packed_k, elem_bytes):
    """Largest tile of the flattened spatial axis M that (a) divides M,
    (b) is a multiple of 8 (sublane constraint), (c) keeps the double-buffered
    input tile comfortably inside VMEM."""
    cap = _vmem_capacity_bytes()
    budget_bytes = cap // 32            # ~2 MiB on v7x, ~4 MiB on v5e/v6e
    max_rows = 2048 if cap >= 96 * 1024 * 1024 else 1024
    budget_rows = max(8, budget_bytes // max(1, packed_k * elem_bytes))
    limit = min(M, max_rows, budget_rows)
    tm = (limit // 8) * 8
    while tm >= 8:
        if M % tm == 0:
            return tm
        tm -= 8
    return M  # fallback: single tile covering the (non-8-aligned) full M


# ----------------------------------------------------------------------------
# Pallas kernel: packed conv-as-matmul, fused bias + optional SiLU
# ----------------------------------------------------------------------------
def _make_matmul_bias_act_kernel(apply_silu):
    def kernel(x_ref, w_ref, b_ref, o_ref):
        # x_ref: (1, TM, T*Cin) bf16   w_ref: (T*Cin, Cout) bf16   b_ref: (1, Cout) f32
        acc = jnp.dot(x_ref[0], w_ref[...], preferred_element_type=jnp.float32)
        acc = acc + b_ref[...]
        if apply_silu:
            acc = acc * jax.nn.sigmoid(acc)     # SiLU fused, f32 epilogue
        o_ref[0] = acc.astype(o_ref.dtype)
    return kernel


def _matmul_bias_act(x_packed, w_packed, bias, *, apply_silu, out_dtype):
    """out[b, m, :] = act(x_packed[b, m, :] @ w_packed + bias), tiled over (B, M)."""
    B, M, K = x_packed.shape
    Kw, Cout = w_packed.shape
    assert K == Kw
    tm = _pick_m_tile(M, K, x_packed.dtype.itemsize)
    if M % tm:
        tm = M
    num_m_tiles = M // tm

    return pl.pallas_call(
        _make_matmul_bias_act_kernel(apply_silu),
        out_shape=jax.ShapeDtypeStruct((B, M, Cout), out_dtype),
        grid=(B, num_m_tiles),
        in_specs=[
            pl.BlockSpec((1, tm, K), lambda b, t: (b, t, 0)),
            pl.BlockSpec((K, Cout), lambda b, t: (0, 0)),
            pl.BlockSpec((1, Cout), lambda b, t: (0, 0)),
        ],
        out_specs=pl.BlockSpec((1, tm, Cout), lambda b, t: (b, t, 0)),
        compiler_params=pltpu.CompilerParams(
            dimension_semantics=("parallel", "parallel"),
            vmem_limit_bytes=_VMEM_LIMIT_BYTES,
        ),
    )(x_packed, w_packed, bias.reshape(1, Cout).astype(jnp.float32))


# ----------------------------------------------------------------------------
# Conv wrappers (NHWC activations, HWIO weights)
# ----------------------------------------------------------------------------
def conv2d_nhwc(x, w_hwio, bias, *, pad, apply_silu, out_dtype):
    """Stride-1 KxK conv via a single packed-matmul Pallas call per tile."""
    B, H, W, Cin = x.shape
    KH, KW, _, Cout = w_hwio.shape
    x = x.astype(_COMPUTE_DTYPE)
    w = w_hwio.astype(_COMPUTE_DTYPE)
    if pad:
        x = jnp.pad(x, ((0, 0), (pad, pad), (pad, pad), (0, 0)))
    Ho = H + 2 * pad - KH + 1
    Wo = W + 2 * pad - KW + 1
    if KH == 1 and KW == 1:
        cols = x
    else:
        # tap-packed im2col: channel index = (kh*KW + kw)*Cin + ci (lane-dense T*Cin)
        cols = jnp.concatenate(
            [x[:, kh:kh + Ho, kw:kw + Wo, :] for kh in range(KH) for kw in range(KW)],
            axis=-1)
    x_packed = cols.reshape(B, Ho * Wo, KH * KW * Cin)
    w_packed = w.reshape(KH * KW * Cin, Cout)     # matches tap packing order
    y = _matmul_bias_act(x_packed, w_packed, bias,
                         apply_silu=apply_silu, out_dtype=out_dtype)
    return y.reshape(B, Ho, Wo, Cout)


def _convtranspose_421_as_conv3x3(w_iohw):
    """ConvTranspose2d(k=4, s=2, p=1) weight (Cin, Cout, 4, 4) -> effective
    stride-1 3x3 HWIO weight (3, 3, Cin, 4*Cout). The 4 Cout blocks are the
    output parities p = 2*ph + pw, interleaved afterwards by depth-to-space.
    Derivation: out[2r+ph, 2c+pw] = sum_{dh,dw} xpad[r+dh, c+dw] * w[kh, kw]
    with kh = 3 + ph - 2*dh, kw = 3 + pw - 2*dw (taps outside [0,4) are zero)."""
    Cin, Cout, KH, KW = w_iohw.shape
    assert (KH, KW) == (4, 4)
    w_eff = jnp.zeros((3, 3, Cin, 4 * Cout), w_iohw.dtype)
    for ph in range(2):
        for pw in range(2):
            p = 2 * ph + pw
            for dh in range(3):
                kh = 3 + ph - 2 * dh
                if not 0 <= kh < 4:
                    continue
                for dw in range(3):
                    kw = 3 + pw - 2 * dw
                    if not 0 <= kw < 4:
                        continue
                    w_eff = w_eff.at[dh, dw, :, p * Cout:(p + 1) * Cout].set(
                        w_iohw[:, :, kh, kw])
    return w_eff


def conv_transpose2d_nhwc(x, w_iohw, bias, *, apply_silu, out_dtype):
    """PyTorch ConvTranspose2d(kernel=4, stride=2, padding=1) via sub-pixel
    decomposition (no zero-dilated MACs): 3x3 conv producing the 4 output
    parities in the channel dim, then depth-to-space."""
    Cout = w_iohw.shape[1]
    w_eff = _convtranspose_421_as_conv3x3(w_iohw)
    bias_eff = jnp.tile(bias, 4)                  # per-parity copy of the bias
    y = conv2d_nhwc(x, w_eff, bias_eff, pad=1, apply_silu=apply_silu,
                    out_dtype=out_dtype)
    B, H, W, _ = y.shape
    y = y.reshape(B, H, W, 2, 2, Cout)
    y = jnp.transpose(y, (0, 1, 3, 2, 4, 5)).reshape(B, 2 * H, 2 * W, Cout)
    return y


# ----------------------------------------------------------------------------
# FinalDecoder: parameters + forward (keeps the PyTorch NCHW interface)
# ----------------------------------------------------------------------------
def make_params(key, in_dim, out_dim, up_scale=4):
    params = {"up": []}
    for i in range(int(math.log2(up_scale))):
        cin = in_dim // 2 ** i
        cout = in_dim // 2 ** (i + 1)
        key, k1, k2, k3, k4 = jax.random.split(key, 5)
        bt_bound = 1.0 / math.sqrt(cin * 4 * 4)
        wt = jax.random.uniform(k1, (cin, cout, 4, 4), jnp.float32, -bt_bound, bt_bound)
        bt = jax.random.uniform(k2, (cout,), jnp.float32, -bt_bound, bt_bound)
        bc_bound = 1.0 / math.sqrt(cout * 3 * 3)
        wc = jax.random.uniform(k3, (cout, cout, 3, 3), jnp.float32, -bc_bound, bc_bound)
        bc = jax.random.uniform(k4, (cout,), jnp.float32, -bc_bound, bc_bound)
        params["up"].append((wt, bt, wc, bc))
    key, k1, k2 = jax.random.split(key, 3)
    cpf = in_dim // up_scale
    bp_bound = 1.0 / math.sqrt(cpf)
    wp = jax.random.uniform(k1, (out_dim, cpf, 1, 1), jnp.float32, -bp_bound, bp_bound)
    bp = jax.random.uniform(k2, (out_dim,), jnp.float32, -bp_bound, bp_bound)
    params["proj"] = (wp, bp)
    return params


def final_decoder_forward(params, x_nchw):
    x = jnp.transpose(x_nchw, (0, 2, 3, 1))       # NCHW -> NHWC (channels on lanes)
    for wt, bt, wc, bc in params["up"]:
        x = conv_transpose2d_nhwc(x, wt, bt, apply_silu=True,
                                  out_dtype=_COMPUTE_DTYPE)
        x = conv2d_nhwc(x, jnp.transpose(wc, (2, 3, 1, 0)), bc, pad=1,
                        apply_silu=True, out_dtype=_COMPUTE_DTYPE)
    wp, bp = params["proj"]
    x = conv2d_nhwc(x, jnp.transpose(wp, (2, 3, 1, 0)), bp, pad=0,
                    apply_silu=False, out_dtype=jnp.float32)
    return jnp.transpose(x, (0, 3, 1, 2))         # NHWC -> NCHW


# ----------------------------------------------------------------------------
# Pure-JAX references (XLA convs) for correctness checking
# ----------------------------------------------------------------------------
def _conv_ref(x, w_hwio, bias, pad, silu, lhs_dilation=(1, 1)):
    y = lax.conv_general_dilated(
        x, w_hwio, (1, 1), ((pad, pad), (pad, pad)),
        lhs_dilation=lhs_dilation,
        dimension_numbers=("NHWC", "HWIO", "NHWC"),
        preferred_element_type=jnp.float32)
    y = y + bias[None, None, None, :].astype(y.dtype)
    if silu:
        y = y * jax.nn.sigmoid(y)
    return y


def final_decoder_ref_f32(params, x_nchw):
    x = jnp.transpose(x_nchw, (0, 2, 3, 1))
    for wt, bt, wc, bc in params["up"]:
        w_hwio = jnp.transpose(wt[:, :, ::-1, ::-1], (2, 3, 0, 1))
        x = _conv_ref(x, w_hwio, bt, pad=2, silu=True, lhs_dilation=(2, 2))
        x = _conv_ref(x, jnp.transpose(wc, (2, 3, 1, 0)), bc, pad=1, silu=True)
    wp, bp = params["proj"]
    x = _conv_ref(x, jnp.transpose(wp, (2, 3, 1, 0)), bp, pad=0, silu=False)
    return jnp.transpose(x, (0, 3, 1, 2))


def final_decoder_ref_bf16(params, x_nchw):
    """Reference with the same bf16-operand / f32-accumulate discipline as the
    Pallas path (intermediate activations stored in bf16)."""
    x = jnp.transpose(x_nchw, (0, 2, 3, 1))
    for wt, bt, wc, bc in params["up"]:
        w_hwio = jnp.transpose(wt[:, :, ::-1, ::-1], (2, 3, 0, 1)).astype(_COMPUTE_DTYPE)
        x = _conv_ref(x.astype(_COMPUTE_DTYPE), w_hwio, bt, pad=2, silu=True,
                      lhs_dilation=(2, 2)).astype(_COMPUTE_DTYPE)
        wc_hwio = jnp.transpose(wc, (2, 3, 1, 0)).astype(_COMPUTE_DTYPE)
        x = _conv_ref(x.astype(_COMPUTE_DTYPE), wc_hwio, bc, pad=1,
                      silu=True).astype(_COMPUTE_DTYPE)
    wp, bp = params["proj"]
    wp_hwio = jnp.transpose(wp, (2, 3, 1, 0)).astype(_COMPUTE_DTYPE)
    x = _conv_ref(x.astype(_COMPUTE_DTYPE), wp_hwio, bp, pad=0, silu=False)
    return jnp.transpose(x, (0, 3, 1, 2))


if __name__ == "__main__":
    B, in_dim, out_dim, H, W = 2, 16, 4, 8, 8
    up_scale = 4

    key = jax.random.PRNGKey(0)
    kx, kp = jax.random.split(key)
    x = jax.random.normal(kx, (B, in_dim, H, W), jnp.float32)
    params = make_params(kp, in_dim, out_dim, up_scale)

    y = jax.jit(final_decoder_forward)(params, x)
    y = jax.block_until_ready(y)
    assert y.shape == (B, out_dim, H * up_scale, W * up_scale), y.shape
    assert y.dtype == jnp.float32, y.dtype

    # Same-precision-discipline reference (tight tolerance).
    y_bf16_ref = jax.jit(final_decoder_ref_bf16)(params, x).astype(jnp.float32)
    err_bf16 = float(jnp.max(jnp.abs(y - y_bf16_ref)))
    assert jnp.allclose(y, y_bf16_ref, rtol=2e-2, atol=2e-2), err_bf16

    # Full-f32 reference (loose tolerance, bf16 operands in the kernel path).
    y_f32_ref = jax.jit(final_decoder_ref_f32)(params, x)
    err_f32 = float(jnp.max(jnp.abs(y - y_f32_ref)))
    assert jnp.allclose(y, y_f32_ref, rtol=1e-1, atol=1e-1), err_f32

    print("KERNEL_OK")
</pallas_src>

<mosaic_0001>
module attributes {stable_mosaic.version = 11 : i64} {
  func.func @kernel(%arg0: i32, %arg1: i32, %arg2: memref<1x64x144xbf16, #tpu.memory_space<vmem>>, %arg3: memref<144x32xbf16, #tpu.memory_space<vmem>>, %arg4: memref<1x32xf32, #tpu.memory_space<vmem>>, %arg5: memref<1x64x32xbf16, #tpu.memory_space<vmem>>) attributes {dimension_semantics = [#tpu.dimension_semantics<parallel>, #tpu.dimension_semantics<parallel>], iteration_bounds = array<i64: 2, 1>, scalar_prefetch = 0 : i64, scratch_operands = 0 : i64, tpu.core_type = #tpu.core_type<tc>, window_params = [{transform_indices = @transform_0, window_bounds = array<i64: 1, 64, 144>}, {pipeline_mode = #tpu.pipeline_mode<synchronous>, transform_indices = @transform_1, window_bounds = array<i64: 144, 32>}, {pipeline_mode = #tpu.pipeline_mode<synchronous>, transform_indices = @transform_2, window_bounds = array<i64: 1, 32>}, {transform_indices = @transform_3, window_bounds = array<i64: 1, 64, 32>}]} {
    %c0 = arith.constant 0 : index
    %c0_0 = arith.constant 0 : index
    %c0_1 = arith.constant 0 : index
    %0 = vector.load %arg2[%c0, %c0_0, %c0_1] : memref<1x64x144xbf16, #tpu.memory_space<vmem>>, vector<1x64x144xbf16>
    %1 = vector.shape_cast %0 : vector<1x64x144xbf16> to vector<64x144xbf16>
    %c0_2 = arith.constant 0 : index
    %c0_3 = arith.constant 0 : index
    %2 = vector.load %arg3[%c0_2, %c0_3] : memref<144x32xbf16, #tpu.memory_space<vmem>>, vector<144x32xbf16>
    %cst = arith.constant dense<0.000000e+00> : vector<64x32xf32>
    %3 = tpu.matmul %1, %2, %cst {dimension_numbers = #tpu.dot_dimension_numbers<[1], [0], [0], [1], [0, 0, 1, 1], [], []>} : vector<64x144xbf16>, vector<144x32xbf16>, vector<64x32xf32> -> vector<64x32xf32>
    %c0_4 = arith.constant 0 : index
    %c0_5 = arith.constant 0 : index
    %4 = vector.load %arg4[%c0_4, %c0_5] : memref<1x32xf32, #tpu.memory_space<vmem>>, vector<1x32xf32>
    %5 = vector.broadcast %4 : vector<1x32xf32> to vector<64x32xf32>
    %6 = arith.addf %3, %5 : vector<64x32xf32>
    %7 = arith.negf %6 : vector<64x32xf32>
    %8 = math.exp %7 : vector<64x32xf32>
    %cst_6 = arith.constant 1.000000e+00 : f32
    %9 = vector.broadcast %cst_6 : f32 to vector<64x32xf32>
    %10 = arith.addf %9, %8 : vector<64x32xf32>
    %11 = arith.divf %9, %10 : vector<64x32xf32>
    %12 = arith.mulf %6, %11 : vector<64x32xf32>
    %13 = arith.truncf %12 : vector<64x32xf32> to vector<64x32xbf16>
    %c0_7 = arith.constant 0 : index
    %c0_8 = arith.constant 0 : index
    %c0_9 = arith.constant 0 : index
    %14 = vector.load %arg5[%c0_7, %c0_8, %c0_9] : memref<1x64x32xbf16, #tpu.memory_space<vmem>>, vector<1x64x32xbf16>
    %15 = vector.shape_cast %14 : vector<1x64x32xbf16> to vector<64x32xbf16>
    %16 = vector.shape_cast %13 : vector<64x32xbf16> to vector<1x64x32xbf16>
    tpu.vector_store %arg5[%c0_7, %c0_8, %c0_9], %16 {strides = array<i32>} : memref<1x64x32xbf16, #tpu.memory_space<vmem>>, vector<1x64x32xbf16>,
    return
  }
  func.func @transform_0(%arg0: i32, %arg1: i32) -> (i32, i32, i32) {
    %c0_i32 = arith.constant 0 : i32
    %c0_i32_0 = arith.constant 0 : i32
    return %arg0, %arg1, %c0_i32 : i32, i32, i32
  }
  func.func @transform_1(%arg0: i32, %arg1: i32) -> (i32, i32) {
    %c0_i32 = arith.constant 0 : i32
    %c0_i32_0 = arith.constant 0 : i32
    %c0_i32_1 = arith.constant 0 : i32
    return %c0_i32, %c0_i32_0 : i32, i32
  }
  func.func @transform_2(%arg0: i32, %arg1: i32) -> (i32, i32) {
    %c0_i32 = arith.constant 0 : i32
    %c0_i32_0 = arith.constant 0 : i32
    %c0_i32_1 = arith.constant 0 : i32
    return %c0_i32, %c0_i32_0 : i32, i32
  }
  func.func @transform_3(%arg0: i32, %arg1: i32) -> (i32, i32, i32) {
    %c0_i32 = arith.constant 0 : i32
    %c0_i32_0 = arith.constant 0 : i32
    return %arg0, %arg1, %c0_i32 : i32, i32, i32
  }
}

module attributes {stable_mosaic.version = 11 : i64} {
  func.func @kernel(%arg0: i32, %arg1: i32, %arg2: memref<1x256x72xbf16, #tpu.memory_space<vmem>>, %arg3: memref<72x8xbf16, #tpu.memory_space<vmem>>, %arg4: memref<1x8xf32, #tpu.memory_space<vmem>>, %arg5: memref<1x256x8xbf16, #tpu.memory_space<vmem>>) attributes {dimension_semantics = [#tpu.dimension_semantics<parallel>, #tpu.dimension_semantics<parallel>], iteration_bounds = array<i64: 2, 1>, scalar_prefetch = 0 : i64, scratch_operands = 0 : i64, tpu.core_type = #tpu.core_type<tc>, window_params = [{transform_indices = @transform_0, window_bounds = array<i64: 1, 256, 72>}, {pipeline_mode = #tpu.pipeline_mode<synchronous>, transform_indices = @transform_1, window_bounds = array<i64: 72, 8>}, {pipeline_mode = #tpu.pipeline_mode<synchronous>, transform_indices = @transform_2, window_bounds = array<i64: 1, 8>}, {transform_indices = @transform_3, window_bounds = array<i64: 1, 256, 8>}]} {
    %c0 = arith.constant 0 : index
    %c0_0 = arith.constant 0 : index
    %c0_1 = arith.constant 0 : index
    %0 = vector.load %arg2[%c0, %c0_0, %c0_1] : memref<1x256x72xbf16, #tpu.memory_space<vmem>>, vector<1x256x72xbf16>
    %1 = vector.shape_cast %0 : vector<1x256x72xbf16> to vector<256x72xbf16>
    %c0_2 = arith.constant 0 : index
    %c0_3 = arith.constant 0 : index
    %2 = vector.load %arg3[%c0_2, %c0_3] : memref<72x8xbf16, #tpu.memory_space<vmem>>, vector<72x8xbf16>
    %cst = arith.constant dense<0.000000e+00> : vector<256x8xf32>
    %3 = tpu.matmul %1, %2, %cst {dimension_numbers = #tpu.dot_dimension_numbers<[1], [0], [0], [1], [0, 0, 1, 1], [], []>} : vector<256x72xbf16>, vector<72x8xbf16>, vector<256x8xf32> -> vector<256x8xf32>
    %c0_4 = arith.constant 0 : index
    %c0_5 = arith.constant 0 : index
    %4 = vector.load %arg4[%c0_4, %c0_5] : memref<1x8xf32, #tpu.memory_space<vmem>>, vector<1x8xf32>
    %5 = vector.broadcast %4 : vector<1x8xf32> to vector<256x8xf32>
    %6 = arith.addf %3, %5 : vector<256x8xf32>
    %7 = arith.negf %6 : vector<256x8xf32>
    %8 = math.exp %7 : vector<256x8xf32>
    %cst_6 = arith.constant 1.000000e+00 : f32
    %9 = vector.broadcast %cst_6 : f32 to vector<256x8xf32>
    %10 = arith.addf %9, %8 : vector<256x8xf32>
    %11 = arith.divf %9, %10 : vector<256x8xf32>
    %12 = arith.mulf %6, %11 : vector<256x8xf32>
    %13 = arith.truncf %12 : vector<256x8xf32> to vector<256x8xbf16>
    %c0_7 = arith.constant 0 : index
    %c0_8 = arith.constant 0 : index
    %c0_9 = arith.constant 0 : index
    %14 = vector.load %arg5[%c0_7, %c0_8, %c0_9] : memref<1x256x8xbf16, #tpu.memory_space<vmem>>, vector<1x256x8xbf16>
    %15 = vector.shape_cast %14 : vector<1x256x8xbf16> to vector<256x8xbf16>
    %16 = vector.shape_cast %13 : vector<256x8xbf16> to vector<1x256x8xbf16>
    tpu.vector_store %arg5[%c0_7, %c0_8, %c0_9], %16 {strides = array<i32>} : memref<1x256x8xbf16, #tpu.memory_space<vmem>>, vector<1x256x8xbf16>,
    return
  }
  func.func @transform_0(%arg0: i32, %arg1: i32) -> (i32, i32, i32) {
    %c0_i32 = arith.constant 0 : i32
    %c0_i32_0 = arith.constant 0 : i32
    return %arg0, %arg1, %c0_i32 : i32, i32, i32
  }
  func.func @transform_1(%arg0: i32, %arg1: i32) -> (i32, i32) {
    %c0_i32 = arith.constant 0 : i32
    %c0_i32_0 = arith.constant 0 : i32
    %c0_i32_1 = arith.constant 0 : i32
    return %c0_i32, %c0_i32_0 : i32, i32
  }
  func.func @transform_2(%arg0: i32, %arg1: i32) -> (i32, i32) {
    %c0_i32 = arith.constant 0 : i32
    %c0_i32_0 = arith.constant 0 : i32
    %c0_i32_1 = arith.constant 0 : i32
    return %c0_i32, %c0_i32_0 : i32, i32
  }
  func.func @transform_3(%arg0: i32, %arg1: i32) -> (i32, i32, i32) {
    %c0_i32 = arith.constant 0 : i32
    %c0_i32_0 = arith.constant 0 : i32
    return %arg0, %arg1, %c0_i32 : i32, i32, i32
  }
}

module attributes {stable_mosaic.version = 11 : i64} {
  func.func @kernel(%arg0: i32, %arg1: i32, %arg2: memref<1x256x72xbf16, #tpu.memory_space<vmem>>, %arg3: memref<72x16xbf16, #tpu.memory_space<vmem>>, %arg4: memref<1x16xf32, #tpu.memory_space<vmem>>, %arg5: memref<1x256x16xbf16, #tpu.memory_space<vmem>>) attributes {dimension_semantics = [#tpu.dimension_semantics<parallel>, #tpu.dimension_semantics<parallel>], iteration_bounds = array<i64: 2, 1>, scalar_prefetch = 0 : i64, scratch_operands = 0 : i64, tpu.core_type = #tpu.core_type<tc>, window_params = [{transform_indices = @transform_0, window_bounds = array<i64: 1, 256, 72>}, {pipeline_mode = #tpu.pipeline_mode<synchronous>, transform_indices = @transform_1, window_bounds = array<i64: 72, 16>}, {pipeline_mode = #tpu.pipeline_mode<synchronous>, transform_indices = @transform_2, window_bounds = array<i64: 1, 16>}, {transform_indices = @transform_3, window_bounds = array<i64: 1, 256, 16>}]} {
    %c0 = arith.constant 0 : index
    %c0_0 = arith.constant 0 : index
    %c0_1 = arith.constant 0 : index
    %0 = vector.load %arg2[%c0, %c0_0, %c0_1] : memref<1x256x72xbf16, #tpu.memory_space<vmem>>, vector<1x256x72xbf16>
    %1 = vector.shape_cast %0 : vector<1x256x72xbf16> to vector<256x72xbf16>
    %c0_2 = arith.constant 0 : index
    %c0_3 = arith.constant 0 : index
    %2 = vector.load %arg3[%c0_2, %c0_3] : memref<72x16xbf16, #tpu.memory_space<vmem>>, vector<72x16xbf16>
    %cst = arith.constant dense<0.000000e+00> : vector<256x16xf32>
    %3 = tpu.matmul %1, %2, %cst {dimension_numbers = #tpu.dot_dimension_numbers<[1], [0], [0], [1], [0, 0, 1, 1], [], []>} : vector<256x72xbf16>, vector<72x16xbf16>, vector<256x16xf32> -> vector<256x16xf32>
    %c0_4 = arith.constant 0 : index
    %c0_5 = arith.constant 0 : index
    %4 = vector.load %arg4[%c0_4, %c0_5] : memref<1x16xf32, #tpu.memory_space<vmem>>, vector<1x16xf32>
    %5 = vector.broadcast %4 : vector<1x16xf32> to vector<256x16xf32>
    %6 = arith.addf %3, %5 : vector<256x16xf32>
    %7 = arith.negf %6 : vector<256x16xf32>
    %8 = math.exp %7 : vector<256x16xf32>
    %cst_6 = arith.constant 1.000000e+00 : f32
    %9 = vector.broadcast %cst_6 : f32 to vector<256x16xf32>
    %10 = arith.addf %9, %8 : vector<256x16xf32>
    %11 = arith.divf %9, %10 : vector<256x16xf32>
    %12 = arith.mulf %6, %11 : vector<256x16xf32>
    %13 = arith.truncf %12 : vector<256x16xf32> to vector<256x16xbf16>
    %c0_7 = arith.constant 0 : index
    %c0_8 = arith.constant 0 : index
    %c0_9 = arith.constant 0 : index
    %14 = vector.load %arg5[%c0_7, %c0_8, %c0_9] : memref<1x256x16xbf16, #tpu.memory_space<vmem>>, vector<1x256x16xbf16>
    %15 = vector.shape_cast %14 : vector<1x256x16xbf16> to vector<256x16xbf16>
    %16 = vector.shape_cast %13 : vector<256x16xbf16> to vector<1x256x16xbf16>
    tpu.vector_store %arg5[%c0_7, %c0_8, %c0_9], %16 {strides = array<i32>} : memref<1x256x16xbf16, #tpu.memory_space<vmem>>, vector<1x256x16xbf16>,
    return
  }
  func.func @transform_0(%arg0: i32, %arg1: i32) -> (i32, i32, i32) {
    %c0_i32 = arith.constant 0 : i32
    %c0_i32_0 = arith.constant 0 : i32
    return %arg0, %arg1, %c0_i32 : i32, i32, i32
  }
  func.func @transform_1(%arg0: i32, %arg1: i32) -> (i32, i32) {
    %c0_i32 = arith.constant 0 : i32
    %c0_i32_0 = arith.constant 0 : i32
    %c0_i32_1 = arith.constant 0 : i32
    return %c0_i32, %c0_i32_0 : i32, i32
  }
  func.func @transform_2(%arg0: i32, %arg1: i32) -> (i32, i32) {
    %c0_i32 = arith.constant 0 : i32
    %c0_i32_0 = arith.constant 0 : i32
    %c0_i32_1 = arith.constant 0 : i32
    return %c0_i32, %c0_i32_0 : i32, i32
  }
  func.func @transform_3(%arg0: i32, %arg1: i32) -> (i32, i32, i32) {
    %c0_i32 = arith.constant 0 : i32
    %c0_i32_0 = arith.constant 0 : i32
    return %arg0, %arg1, %c0_i32 : i32, i32, i32
  }
}

module attributes {stable_mosaic.version = 11 : i64} {
  func.func @kernel(%arg0: i32, %arg1: i32, %arg2: memref<1x1024x36xbf16, #tpu.memory_space<vmem>>, %arg3: memref<36x4xbf16, #tpu.memory_space<vmem>>, %arg4: memref<1x4xf32, #tpu.memory_space<vmem>>, %arg5: memref<1x1024x4xbf16, #tpu.memory_space<vmem>>) attributes {dimension_semantics = [#tpu.dimension_semantics<parallel>, #tpu.dimension_semantics<parallel>], iteration_bounds = array<i64: 2, 1>, scalar_prefetch = 0 : i64, scratch_operands = 0 : i64, tpu.core_type = #tpu.core_type<tc>, window_params = [{transform_indices = @transform_0, window_bounds = array<i64: 1, 1024, 36>}, {pipeline_mode = #tpu.pipeline_mode<synchronous>, transform_indices = @transform_1, window_bounds = array<i64: 36, 4>}, {pipeline_mode = #tpu.pipeline_mode<synchronous>, transform_indices = @transform_2, window_bounds = array<i64: 1, 4>}, {transform_indices = @transform_3, window_bounds = array<i64: 1, 1024, 4>}]} {
    %c0 = arith.constant 0 : index
    %c0_0 = arith.constant 0 : index
    %c0_1 = arith.constant 0 : index
    %0 = vector.load %arg2[%c0, %c0_0, %c0_1] : memref<1x1024x36xbf16, #tpu.memory_space<vmem>>, vector<1x1024x36xbf16>
    %1 = vector.shape_cast %0 : vector<1x1024x36xbf16> to vector<1024x36xbf16>
    %c0_2 = arith.constant 0 : index
    %c0_3 = arith.constant 0 : index
    %2 = vector.load %arg3[%c0_2, %c0_3] : memref<36x4xbf16, #tpu.memory_space<vmem>>, vector<36x4xbf16>
    %cst = arith.constant dense<0.000000e+00> : vector<1024x4xf32>
    %3 = tpu.matmul %1, %2, %cst {dimension_numbers = #tpu.dot_dimension_numbers<[1], [0], [0], [1], [0, 0, 1, 1], [], []>} : vector<1024x36xbf16>, vector<36x4xbf16>, vector<1024x4xf32> -> vector<1024x4xf32>
    %c0_4 = arith.constant 0 : index
    %c0_5 = arith.constant 0 : index
    %4 = vector.load %arg4[%c0_4, %c0_5] : memref<1x4xf32, #tpu.memory_space<vmem>>, vector<1x4xf32>
    %5 = vector.broadcast %4 : vector<1x4xf32> to vector<1024x4xf32>
    %6 = arith.addf %3, %5 : vector<1024x4xf32>
    %7 = arith.negf %6 : vector<1024x4xf32>
    %8 = math.exp %7 : vector<1024x4xf32>
    %cst_6 = arith.constant 1.000000e+00 : f32
    %9 = vector.broadcast %cst_6 : f32 to vector<1024x4xf32>
    %10 = arith.addf %9, %8 : vector<1024x4xf32>
    %11 = arith.divf %9, %10 : vector<1024x4xf32>
    %12 = arith.mulf %6, %11 : vector<1024x4xf32>
    %13 = arith.truncf %12 : vector<1024x4xf32> to vector<1024x4xbf16>
    %c0_7 = arith.constant 0 : index
    %c0_8 = arith.constant 0 : index
    %c0_9 = arith.constant 0 : index
    %14 = vector.load %arg5[%c0_7, %c0_8, %c0_9] : memref<1x1024x4xbf16, #tpu.memory_space<vmem>>, vector<1x1024x4xbf16>
    %15 = vector.shape_cast %14 : vector<1x1024x4xbf16> to vector<1024x4xbf16>
    %16 = vector.shape_cast %13 : vector<1024x4xbf16> to vector<1x1024x4xbf16>
    tpu.vector_store %arg5[%c0_7, %c0_8, %c0_9], %16 {strides = array<i32>} : memref<1x1024x4xbf16, #tpu.memory_space<vmem>>, vector<1x1024x4xbf16>,
    return
  }
  func.func @transform_0(%arg0: i32, %arg1: i32) -> (i32, i32, i32) {
    %c0_i32 = arith.constant 0 : i32
    %c0_i32_0 = arith.constant 0 : i32
    return %arg0, %arg1, %c0_i32 : i32, i32, i32
  }
  func.func @transform_1(%arg0: i32, %arg1: i32) -> (i32, i32) {
    %c0_i32 = arith.constant 0 : i32
    %c0_i32_0 = arith.constant 0 : i32
    %c0_i32_1 = arith.constant 0 : i32
    return %c0_i32, %c0_i32_0 : i32, i32
  }
  func.func @transform_2(%arg0: i32, %arg1: i32) -> (i32, i32) {
    %c0_i32 = arith.constant 0 : i32
    %c0_i32_0 = arith.constant 0 : i32
    %c0_i32_1 = arith.constant 0 : i32
    return %c0_i32, %c0_i32_0 : i32, i32
  }
  func.func @transform_3(%arg0: i32, %arg1: i32) -> (i32, i32, i32) {
    %c0_i32 = arith.constant 0 : i32
    %c0_i32_0 = arith.constant 0 : i32
    return %arg0, %arg1, %c0_i32 : i32, i32, i32
  }
}

module attributes {stable_mosaic.version = 11 : i64} {
  func.func @kernel(%arg0: i32, %arg1: i32, %arg2: memref<1x1024x4xbf16, #tpu.memory_space<vmem>>, %arg3: memref<4x4xbf16, #tpu.memory_space<vmem>>, %arg4: memref<1x4xf32, #tpu.memory_space<vmem>>, %arg5: memref<1x1024x4xf32, #tpu.memory_space<vmem>>) attributes {dimension_semantics = [#tpu.dimension_semantics<parallel>, #tpu.dimension_semantics<parallel>], iteration_bounds = array<i64: 2, 1>, scalar_prefetch = 0 : i64, scratch_operands = 0 : i64, tpu.core_type = #tpu.core_type<tc>, window_params = [{transform_indices = @transform_0, window_bounds = array<i64: 1, 1024, 4>}, {pipeline_mode = #tpu.pipeline_mode<synchronous>, transform_indices = @transform_1, window_bounds = array<i64: 4, 4>}, {pipeline_mode = #tpu.pipeline_mode<synchronous>, transform_indices = @transform_2, window_bounds = array<i64: 1, 4>}, {transform_indices = @transform_3, window_bounds = array<i64: 1, 1024, 4>}]} {
    %c0 = arith.constant 0 : index
    %c0_0 = arith.constant 0 : index
    %c0_1 = arith.constant 0 : index
    %0 = vector.load %arg2[%c0, %c0_0, %c0_1] : memref<1x1024x4xbf16, #tpu.memory_space<vmem>>, vector<1x1024x4xbf16>
    %1 = vector.shape_cast %0 : vector<1x1024x4xbf16> to vector<1024x4xbf16>
    %c0_2 = arith.constant 0 : index
    %c0_3 = arith.constant 0 : index
    %2 = vector.load %arg3[%c0_2, %c0_3] : memref<4x4xbf16, #tpu.memory_space<vmem>>, vector<4x4xbf16>
    %cst = arith.constant dense<0.000000e+00> : vector<1024x4xf32>
    %3 = tpu.matmul %1, %2, %cst {dimension_numbers = #tpu.dot_dimension_numbers<[1], [0], [0], [1], [0, 0, 1, 1], [], []>} : vector<1024x4xbf16>, vector<4x4xbf16>, vector<1024x4xf32> -> vector<1024x4xf32>
    %c0_4 = arith.constant 0 : index
    %c0_5 = arith.constant 0 : index
    %4 = vector.load %arg4[%c0_4, %c0_5] : memref<1x4xf32, #tpu.memory_space<vmem>>, vector<1x4xf32>
    %5 = vector.broadcast %4 : vector<1x4xf32> to vector<1024x4xf32>
    %6 = arith.addf %3, %5 : vector<1024x4xf32>
    %c0_6 = arith.constant 0 : index
    %c0_7 = arith.constant 0 : index
    %c0_8 = arith.constant 0 : index
    %7 = vector.load %arg5[%c0_6, %c0_7, %c0_8] : memref<1x1024x4xf32, #tpu.memory_space<vmem>>, vector<1x1024x4xf32>
    %8 = vector.shape_cast %7 : vector<1x1024x4xf32> to vector<1024x4xf32>
    %9 = vector.shape_cast %6 : vector<1024x4xf32> to vector<1x1024x4xf32>
    tpu.vector_store %arg5[%c0_6, %c0_7, %c0_8], %9 {strides = array<i32>} : memref<1x1024x4xf32, #tpu.memory_space<vmem>>, vector<1x1024x4xf32>,
    return
  }
  func.func @transform_0(%arg0: i32, %arg1: i32) -> (i32, i32, i32) {
    %c0_i32 = arith.constant 0 : i32
    %c0_i32_0 = arith.constant 0 : i32
    return %arg0, %arg1, %c0_i32 : i32, i32, i32
  }
  func.func @transform_1(%arg0: i32, %arg1: i32) -> (i32, i32) {
    %c0_i32 = arith.constant 0 : i32
    %c0_i32_0 = arith.constant 0 : i32
    %c0_i32_1 = arith.constant 0 : i32
    return %c0_i32, %c0_i32_0 : i32, i32
  }
  func.func @transform_2(%arg0: i32, %arg1: i32) -> (i32, i32) {
    %c0_i32 = arith.constant 0 : i32
    %c0_i32_0 = arith.constant 0 : i32
    %c0_i32_1 = arith.constant 0 : i32
    return %c0_i32, %c0_i32_0 : i32, i32
  }
  func.func @transform_3(%arg0: i32, %arg1: i32) -> (i32, i32, i32) {
    %c0_i32 = arith.constant 0 : i32
    %c0_i32_0 = arith.constant 0 : i32
    return %arg0, %arg1, %c0_i32 : i32, i32, i32
  }
}

</mosaic_0001>

<llo_original>
// kernel: tile.13
$region0: #{tile.13}
  #allocation0 [shape = 's32[1]{0}', space=sflag, size = 0x4, scoped, tag = 'scoped memory for tile.13']
  %s0 = inlined_call_operand.vmem [shape: f32[8], index: 0, kind: input, shape index: {}]
  %s1 = inlined_call_operand.vmem [shape: f32[4,8], index: 1, kind: output, shape index: {}]
  // Predicated region
  $region2: #{tile.13} parent=0 // pred_check
    _
  $region3: #{tile.13} parent=0 // pred_check_branch
    %3 = sbr.rel (0) target = $region5
  $region4: #{tile.13} parent=0 // pred_region
    _
  $region5: #{tile.13} parent=0 // pred_fallthru
    _
  %v4 = vld [vmem:[%s0] ss:$0 sm:$0xff]
  %5 = vst [vmem:[%s1] sm:$0xf] %v4

// kernel: tile.14
$region0: #{tile.14}
  %s0 = inlined_call_operand.vmem [shape: f32[4,8], index: 0, kind: input, shape index: {}]
  %s1 = inlined_call_operand.vmem [shape: f32[1,32], index: 1, kind: output, shape index: {}]
  $region1: #{tile.14} parent=0
    #allocation0 [shape = 'u8[4096]{0}', space=vmem, size = 0x1000, scoped, tag = 'scoped mem for output reshape']
    #allocation1 [shape = 'u8[4096]{0}', space=vmem, size = 0x1000, scoped, tag = 'scoped mem for input reshape']
    %s3 = sshllo.u32 0, 4
    %v4 = vld [vmem:[%s0] sm:%s3]
    %5 = vst [vmem:[#allocation1] sm:%s3] %v4
    %v6 = vld [vmem:[#allocation1] sm:$0x1]
    %vm7 = vcmask 64512
    %8 = vst.msk [vmem:[#allocation0] sm:$0x1] %vm7, %v6
    %s9 = scalar_lea.vmem [#allocation1], 3
    %v10 = vld [vmem:[%s9] sm:$0x1]
    %11 = vrot.lane.b32.xlu0 %v10, 24
    %v12 = vpop.permute.xlu0 %11
    %vm13 = vcmask 261312
    %14 = vst.msk [vmem:[#allocation0] sm:$0x1] %vm13, %v12
    %s15 = scalar_lea.vmem [#allocation1], 2
    %v16 = vld [vmem:[%s15] sm:$0x1]
    %17 = vrot.lane.b32.xlu0 %v16, 16
    %v18 = vpop.permute.xlu0 %17
    %vm19 = vcmask 195712
    %20 = vst.msk [vmem:[#allocation0] sm:$0x1] %vm19, %v18
    %s21 = scalar_lea.vmem [#allocation1], 1
    %v22 = vld [vmem:[%s21] sm:$0x1]
    %23 = vrot.lane.b32.xlu0 %v22, 8
    %v24 = vpop.permute.xlu0 %23
    %vm25 = vcmask 130112
    %26 = vst.msk [vmem:[#allocation0] sm:$0x1] %vm25, %v24
    %s28 = sshllo.u32 0, 1
    %v30 = vld [vmem:[#allocation0] sm:%s28]
    %s31 = sshllo.u32 0, 1
    %32 = vst [vmem:[%s1] sm:%s31] %v30

// kernel: final_decoder_forward.5
$region0: #{final_decoder_forward.5}
  #allocation0 [shape = 'u32[]', space=smem, size = 0x4, offset = 0x4, fixed_abs, tag = 'smem constant byte address 0x4 - core index']
  #allocation1 [shape = 'u32[144,128]{1,0:T(1,128)}', space=vmem, size = 0x12000, scoped, tag = 'internal scratch']
  %s0 = inlined_call_operand.vmem [shape: bf16[2,64,144], index: 0, kind: input, shape index: {}]
  %s1 = inlined_call_operand.vmem [shape: bf16[144,32], index: 1, kind: input, shape index: {}]
  %s2 = inlined_call_operand.vmem [shape: f32[1,32], index: 2, kind: input, shape index: {}]
  %s3 = inlined_call_operand.vmem [shape: bf16[2,64,32], index: 3, kind: output, shape index: {}]
  %s4 = sld [smem:[#allocation0]]
  $region45: #{final_decoder_forward.5} parent=0
    _
  %s6 = ssub.s32 1, %s4
  %s7 = scalar_select 0, %s6, %s4
  loop: start=0, step=1, limit=4
  $region2: #{final_decoder_forward.5} parent=0 // loop_pre_header
    _
  $region3: #{final_decoder_forward.5} parent=0 // loop_header
    %s9 = sphi 0, %s13
    %p10 = scmp.ge.s32.totalorder %s9, 4
    %s16 = sphi 0, %s28
    %s17 = sphi 0, %s24
    %s18 = sphi 0, %s16
    %s19 = sphi 0, %s17
    %s20 = sphi 0, %s18
    %s21 = sphi 0, %s19
    %s33 = sphi 0, %s35
    %s36 = sphi 0, %s33
    %s37 = sphi 0, %s36
    %s53 = sphi 0, %s37
    %s57 = sphi 0, %s57
    %s59 = sphi 0, %s57
    %s60 = sphi 0, %s59
    %s74 = sphi 0, %s60
    %s78 = sphi 0, %s78
    %s80 = sphi 0, %s78
    %s81 = sphi 0, %s80
    %s95 = sphi 0, %s81
    %s103 = sphi 0, %s105
    %s106 = sphi 0, %s103
    %s107 = sphi 0, %s106
    %s123 = sphi 0, %s107
  $region4: #{final_decoder_forward.5} parent=0 // loop_header_branch
    %12 = sbr.rel (%p10) target = $region8
  $region5: #{final_decoder_forward.5} parent=0 // loop_body
    %s14 = ssub.s32 %s9, 1
    %s15 = ssub.s32 %s9, 2
    %s22 = sadd.s32 1, %s17
    %p23 = scmp.ge.s32.totalorder %s22, 1
    %s24 = scalar_select %p23, 0, %s22
    %s25 = sadd.s32 1, %s16
    %s26 = scalar_select %p23, %s25, %s16
    %p27 = scmp.ge.s32.totalorder %s26, 2
    %s28 = scalar_select %p27, 0, %s26
    %s29 = ssub.s32 %s16, %s28
    %s30 = ssub.s32 %s17, %s24
    %s31 = sor.u32 %s29, %s30
    %p32 = scmp.eq.s32.totalorder %s31, 0
    %s34 = sadd.s32 %s33, 1
    %s35 = scalar_select %p32, %s33, %s34
    %p38 = pneg %p32
    %p39 = scmp.eq.s32.totalorder %s9, 1
    %p40 = por %p38, %p39
    %p41 = scmp.ne.s32.totalorder %s33, %s36
    %p42 = scmp.eq.s32.totalorder %s9, 0
    %p43 = por %p41, %p42
    %p44 = scmp.ne.s32.totalorder %s33, %s36
    %p45 = scmp.eq.s32.totalorder %s14, 1
    %p46 = por %p44, %p45
    %p47 = scmp.ne.s32.totalorder %s36, %s37
    %p48 = scmp.eq.s32.totalorder %s14, 0
    %p49 = por %p47, %p48
    %p50 = scmp.ne.s32.totalorder %s36, %s37
    %p51 = scmp.eq.s32.totalorder %s15, 1
    %p52 = por %p50, %p51
    %p54 = scmp.ne.s32.totalorder %s37, %s53
    %p55 = scmp.eq.s32.totalorder %s15, 0
    %p56 = por %p54, %p55
    %s58 = sadd.s32 %s57, 1
    %p61 = scmp.eq.s32.totalorder %s9, 1
    %p62 = scmp.ne.s32.totalorder %s57, %s59
    %p63 = scmp.eq.s32.totalorder %s9, 0
    %p64 = por %p62, %p63
    %p65 = scmp.ne.s32.totalorder %s57, %s59
    %p66 = scmp.eq.s32.totalorder %s14, 1
    %p67 = por %p65, %p66
    %p68 = scmp.ne.s32.totalorder %s59, %s60
    %p69 = scmp.eq.s32.totalorder %s14, 0
    %p70 = por %p68, %p69
    %p71 = scmp.ne.s32.totalorder %s59, %s60
    %p72 = scmp.eq.s32.totalorder %s15, 1
    %p73 = por %p71, %p72
    %p75 = scmp.ne.s32.totalorder %s60, %s74
    %p76 = scmp.eq.s32.totalorder %s15, 0
    %p77 = por %p75, %p76
    %s79 = sadd.s32 %s78, 1
    %p82 = scmp.eq.s32.totalorder %s9, 1
    %p83 = scmp.ne.s32.totalorder %s78, %s80
    %p84 = scmp.eq.s32.totalorder %s9, 0
    %p85 = por %p83, %p84
    %p86 = scmp.ne.s32.totalorder %s78, %s80
    %p87 = scmp.eq.s32.totalorder %s14, 1
    %p88 = por %p86, %p87
    %p89 = scmp.ne.s32.totalorder %s80, %s81
    %p90 = scmp.eq.s32.totalorder %s14, 0
    %p91 = por %p89, %p90
    %p92 = scmp.ne.s32.totalorder %s80, %s81
    %p93 = scmp.eq.s32.totalorder %s15, 1
    %p94 = por %p92, %p93
    %p96 = scmp.ne.s32.totalorder %s81, %s95
    %p97 = scmp.eq.s32.totalorder %s15, 0
    %p98 = por %p96, %p97
    %s99 = ssub.s32 %s16, %s28
    %s100 = ssub.s32 %s17, %s24
    %s101 = sor.u32 %s99, %s100
    %p102 = scmp.eq.s32.totalorder %s101, 0
    %s104 = sadd.s32 %s103, 1
    %s105 = scalar_select %p102, %s103, %s104
    %p108 = pneg %p102
    %p109 = scmp.eq.s32.totalorder %s9, 1
    %p110 = por %p108, %p109
    %p111 = scmp.ne.s32.totalorder %s103, %s106
    %p112 = scmp.eq.s32.totalorder %s9, 0
    %p113 = por %p111, %p112
    %p114 = scmp.ne.s32.totalorder %s103, %s106
    %p115 = scmp.eq.s32.totalorder %s14, 1
    %p116 = por %p114, %p115
    %p117 = scmp.ne.s32.totalorder %s106, %s107
    %p118 = scmp.eq.s32.totalorder %s14, 0
    %p119 = por %p117, %p118
    %p120 = scmp.ne.s32.totalorder %s106, %s107
    %p121 = scmp.eq.s32.totalorder %s15, 1
    %p122 = por %p120, %p121
    %p124 = scmp.ne.s32.totalorder %s107, %s123
    %p125 = scmp.eq.s32.totalorder %s15, 0
    %p126 = por %p124, %p125
    %p127 = scmp.le.s32.totalorder 1, %s9
    %p128 = scmp.lt.s32.totalorder %s9, 3
    %p129 = pnand %p127, %p128
    %p130 = pneg %p129
    // Predicated region
    $region9: #{final_decoder_forward.5} parent=5 // pred_check
      _
    $region10: #{final_decoder_forward.5} parent=5 // pred_check_branch
      %132 = sbr.rel (%p129) target = $region12
    $region11: #{final_decoder_forward.5} parent=5 // pred_region
      %s133 = ssub.s32 %s9, 1
      // Predicated region
      $region13: #{final_decoder_forward.5} parent=11 // pred_check
        %p134 = pneg %p70
      $region14: #{final_decoder_forward.5} parent=11 // pred_check_branch
        %136 = sbr.rel (%p134) target = $region16
      $region15: #{final_decoder_forward.5} parent=11 // pred_region
        _
      $region16: #{final_decoder_forward.5} parent=11 // pred_fallthru
        _
      // Predicated region
      $region17: #{final_decoder_forward.5} parent=11 // pred_check
        %p137 = pneg %p91
      $region18: #{final_decoder_forward.5} parent=11 // pred_check_branch
        %139 = sbr.rel (%p137) target = $region20
      $region19: #{final_decoder_forward.5} parent=11 // pred_region
        _
      $region20: #{final_decoder_forward.5} parent=11 // pred_fallthru
        _
    $region12: #{final_decoder_forward.5} parent=5 // pred_fallthru
      _
    %p140 = scmp.lt.s32.totalorder %s9, 2
    // Predicated region
    $region21: #{final_decoder_forward.5} parent=5 // pred_check
      %p141 = pneg %p140
    $region22: #{final_decoder_forward.5} parent=5 // pred_check_branch
      %143 = sbr.rel (%p141) target = $region24
    $region23: #{final_decoder_forward.5} parent=5 // pred_region
      // Predicated region
      $region25: #{final_decoder_forward.5} parent=23 // pred_check
        %p144 = pneg %p43
      $region26: #{final_decoder_forward.5} parent=23 // pred_check_branch
        %146 = sbr.rel (%p144) target = $region28
      $region27: #{final_decoder_forward.5} parent=23 // pred_region
        %s147 = smul.u32 8, %s17
        %p148 = scmp.lt.s32.totalorder %s16, 1
        %s149 = scalar_select %p148, %s16, 1
        %p150 = scmp.lt.s32.totalorder %s147, 7
        %s151 = scalar_select %p150, %s147, 7
        %s152 = smul.addr %s151, 2
        %s153 = smul.addr %s149, 16
        %s154 = sadd.s32 %s152, %s153
        %s155 = smul.addr %s154, 4
        %s156 = scalar_lea.vmem %s0, %s155
        %s157 = smul.u32 8, %s17
      $region28: #{final_decoder_forward.5} parent=23 // pred_fallthru
        _
    $region24: #{final_decoder_forward.5} parent=5 // pred_fallthru
      _
    %p158 = scmp.le.s32.totalorder 1, %s9
    %p159 = scmp.lt.s32.totalorder %s9, 3
    %p160 = pnand %p158, %p159
    %p161 = pneg %p160
    // Predicated region
    $region29: #{final_decoder_forward.5} parent=5 // pred_check
      _
    $region30: #{final_decoder_forward.5} parent=5 // pred_check_branch
      %163 = sbr.rel (%p160) target = $region32
    $region31: #{final_decoder_forward.5} parent=5 // pred_region
      %s164 = ssub.s32 %s9, 1
      %s165 = smul.u32 8, %s19
      %p166 = scmp.lt.s32.totalorder %s18, 1
      %s167 = scalar_select %p166, %s18, 1
      %p168 = scmp.lt.s32.totalorder %s165, 7
      %s169 = scalar_select %p168, %s165, 7
      %s170 = smul.addr %s169, 2
      %s171 = smul.addr %s167, 16
      %s172 = sadd.s32 %s170, %s171
      %s173 = smul.addr %s172, 4
      %s174 = scalar_lea.vmem %s0, %s173
      %p175 = pneg %p49
      %p176 = pneg %p46
      %p177 = pneg %p70
      %p178 = pneg %p67
      %p179 = pneg %p91
      %p180 = pneg %p88
      %p181 = pneg %p119
      %p182 = pneg %p116
      %s183 = smul.u32 8, %s19
      %p184 = scmp.lt.s32.totalorder %s18, 1
      %s185 = scalar_select %p184, %s18, 1
      %p186 = scmp.lt.s32.totalorder %s183, 7
      %s187 = scalar_select %p186, %s183, 7
      %s188 = smul.addr %s185, 8
      %s189 = sadd.s32 %s187, %s188
      %s190 = smul.addr %s189, 4
      %s191 = scalar_lea.vmem %s3, %s190
      %s192 = smul.u32 8, %s19
      %p193 = scmp.lt.s32.totalorder %s18, 1
      %s194 = scalar_select %p193, %s18, 1
      %p195 = scmp.lt.s32.totalorder %s192, 7
      %s196 = scalar_select %p195, %s192, 7
      %s197 = smul.addr %s196, 2
      %s198 = smul.addr %s194, 16
      %s199 = sadd.s32 %s197, %s198
      %s200 = smul.addr %s199, 4
      %s201 = scalar_lea.vmem %s0, %s200
      %s202 = smul.u32 8, %s19
      %s203 = smul.u32 8, %s19
      %p204 = scmp.lt.s32.totalorder %s18, 1
      %s205 = scalar_select %p204, %s18, 1
      %p206 = scmp.lt.s32.totalorder %s203, 7
      %s207 = scalar_select %p206, %s203, 7
      %s208 = smul.addr %s205, 8
      %s209 = sadd.s32 %s207, %s208
      %s210 = smul.addr %s209, 4
      %s211 = scalar_lea.vmem %s3, %s210
      %s212 = smul.u32 8, %s19
      %v214 = vld [vmem:[%s201] sm:$0xff]
      %v215 = vld [vmem:[%s201 + $0x8] sm:$0xff]
      %v216 = vld [vmem:[%s201 + $0x10] sm:$0xff]
      %v217 = vld [vmem:[%s201 + $0x18] sm:$0xff]
      %v218 = vld [vmem:[%s201 + $0x20] sm:$0xff]
      %v219 = vld [vmem:[%s201 + $0x28] sm:$0xff]
      %v220 = vld [vmem:[%s201 + $0x30] sm:$0xff]
      %v221 = vld [vmem:[%s201 + $0x38] sm:$0xff]
      %v222 = vld [vmem:[%s1] sm:$0xf]
      %v223 = vld [vmem:[%s1 + $0x4] sm:$0xf]
      %v224 = vld [vmem:[%s1 + $0x8] sm:$0xf]
      %v225 = vld [vmem:[%s1 + $0xc] sm:$0xf]
      %v226 = vld [vmem:[%s1 + $0x10] sm:$0xf]
      %v227 = vld [vmem:[%s1 + $0x14] sm:$0xf]
      %v228 = vld [vmem:[%s1 + $0x18] sm:$0xf]
      %v229 = vld [vmem:[%s1 + $0x1c] sm:$0xf]
      %v230 = vld [vmem:[%s1 + $0x20] sm:$0xf]
      %v231 = vld [vmem:[%s1 + $0x24] sm:$0xf]
      %v232 = vld [vmem:[%s1 + $0x28] sm:$0xf]
      %v233 = vld [vmem:[%s1 + $0x2c] sm:$0xf]
      %v234 = vld [vmem:[%s1 + $0x30] sm:$0xf]
      %v235 = vld [vmem:[%s1 + $0x34] sm:$0xf]
      %v236 = vld [vmem:[%s1 + $0x38] sm:$0xf]
      %v237 = vld [vmem:[%s1 + $0x3c] sm:$0xf]
      %v238 = vld [vmem:[%s1 + $0x40] sm:$0xf]
      %v239 = vld [vmem:[%s1 + $0x44] sm:$0xf]
      %v240 = vld [vmem:[%s2] sm:$0x1]
      %v242 = vlaneseq
      %v243 = vshrl.u32 %v242, 7
      %v244 = vsub.s32 0, %v243
      %v245 = vrot.slane %v240, %v244
      %v255 = vunpack.c.l.b16 %v214
      %v256 = vunpack.c.h.b16 %v214
      %v257 = vunpack.c.l.b16 %v215
      %v258 = vunpack.c.h.b16 %v215
      %v259 = vunpack.c.l.b16 %v216
      %v260 = vunpack.c.h.b16 %v216
      %v261 = vunpack.c.l.b16 %v217
      %v262 = vunpack.c.h.b16 %v217
      %v263 = vunpack.c.l.b16 %v218
      %v264 = vunpack.c.h.b16 %v218
      %v265 = vunpack.c.l.b16 %v219
      %v266 = vunpack.c.h.b16 %v219
      %v267 = vunpack.c.l.b16 %v220
      %v268 = vunpack.c.h.b16 %v220
      %v269 = vunpack.c.l.b16 %v221
      %v270 = vunpack.c.h.b16 %v221
      %v271 = vpack.c.b16 %v257, %v255
      %v272 = vpack.c.b16 %v258, %v256
      %v273 = vpack.c.b16 %v261, %v259
      %v274 = vpack.c.b16 %v262, %v260
      %v275 = vpack.c.b16 %v265, %v263
      %v276 = vpack.c.b16 %v266, %v264
      %v277 = vpack.c.b16 %v269, %v267
      %v278 = vpack.c.b16 %v270, %v268
      %v301 = vunpack.c.l.b16 %v222
      %v302 = vunpack.c.l.b16 %v223
      %v303 = vunpack.c.l.b16 %v224
      %v304 = vunpack.c.l.b16 %v225
      %v305 = vunpack.c.l.b16 %v226
      %v306 = vunpack.c.l.b16 %v227
      %v307 = vunpack.c.l.b16 %v228
      %v308 = vunpack.c.l.b16 %v229
      %v309 = vunpack.c.l.b16 %v230
      %v310 = vunpack.c.l.b16 %v231
      %v311 = vunpack.c.l.b16 %v232
      %v312 = vunpack.c.l.b16 %v233
      %v313 = vunpack.c.l.b16 %v234
      %v314 = vunpack.c.l.b16 %v235
      %v315 = vunpack.c.l.b16 %v236
      %v316 = vunpack.c.l.b16 %v237
      %v317 = vunpack.c.l.b16 %v238
      %v318 = vunpack.c.l.b16 %v239
      %v319 = vpack.c.b16 %v302, %v301
      %v320 = vpack.c.b16 %v304, %v303
      %v321 = vpack.c.b16 %v306, %v305
      %v322 = vpack.c.b16 %v308, %v307
      %v323 = vpack.c.b16 %v310, %v309
      %v324 = vpack.c.b16 %v312, %v311
      %v325 = vpack.c.b16 %v314, %v313
      %v326 = vpack.c.b16 %v316, %v315
      %v327 = vpack.c.b16 %v318, %v317
      %vm337 = vcmask 130048
      %v339 = vsel %vm337, %v272, 0
      %v342 = vsel %vm337, %v274, 0
      %v345 = vsel %vm337, %v276, 0
      %v348 = vsel %vm337, %v278, 0
      %350 = vmatprep.subr.bf16.mxu0 0
      %351 = vmatpush1.bf16.msra.mxu0 %v319
      %352 = vmatprep.subr.bf16.mxu0 0
      %353 = vmatpush1.bf16.msra.mxu0 %v320
      %354 = vmatprep.subr.bf16.mxu0 0
      %355 = vmatpush1.bf16.msra.mxu0 %v321
      %356 = vmatprep.subr.bf16.mxu0 0
      %357 = vmatpush1.bf16.msra.mxu0 %v322
      %358 = vmatprep.subr.bf16.mxu0 0
      %359 = vmatpush1.bf16.msra.mxu0 %v323
      %360 = vmatprep.subr.bf16.mxu0 0
      %361 = vmatpush1.bf16.msra.mxu0 %v324
      %362 = vmatprep.subr.bf16.mxu0 0
      %363 = vmatpush1.bf16.msra.mxu0 %v325
      %364 = vmatprep.subr.bf16.mxu0 0
      %365 = vmatpush1.bf16.msra.mxu0 %v326
      %366 = vmatprep.subr.bf16.mxu0 0
      %367 = vmatpush1.bf16.msra.mxu0 %v327
      %368 = vmatprep.subr.bf16.mxu0 0
      %369 = vmatpush1.bf16.msra.mxu0 0
      %370 = vmatprep.subr.bf16.mxu0 0
      %371 = vmatpush1.bf16.msra.mxu0 0
      %372 = vmatprep.subr.bf16.mxu0 0
      %373 = vmatpush1.bf16.msra.mxu0 0
      %374 = vmatprep.subr.bf16.mxu0 0
      %375 = vmatpush1.bf16.msra.mxu0 0
      %376 = vmatprep.subr.bf16.mxu0 0
      %377 = vmatpush1.bf16.msra.mxu0 0
      %378 = vmatprep.subr.bf16.mxu0 0
      %379 = vmatpush1.bf16.msra.mxu0 0
      %380 = vmatprep.subr.bf16.mxu0 0
      %381 = vmatpush1.bf16.msra.mxu0 0
      %382 = vmatprep.mubr.bf16.mxu0 %v339
      %383 = vmatmul.mubr.bf16.gmra.mrb[0].mxu0 %v271
      %v384 = vpop.f32.mrb[0].mxu0
      %v385 = vadd.f32 %v245, %v384
      %v386 = vpop.f32.mrb[0].mxu0
      %v387 = vpop.f32.mrb[0].mxu0
      %v388 = vadd.f32 %v245, %v387
      %v389 = vpop.f32.mrb[0].mxu0
      %390 = vmatprep.mubr.bf16.mxu0 %v342
      %391 = vmatmul.mubr.bf16.gmra.mrb[0].mxu0 %v273
      %v392 = vpop.f32.mrb[0].mxu0
      %v393 = vadd.f32 %v245, %v392
      %v394 = vpop.f32.mrb[0].mxu0
      %v395 = vpop.f32.mrb[0].mxu0
      %v396 = vadd.f32 %v245, %v395
      %v397 = vpop.f32.mrb[0].mxu0
      %398 = vmatprep.mubr.bf16.mxu0 %v345
      %399 = vmatmul.mubr.bf16.gmra.mrb[0].mxu0 %v275
      %v400 = vpop.f32.mrb[0].mxu0
      %v401 = vadd.f32 %v245, %v400
      %v402 = vpop.f32.mrb[0].mxu0
      %v403 = vpop.f32.mrb[0].mxu0
      %v404 = vadd.f32 %v245, %v403
      %v405 = vpop.f32.mrb[0].mxu0
      %406 = vmatprep.mubr.bf16.mxu0 %v348
      %407 = vmatmul.mubr.bf16.gmra.mrb[0].mxu0 %v277
      %v408 = vpop.f32.mrb[0].mxu0
      %v409 = vadd.f32 %v245, %v408
      %v410 = vpop.f32.mrb[0].mxu0
      %v411 = vpop.f32.mrb[0].mxu0
      %v412 = vadd.f32 %v245, %v411
      %v413 = vpop.f32.mrb[0].mxu0
      %414 = vdwg.mxu0
      %v415 = vxor.u32 %v385, 2147483648
      %v416 = vxor.u32 %v388, 2147483648
      %v417 = vxor.u32 %v393, 2147483648
      %v418 = vxor.u32 %v396, 2147483648
      %v419 = vxor.u32 %v401, 2147483648
      %v420 = vxor.u32 %v404, 2147483648
      %v421 = vxor.u32 %v409, 2147483648
      %v422 = vxor.u32 %v412, 2147483648
      %v423 = vmul.f32 %v415, 1.442695
      %v424 = vpow.pop %v423
      %v425 = vmul.f32 %v416, 1.442695
      %v426 = vpow.pop %v425
      %v427 = vmul.f32 %v417, 1.442695
      %v428 = vpow.pop %v427
      %v429 = vmul.f32 %v418, 1.442695
      %v430 = vpow.pop %v429
      %v431 = vmul.f32 %v419, 1.442695
      %v432 = vpow.pop %v431
      %v433 = vmul.f32 %v420, 1.442695
      %v434 = vpow.pop %v433
      %v435 = vmul.f32 %v421, 1.442695
      %v436 = vpow.pop %v435
      %v437 = vmul.f32 %v422, 1.442695
      %v438 = vpow.pop %v437
      %v439 = vadd.f32 %v424, 1.0
      %v440 = vadd.f32 %v426, 1.0
      %v441 = vadd.f32 %v428, 1.0
      %v442 = vadd.f32 %v430, 1.0
      %v443 = vadd.f32 %v432, 1.0
      %v444 = vadd.f32 %v434, 1.0
      %v445 = vadd.f32 %v436, 1.0
      %v446 = vadd.f32 %v438, 1.0
      %v447 = vrcp.pop %v439
      %v448 = vmul.f32 1.0, %v447
      %v449 = vrcp.pop %v440
      %v450 = vmul.f32 1.0, %v449
      %v451 = vrcp.pop %v441
      %v452 = vmul.f32 1.0, %v451
      %v453 = vrcp.pop %v442
      %v454 = vmul.f32 1.0, %v453
      %v455 = vrcp.pop %v443
      %v456 = vmul.f32 1.0, %v455
      %v457 = vrcp.pop %v444
      %v458 = vmul.f32 1.0, %v457
      %v459 = vrcp.pop %v445
      %v460 = vmul.f32 1.0, %v459
      %v461 = vrcp.pop %v446
      %v462 = vmul.f32 1.0, %v461
      %v463 = vmul.f32 %v385, %v448
      %v464 = vmul.f32 %v388, %v450
      %v465 = vmul.f32 %v393, %v452
      %v466 = vmul.f32 %v396, %v454
      %v467 = vmul.f32 %v401, %v456
      %v468 = vmul.f32 %v404, %v458
      %v469 = vmul.f32 %v409, %v460
      %v470 = vmul.f32 %v412, %v462
      %v471 = vpack.c.bf16 %v464, %v463
      %v472 = vpack.c.bf16 %v466, %v465
      %v473 = vpack.c.bf16 %v468, %v467
      %v474 = vpack.c.bf16 %v470, %v469
      %v479 = vunpack.c.l.b16 %v471
      %v480 = vunpack.c.h.b16 %v471
      %v481 = vunpack.c.l.b16 %v472
      %v482 = vunpack.c.h.b16 %v472
      %v483 = vunpack.c.l.b16 %v473
      %v484 = vunpack.c.h.b16 %v473
      %v485 = vunpack.c.l.b16 %v474
      %v486 = vunpack.c.h.b16 %v474
      %v487 = vpack.c.b16 %v479, %v479
      %v488 = vpack.c.b16 %v480, %v480
      %v489 = vpack.c.b16 %v481, %v481
      %v490 = vpack.c.b16 %v482, %v482
      %v491 = vpack.c.b16 %v483, %v483
      %v492 = vpack.c.b16 %v484, %v484
      %v493 = vpack.c.b16 %v485, %v485
      %v494 = vpack.c.b16 %v486, %v486
      %vm503 = vcmask 257024
      %504 = vst.msk [vmem:[%s211] sm:$0xf] %vm503, %v487
      %505 = vst.msk [vmem:[%s211 + $0x4] sm:$0xf] %vm503, %v488
      %506 = vst.msk [vmem:[%s211 + $0x8] sm:$0xf] %vm503, %v489
      %507 = vst.msk [vmem:[%s211 + $0xc] sm:$0xf] %vm503, %v490
      %508 = vst.msk [vmem:[%s211 + $0x10] sm:$0xf] %vm503, %v491
      %509 = vst.msk [vmem:[%s211 + $0x14] sm:$0xf] %vm503, %v492
      %510 = vst.msk [vmem:[%s211 + $0x18] sm:$0xf] %vm503, %v493
      %511 = vst.msk [vmem:[%s211 + $0x1c] sm:$0xf] %vm503, %v494
      %s512 = smul.u32 8, %s19
      %p513 = scmp.lt.s32.totalorder %s18, 1
      %s514 = scalar_select %p513, %s18, 1
      %p515 = scmp.lt.s32.totalorder %s512, 7
      %s516 = scalar_select %p515, %s512, 7
      %s517 = smul.addr %s514, 8
      %s518 = sadd.s32 %s516, %s517
      %s519 = smul.addr %s518, 4
      %s520 = scalar_lea.vmem %s3, %s519
      // Predicated region
      $region33: #{final_decoder_forward.5} parent=31 // pred_check
        %p521 = pneg %p116
      $region34: #{final_decoder_forward.5} parent=31 // pred_check_branch
        %523 = sbr.rel (%p521) target = $region36
      $region35: #{final_decoder_forward.5} parent=31 // pred_region
        %s524 = smul.u32 8, %s19
      $region36: #{final_decoder_forward.5} parent=31 // pred_fallthru
        _
    $region32: #{final_decoder_forward.5} parent=5 // pred_fallthru
      _
    %p525 = scmp.le.s32.totalorder 2, %s9
    // Predicated region
    $region37: #{final_decoder_forward.5} parent=5 // pred_check
      %p526 = pneg %p525
    $region38: #{final_decoder_forward.5} parent=5 // pred_check_branch
      %528 = sbr.rel (%p526) target = $region40
    $region39: #{final_decoder_forward.5} parent=5 // pred_region
      %s529 = ssub.s32 %s9, 2
      // Predicated region
      $region41: #{final_decoder_forward.5} parent=39 // pred_check
        %p530 = pneg %p122
      $region42: #{final_decoder_forward.5} parent=39 // pred_check_branch
        %532 = sbr.rel (%p530) target = $region44
      $region43: #{final_decoder_forward.5} parent=39 // pred_region
        %s533 = smul.u32 8, %s21
        %p534 = scmp.lt.s32.totalorder %s20, 1
        %s535 = scalar_select %p534, %s20, 1
        %p536 = scmp.lt.s32.totalorder %s533, 7
        %s537 = scalar_select %p536, %s533, 7
        %s538 = smul.addr %s535, 8
        %s539 = sadd.s32 %s537, %s538
        %s540 = smul.addr %s539, 4
        %s541 = scalar_lea.vmem %s3, %s540
      $region44: #{final_decoder_forward.5} parent=39 // pred_fallthru
        _
    $region40: #{final_decoder_forward.5} parent=5 // pred_fallthru
      _
  $region6: #{final_decoder_forward.5} parent=0 // loop_footer
    %s13 = sadd.s32 1, %s9
  $region7: #{final_decoder_forward.5} parent=0 // loop_footer_branch
    %8 = sbr.rel target = $region3
  $region8: #{final_decoder_forward.5} parent=0 // loop_exit
    _

// kernel: final_decoder_forward.6
$region0: #{final_decoder_forward.6}
  #allocation0 [shape = 'u32[]', space=smem, size = 0x4, offset = 0x4, fixed_abs, tag = 'smem constant byte address 0x4 - core index']
  #allocation1 [shape = 'u32[144,128]{1,0:T(1,128)}', space=vmem, size = 0x12000, scoped, tag = 'internal scratch']
  %s0 = inlined_call_operand.vmem [shape: bf16[2,256,72], index: 0, kind: input, shape index: {}]
  %s1 = inlined_call_operand.vmem [shape: bf16[72,8], index: 1, kind: input, shape index: {}]
  %s2 = inlined_call_operand.vmem [shape: f32[1,8], index: 2, kind: input, shape index: {}]
  %s3 = inlined_call_operand.vmem [shape: bf16[2,256,8], index: 3, kind: output, shape index: {}]
  %s4 = sld [smem:[#allocation0]]
  $region45: #{final_decoder_forward.6} parent=0
    _
  %s6 = ssub.s32 1, %s4
  %s7 = scalar_select 0, %s6, %s4
  loop: start=0, step=1, limit=4
  $region2: #{final_decoder_forward.6} parent=0 // loop_pre_header
    _
  $region3: #{final_decoder_forward.6} parent=0 // loop_header
    %s9 = sphi 0, %s13
    %p10 = scmp.ge.s32.totalorder %s9, 4
    %s16 = sphi 0, %s28
    %s17 = sphi 0, %s24
    %s18 = sphi 0, %s16
    %s19 = sphi 0, %s17
    %s20 = sphi 0, %s18
    %s21 = sphi 0, %s19
    %s33 = sphi 0, %s35
    %s36 = sphi 0, %s33
    %s37 = sphi 0, %s36
    %s53 = sphi 0, %s37
    %s57 = sphi 0, %s57
    %s59 = sphi 0, %s57
    %s60 = sphi 0, %s59
    %s74 = sphi 0, %s60
    %s78 = sphi 0, %s78
    %s80 = sphi 0, %s78
    %s81 = sphi 0, %s80
    %s95 = sphi 0, %s81
    %s103 = sphi 0, %s105
    %s106 = sphi 0, %s103
    %s107 = sphi 0, %s106
    %s123 = sphi 0, %s107
  $region4: #{final_decoder_forward.6} parent=0 // loop_header_branch
    %12 = sbr.rel (%p10) target = $region8
  $region5: #{final_decoder_forward.6} parent=0 // loop_body
    %s14 = ssub.s32 %s9, 1
    %s15 = ssub.s32 %s9, 2
    %s22 = sadd.s32 1, %s17
    %p23 = scmp.ge.s32.totalorder %s22, 1
    %s24 = scalar_select %p23, 0, %s22
    %s25 = sadd.s32 1, %s16
    %s26 = scalar_select %p23, %s25, %s16
    %p27 = scmp.ge.s32.totalorder %s26, 2
    %s28 = scalar_select %p27, 0, %s26
    %s29 = ssub.s32 %s16, %s28
    %s30 = ssub.s32 %s17, %s24
    %s31 = sor.u32 %s29, %s30
    %p32 = scmp.eq.s32.totalorder %s31, 0
    %s34 = sadd.s32 %s33, 1
    %s35 = scalar_select %p32, %s33, %s34
    %p38 = pneg %p32
    %p39 = scmp.eq.s32.totalorder %s9, 1
    %p40 = por %p38, %p39
    %p41 = scmp.ne.s32.totalorder %s33, %s36
    %p42 = scmp.eq.s32.totalorder %s9, 0
    %p43 = por %p41, %p42
    %p44 = scmp.ne.s32.totalorder %s33, %s36
    %p45 = scmp.eq.s32.totalorder %s14, 1
    %p46 = por %p44, %p45
    %p47 = scmp.ne.s32.totalorder %s36, %s37
    %p48 = scmp.eq.s32.totalorder %s14, 0
    %p49 = por %p47, %p48
    %p50 = scmp.ne.s32.totalorder %s36, %s37
    %p51 = scmp.eq.s32.totalorder %s15, 1
    %p52 = por %p50, %p51
    %p54 = scmp.ne.s32.totalorder %s37, %s53
    %p55 = scmp.eq.s32.totalorder %s15, 0
    %p56 = por %p54, %p55
    %s58 = sadd.s32 %s57, 1
    %p61 = scmp.eq.s32.totalorder %s9, 1
    %p62 = scmp.ne.s32.totalorder %s57, %s59
    %p63 = scmp.eq.s32.totalorder %s9, 0
    %p64 = por %p62, %p63
    %p65 = scmp.ne.s32.totalorder %s57, %s59
    %p66 = scmp.eq.s32.totalorder %s14, 1
    %p67 = por %p65, %p66
    %p68 = scmp.ne.s32.totalorder %s59, %s60
    %p69 = scmp.eq.s32.totalorder %s14, 0
    %p70 = por %p68, %p69
    %p71 = scmp.ne.s32.totalorder %s59, %s60
    %p72 = scmp.eq.s32.totalorder %s15, 1
    %p73 = por %p71, %p72
    %p75 = scmp.ne.s32.totalorder %s60, %s74
    %p76 = scmp.eq.s32.totalorder %s15, 0
    %p77 = por %p75, %p76
    %s79 = sadd.s32 %s78, 1
    %p82 = scmp.eq.s32.totalorder %s9, 1
    %p83 = scmp.ne.s32.totalorder %s78, %s80
    %p84 = scmp.eq.s32.totalorder %s9, 0
    %p85 = por %p83, %p84
    %p86 = scmp.ne.s32.totalorder %s78, %s80
    %p87 = scmp.eq.s32.totalorder %s14, 1
    %p88 = por %p86, %p87
    %p89 = scmp.ne.s32.totalorder %s80, %s81
    %p90 = scmp.eq.s32.totalorder %s14, 0
    %p91 = por %p89, %p90
    %p92 = scmp.ne.s32.totalorder %s80, %s81
    %p93 = scmp.eq.s32.totalorder %s15, 1
    %p94 = por %p92, %p93
    %p96 = scmp.ne.s32.totalorder %s81, %s95
    %p97 = scmp.eq.s32.totalorder %s15, 0
    %p98 = por %p96, %p97
    %s99 = ssub.s32 %s16, %s28
    %s100 = ssub.s32 %s17, %s24
    %s101 = sor.u32 %s99, %s100
    %p102 = scmp.eq.s32.totalorder %s101, 0
    %s104 = sadd.s32 %s103, 1
    %s105 = scalar_select %p102, %s103, %s104
    %p108 = pneg %p102
    %p109 = scmp.eq.s32.totalorder %s9, 1
    %p110 = por %p108, %p109
    %p111 = scmp.ne.s32.totalorder %s103, %s106
    %p112 = scmp.eq.s32.totalorder %s9, 0
    %p113 = por %p111, %p112
    %p114 = scmp.ne.s32.totalorder %s103, %s106
    %p115 = scmp.eq.s32.totalorder %s14, 1
    %p116 = por %p114, %p115
    %p117 = scmp.ne.s32.totalorder %s106, %s107
    %p118 = scmp.eq.s32.totalorder %s14, 0
    %p119 = por %p117, %p118
    %p120 = scmp.ne.s32.totalorder %s106, %s107
    %p121 = scmp.eq.s32.totalorder %s15, 1
    %p122 = por %p120, %p121
    %p124 = scmp.ne.s32.totalorder %s107, %s123
    %p125 = scmp.eq.s32.totalorder %s15, 0
    %p126 = por %p124, %p125
    %p127 = scmp.le.s32.totalorder 1, %s9
    %p128 = scmp.lt.s32.totalorder %s9, 3
    %p129 = pnand %p127, %p128
    %p130 = pneg %p129
    // Predicated region
    $region9: #{final_decoder_forward.6} parent=5 // pred_check
      _
    $region10: #{final_decoder_forward.6} parent=5 // pred_check_branch
      %132 = sbr.rel (%p129) target = $region12
    $region11: #{final_decoder_forward.6} parent=5 // pred_region
      %s133 = ssub.s32 %s9, 1
      // Predicated region
      $region13: #{final_decoder_forward.6} parent=11 // pred_check
        %p134 = pneg %p70
      $region14: #{final_decoder_forward.6} parent=11 // pred_check_branch
        %136 = sbr.rel (%p134) target = $region16
      $region15: #{final_decoder_forward.6} parent=11 // pred_region
        _
      $region16: #{final_decoder_forward.6} parent=11 // pred_fallthru
        _
      // Predicated region
      $region17: #{final_decoder_forward.6} parent=11 // pred_check
        %p137 = pneg %p91
      $region18: #{final_decoder_forward.6} parent=11 // pred_check_branch
        %139 = sbr.rel (%p137) target = $region20
      $region19: #{final_decoder_forward.6} parent=11 // pred_region
        _
      $region20: #{final_decoder_forward.6} parent=11 // pred_fallthru
        _
    $region12: #{final_decoder_forward.6} parent=5 // pred_fallthru
      _
    %p140 = scmp.lt.s32.totalorder %s9, 2
    // Predicated region
    $region21: #{final_decoder_forward.6} parent=5 // pred_check
      %p141 = pneg %p140
    $region22: #{final_decoder_forward.6} parent=5 // pred_check_branch
      %143 = sbr.rel (%p141) target = $region24
    $region23: #{final_decoder_forward.6} parent=5 // pred_region
      // Predicated region
      $region25: #{final_decoder_forward.6} parent=23 // pred_check
        %p144 = pneg %p43
      $region26: #{final_decoder_forward.6} parent=23 // pred_check_branch
        %146 = sbr.rel (%p144) target = $region28
      $region27: #{final_decoder_forward.6} parent=23 // pred_region
        %s147 = smul.u32 32, %s17
        %p148 = scmp.lt.s32.totalorder %s16, 1
        %s149 = scalar_select %p148, %s16, 1
        %p150 = scmp.lt.s32.totalorder %s147, 31
        %s151 = scalar_select %p150, %s147, 31
        %s152 = smul.addr %s149, 32
        %s153 = sadd.s32 %s151, %s152
        %s154 = smul.addr %s153, 4
        %s155 = scalar_lea.vmem %s0, %s154
        %s156 = smul.u32 32, %s17
      $region28: #{final_decoder_forward.6} parent=23 // pred_fallthru
        _
    $region24: #{final_decoder_forward.6} parent=5 // pred_fallthru
      _
    %p157 = scmp.le.s32.totalorder 1, %s9
    %p158 = scmp.lt.s32.totalorder %s9, 3
    %p159 = pnand %p157, %p158
    %p160 = pneg %p159
    // Predicated region
    $region29: #{final_decoder_forward.6} parent=5 // pred_check
      _
    $region30: #{final_decoder_forward.6} parent=5 // pred_check_branch
      %162 = sbr.rel (%p159) target = $region32
    $region31: #{final_decoder_forward.6} parent=5 // pred_region
      %s163 = ssub.s32 %s9, 1
      %s164 = smul.u32 32, %s19
      %p165 = scmp.lt.s32.totalorder %s18, 1
      %s166 = scalar_select %p165, %s18, 1
      %p167 = scmp.lt.s32.totalorder %s164, 31
      %s168 = scalar_select %p167, %s164, 31
      %s169 = smul.addr %s166, 32
      %s170 = sadd.s32 %s168, %s169
      %s171 = smul.addr %s170, 4
      %s172 = scalar_lea.vmem %s0, %s171
      %p173 = pneg %p49
      %p174 = pneg %p46
      %p175 = pneg %p70
      %p176 = pneg %p67
      %p177 = pneg %p91
      %p178 = pneg %p88
      %p179 = pneg %p119
      %p180 = pneg %p116
      %s181 = smul.u32 32, %s19
      %p182 = scmp.lt.s32.totalorder %s18, 1
      %s183 = scalar_select %p182, %s18, 1
      %p184 = scmp.lt.s32.totalorder %s181, 31
      %s185 = scalar_select %p184, %s181, 31
      %s186 = smul.addr %s183, 32
      %s187 = sadd.s32 %s185, %s186
      %s188 = smul.addr %s187, 4
      %s189 = scalar_lea.vmem %s3, %s188
      %s190 = smul.u32 32, %s19
      %p191 = scmp.lt.s32.totalorder %s18, 1
      %s192 = scalar_select %p191, %s18, 1
      %p193 = scmp.lt.s32.totalorder %s190, 31
      %s194 = scalar_select %p193, %s190, 31
      %s195 = smul.addr %s192, 32
      %s196 = sadd.s32 %s194, %s195
      %s197 = smul.addr %s196, 4
      %s198 = scalar_lea.vmem %s0, %s197
      %s199 = smul.u32 32, %s19
      %s200 = smul.u32 32, %s19
      %p201 = scmp.lt.s32.totalorder %s18, 1
      %s202 = scalar_select %p201, %s18, 1
      %p203 = scmp.lt.s32.totalorder %s200, 31
      %s204 = scalar_select %p203, %s200, 31
      %s205 = smul.addr %s202, 32
      %s206 = sadd.s32 %s204, %s205
      %s207 = smul.addr %s206, 4
      %s208 = scalar_lea.vmem %s3, %s207
      %s209 = smul.u32 32, %s19
      %v211 = vld [vmem:[%s198] sm:$0xf]
      %v212 = vld [vmem:[%s198 + $0x4] sm:$0xf]
      %v213 = vld [vmem:[%s198 + $0x8] sm:$0xf]
      %v214 = vld [vmem:[%s198 + $0xc] sm:$0xf]
      %v215 = vld [vmem:[%s198 + $0x10] sm:$0xf]
      %v216 = vld [vmem:[%s198 + $0x14] sm:$0xf]
      %v217 = vld [vmem:[%s198 + $0x18] sm:$0xf]
      %v218 = vld [vmem:[%s198 + $0x1c] sm:$0xf]
      %v219 = vld [vmem:[%s198 + $0x20] sm:$0xf]
      %v220 = vld [vmem:[%s198 + $0x24] sm:$0xf]
      %v221 = vld [vmem:[%s198 + $0x28] sm:$0xf]
      %v222 = vld [vmem:[%s198 + $0x2c] sm:$0xf]
      %v223 = vld [vmem:[%s198 + $0x30] sm:$0xf]
      %v224 = vld [vmem:[%s198 + $0x34] sm:$0xf]
      %v225 = vld [vmem:[%s198 + $0x38] sm:$0xf]
      %v226 = vld [vmem:[%s198 + $0x3c] sm:$0xf]
      %v227 = vld [vmem:[%s198 + $0x40] sm:$0xf]
      %v228 = vld [vmem:[%s198 + $0x44] sm:$0xf]
      %v229 = vld [vmem:[%s198 + $0x48] sm:$0xf]
      %v230 = vld [vmem:[%s198 + $0x4c] sm:$0xf]
      %v231 = vld [vmem:[%s198 + $0x50] sm:$0xf]
      %v232 = vld [vmem:[%s198 + $0x54] sm:$0xf]
      %v233 = vld [vmem:[%s198 + $0x58] sm:$0xf]
      %v234 = vld [vmem:[%s198 + $0x5c] sm:$0xf]
      %v235 = vld [vmem:[%s198 + $0x60] sm:$0xf]
      %v236 = vld [vmem:[%s198 + $0x64] sm:$0xf]
      %v237 = vld [vmem:[%s198 + $0x68] sm:$0xf]
      %v238 = vld [vmem:[%s198 + $0x6c] sm:$0xf]
      %v239 = vld [vmem:[%s198 + $0x70] sm:$0xf]
      %v240 = vld [vmem:[%s198 + $0x74] sm:$0xf]
      %v241 = vld [vmem:[%s198 + $0x78] sm:$0xf]
      %v242 = vld [vmem:[%s198 + $0x7c] sm:$0xf]
      %v243 = vld [vmem:[%s1] sm:$0xf]
      %v244 = vld [vmem:[%s1 + $0x4] sm:$0xf]
      %v245 = vld [vmem:[%s1 + $0x8] sm:$0xf]
      %v246 = vld [vmem:[%s1 + $0xc] sm:$0xf]
      %v247 = vld [vmem:[%s1 + $0x10] sm:$0xf]
      %v248 = vld [vmem:[%s1 + $0x14] sm:$0xf]
      %v249 = vld [vmem:[%s1 + $0x18] sm:$0xf]
      %v250 = vld [vmem:[%s1 + $0x1c] sm:$0xf]
      %v251 = vld [vmem:[%s1 + $0x20] sm:$0xf]
      %v252 = vld [vmem:[%s2] sm:$0x1]
      %v254 = vlaneseq
      %v255 = vshrl.u32 %v254, 7
      %v256 = vsub.s32 0, %v255
      %v257 = vrot.slane %v252, %v256
      %v291 = vunpack.c.l.b16 %v211
      %v292 = vunpack.c.l.b16 %v212
      %v293 = vunpack.c.l.b16 %v213
      %v294 = vunpack.c.l.b16 %v214
      %v295 = vunpack.c.l.b16 %v215
      %v296 = vunpack.c.l.b16 %v216
      %v297 = vunpack.c.l.b16 %v217
      %v298 = vunpack.c.l.b16 %v218
      %v299 = vunpack.c.l.b16 %v219
      %v300 = vunpack.c.l.b16 %v220
      %v301 = vunpack.c.l.b16 %v221
      %v302 = vunpack.c.l.b16 %v222
      %v303 = vunpack.c.l.b16 %v223
      %v304 = vunpack.c.l.b16 %v224
      %v305 = vunpack.c.l.b16 %v225
      %v306 = vunpack.c.l.b16 %v226
      %v307 = vunpack.c.l.b16 %v227
      %v308 = vunpack.c.l.b16 %v228
      %v309 = vunpack.c.l.b16 %v229
      %v310 = vunpack.c.l.b16 %v230
      %v311 = vunpack.c.l.b16 %v231
      %v312 = vunpack.c.l.b16 %v232
      %v313 = vunpack.c.l.b16 %v233
      %v314 = vunpack.c.l.b16 %v234
      %v315 = vunpack.c.l.b16 %v235
      %v316 = vunpack.c.l.b16 %v236
      %v317 = vunpack.c.l.b16 %v237
      %v318 = vunpack.c.l.b16 %v238
      %v319 = vunpack.c.l.b16 %v239
      %v320 = vunpack.c.l.b16 %v240
      %v321 = vunpack.c.l.b16 %v241
      %v322 = vunpack.c.l.b16 %v242
      %v323 = vpack.c.b16 %v292, %v291
      %v324 = vpack.c.b16 %v294, %v293
      %v325 = vpack.c.b16 %v296, %v295
      %v326 = vpack.c.b16 %v298, %v297
      %v327 = vpack.c.b16 %v300, %v299
      %v328 = vpack.c.b16 %v302, %v301
      %v329 = vpack.c.b16 %v304, %v303
      %v330 = vpack.c.b16 %v306, %v305
      %v331 = vpack.c.b16 %v308, %v307
      %v332 = vpack.c.b16 %v310, %v309
      %v333 = vpack.c.b16 %v312, %v311
      %v334 = vpack.c.b16 %v314, %v313
      %v335 = vpack.c.b16 %v316, %v315
      %v336 = vpack.c.b16 %v318, %v317
      %v337 = vpack.c.b16 %v320, %v319
      %v338 = vpack.c.b16 %v322, %v321
      %v348 = vunpack.c.l.b16 %v243
      %v349 = vunpack.c.l.b16 %v244
      %v350 = vunpack.c.l.b16 %v245
      %v351 = vunpack.c.l.b16 %v246
      %v352 = vunpack.c.l.b16 %v247
      %v353 = vunpack.c.l.b16 %v248
      %v354 = vunpack.c.l.b16 %v249
      %v355 = vunpack.c.l.b16 %v250
      %v356 = vunpack.c.l.b16 %v251
      %v357 = vpack.c.b16 %v349, %v348
      %v358 = vpack.c.b16 %v351, %v350
      %v359 = vpack.c.b16 %v353, %v352
      %v360 = vpack.c.b16 %v355, %v354
      %v361 = vpack.c.b16 %v356, %v356
      %vm366 = vcmask 588800
      %v368 = vsel %vm366, %v323, 0
      %v371 = vsel %vm366, %v324, 0
      %v374 = vsel %vm366, %v325, 0
      %v377 = vsel %vm366, %v326, 0
      %v380 = vsel %vm366, %v327, 0
      %v383 = vsel %vm366, %v328, 0
      %v386 = vsel %vm366, %v329, 0
      %v389 = vsel %vm366, %v330, 0
      %v392 = vsel %vm366, %v331, 0
      %v395 = vsel %vm366, %v332, 0
      %v398 = vsel %vm366, %v333, 0
      %v401 = vsel %vm366, %v334, 0
      %v404 = vsel %vm366, %v335, 0
      %v407 = vsel %vm366, %v336, 0
      %v410 = vsel %vm366, %v337, 0
      %v413 = vsel %vm366, %v338, 0
      %vm415 = vcmask 1043456
      %v417 = vsel %vm415, %v361, 0
      %419 = vmatprep.subr.bf16.mxu0 0
      %420 = vmatpush1.bf16.msra.mxu0 %v357
      %421 = vmatprep.subr.bf16.mxu0 0
      %422 = vmatpush1.bf16.msra.mxu0 %v358
      %423 = vmatprep.subr.bf16.mxu0 0
      %424 = vmatpush1.bf16.msra.mxu0 %v359
      %425 = vmatprep.subr.bf16.mxu0 0
      %426 = vmatpush1.bf16.msra.mxu0 %v360
      %427 = vmatprep.subr.bf16.mxu0 0
      %428 = vmatpush1.bf16.msra.mxu0 %v417
      %429 = vmatprep.subr.bf16.mxu0 0
      %430 = vmatpush1.bf16.msra.mxu0 0
      %431 = vmatprep.subr.bf16.mxu0 0
      %432 = vmatpush1.bf16.msra.mxu0 0
      %433 = vmatprep.subr.bf16.mxu0 0
      %434 = vmatpush1.bf16.msra.mxu0 0
      %435 = vmatprep.subr.bf16.mxu0 0
      %436 = vmatpush1.bf16.msra.mxu0 0
      %437 = vmatprep.subr.bf16.mxu0 0
      %438 = vmatpush1.bf16.msra.mxu0 0
      %439 = vmatprep.subr.bf16.mxu0 0
      %440 = vmatpush1.bf16.msra.mxu0 0
      %441 = vmatprep.subr.bf16.mxu0 0
      %442 = vmatpush1.bf16.msra.mxu0 0
      %443 = vmatprep.subr.bf16.mxu0 0
      %444 = vmatpush1.bf16.msra.mxu0 0
      %445 = vmatprep.subr.bf16.mxu0 0
      %446 = vmatpush1.bf16.msra.mxu0 0
      %447 = vmatprep.subr.bf16.mxu0 0
      %448 = vmatpush1.bf16.msra.mxu0 0
      %449 = vmatprep.subr.bf16.mxu0 0
      %450 = vmatpush1.bf16.msra.mxu0 0
      %451 = vmatprep.mubr.bf16.mxu0 0
      %452 = vmatmul.mubr.bf16.gmra.mrb[0].mxu0 %v368
      %v453 = vpop.f32.mrb[0].mxu0
      %v454 = vadd.f32 %v257, %v453
      %v455 = vpop.f32.mrb[0].mxu0
      %v456 = vpop.f32.mrb[0].mxu0
      %v457 = vadd.f32 %v257, %v456
      %v458 = vpop.f32.mrb[0].mxu0
      %459 = vmatprep.mubr.bf16.mxu0 0
      %460 = vmatmul.mubr.bf16.gmra.mrb[0].mxu0 %v371
      %v461 = vpop.f32.mrb[0].mxu0
      %v462 = vadd.f32 %v257, %v461
      %v463 = vpop.f32.mrb[0].mxu0
      %v464 = vpop.f32.mrb[0].mxu0
      %v465 = vadd.f32 %v257, %v464
      %v466 = vpop.f32.mrb[0].mxu0
      %467 = vmatprep.mubr.bf16.mxu0 0
      %468 = vmatmul.mubr.bf16.gmra.mrb[0].mxu0 %v374
      %v469 = vpop.f32.mrb[0].mxu0
      %v470 = vadd.f32 %v257, %v469
      %v471 = vpop.f32.mrb[0].mxu0
      %v472 = vpop.f32.mrb[0].mxu0
      %v473 = vadd.f32 %v257, %v472
      %v474 = vpop.f32.mrb[0].mxu0
      %475 = vmatprep.mubr.bf16.mxu0 0
      %476 = vmatmul.mubr.bf16.gmra.mrb[0].mxu0 %v377
      %v477 = vpop.f32.mrb[0].mxu0
      %v478 = vadd.f32 %v257, %v477
      %v479 = vpop.f32.mrb[0].mxu0
      %v480 = vpop.f32.mrb[0].mxu0
      %v481 = vadd.f32 %v257, %v480
      %v482 = vpop.f32.mrb[0].mxu0
      %483 = vmatprep.mubr.bf16.mxu0 0
      %484 = vmatmul.mubr.bf16.gmra.mrb[0].mxu0 %v380
      %v485 = vpop.f32.mrb[0].mxu0
      %v486 = vadd.f32 %v257, %v485
      %v487 = vpop.f32.mrb[0].mxu0
      %v488 = vpop.f32.mrb[0].mxu0
      %v489 = vadd.f32 %v257, %v488
      %v490 = vpop.f32.mrb[0].mxu0
      %491 = vmatprep.mubr.bf16.mxu0 0
      %492 = vmatmul.mubr.bf16.gmra.mrb[0].mxu0 %v383
      %v493 = vpop.f32.mrb[0].mxu0
      %v494 = vadd.f32 %v257, %v493
      %v495 = vpop.f32.mrb[0].mxu0
      %v496 = vpop.f32.mrb[0].mxu0
      %v497 = vadd.f32 %v257, %v496
      %v498 = vpop.f32.mrb[0].mxu0
      %499 = vmatprep.mubr.bf16.mxu0 0
      %500 = vmatmul.mubr.bf16.gmra.mrb[0].mxu0 %v386
      %v501 = vpop.f32.mrb[0].mxu0
      %v502 = vadd.f32 %v257, %v501
      %v503 = vpop.f32.mrb[0].mxu0
      %v504 = vpop.f32.mrb[0].mxu0
      %v505 = vadd.f32 %v257, %v504
      %v506 = vpop.f32.mrb[0].mxu0
      %507 = vmatprep.mubr.bf16.mxu0 0
      %508 = vmatmul.mubr.bf16.gmra.mrb[0].mxu0 %v389
      %v509 = vpop.f32.mrb[0].mxu0
      %v510 = vadd.f32 %v257, %v509
      %v511 = vpop.f32.mrb[0].mxu0
      %v512 = vpop.f32.mrb[0].mxu0
      %v513 = vadd.f32 %v257, %v512
      %v514 = vpop.f32.mrb[0].mxu0
      %515 = vmatprep.mubr.bf16.mxu0 0
      %516 = vmatmul.mubr.bf16.gmra.mrb[0].mxu0 %v392
      %v517 = vpop.f32.mrb[0].mxu0
      %v518 = vadd.f32 %v257, %v517
      %v519 = vpop.f32.mrb[0].mxu0
      %v520 = vpop.f32.mrb[0].mxu0
      %v521 = vadd.f32 %v257, %v520
      %v522 = vpop.f32.mrb[0].mxu0
      %523 = vmatprep.mubr.bf16.mxu0 0
      %524 = vmatmul.mubr.bf16.gmra.mrb[0].mxu0 %v395
      %v525 = vpop.f32.mrb[0].mxu0
      %v526 = vadd.f32 %v257, %v525
      %v527 = vpop.f32.mrb[0].mxu0
      %v528 = vpop.f32.mrb[0].mxu0
      %v529 = vadd.f32 %v257, %v528
      %v530 = vpop.f32.mrb[0].mxu0
      %531 = vmatprep.mubr.bf16.mxu0 0
      %532 = vmatmul.mubr.bf16.gmra.mrb[0].mxu0 %v398
      %v533 = vpop.f32.mrb[0].mxu0
      %v534 = vadd.f32 %v257, %v533
      %v535 = vpop.f32.mrb[0].mxu0
      %v536 = vpop.f32.mrb[0].mxu0
      %v537 = vadd.f32 %v257, %v536
      %v538 = vpop.f32.mrb[0].mxu0
      %539 = vmatprep.mubr.bf16.mxu0 0
      %540 = vmatmul.mubr.bf16.gmra.mrb[0].mxu0 %v401
      %v541 = vpop.f32.mrb[0].mxu0
      %v542 = vadd.f32 %v257, %v541
      %v543 = vpop.f32.mrb[0].mxu0
      %v544 = vpop.f32.mrb[0].mxu0
      %v545 = vadd.f32 %v257, %v544
      %v546 = vpop.f32.mrb[0].mxu0
      %547 = vmatprep.mubr.bf16.mxu0 0
      %548 = vmatmul.mubr.bf16.gmra.mrb[0].mxu0 %v404
      %v549 = vpop.f32.mrb[0].mxu0
      %v550 = vadd.f32 %v257, %v549
      %v551 = vpop.f32.mrb[0].mxu0
      %v552 = vpop.f32.mrb[0].mxu0
      %v553 = vadd.f32 %v257, %v552
      %v554 = vpop.f32.mrb[0].mxu0
      %555 = vmatprep.mubr.bf16.mxu0 0
      %556 = vmatmul.mubr.bf16.gmra.mrb[0].mxu0 %v407
      %v557 = vpop.f32.mrb[0].mxu0
      %v558 = vadd.f32 %v257, %v557
      %v559 = vpop.f32.mrb[0].mxu0
      %v560 = vpop.f32.mrb[0].mxu0
      %v561 = vadd.f32 %v257, %v560
      %v562 = vpop.f32.mrb[0].mxu0
      %563 = vmatprep.mubr.bf16.mxu0 0
      %564 = vmatmul.mubr.bf16.gmra.mrb[0].mxu0 %v410
      %v565 = vpop.f32.mrb[0].mxu0
      %v566 = vadd.f32 %v257, %v565
      %v567 = vpop.f32.mrb[0].mxu0
      %v568 = vpop.f32.mrb[0].mxu0
      %v569 = vadd.f32 %v257, %v568
      %v570 = vpop.f32.mrb[0].mxu0
      %571 = vmatprep.mubr.bf16.mxu0 0
      %572 = vmatmul.mubr.bf16.gmra.mrb[0].mxu0 %v413
      %v573 = vpop.f32.mrb[0].mxu0
      %v574 = vadd.f32 %v257, %v573
      %v575 = vpop.f32.mrb[0].mxu0
      %v576 = vpop.f32.mrb[0].mxu0
      %v577 = vadd.f32 %v257, %v576
      %v578 = vpop.f32.mrb[0].mxu0
      %579 = vdwg.mxu0
      %v580 = vxor.u32 %v454, 2147483648
      %v581 = vxor.u32 %v457, 2147483648
      %v582 = vxor.u32 %v462, 2147483648
      %v583 = vxor.u32 %v465, 2147483648
      %v584 = vxor.u32 %v470, 2147483648
      %v585 = vxor.u32 %v473, 2147483648
      %v586 = vxor.u32 %v478, 2147483648
      %v587 = vxor.u32 %v481, 2147483648
      %v588 = vxor.u32 %v486, 2147483648
      %v589 = vxor.u32 %v489, 2147483648
      %v590 = vxor.u32 %v494, 2147483648
      %v591 = vxor.u32 %v497, 2147483648
      %v592 = vxor.u32 %v502, 2147483648
      %v593 = vxor.u32 %v505, 2147483648
      %v594 = vxor.u32 %v510, 2147483648
      %v595 = vxor.u32 %v513, 2147483648
      %v596 = vxor.u32 %v518, 2147483648
      %v597 = vxor.u32 %v521, 2147483648
      %v598 = vxor.u32 %v526, 2147483648
      %v599 = vxor.u32 %v529, 2147483648
      %v600 = vxor.u32 %v534, 2147483648
      %v601 = vxor.u32 %v537, 2147483648
      %v602 = vxor.u32 %v542, 2147483648
      %v603 = vxor.u32 %v545, 2147483648
      %v604 = vxor.u32 %v550, 2147483648
      %v605 = vxor.u32 %v553, 2147483648
      %v606 = vxor.u32 %v558, 2147483648
      %v607 = vxor.u32 %v561, 2147483648
      %v608 = vxor.u32 %v566, 2147483648
      %v609 = vxor.u32 %v569, 2147483648
      %v610 = vxor.u32 %v574, 2147483648
      %v611 = vxor.u32 %v577, 2147483648
      %v612 = vmul.f32 %v580, 1.442695
      %v613 = vpow.pop %v612
      %v614 = vmul.f32 %v581, 1.442695
      %v615 = vpow.pop %v614
      %v616 = vmul.f32 %v582, 1.442695
      %v617 = vpow.pop %v616
      %v618 = vmul.f32 %v583, 1.442695
      %v619 = vpow.pop %v618
      %v620 = vmul.f32 %v584, 1.442695
      %v621 = vpow.pop %v620
      %v622 = vmul.f32 %v585, 1.442695
      %v623 = vpow.pop %v622
      %v624 = vmul.f32 %v586, 1.442695
      %v625 = vpow.pop %v624
      %v626 = vmul.f32 %v587, 1.442695
      %v627 = vpow.pop %v626
      %v628 = vmul.f32 %v588, 1.442695
      %v629 = vpow.pop %v628
      %v630 = vmul.f32 %v589, 1.442695
      %v631 = vpow.pop %v630
      %v632 = vmul.f32 %v590, 1.442695
      %v633 = vpow.pop %v632
      %v634 = vmul.f32 %v591, 1.442695
      %v635 = vpow.pop %v634
      %v636 = vmul.f32 %v592, 1.442695
      %v637 = vpow.pop %v636
      %v638 = vmul.f32 %v593, 1.442695
      %v639 = vpow.pop %v638
      %v640 = vmul.f32 %v594, 1.442695
      %v641 = vpow.pop %v640
      %v642 = vmul.f32 %v595, 1.442695
      %v643 = vpow.pop %v642
      %v644 = vmul.f32 %v596, 1.442695
      %v645 = vpow.pop %v644
      %v646 = vmul.f32 %v597, 1.442695
      %v647 = vpow.pop %v646
      %v648 = vmul.f32 %v598, 1.442695
      %v649 = vpow.pop %v648
      %v650 = vmul.f32 %v599, 1.442695
      %v651 = vpow.pop %v650
      %v652 = vmul.f32 %v600, 1.442695
      %v653 = vpow.pop %v652
      %v654 = vmul.f32 %v601, 1.442695
      %v655 = vpow.pop %v654
      %v656 = vmul.f32 %v602, 1.442695
      %v657 = vpow.pop %v656
      %v658 = vmul.f32 %v603, 1.442695
      %v659 = vpow.pop %v658
      %v660 = vmul.f32 %v604, 1.442695
      %v661 = vpow.pop %v660
      %v662 = vmul.f32 %v605, 1.442695
      %v663 = vpow.pop %v662
      %v664 = vmul.f32 %v606, 1.442695
      %v665 = vpow.pop %v664
      %v666 = vmul.f32 %v607, 1.442695
      %v667 = vpow.pop %v666
      %v668 = vmul.f32 %v608, 1.442695
      %v669 = vpow.pop %v668
      %v670 = vmul.f32 %v609, 1.442695
      %v671 = vpow.pop %v670
      %v672 = vmul.f32 %v610, 1.442695
      %v673 = vpow.pop %v672
      %v674 = vmul.f32 %v611, 1.442695
      %v675 = vpow.pop %v674
      %v676 = vadd.f32 %v613, 1.0
      %v677 = vadd.f32 %v615, 1.0
      %v678 = vadd.f32 %v617, 1.0
      %v679 = vadd.f32 %v619, 1.0
      %v680 = vadd.f32 %v621, 1.0
      %v681 = vadd.f32 %v623, 1.0
      %v682 = vadd.f32 %v625, 1.0
      %v683 = vadd.f32 %v627, 1.0
      %v684 = vadd.f32 %v629, 1.0
      %v685 = vadd.f32 %v631, 1.0
      %v686 = vadd.f32 %v633, 1.0
      %v687 = vadd.f32 %v635, 1.0
      %v688 = vadd.f32 %v637, 1.0
      %v689 = vadd.f32 %v639, 1.0
      %v690 = vadd.f32 %v641, 1.0
      %v691 = vadd.f32 %v643, 1.0
      %v692 = vadd.f32 %v645, 1.0
      %v693 = vadd.f32 %v647, 1.0
      %v694 = vadd.f32 %v649, 1.0
      %v695 = vadd.f32 %v651, 1.0
      %v696 = vadd.f32 %v653, 1.0
      %v697 = vadd.f32 %v655, 1.0
      %v698 = vadd.f32 %v657, 1.0
      %v699 = vadd.f32 %v659, 1.0
      %v700 = vadd.f32 %v661, 1.0
      %v701 = vadd.f32 %v663, 1.0
      %v702 = vadd.f32 %v665, 1.0
      %v703 = vadd.f32 %v667, 1.0
      %v704 = vadd.f32 %v669, 1.0
      %v705 = vadd.f32 %v671, 1.0
      %v706 = vadd.f32 %v673, 1.0
      %v707 = vadd.f32 %v675, 1.0
      %v708 = vrcp.pop %v676
      %v709 = vmul.f32 1.0, %v708
      %v710 = vrcp.pop %v677
      %v711 = vmul.f32 1.0, %v710
      %v712 = vrcp.pop %v678
      %v713 = vmul.f32 1.0, %v712
      %v714 = vrcp.pop %v679
      %v715 = vmul.f32 1.0, %v714
      %v716 = vrcp.pop %v680
      %v717 = vmul.f32 1.0, %v716
      %v718 = vrcp.pop %v681
      %v719 = vmul.f32 1.0, %v718
      %v720 = vrcp.pop %v682
      %v721 = vmul.f32 1.0, %v720
      %v722 = vrcp.pop %v683
      %v723 = vmul.f32 1.0, %v722
      %v724 = vrcp.pop %v684
      %v725 = vmul.f32 1.0, %v724
      %v726 = vrcp.pop %v685
      %v727 = vmul.f32 1.0, %v726
      %v728 = vrcp.pop %v686
      %v729 = vmul.f32 1.0, %v728
      %v730 = vrcp.pop %v687
      %v731 = vmul.f32 1.0, %v730
      %v732 = vrcp.pop %v688
      %v733 = vmul.f32 1.0, %v732
      %v734 = vrcp.pop %v689
      %v735 = vmul.f32 1.0, %v734
      %v736 = vrcp.pop %v690
      %v737 = vmul.f32 1.0, %v736
      %v738 = vrcp.pop %v691
      %v739 = vmul.f32 1.0, %v738
      %v740 = vrcp.pop %v692
      %v741 = vmul.f32 1.0, %v740
      %v742 = vrcp.pop %v693
      %v743 = vmul.f32 1.0, %v742
      %v744 = vrcp.pop %v694
      %v745 = vmul.f32 1.0, %v744
      %v746 = vrcp.pop %v695
      %v747 = vmul.f32 1.0, %v746
      %v748 = vrcp.pop %v696
      %v749 = vmul.f32 1.0, %v748
      %v750 = vrcp.pop %v697
      %v751 = vmul.f32 1.0, %v750
      %v752 = vrcp.pop %v698
      %v753 = vmul.f32 1.0, %v752
      %v754 = vrcp.pop %v699
      %v755 = vmul.f32 1.0, %v754
      %v756 = vrcp.pop %v700
      %v757 = vmul.f32 1.0, %v756
      %v758 = vrcp.pop %v701
      %v759 = vmul.f32 1.0, %v758
      %v760 = vrcp.pop %v702
      %v761 = vmul.f32 1.0, %v760
      %v762 = vrcp.pop %v703
      %v763 = vmul.f32 1.0, %v762
      %v764 = vrcp.pop %v704
      %v765 = vmul.f32 1.0, %v764
      %v766 = vrcp.pop %v705
      %v767 = vmul.f32 1.0, %v766
      %v768 = vrcp.pop %v706
      %v769 = vmul.f32 1.0, %v768
      %v770 = vrcp.pop %v707
      %v771 = vmul.f32 1.0, %v770
      %v772 = vmul.f32 %v454, %v709
      %v773 = vmul.f32 %v457, %v711
      %v774 = vmul.f32 %v462, %v713
      %v775 = vmul.f32 %v465, %v715
      %v776 = vmul.f32 %v470, %v717
      %v777 = vmul.f32 %v473, %v719
      %v778 = vmul.f32 %v478, %v721
      %v779 = vmul.f32 %v481, %v723
      %v780 = vmul.f32 %v486, %v725
      %v781 = vmul.f32 %v489, %v727
      %v782 = vmul.f32 %v494, %v729
      %v783 = vmul.f32 %v497, %v731
      %v784 = vmul.f32 %v502, %v733
      %v785 = vmul.f32 %v505, %v735
      %v786 = vmul.f32 %v510, %v737
      %v787 = vmul.f32 %v513, %v739
      %v788 = vmul.f32 %v518, %v741
      %v789 = vmul.f32 %v521, %v743
      %v790 = vmul.f32 %v526, %v745
      %v791 = vmul.f32 %v529, %v747
      %v792 = vmul.f32 %v534, %v749
      %v793 = vmul.f32 %v537, %v751
      %v794 = vmul.f32 %v542, %v753
      %v795 = vmul.f32 %v545, %v755
      %v796 = vmul.f32 %v550, %v757
      %v797 = vmul.f32 %v553, %v759
      %v798 = vmul.f32 %v558, %v761
      %v799 = vmul.f32 %v561, %v763
      %v800 = vmul.f32 %v566, %v765
      %v801 = vmul.f32 %v569, %v767
      %v802 = vmul.f32 %v574, %v769
      %v803 = vmul.f32 %v577, %v771
      %v804 = vpack.c.bf16 %v773, %v772
      %v805 = vpack.c.bf16 %v775, %v774
      %v806 = vpack.c.bf16 %v777, %v776
      %v807 = vpack.c.bf16 %v779, %v778
      %v808 = vpack.c.bf16 %v781, %v780
      %v809 = vpack.c.bf16 %v783, %v782
      %v810 = vpack.c.bf16 %v785, %v784
      %v811 = vpack.c.bf16 %v787, %v786
      %v812 = vpack.c.bf16 %v789, %v788
      %v813 = vpack.c.bf16 %v791, %v790
      %v814 = vpack.c.bf16 %v793, %v792
      %v815 = vpack.c.bf16 %v795, %v794
      %v816 = vpack.c.bf16 %v797, %v796
      %v817 = vpack.c.bf16 %v799, %v798
      %v818 = vpack.c.bf16 %v801, %v800
      %v819 = vpack.c.bf16 %v803, %v802
      %v836 = vunpack.c.l.b16 %v804
      %v837 = vunpack.c.h.b16 %v804
      %v838 = vunpack.c.l.b16 %v805
      %v839 = vunpack.c.h.b16 %v805
      %v840 = vunpack.c.l.b16 %v806
      %v841 = vunpack.c.h.b16 %v806
      %v842 = vunpack.c.l.b16 %v807
      %v843 = vunpack.c.h.b16 %v807
      %v844 = vunpack.c.l.b16 %v808
      %v845 = vunpack.c.h.b16 %v808
      %v846 = vunpack.c.l.b16 %v809
      %v847 = vunpack.c.h.b16 %v809
      %v848 = vunpack.c.l.b16 %v810
      %v849 = vunpack.c.h.b16 %v810
      %v850 = vunpack.c.l.b16 %v811
      %v851 = vunpack.c.h.b16 %v811
      %v852 = vunpack.c.l.b16 %v812
      %v853 = vunpack.c.h.b16 %v812
      %v854 = vunpack.c.l.b16 %v813
      %v855 = vunpack.c.h.b16 %v813
      %v856 = vunpack.c.l.b16 %v814
      %v857 = vunpack.c.h.b16 %v814
      %v858 = vunpack.c.l.b16 %v815
      %v859 = vunpack.c.h.b16 %v815
      %v860 = vunpack.c.l.b16 %v816
      %v861 = vunpack.c.h.b16 %v816
      %v862 = vunpack.c.l.b16 %v817
      %v863 = vunpack.c.h.b16 %v817
      %v864 = vunpack.c.l.b16 %v818
      %v865 = vunpack.c.h.b16 %v818
      %v866 = vunpack.c.l.b16 %v819
      %v867 = vunpack.c.h.b16 %v819
      %v868 = vpack.c.b16 %v836, %v836
      %v869 = vpack.c.b16 %v837, %v837
      %v870 = vpack.c.b16 %v838, %v838
      %v871 = vpack.c.b16 %v839, %v839
      %v872 = vpack.c.b16 %v840, %v840
      %v873 = vpack.c.b16 %v841, %v841
      %v874 = vpack.c.b16 %v842, %v842
      %v875 = vpack.c.b16 %v843, %v843
      %v876 = vpack.c.b16 %v844, %v844
      %v877 = vpack.c.b16 %v845, %v845
      %v878 = vpack.c.b16 %v846, %v846
      %v879 = vpack.c.b16 %v847, %v847
      %v880 = vpack.c.b16 %v848, %v848
      %v881 = vpack.c.b16 %v849, %v849
      %v882 = vpack.c.b16 %v850, %v850
      %v883 = vpack.c.b16 %v851, %v851
      %v884 = vpack.c.b16 %v852, %v852
      %v885 = vpack.c.b16 %v853, %v853
      %v886 = vpack.c.b16 %v854, %v854
      %v887 = vpack.c.b16 %v855, %v855
      %v888 = vpack.c.b16 %v856, %v856
      %v889 = vpack.c.b16 %v857, %v857
      %v890 = vpack.c.b16 %v858, %v858
      %v891 = vpack.c.b16 %v859, %v859
      %v892 = vpack.c.b16 %v860, %v860
      %v893 = vpack.c.b16 %v861, %v861
      %v894 = vpack.c.b16 %v862, %v862
      %v895 = vpack.c.b16 %v863, %v863
      %v896 = vpack.c.b16 %v864, %v864
      %v897 = vpack.c.b16 %v865, %v865
      %v898 = vpack.c.b16 %v866, %v866
      %v899 = vpack.c.b16 %v867, %v867
      %vm932 = vcmask 60416
      %933 = vst.msk [vmem:[%s208] sm:$0xf] %vm932, %v868
      %934 = vst.msk [vmem:[%s208 + $0x4] sm:$0xf] %vm932, %v869
      %935 = vst.msk [vmem:[%s208 + $0x8] sm:$0xf] %vm932, %v870
      %936 = vst.msk [vmem:[%s208 + $0xc] sm:$0xf] %vm932, %v871
      %937 = vst.msk [vmem:[%s208 + $0x10] sm:$0xf] %vm932, %v872
      %938 = vst.msk [vmem:[%s208 + $0x14] sm:$0xf] %vm932, %v873
      %939 = vst.msk [vmem:[%s208 + $0x18] sm:$0xf] %vm932, %v874
      %940 = vst.msk [vmem:[%s208 + $0x1c] sm:$0xf] %vm932, %v875
      %941 = vst.msk [vmem:[%s208 + $0x20] sm:$0xf] %vm932, %v876
      %942 = vst.msk [vmem:[%s208 + $0x24] sm:$0xf] %vm932, %v877
      %943 = vst.msk [vmem:[%s208 + $0x28] sm:$0xf] %vm932, %v878
      %944 = vst.msk [vmem:[%s208 + $0x2c] sm:$0xf] %vm932, %v879
      %945 = vst.msk [vmem:[%s208 + $0x30] sm:$0xf] %vm932, %v880
      %946 = vst.msk [vmem:[%s208 + $0x34] sm:$0xf] %vm932, %v881
      %947 = vst.msk [vmem:[%s208 + $0x38] sm:$0xf] %vm932, %v882
      %948 = vst.msk [vmem:[%s208 + $0x3c] sm:$0xf] %vm932, %v883
      %949 = vst.msk [vmem:[%s208 + $0x40] sm:$0xf] %vm932, %v884
      %950 = vst.msk [vmem:[%s208 + $0x44] sm:$0xf] %vm932, %v885
      %951 = vst.msk [vmem:[%s208 + $0x48] sm:$0xf] %vm932, %v886
      %952 = vst.msk [vmem:[%s208 + $0x4c] sm:$0xf] %vm932, %v887
      %953 = vst.msk [vmem:[%s208 + $0x50] sm:$0xf] %vm932, %v888
      %954 = vst.msk [vmem:[%s208 + $0x54] sm:$0xf] %vm932, %v889
      %955 = vst.msk [vmem:[%s208 + $0x58] sm:$0xf] %vm932, %v890
      %956 = vst.msk [vmem:[%s208 + $0x5c] sm:$0xf] %vm932, %v891
      %957 = vst.msk [vmem:[%s208 + $0x60] sm:$0xf] %vm932, %v892
      %958 = vst.msk [vmem:[%s208 + $0x64] sm:$0xf] %vm932, %v893
      %959 = vst.msk [vmem:[%s208 + $0x68] sm:$0xf] %vm932, %v894
      %960 = vst.msk [vmem:[%s208 + $0x6c] sm:$0xf] %vm932, %v895
      %961 = vst.msk [vmem:[%s208 + $0x70] sm:$0xf] %vm932, %v896
      %962 = vst.msk [vmem:[%s208 + $0x74] sm:$0xf] %vm932, %v897
      %963 = vst.msk [vmem:[%s208 + $0x78] sm:$0xf] %vm932, %v898
      %964 = vst.msk [vmem:[%s208 + $0x7c] sm:$0xf] %vm932, %v899
      %s965 = smul.u32 32, %s19
      %p966 = scmp.lt.s32.totalorder %s18, 1
      %s967 = scalar_select %p966, %s18, 1
      %p968 = scmp.lt.s32.totalorder %s965, 31
      %s969 = scalar_select %p968, %s965, 31
      %s970 = smul.addr %s967, 32
      %s971 = sadd.s32 %s969, %s970
      %s972 = smul.addr %s971, 4
      %s973 = scalar_lea.vmem %s3, %s972
      // Predicated region
      $region33: #{final_decoder_forward.6} parent=31 // pred_check
        %p974 = pneg %p116
      $region34: #{final_decoder_forward.6} parent=31 // pred_check_branch
        %976 = sbr.rel (%p974) target = $region36
      $region35: #{final_decoder_forward.6} parent=31 // pred_region
        %s977 = smul.u32 32, %s19
      $region36: #{final_decoder_forward.6} parent=31 // pred_fallthru
        _
    $region32: #{final_decoder_forward.6} parent=5 // pred_fallthru
      _
    %p978 = scmp.le.s32.totalorder 2, %s9
    // Predicated region
    $region37: #{final_decoder_forward.6} parent=5 // pred_check
      %p979 = pneg %p978
    $region38: #{final_decoder_forward.6} parent=5 // pred_check_branch
      %981 = sbr.rel (%p979) target = $region40
    $region39: #{final_decoder_forward.6} parent=5 // pred_region
      %s982 = ssub.s32 %s9, 2
      // Predicated region
      $region41: #{final_decoder_forward.6} parent=39 // pred_check
        %p983 = pneg %p122
      $region42: #{final_decoder_forward.6} parent=39 // pred_check_branch
        %985 = sbr.rel (%p983) target = $region44
      $region43: #{final_decoder_forward.6} parent=39 // pred_region
        %s986 = smul.u32 32, %s21
        %p987 = scmp.lt.s32.totalorder %s20, 1
        %s988 = scalar_select %p987, %s20, 1
        %p989 = scmp.lt.s32.totalorder %s986, 31
        %s990 = scalar_select %p989, %s986, 31
        %s991 = smul.addr %s988, 32
        %s992 = sadd.s32 %s990, %s991
        %s993 = smul.addr %s992, 4
        %s994 = scalar_lea.vmem %s3, %s993
      $region44: #{final_decoder_forward.6} parent=39 // pred_fallthru
        _
    $region40: #{final_decoder_forward.6} parent=5 // pred_fallthru
      _
  $region6: #{final_decoder_forward.6} parent=0 // loop_footer
    %s13 = sadd.s32 1, %s9
  $region7: #{final_decoder_forward.6} parent=0 // loop_footer_branch
    %8 = sbr.rel target = $region3
  $region8: #{final_decoder_forward.6} parent=0 // loop_exit
    _

// kernel: tile.18
$region0: #{tile.18}
  #allocation0 [shape = 's32[1]{0}', space=sflag, size = 0x4, scoped, tag = 'scoped memory for tile.18']
  %s0 = inlined_call_operand.vmem [shape: f32[4], index: 0, kind: input, shape index: {}]
  %s1 = inlined_call_operand.vmem [shape: f32[4,4], index: 1, kind: output, shape index: {}]
  // Predicated region
  $region2: #{tile.18} parent=0 // pred_check
    _
  $region3: #{tile.18} parent=0 // pred_check_branch
    %3 = sbr.rel (0) target = $region5
  $region4: #{tile.18} parent=0 // pred_region
    _
  $region5: #{tile.18} parent=0 // pred_fallthru
    _
  %v4 = vld [vmem:[%s0] ss:$0 sm:$0xff]
  %5 = vst [vmem:[%s1] sm:$0xf] %v4

// kernel: tile.19
$region0: #{tile.19}
  %s0 = inlined_call_operand.vmem [shape: f32[4,4], index: 0, kind: input, shape index: {}]
  %s1 = inlined_call_operand.vmem [shape: f32[1,16], index: 1, kind: output, shape index: {}]
  $region1: #{tile.19} parent=0
    #allocation0 [shape = 'u8[4096]{0}', space=vmem, size = 0x1000, scoped, tag = 'scoped mem for output reshape']
    #allocation1 [shape = 'u8[4096]{0}', space=vmem, size = 0x1000, scoped, tag = 'scoped mem for input reshape']
    %s3 = sshllo.u32 0, 4
    %v4 = vld [vmem:[%s0] sm:%s3]
    %5 = vst [vmem:[#allocation1] sm:%s3] %v4
    %v6 = vld [vmem:[#allocation1] sm:$0x1]
    %vm7 = vcmask 31744
    %8 = vst.msk [vmem:[#allocation0] sm:$0x1] %vm7, %v6
    %s9 = scalar_lea.vmem [#allocation1], 3
    %v10 = vld [vmem:[%s9] sm:$0x1]
    %11 = vrot.lane.b32.xlu0 %v10, 12
    %v12 = vpop.permute.xlu0 %11
    %vm13 = vcmask 130144
    %14 = vst.msk [vmem:[#allocation0] sm:$0x1] %vm13, %v12
    %s15 = scalar_lea.vmem [#allocation1], 2
    %v16 = vld [vmem:[%s15] sm:$0x1]
    %17 = vrot.lane.b32.xlu0 %v16, 8
    %v18 = vpop.permute.xlu0 %17
    %vm19 = vcmask 97344
    %20 = vst.msk [vmem:[#allocation0] sm:$0x1] %vm19, %v18
    %s21 = scalar_lea.vmem [#allocation1], 1
    %v22 = vld [vmem:[%s21] sm:$0x1]
    %23 = vrot.lane.b32.xlu0 %v22, 4
    %v24 = vpop.permute.xlu0 %23
    %vm25 = vcmask 64544
    %26 = vst.msk [vmem:[#allocation0] sm:$0x1] %vm25, %v24
    %s28 = sshllo.u32 0, 1
    %v30 = vld [vmem:[#allocation0] sm:%s28]
    %s31 = sshllo.u32 0, 1
    %32 = vst [vmem:[%s1] sm:%s31] %v30

// kernel: final_decoder_forward.7
$region0: #{final_decoder_forward.7}
  #allocation0 [shape = 'u32[]', space=smem, size = 0x4, offset = 0x4, fixed_abs, tag = 'smem constant byte address 0x4 - core index']
  #allocation1 [shape = 'u32[144,128]{1,0:T(1,128)}', space=vmem, size = 0x12000, scoped, tag = 'internal scratch']
  %s0 = inlined_call_operand.vmem [shape: bf16[2,256,72], index: 0, kind: input, shape index: {}]
  %s1 = inlined_call_operand.vmem [shape: bf16[72,16], index: 1, kind: input, shape index: {}]
  %s2 = inlined_call_operand.vmem [shape: f32[1,16], index: 2, kind: input, shape index: {}]
  %s3 = inlined_call_operand.vmem [shape: bf16[2,256,16], index: 3, kind: output, shape index: {}]
  %s4 = sld [smem:[#allocation0]]
  $region45: #{final_decoder_forward.7} parent=0
    _
  %s6 = ssub.s32 1, %s4
  %s7 = scalar_select 0, %s6, %s4
  loop: start=0, step=1, limit=4
  $region2: #{final_decoder_forward.7} parent=0 // loop_pre_header
    _
  $region3: #{final_decoder_forward.7} parent=0 // loop_header
    %s9 = sphi 0, %s13
    %p10 = scmp.ge.s32.totalorder %s9, 4
    %s16 = sphi 0, %s28
    %s17 = sphi 0, %s24
    %s18 = sphi 0, %s16
    %s19 = sphi 0, %s17
    %s20 = sphi 0, %s18
    %s21 = sphi 0, %s19
    %s33 = sphi 0, %s35
    %s36 = sphi 0, %s33
    %s37 = sphi 0, %s36
    %s53 = sphi 0, %s37
    %s57 = sphi 0, %s57
    %s59 = sphi 0, %s57
    %s60 = sphi 0, %s59
    %s74 = sphi 0, %s60
    %s78 = sphi 0, %s78
    %s80 = sphi 0, %s78
    %s81 = sphi 0, %s80
    %s95 = sphi 0, %s81
    %s103 = sphi 0, %s105
    %s106 = sphi 0, %s103
    %s107 = sphi 0, %s106
    %s123 = sphi 0, %s107
  $region4: #{final_decoder_forward.7} parent=0 // loop_header_branch
    %12 = sbr.rel (%p10) target = $region8
  $region5: #{final_decoder_forward.7} parent=0 // loop_body
    %s14 = ssub.s32 %s9, 1
    %s15 = ssub.s32 %s9, 2
    %s22 = sadd.s32 1, %s17
    %p23 = scmp.ge.s32.totalorder %s22, 1
    %s24 = scalar_select %p23, 0, %s22
    %s25 = sadd.s32 1, %s16
    %s26 = scalar_select %p23, %s25, %s16
    %p27 = scmp.ge.s32.totalorder %s26, 2
    %s28 = scalar_select %p27, 0, %s26
    %s29 = ssub.s32 %s16, %s28
    %s30 = ssub.s32 %s17, %s24
    %s31 = sor.u32 %s29, %s30
    %p32 = scmp.eq.s32.totalorder %s31, 0
    %s34 = sadd.s32 %s33, 1
    %s35 = scalar_select %p32, %s33, %s34
    %p38 = pneg %p32
    %p39 = scmp.eq.s32.totalorder %s9, 1
    %p40 = por %p38, %p39
    %p41 = scmp.ne.s32.totalorder %s33, %s36
    %p42 = scmp.eq.s32.totalorder %s9, 0
    %p43 = por %p41, %p42
    %p44 = scmp.ne.s32.totalorder %s33, %s36
    %p45 = scmp.eq.s32.totalorder %s14, 1
    %p46 = por %p44, %p45
    %p47 = scmp.ne.s32.totalorder %s36, %s37
    %p48 = scmp.eq.s32.totalorder %s14, 0
    %p49 = por %p47, %p48
    %p50 = scmp.ne.s32.totalorder %s36, %s37
    %p51 = scmp.eq.s32.totalorder %s15, 1
    %p52 = por %p50, %p51
    %p54 = scmp.ne.s32.totalorder %s37, %s53
    %p55 = scmp.eq.s32.totalorder %s15, 0
    %p56 = por %p54, %p55
    %s58 = sadd.s32 %s57, 1
    %p61 = scmp.eq.s32.totalorder %s9, 1
    %p62 = scmp.ne.s32.totalorder %s57, %s59
    %p63 = scmp.eq.s32.totalorder %s9, 0
    %p64 = por %p62, %p63
    %p65 = scmp.ne.s32.totalorder %s57, %s59
    %p66 = scmp.eq.s32.totalorder %s14, 1
    %p67 = por %p65, %p66
    %p68 = scmp.ne.s32.totalorder %s59, %s60
    %p69 = scmp.eq.s32.totalorder %s14, 0
    %p70 = por %p68, %p69
    %p71 = scmp.ne.s32.totalorder %s59, %s60
    %p72 = scmp.eq.s32.totalorder %s15, 1
    %p73 = por %p71, %p72
    %p75 = scmp.ne.s32.totalorder %s60, %s74
    %p76 = scmp.eq.s32.totalorder %s15, 0
    %p77 = por %p75, %p76
    %s79 = sadd.s32 %s78, 1
    %p82 = scmp.eq.s32.totalorder %s9, 1
    %p83 = scmp.ne.s32.totalorder %s78, %s80
    %p84 = scmp.eq.s32.totalorder %s9, 0
    %p85 = por %p83, %p84
    %p86 = scmp.ne.s32.totalorder %s78, %s80
    %p87 = scmp.eq.s32.totalorder %s14, 1
    %p88 = por %p86, %p87
    %p89 = scmp.ne.s32.totalorder %s80, %s81
    %p90 = scmp.eq.s32.totalorder %s14, 0
    %p91 = por %p89, %p90
    %p92 = scmp.ne.s32.totalorder %s80, %s81
    %p93 = scmp.eq.s32.totalorder %s15, 1
    %p94 = por %p92, %p93
    %p96 = scmp.ne.s32.totalorder %s81, %s95
    %p97 = scmp.eq.s32.totalorder %s15, 0
    %p98 = por %p96, %p97
    %s99 = ssub.s32 %s16, %s28
    %s100 = ssub.s32 %s17, %s24
    %s101 = sor.u32 %s99, %s100
    %p102 = scmp.eq.s32.totalorder %s101, 0
    %s104 = sadd.s32 %s103, 1
    %s105 = scalar_select %p102, %s103, %s104
    %p108 = pneg %p102
    %p109 = scmp.eq.s32.totalorder %s9, 1
    %p110 = por %p108, %p109
    %p111 = scmp.ne.s32.totalorder %s103, %s106
    %p112 = scmp.eq.s32.totalorder %s9, 0
    %p113 = por %p111, %p112
    %p114 = scmp.ne.s32.totalorder %s103, %s106
    %p115 = scmp.eq.s32.totalorder %s14, 1
    %p116 = por %p114, %p115
    %p117 = scmp.ne.s32.totalorder %s106, %s107
    %p118 = scmp.eq.s32.totalorder %s14, 0
    %p119 = por %p117, %p118
    %p120 = scmp.ne.s32.totalorder %s106, %s107
    %p121 = scmp.eq.s32.totalorder %s15, 1
    %p122 = por %p120, %p121
    %p124 = scmp.ne.s32.totalorder %s107, %s123
    %p125 = scmp.eq.s32.totalorder %s15, 0
    %p126 = por %p124, %p125
    %p127 = scmp.le.s32.totalorder 1, %s9
    %p128 = scmp.lt.s32.totalorder %s9, 3
    %p129 = pnand %p127, %p128
    %p130 = pneg %p129
    // Predicated region
    $region9: #{final_decoder_forward.7} parent=5 // pred_check
      _
    $region10: #{final_decoder_forward.7} parent=5 // pred_check_branch
      %132 = sbr.rel (%p129) target = $region12
    $region11: #{final_decoder_forward.7} parent=5 // pred_region
      %s133 = ssub.s32 %s9, 1
      // Predicated region
      $region13: #{final_decoder_forward.7} parent=11 // pred_check
        %p134 = pneg %p70
      $region14: #{final_decoder_forward.7} parent=11 // pred_check_branch
        %136 = sbr.rel (%p134) target = $region16
      $region15: #{final_decoder_forward.7} parent=11 // pred_region
        _
      $region16: #{final_decoder_forward.7} parent=11 // pred_fallthru
        _
      // Predicated region
      $region17: #{final_decoder_forward.7} parent=11 // pred_check
        %p137 = pneg %p91
      $region18: #{final_decoder_forward.7} parent=11 // pred_check_branch
        %139 = sbr.rel (%p137) target = $region20
      $region19: #{final_decoder_forward.7} parent=11 // pred_region
        _
      $region20: #{final_decoder_forward.7} parent=11 // pred_fallthru
        _
    $region12: #{final_decoder_forward.7} parent=5 // pred_fallthru
      _
    %p140 = scmp.lt.s32.totalorder %s9, 2
    // Predicated region
    $region21: #{final_decoder_forward.7} parent=5 // pred_check
      %p141 = pneg %p140
    $region22: #{final_decoder_forward.7} parent=5 // pred_check_branch
      %143 = sbr.rel (%p141) target = $region24
    $region23: #{final_decoder_forward.7} parent=5 // pred_region
      // Predicated region
      $region25: #{final_decoder_forward.7} parent=23 // pred_check
        %p144 = pneg %p43
      $region26: #{final_decoder_forward.7} parent=23 // pred_check_branch
        %146 = sbr.rel (%p144) target = $region28
      $region27: #{final_decoder_forward.7} parent=23 // pred_region
        %s147 = smul.u32 32, %s17
        %p148 = scmp.lt.s32.totalorder %s16, 1
        %s149 = scalar_select %p148, %s16, 1
        %p150 = scmp.lt.s32.totalorder %s147, 31
        %s151 = scalar_select %p150, %s147, 31
        %s152 = smul.addr %s149, 32
        %s153 = sadd.s32 %s151, %s152
        %s154 = smul.addr %s153, 4
        %s155 = scalar_lea.vmem %s0, %s154
        %s156 = smul.u32 32, %s17
      $region28: #{final_decoder_forward.7} parent=23 // pred_fallthru
        _
    $region24: #{final_decoder_forward.7} parent=5 // pred_fallthru
      _
    %p157 = scmp.le.s32.totalorder 1, %s9
    %p158 = scmp.lt.s32.totalorder %s9, 3
    %p159 = pnand %p157, %p158
    %p160 = pneg %p159
    // Predicated region
    $region29: #{final_decoder_forward.7} parent=5 // pred_check
      _
    $region30: #{final_decoder_forward.7} parent=5 // pred_check_branch
      %162 = sbr.rel (%p159) target = $region32
    $region31: #{final_decoder_forward.7} parent=5 // pred_region
      %s163 = ssub.s32 %s9, 1
      %s164 = smul.u32 32, %s19
      %p165 = scmp.lt.s32.totalorder %s18, 1
      %s166 = scalar_select %p165, %s18, 1
      %p167 = scmp.lt.s32.totalorder %s164, 31
      %s168 = scalar_select %p167, %s164, 31
      %s169 = smul.addr %s166, 32
      %s170 = sadd.s32 %s168, %s169
      %s171 = smul.addr %s170, 4
      %s172 = scalar_lea.vmem %s0, %s171
      %p173 = pneg %p49
      %p174 = pneg %p46
      %p175 = pneg %p70
      %p176 = pneg %p67
      %p177 = pneg %p91
      %p178 = pneg %p88
      %p179 = pneg %p119
      %p180 = pneg %p116
      %s181 = smul.u32 32, %s19
      %p182 = scmp.lt.s32.totalorder %s18, 1
      %s183 = scalar_select %p182, %s18, 1
      %p184 = scmp.lt.s32.totalorder %s181, 31
      %s185 = scalar_select %p184, %s181, 31
      %s186 = smul.addr %s183, 32
      %s187 = sadd.s32 %s185, %s186
      %s188 = smul.addr %s187, 4
      %s189 = scalar_lea.vmem %s3, %s188
      %s190 = smul.u32 32, %s19
      %p191 = scmp.lt.s32.totalorder %s18, 1
      %s192 = scalar_select %p191, %s18, 1
      %p193 = scmp.lt.s32.totalorder %s190, 31
      %s194 = scalar_select %p193, %s190, 31
      %s195 = smul.addr %s192, 32
      %s196 = sadd.s32 %s194, %s195
      %s197 = smul.addr %s196, 4
      %s198 = scalar_lea.vmem %s0, %s197
      %s199 = smul.u32 32, %s19
      %s200 = smul.u32 32, %s19
      %p201 = scmp.lt.s32.totalorder %s18, 1
      %s202 = scalar_select %p201, %s18, 1
      %p203 = scmp.lt.s32.totalorder %s200, 31
      %s204 = scalar_select %p203, %s200, 31
      %s205 = smul.addr %s202, 32
      %s206 = sadd.s32 %s204, %s205
      %s207 = smul.addr %s206, 4
      %s208 = scalar_lea.vmem %s3, %s207
      %s209 = smul.u32 32, %s19
      %v211 = vld [vmem:[%s198] sm:$0xf]
      %v212 = vld [vmem:[%s198 + $0x4] sm:$0xf]
      %v213 = vld [vmem:[%s198 + $0x8] sm:$0xf]
      %v214 = vld [vmem:[%s198 + $0xc] sm:$0xf]
      %v215 = vld [vmem:[%s198 + $0x10] sm:$0xf]
      %v216 = vld [vmem:[%s198 + $0x14] sm:$0xf]
      %v217 = vld [vmem:[%s198 + $0x18] sm:$0xf]
      %v218 = vld [vmem:[%s198 + $0x1c] sm:$0xf]
      %v219 = vld [vmem:[%s198 + $0x20] sm:$0xf]
      %v220 = vld [vmem:[%s198 + $0x24] sm:$0xf]
      %v221 = vld [vmem:[%s198 + $0x28] sm:$0xf]
      %v222 = vld [vmem:[%s198 + $0x2c] sm:$0xf]
      %v223 = vld [vmem:[%s198 + $0x30] sm:$0xf]
      %v224 = vld [vmem:[%s198 + $0x34] sm:$0xf]
      %v225 = vld [vmem:[%s198 + $0x38] sm:$0xf]
      %v226 = vld [vmem:[%s198 + $0x3c] sm:$0xf]
      %v227 = vld [vmem:[%s198 + $0x40] sm:$0xf]
      %v228 = vld [vmem:[%s198 + $0x44] sm:$0xf]
      %v229 = vld [vmem:[%s198 + $0x48] sm:$0xf]
      %v230 = vld [vmem:[%s198 + $0x4c] sm:$0xf]
      %v231 = vld [vmem:[%s198 + $0x50] sm:$0xf]
      %v232 = vld [vmem:[%s198 + $0x54] sm:$0xf]
      %v233 = vld [vmem:[%s198 + $0x58] sm:$0xf]
      %v234 = vld [vmem:[%s198 + $0x5c] sm:$0xf]
      %v235 = vld [vmem:[%s198 + $0x60] sm:$0xf]
      %v236 = vld [vmem:[%s198 + $0x64] sm:$0xf]
      %v237 = vld [vmem:[%s198 + $0x68] sm:$0xf]
      %v238 = vld [vmem:[%s198 + $0x6c] sm:$0xf]
      %v239 = vld [vmem:[%s198 + $0x70] sm:$0xf]
      %v240 = vld [vmem:[%s198 + $0x74] sm:$0xf]
      %v241 = vld [vmem:[%s198 + $0x78] sm:$0xf]
      %v242 = vld [vmem:[%s198 + $0x7c] sm:$0xf]
      %v243 = vld [vmem:[%s1] sm:$0xf]
      %v244 = vld [vmem:[%s1 + $0x4] sm:$0xf]
      %v245 = vld [vmem:[%s1 + $0x8] sm:$0xf]
      %v246 = vld [vmem:[%s1 + $0xc] sm:$0xf]
      %v247 = vld [vmem:[%s1 + $0x10] sm:$0xf]
      %v248 = vld [vmem:[%s1 + $0x14] sm:$0xf]
      %v249 = vld [vmem:[%s1 + $0x18] sm:$0xf]
      %v250 = vld [vmem:[%s1 + $0x1c] sm:$0xf]
      %v251 = vld [vmem:[%s1 + $0x20] sm:$0xf]
      %v252 = vld [vmem:[%s2] sm:$0x1]
      %v254 = vlaneseq
      %v255 = vshrl.u32 %v254, 7
      %v256 = vsub.s32 0, %v255
      %v257 = vrot.slane %v252, %v256
      %v291 = vunpack.c.l.b16 %v211
      %v292 = vunpack.c.l.b16 %v212
      %v293 = vunpack.c.l.b16 %v213
      %v294 = vunpack.c.l.b16 %v214
      %v295 = vunpack.c.l.b16 %v215
      %v296 = vunpack.c.l.b16 %v216
      %v297 = vunpack.c.l.b16 %v217
      %v298 = vunpack.c.l.b16 %v218
      %v299 = vunpack.c.l.b16 %v219
      %v300 = vunpack.c.l.b16 %v220
      %v301 = vunpack.c.l.b16 %v221
      %v302 = vunpack.c.l.b16 %v222
      %v303 = vunpack.c.l.b16 %v223
      %v304 = vunpack.c.l.b16 %v224
      %v305 = vunpack.c.l.b16 %v225
      %v306 = vunpack.c.l.b16 %v226
      %v307 = vunpack.c.l.b16 %v227
      %v308 = vunpack.c.l.b16 %v228
      %v309 = vunpack.c.l.b16 %v229
      %v310 = vunpack.c.l.b16 %v230
      %v311 = vunpack.c.l.b16 %v231
      %v312 = vunpack.c.l.b16 %v232
      %v313 = vunpack.c.l.b16 %v233
      %v314 = vunpack.c.l.b16 %v234
      %v315 = vunpack.c.l.b16 %v235
      %v316 = vunpack.c.l.b16 %v236
      %v317 = vunpack.c.l.b16 %v237
      %v318 = vunpack.c.l.b16 %v238
      %v319 = vunpack.c.l.b16 %v239
      %v320 = vunpack.c.l.b16 %v240
      %v321 = vunpack.c.l.b16 %v241
      %v322 = vunpack.c.l.b16 %v242
      %v323 = vpack.c.b16 %v292, %v291
      %v324 = vpack.c.b16 %v294, %v293
      %v325 = vpack.c.b16 %v296, %v295
      %v326 = vpack.c.b16 %v298, %v297
      %v327 = vpack.c.b16 %v300, %v299
      %v328 = vpack.c.b16 %v302, %v301
      %v329 = vpack.c.b16 %v304, %v303
      %v330 = vpack.c.b16 %v306, %v305
      %v331 = vpack.c.b16 %v308, %v307
      %v332 = vpack.c.b16 %v310, %v309
      %v333 = vpack.c.b16 %v312, %v311
      %v334 = vpack.c.b16 %v314, %v313
      %v335 = vpack.c.b16 %v316, %v315
      %v336 = vpack.c.b16 %v318, %v317
      %v337 = vpack.c.b16 %v320, %v319
      %v338 = vpack.c.b16 %v322, %v321
      %v348 = vunpack.c.l.b16 %v243
      %v349 = vunpack.c.l.b16 %v244
      %v350 = vunpack.c.l.b16 %v245
      %v351 = vunpack.c.l.b16 %v246
      %v352 = vunpack.c.l.b16 %v247
      %v353 = vunpack.c.l.b16 %v248
      %v354 = vunpack.c.l.b16 %v249
      %v355 = vunpack.c.l.b16 %v250
      %v356 = vunpack.c.l.b16 %v251
      %v357 = vpack.c.b16 %v349, %v348
      %v358 = vpack.c.b16 %v351, %v350
      %v359 = vpack.c.b16 %v353, %v352
      %v360 = vpack.c.b16 %v355, %v354
      %v361 = vpack.c.b16 %v356, %v356
      %vm366 = vcmask 588800
      %v368 = vsel %vm366, %v323, 0
      %v371 = vsel %vm366, %v324, 0
      %v374 = vsel %vm366, %v325, 0
      %v377 = vsel %vm366, %v326, 0
      %v380 = vsel %vm366, %v327, 0
      %v383 = vsel %vm366, %v328, 0
      %v386 = vsel %vm366, %v329, 0
      %v389 = vsel %vm366, %v330, 0
      %v392 = vsel %vm366, %v331, 0
      %v395 = vsel %vm366, %v332, 0
      %v398 = vsel %vm366, %v333, 0
      %v401 = vsel %vm366, %v334, 0
      %v404 = vsel %vm366, %v335, 0
      %v407 = vsel %vm366, %v336, 0
      %v410 = vsel %vm366, %v337, 0
      %v413 = vsel %vm366, %v338, 0
      %vm415 = vcmask 1043456
      %v417 = vsel %vm415, %v361, 0
      %419 = vmatprep.subr.bf16.mxu0 0
      %420 = vmatpush1.bf16.msra.mxu0 %v357
      %421 = vmatprep.subr.bf16.mxu0 0
      %422 = vmatpush1.bf16.msra.mxu0 %v358
      %423 = vmatprep.subr.bf16.mxu0 0
      %424 = vmatpush1.bf16.msra.mxu0 %v359
      %425 = vmatprep.subr.bf16.mxu0 0
      %426 = vmatpush1.bf16.msra.mxu0 %v360
      %427 = vmatprep.subr.bf16.mxu0 0
      %428 = vmatpush1.bf16.msra.mxu0 %v417
      %429 = vmatprep.subr.bf16.mxu0 0
      %430 = vmatpush1.bf16.msra.mxu0 0
      %431 = vmatprep.subr.bf16.mxu0 0
      %432 = vmatpush1.bf16.msra.mxu0 0
      %433 = vmatprep.subr.bf16.mxu0 0
      %434 = vmatpush1.bf16.msra.mxu0 0
      %435 = vmatprep.subr.bf16.mxu0 0
      %436 = vmatpush1.bf16.msra.mxu0 0
      %437 = vmatprep.subr.bf16.mxu0 0
      %438 = vmatpush1.bf16.msra.mxu0 0
      %439 = vmatprep.subr.bf16.mxu0 0
      %440 = vmatpush1.bf16.msra.mxu0 0
      %441 = vmatprep.subr.bf16.mxu0 0
      %442 = vmatpush1.bf16.msra.mxu0 0
      %443 = vmatprep.subr.bf16.mxu0 0
      %444 = vmatpush1.bf16.msra.mxu0 0
      %445 = vmatprep.subr.bf16.mxu0 0
      %446 = vmatpush1.bf16.msra.mxu0 0
      %447 = vmatprep.subr.bf16.mxu0 0
      %448 = vmatpush1.bf16.msra.mxu0 0
      %449 = vmatprep.subr.bf16.mxu0 0
      %450 = vmatpush1.bf16.msra.mxu0 0
      %451 = vmatprep.mubr.bf16.mxu0 0
      %452 = vmatmul.mubr.bf16.gmra.mrb[0].mxu0 %v368
      %v453 = vpop.f32.mrb[0].mxu0
      %v454 = vadd.f32 %v257, %v453
      %v455 = vpop.f32.mrb[0].mxu0
      %v456 = vpop.f32.mrb[0].mxu0
      %v457 = vadd.f32 %v257, %v456
      %v458 = vpop.f32.mrb[0].mxu0
      %459 = vmatprep.mubr.bf16.mxu0 0
      %460 = vmatmul.mubr.bf16.gmra.mrb[0].mxu0 %v371
      %v461 = vpop.f32.mrb[0].mxu0
      %v462 = vadd.f32 %v257, %v461
      %v463 = vpop.f32.mrb[0].mxu0
      %v464 = vpop.f32.mrb[0].mxu0
      %v465 = vadd.f32 %v257, %v464
      %v466 = vpop.f32.mrb[0].mxu0
      %467 = vmatprep.mubr.bf16.mxu0 0
      %468 = vmatmul.mubr.bf16.gmra.mrb[0].mxu0 %v374
      %v469 = vpop.f32.mrb[0].mxu0
      %v470 = vadd.f32 %v257, %v469
      %v471 = vpop.f32.mrb[0].mxu0
      %v472 = vpop.f32.mrb[0].mxu0
      %v473 = vadd.f32 %v257, %v472
      %v474 = vpop.f32.mrb[0].mxu0
      %475 = vmatprep.mubr.bf16.mxu0 0
      %476 = vmatmul.mubr.bf16.gmra.mrb[0].mxu0 %v377
      %v477 = vpop.f32.mrb[0].mxu0
      %v478 = vadd.f32 %v257, %v477
      %v479 = vpop.f32.mrb[0].mxu0
      %v480 = vpop.f32.mrb[0].mxu0
      %v481 = vadd.f32 %v257, %v480
      %v482 = vpop.f32.mrb[0].mxu0
      %483 = vmatprep.mubr.bf16.mxu0 0
      %484 = vmatmul.mubr.bf16.gmra.mrb[0].mxu0 %v380
      %v485 = vpop.f32.mrb[0].mxu0
      %v486 = vadd.f32 %v257, %v485
      %v487 = vpop.f32.mrb[0].mxu0
      %v488 = vpop.f32.mrb[0].mxu0
      %v489 = vadd.f32 %v257, %v488
      %v490 = vpop.f32.mrb[0].mxu0
      %491 = vmatprep.mubr.bf16.mxu0 0
      %492 = vmatmul.mubr.bf16.gmra.mrb[0].mxu0 %v383
      %v493 = vpop.f32.mrb[0].mxu0
      %v494 = vadd.f32 %v257, %v493
      %v495 = vpop.f32.mrb[0].mxu0
      %v496 = vpop.f32.mrb[0].mxu0
      %v497 = vadd.f32 %v257, %v496
      %v498 = vpop.f32.mrb[0].mxu0
      %499 = vmatprep.mubr.bf16.mxu0 0
      %500 = vmatmul.mubr.bf16.gmra.mrb[0].mxu0 %v386
      %v501 = vpop.f32.mrb[0].mxu0
      %v502 = vadd.f32 %v257, %v501
      %v503 = vpop.f32.mrb[0].mxu0
      %v504 = vpop.f32.mrb[0].mxu0
      %v505 = vadd.f32 %v257, %v504
      %v506 = vpop.f32.mrb[0].mxu0
      %507 = vmatprep.mubr.bf16.mxu0 0
      %508 = vmatmul.mubr.bf16.gmra.mrb[0].mxu0 %v389
      %v509 = vpop.f32.mrb[0].mxu0
      %v510 = vadd.f32 %v257, %v509
      %v511 = vpop.f32.mrb[0].mxu0
      %v512 = vpop.f32.mrb[0].mxu0
      %v513 = vadd.f32 %v257, %v512
      %v514 = vpop.f32.mrb[0].mxu0
      %515 = vmatprep.mubr.bf16.mxu0 0
      %516 = vmatmul.mubr.bf16.gmra.mrb[0].mxu0 %v392
      %v517 = vpop.f32.mrb[0].mxu0
      %v518 = vadd.f32 %v257, %v517
      %v519 = vpop.f32.mrb[0].mxu0
      %v520 = vpop.f32.mrb[0].mxu0
      %v521 = vadd.f32 %v257, %v520
      %v522 = vpop.f32.mrb[0].mxu0
      %523 = vmatprep.mubr.bf16.mxu0 0
      %524 = vmatmul.mubr.bf16.gmra.mrb[0].mxu0 %v395
      %v525 = vpop.f32.mrb[0].mxu0
      %v526 = vadd.f32 %v257, %v525
      %v527 = vpop.f32.mrb[0].mxu0
      %v528 = vpop.f32.mrb[0].mxu0
      %v529 = vadd.f32 %v257, %v528
      %v530 = vpop.f32.mrb[0].mxu0
      %531 = vmatprep.mubr.bf16.mxu0 0
      %532 = vmatmul.mubr.bf16.gmra.mrb[0].mxu0 %v398
      %v533 = vpop.f32.mrb[0].mxu0
      %v534 = vadd.f32 %v257, %v533
      %v535 = vpop.f32.mrb[0].mxu0
      %v536 = vpop.f32.mrb[0].mxu0
      %v537 = vadd.f32 %v257, %v536
      %v538 = vpop.f32.mrb[0].mxu0
      %539 = vmatprep.mubr.bf16.mxu0 0
      %540 = vmatmul.mubr.bf16.gmra.mrb[0].mxu0 %v401
      %v541 = vpop.f32.mrb[0].mxu0
      %v542 = vadd.f32 %v257, %v541
      %v543 = vpop.f32.mrb[0].mxu0
      %v544 = vpop.f32.mrb[0].mxu0
      %v545 = vadd.f32 %v257, %v544
      %v546 = vpop.f32.mrb[0].mxu0
      %547 = vmatprep.mubr.bf16.mxu0 0
      %548 = vmatmul.mubr.bf16.gmra.mrb[0].mxu0 %v404
      %v549 = vpop.f32.mrb[0].mxu0
      %v550 = vadd.f32 %v257, %v549
      %v551 = vpop.f32.mrb[0].mxu0
      %v552 = vpop.f32.mrb[0].mxu0
      %v553 = vadd.f32 %v257, %v552
      %v554 = vpop.f32.mrb[0].mxu0
      %555 = vmatprep.mubr.bf16.mxu0 0
      %556 = vmatmul.mubr.bf16.gmra.mrb[0].mxu0 %v407
      %v557 = vpop.f32.mrb[0].mxu0
      %v558 = vadd.f32 %v257, %v557
      %v559 = vpop.f32.mrb[0].mxu0
      %v560 = vpop.f32.mrb[0].mxu0
      %v561 = vadd.f32 %v257, %v560
      %v562 = vpop.f32.mrb[0].mxu0
      %563 = vmatprep.mubr.bf16.mxu0 0
      %564 = vmatmul.mubr.bf16.gmra.mrb[0].mxu0 %v410
      %v565 = vpop.f32.mrb[0].mxu0
      %v566 = vadd.f32 %v257, %v565
      %v567 = vpop.f32.mrb[0].mxu0
      %v568 = vpop.f32.mrb[0].mxu0
      %v569 = vadd.f32 %v257, %v568
      %v570 = vpop.f32.mrb[0].mxu0
      %571 = vmatprep.mubr.bf16.mxu0 0
      %572 = vmatmul.mubr.bf16.gmra.mrb[0].mxu0 %v413
      %v573 = vpop.f32.mrb[0].mxu0
      %v574 = vadd.f32 %v257, %v573
      %v575 = vpop.f32.mrb[0].mxu0
      %v576 = vpop.f32.mrb[0].mxu0
      %v577 = vadd.f32 %v257, %v576
      %v578 = vpop.f32.mrb[0].mxu0
      %579 = vdwg.mxu0
      %v580 = vxor.u32 %v454, 2147483648
      %v581 = vxor.u32 %v457, 2147483648
      %v582 = vxor.u32 %v462, 2147483648
      %v583 = vxor.u32 %v465, 2147483648
      %v584 = vxor.u32 %v470, 2147483648
      %v585 = vxor.u32 %v473, 2147483648
      %v586 = vxor.u32 %v478, 2147483648
      %v587 = vxor.u32 %v481, 2147483648
      %v588 = vxor.u32 %v486, 2147483648
      %v589 = vxor.u32 %v489, 2147483648
      %v590 = vxor.u32 %v494, 2147483648
      %v591 = vxor.u32 %v497, 2147483648
      %v592 = vxor.u32 %v502, 2147483648
      %v593 = vxor.u32 %v505, 2147483648
      %v594 = vxor.u32 %v510, 2147483648
      %v595 = vxor.u32 %v513, 2147483648
      %v596 = vxor.u32 %v518, 2147483648
      %v597 = vxor.u32 %v521, 2147483648
      %v598 = vxor.u32 %v526, 2147483648
      %v599 = vxor.u32 %v529, 2147483648
      %v600 = vxor.u32 %v534, 2147483648
      %v601 = vxor.u32 %v537, 2147483648
      %v602 = vxor.u32 %v542, 2147483648
      %v603 = vxor.u32 %v545, 2147483648
      %v604 = vxor.u32 %v550, 2147483648
      %v605 = vxor.u32 %v553, 2147483648
      %v606 = vxor.u32 %v558, 2147483648
      %v607 = vxor.u32 %v561, 2147483648
      %v608 = vxor.u32 %v566, 2147483648
      %v609 = vxor.u32 %v569, 2147483648
      %v610 = vxor.u32 %v574, 2147483648
      %v611 = vxor.u32 %v577, 2147483648
      %v612 = vmul.f32 %v580, 1.442695
      %v613 = vpow.pop %v612
      %v614 = vmul.f32 %v581, 1.442695
      %v615 = vpow.pop %v614
      %v616 = vmul.f32 %v582, 1.442695
      %v617 = vpow.pop %v616
      %v618 = vmul.f32 %v583, 1.442695
      %v619 = vpow.pop %v618
      %v620 = vmul.f32 %v584, 1.442695
      %v621 = vpow.pop %v620
      %v622 = vmul.f32 %v585, 1.442695
      %v623 = vpow.pop %v622
      %v624 = vmul.f32 %v586, 1.442695
      %v625 = vpow.pop %v624
      %v626 = vmul.f32 %v587, 1.442695
      %v627 = vpow.pop %v626
      %v628 = vmul.f32 %v588, 1.442695
      %v629 = vpow.pop %v628
      %v630 = vmul.f32 %v589, 1.442695
      %v631 = vpow.pop %v630
      %v632 = vmul.f32 %v590, 1.442695
      %v633 = vpow.pop %v632
      %v634 = vmul.f32 %v591, 1.442695
      %v635 = vpow.pop %v634
      %v636 = vmul.f32 %v592, 1.442695
      %v637 = vpow.pop %v636
      %v638 = vmul.f32 %v593, 1.442695
      %v639 = vpow.pop %v638
      %v640 = vmul.f32 %v594, 1.442695
      %v641 = vpow.pop %v640
      %v642 = vmul.f32 %v595, 1.442695
      %v643 = vpow.pop %v642
      %v644 = vmul.f32 %v596, 1.442695
      %v645 = vpow.pop %v644
      %v646 = vmul.f32 %v597, 1.442695
      %v647 = vpow.pop %v646
      %v648 = vmul.f32 %v598, 1.442695
      %v649 = vpow.pop %v648
      %v650 = vmul.f32 %v599, 1.442695
      %v651 = vpow.pop %v650
      %v652 = vmul.f32 %v600, 1.442695
      %v653 = vpow.pop %v652
      %v654 = vmul.f32 %v601, 1.442695
      %v655 = vpow.pop %v654
      %v656 = vmul.f32 %v602, 1.442695
      %v657 = vpow.pop %v656
      %v658 = vmul.f32 %v603, 1.442695
      %v659 = vpow.pop %v658
      %v660 = vmul.f32 %v604, 1.442695
      %v661 = vpow.pop %v660
      %v662 = vmul.f32 %v605, 1.442695
      %v663 = vpow.pop %v662
      %v664 = vmul.f32 %v606, 1.442695
      %v665 = vpow.pop %v664
      %v666 = vmul.f32 %v607, 1.442695
      %v667 = vpow.pop %v666
      %v668 = vmul.f32 %v608, 1.442695
      %v669 = vpow.pop %v668
      %v670 = vmul.f32 %v609, 1.442695
      %v671 = vpow.pop %v670
      %v672 = vmul.f32 %v610, 1.442695
      %v673 = vpow.pop %v672
      %v674 = vmul.f32 %v611, 1.442695
      %v675 = vpow.pop %v674
      %v676 = vadd.f32 %v613, 1.0
      %v677 = vadd.f32 %v615, 1.0
      %v678 = vadd.f32 %v617, 1.0
      %v679 = vadd.f32 %v619, 1.0
      %v680 = vadd.f32 %v621, 1.0
      %v681 = vadd.f32 %v623, 1.0
      %v682 = vadd.f32 %v625, 1.0
      %v683 = vadd.f32 %v627, 1.0
      %v684 = vadd.f32 %v629, 1.0
      %v685 = vadd.f32 %v631, 1.0
      %v686 = vadd.f32 %v633, 1.0
      %v687 = vadd.f32 %v635, 1.0
      %v688 = vadd.f32 %v637, 1.0
      %v689 = vadd.f32 %v639, 1.0
      %v690 = vadd.f32 %v641, 1.0
      %v691 = vadd.f32 %v643, 1.0
      %v692 = vadd.f32 %v645, 1.0
      %v693 = vadd.f32 %v647, 1.0
      %v694 = vadd.f32 %v649, 1.0
      %v695 = vadd.f32 %v651, 1.0
      %v696 = vadd.f32 %v653, 1.0
      %v697 = vadd.f32 %v655, 1.0
      %v698 = vadd.f32 %v657, 1.0
      %v699 = vadd.f32 %v659, 1.0
      %v700 = vadd.f32 %v661, 1.0
      %v701 = vadd.f32 %v663, 1.0
      %v702 = vadd.f32 %v665, 1.0
      %v703 = vadd.f32 %v667, 1.0
      %v704 = vadd.f32 %v669, 1.0
      %v705 = vadd.f32 %v671, 1.0
      %v706 = vadd.f32 %v673, 1.0
      %v707 = vadd.f32 %v675, 1.0
      %v708 = vrcp.pop %v676
      %v709 = vmul.f32 1.0, %v708
      %v710 = vrcp.pop %v677
      %v711 = vmul.f32 1.0, %v710
      %v712 = vrcp.pop %v678
      %v713 = vmul.f32 1.0, %v712
      %v714 = vrcp.pop %v679
      %v715 = vmul.f32 1.0, %v714
      %v716 = vrcp.pop %v680
      %v717 = vmul.f32 1.0, %v716
      %v718 = vrcp.pop %v681
      %v719 = vmul.f32 1.0, %v718
      %v720 = vrcp.pop %v682
      %v721 = vmul.f32 1.0, %v720
      %v722 = vrcp.pop %v683
      %v723 = vmul.f32 1.0, %v722
      %v724 = vrcp.pop %v684
      %v725 = vmul.f32 1.0, %v724
      %v726 = vrcp.pop %v685
      %v727 = vmul.f32 1.0, %v726
      %v728 = vrcp.pop %v686
      %v729 = vmul.f32 1.0, %v728
      %v730 = vrcp.pop %v687
      %v731 = vmul.f32 1.0, %v730
      %v732 = vrcp.pop %v688
      %v733 = vmul.f32 1.0, %v732
      %v734 = vrcp.pop %v689
      %v735 = vmul.f32 1.0, %v734
      %v736 = vrcp.pop %v690
      %v737 = vmul.f32 1.0, %v736
      %v738 = vrcp.pop %v691
      %v739 = vmul.f32 1.0, %v738
      %v740 = vrcp.pop %v692
      %v741 = vmul.f32 1.0, %v740
      %v742 = vrcp.pop %v693
      %v743 = vmul.f32 1.0, %v742
      %v744 = vrcp.pop %v694
      %v745 = vmul.f32 1.0, %v744
      %v746 = vrcp.pop %v695
      %v747 = vmul.f32 1.0, %v746
      %v748 = vrcp.pop %v696
      %v749 = vmul.f32 1.0, %v748
      %v750 = vrcp.pop %v697
      %v751 = vmul.f32 1.0, %v750
      %v752 = vrcp.pop %v698
      %v753 = vmul.f32 1.0, %v752
      %v754 = vrcp.pop %v699
      %v755 = vmul.f32 1.0, %v754
      %v756 = vrcp.pop %v700
      %v757 = vmul.f32 1.0, %v756
      %v758 = vrcp.pop %v701
      %v759 = vmul.f32 1.0, %v758
      %v760 = vrcp.pop %v702
      %v761 = vmul.f32 1.0, %v760
      %v762 = vrcp.pop %v703
      %v763 = vmul.f32 1.0, %v762
      %v764 = vrcp.pop %v704
      %v765 = vmul.f32 1.0, %v764
      %v766 = vrcp.pop %v705
      %v767 = vmul.f32 1.0, %v766
      %v768 = vrcp.pop %v706
      %v769 = vmul.f32 1.0, %v768
      %v770 = vrcp.pop %v707
      %v771 = vmul.f32 1.0, %v770
      %v772 = vmul.f32 %v454, %v709
      %v773 = vmul.f32 %v457, %v711
      %v774 = vmul.f32 %v462, %v713
      %v775 = vmul.f32 %v465, %v715
      %v776 = vmul.f32 %v470, %v717
      %v777 = vmul.f32 %v473, %v719
      %v778 = vmul.f32 %v478, %v721
      %v779 = vmul.f32 %v481, %v723
      %v780 = vmul.f32 %v486, %v725
      %v781 = vmul.f32 %v489, %v727
      %v782 = vmul.f32 %v494, %v729
      %v783 = vmul.f32 %v497, %v731
      %v784 = vmul.f32 %v502, %v733
      %v785 = vmul.f32 %v505, %v735
      %v786 = vmul.f32 %v510, %v737
      %v787 = vmul.f32 %v513, %v739
      %v788 = vmul.f32 %v518, %v741
      %v789 = vmul.f32 %v521, %v743
      %v790 = vmul.f32 %v526, %v745
      %v791 = vmul.f32 %v529, %v747
      %v792 = vmul.f32 %v534, %v749
      %v793 = vmul.f32 %v537, %v751
      %v794 = vmul.f32 %v542, %v753
      %v795 = vmul.f32 %v545, %v755
      %v796 = vmul.f32 %v550, %v757
      %v797 = vmul.f32 %v553, %v759
      %v798 = vmul.f32 %v558, %v761
      %v799 = vmul.f32 %v561, %v763
      %v800 = vmul.f32 %v566, %v765
      %v801 = vmul.f32 %v569, %v767
      %v802 = vmul.f32 %v574, %v769
      %v803 = vmul.f32 %v577, %v771
      %v804 = vpack.c.bf16 %v773, %v772
      %v805 = vpack.c.bf16 %v775, %v774
      %v806 = vpack.c.bf16 %v777, %v776
      %v807 = vpack.c.bf16 %v779, %v778
      %v808 = vpack.c.bf16 %v781, %v780
      %v809 = vpack.c.bf16 %v783, %v782
      %v810 = vpack.c.bf16 %v785, %v784
      %v811 = vpack.c.bf16 %v787, %v786
      %v812 = vpack.c.bf16 %v789, %v788
      %v813 = vpack.c.bf16 %v791, %v790
      %v814 = vpack.c.bf16 %v793, %v792
      %v815 = vpack.c.bf16 %v795, %v794
      %v816 = vpack.c.bf16 %v797, %v796
      %v817 = vpack.c.bf16 %v799, %v798
      %v818 = vpack.c.bf16 %v801, %v800
      %v819 = vpack.c.bf16 %v803, %v802
      %v836 = vunpack.c.l.b16 %v804
      %v837 = vunpack.c.h.b16 %v804
      %v838 = vunpack.c.l.b16 %v805
      %v839 = vunpack.c.h.b16 %v805
      %v840 = vunpack.c.l.b16 %v806
      %v841 = vunpack.c.h.b16 %v806
      %v842 = vunpack.c.l.b16 %v807
      %v843 = vunpack.c.h.b16 %v807
      %v844 = vunpack.c.l.b16 %v808
      %v845 = vunpack.c.h.b16 %v808
      %v846 = vunpack.c.l.b16 %v809
      %v847 = vunpack.c.h.b16 %v809
      %v848 = vunpack.c.l.b16 %v810
      %v849 = vunpack.c.h.b16 %v810
      %v850 = vunpack.c.l.b16 %v811
      %v851 = vunpack.c.h.b16 %v811
      %v852 = vunpack.c.l.b16 %v812
      %v853 = vunpack.c.h.b16 %v812
      %v854 = vunpack.c.l.b16 %v813
      %v855 = vunpack.c.h.b16 %v813
      %v856 = vunpack.c.l.b16 %v814
      %v857 = vunpack.c.h.b16 %v814
      %v858 = vunpack.c.l.b16 %v815
      %v859 = vunpack.c.h.b16 %v815
      %v860 = vunpack.c.l.b16 %v816
      %v861 = vunpack.c.h.b16 %v816
      %v862 = vunpack.c.l.b16 %v817
      %v863 = vunpack.c.h.b16 %v817
      %v864 = vunpack.c.l.b16 %v818
      %v865 = vunpack.c.h.b16 %v818
      %v866 = vunpack.c.l.b16 %v819
      %v867 = vunpack.c.h.b16 %v819
      %v868 = vpack.c.b16 %v836, %v836
      %v869 = vpack.c.b16 %v837, %v837
      %v870 = vpack.c.b16 %v838, %v838
      %v871 = vpack.c.b16 %v839, %v839
      %v872 = vpack.c.b16 %v840, %v840
      %v873 = vpack.c.b16 %v841, %v841
      %v874 = vpack.c.b16 %v842, %v842
      %v875 = vpack.c.b16 %v843, %v843
      %v876 = vpack.c.b16 %v844, %v844
      %v877 = vpack.c.b16 %v845, %v845
      %v878 = vpack.c.b16 %v846, %v846
      %v879 = vpack.c.b16 %v847, %v847
      %v880 = vpack.c.b16 %v848, %v848
      %v881 = vpack.c.b16 %v849, %v849
      %v882 = vpack.c.b16 %v850, %v850
      %v883 = vpack.c.b16 %v851, %v851
      %v884 = vpack.c.b16 %v852, %v852
      %v885 = vpack.c.b16 %v853, %v853
      %v886 = vpack.c.b16 %v854, %v854
      %v887 = vpack.c.b16 %v855, %v855
      %v888 = vpack.c.b16 %v856, %v856
      %v889 = vpack.c.b16 %v857, %v857
      %v890 = vpack.c.b16 %v858, %v858
      %v891 = vpack.c.b16 %v859, %v859
      %v892 = vpack.c.b16 %v860, %v860
      %v893 = vpack.c.b16 %v861, %v861
      %v894 = vpack.c.b16 %v862, %v862
      %v895 = vpack.c.b16 %v863, %v863
      %v896 = vpack.c.b16 %v864, %v864
      %v897 = vpack.c.b16 %v865, %v865
      %v898 = vpack.c.b16 %v866, %v866
      %v899 = vpack.c.b16 %v867, %v867
      %vm932 = vcmask 125952
      %933 = vst.msk [vmem:[%s208] sm:$0xf] %vm932, %v868
      %934 = vst.msk [vmem:[%s208 + $0x4] sm:$0xf] %vm932, %v869
      %935 = vst.msk [vmem:[%s208 + $0x8] sm:$0xf] %vm932, %v870
      %936 = vst.msk [vmem:[%s208 + $0xc] sm:$0xf] %vm932, %v871
      %937 = vst.msk [vmem:[%s208 + $0x10] sm:$0xf] %vm932, %v872
      %938 = vst.msk [vmem:[%s208 + $0x14] sm:$0xf] %vm932, %v873
      %939 = vst.msk [vmem:[%s208 + $0x18] sm:$0xf] %vm932, %v874
      %940 = vst.msk [vmem:[%s208 + $0x1c] sm:$0xf] %vm932, %v875
      %941 = vst.msk [vmem:[%s208 + $0x20] sm:$0xf] %vm932, %v876
      %942 = vst.msk [vmem:[%s208 + $0x24] sm:$0xf] %vm932, %v877
      %943 = vst.msk [vmem:[%s208 + $0x28] sm:$0xf] %vm932, %v878
      %944 = vst.msk [vmem:[%s208 + $0x2c] sm:$0xf] %vm932, %v879
      %945 = vst.msk [vmem:[%s208 + $0x30] sm:$0xf] %vm932, %v880
      %946 = vst.msk [vmem:[%s208 + $0x34] sm:$0xf] %vm932, %v881
      %947 = vst.msk [vmem:[%s208 + $0x38] sm:$0xf] %vm932, %v882
      %948 = vst.msk [vmem:[%s208 + $0x3c] sm:$0xf] %vm932, %v883
      %949 = vst.msk [vmem:[%s208 + $0x40] sm:$0xf] %vm932, %v884
      %950 = vst.msk [vmem:[%s208 + $0x44] sm:$0xf] %vm932, %v885
      %951 = vst.msk [vmem:[%s208 + $0x48] sm:$0xf] %vm932, %v886
      %952 = vst.msk [vmem:[%s208 + $0x4c] sm:$0xf] %vm932, %v887
      %953 = vst.msk [vmem:[%s208 + $0x50] sm:$0xf] %vm932, %v888
      %954 = vst.msk [vmem:[%s208 + $0x54] sm:$0xf] %vm932, %v889
      %955 = vst.msk [vmem:[%s208 + $0x58] sm:$0xf] %vm932, %v890
      %956 = vst.msk [vmem:[%s208 + $0x5c] sm:$0xf] %vm932, %v891
      %957 = vst.msk [vmem:[%s208 + $0x60] sm:$0xf] %vm932, %v892
      %958 = vst.msk [vmem:[%s208 + $0x64] sm:$0xf] %vm932, %v893
      %959 = vst.msk [vmem:[%s208 + $0x68] sm:$0xf] %vm932, %v894
      %960 = vst.msk [vmem:[%s208 + $0x6c] sm:$0xf] %vm932, %v895
      %961 = vst.msk [vmem:[%s208 + $0x70] sm:$0xf] %vm932, %v896
      %962 = vst.msk [vmem:[%s208 + $0x74] sm:$0xf] %vm932, %v897
      %963 = vst.msk [vmem:[%s208 + $0x78] sm:$0xf] %vm932, %v898
      %964 = vst.msk [vmem:[%s208 + $0x7c] sm:$0xf] %vm932, %v899
      %s965 = smul.u32 32, %s19
      %p966 = scmp.lt.s32.totalorder %s18, 1
      %s967 = scalar_select %p966, %s18, 1
      %p968 = scmp.lt.s32.totalorder %s965, 31
      %s969 = scalar_select %p968, %s965, 31
      %s970 = smul.addr %s967, 32
      %s971 = sadd.s32 %s969, %s970
      %s972 = smul.addr %s971, 4
      %s973 = scalar_lea.vmem %s3, %s972
      // Predicated region
      $region33: #{final_decoder_forward.7} parent=31 // pred_check
        %p974 = pneg %p116
      $region34: #{final_decoder_forward.7} parent=31 // pred_check_branch
        %976 = sbr.rel (%p974) target = $region36
      $region35: #{final_decoder_forward.7} parent=31 // pred_region
        %s977 = smul.u32 32, %s19
      $region36: #{final_decoder_forward.7} parent=31 // pred_fallthru
        _
    $region32: #{final_decoder_forward.7} parent=5 // pred_fallthru
      _
    %p978 = scmp.le.s32.totalorder 2, %s9
    // Predicated region
    $region37: #{final_decoder_forward.7} parent=5 // pred_check
      %p979 = pneg %p978
    $region38: #{final_decoder_forward.7} parent=5 // pred_check_branch
      %981 = sbr.rel (%p979) target = $region40
    $region39: #{final_decoder_forward.7} parent=5 // pred_region
      %s982 = ssub.s32 %s9, 2
      // Predicated region
      $region41: #{final_decoder_forward.7} parent=39 // pred_check
        %p983 = pneg %p122
      $region42: #{final_decoder_forward.7} parent=39 // pred_check_branch
        %985 = sbr.rel (%p983) target = $region44
      $region43: #{final_decoder_forward.7} parent=39 // pred_region
        %s986 = smul.u32 32, %s21
        %p987 = scmp.lt.s32.totalorder %s20, 1
        %s988 = scalar_select %p987, %s20, 1
        %p989 = scmp.lt.s32.totalorder %s986, 31
        %s990 = scalar_select %p989, %s986, 31
        %s991 = smul.addr %s988, 32
        %s992 = sadd.s32 %s990, %s991
        %s993 = smul.addr %s992, 4
        %s994 = scalar_lea.vmem %s3, %s993
      $region44: #{final_decoder_forward.7} parent=39 // pred_fallthru
        _
    $region40: #{final_decoder_forward.7} parent=5 // pred_fallthru
      _
  $region6: #{final_decoder_forward.7} parent=0 // loop_footer
    %s13 = sadd.s32 1, %s9
  $region7: #{final_decoder_forward.7} parent=0 // loop_footer_branch
    %8 = sbr.rel target = $region3
  $region8: #{final_decoder_forward.7} parent=0 // loop_exit
    _

// kernel: final_decoder_forward.9
$region0: #{final_decoder_forward.9}
  #allocation0 [shape = 'u32[]', space=smem, size = 0x4, offset = 0x4, fixed_abs, tag = 'smem constant byte address 0x4 - core index']
  #allocation1 [shape = 'u32[144,128]{1,0:T(1,128)}', space=vmem, size = 0x12000, scoped, tag = 'internal scratch']
  %s0 = inlined_call_operand.vmem [shape: bf16[2,1024,4], index: 0, kind: input, shape index: {}]
  %s1 = inlined_call_operand.vmem [shape: bf16[4,4], index: 1, kind: input, shape index: {}]
  %s2 = inlined_call_operand.vmem [shape: f32[1,4], index: 2, kind: input, shape index: {}]
  %s3 = inlined_call_operand.vmem [shape: f32[2,1024,4], index: 3, kind: output, shape index: {}]
  %s4 = sld [smem:[#allocation0]]
  $region45: #{final_decoder_forward.9} parent=0
    _
  %s6 = ssub.s32 1, %s4
  %s7 = scalar_select 0, %s6, %s4
  loop: start=0, step=1, limit=4
  $region2: #{final_decoder_forward.9} parent=0 // loop_pre_header
    _
  $region3: #{final_decoder_forward.9} parent=0 // loop_header
    %s9 = sphi 0, %s13
    %p10 = scmp.ge.s32.totalorder %s9, 4
    %s16 = sphi 0, %s28
    %s17 = sphi 0, %s24
    %s18 = sphi 0, %s16
    %s19 = sphi 0, %s17
    %s20 = sphi 0, %s18
    %s21 = sphi 0, %s19
    %s33 = sphi 0, %s35
    %s36 = sphi 0, %s33
    %s37 = sphi 0, %s36
    %s53 = sphi 0, %s37
    %s57 = sphi 0, %s57
    %s59 = sphi 0, %s57
    %s60 = sphi 0, %s59
    %s74 = sphi 0, %s60
    %s78 = sphi 0, %s78
    %s80 = sphi 0, %s78
    %s81 = sphi 0, %s80
    %s95 = sphi 0, %s81
    %s103 = sphi 0, %s105
    %s106 = sphi 0, %s103
    %s107 = sphi 0, %s106
    %s123 = sphi 0, %s107
  $region4: #{final_decoder_forward.9} parent=0 // loop_header_branch
    %12 = sbr.rel (%p10) target = $region8
  $region5: #{final_decoder_forward.9} parent=0 // loop_body
    %s14 = ssub.s32 %s9, 1
    %s15 = ssub.s32 %s9, 2
    %s22 = sadd.s32 1, %s17
    %p23 = scmp.ge.s32.totalorder %s22, 1
    %s24 = scalar_select %p23, 0, %s22
    %s25 = sadd.s32 1, %s16
    %s26 = scalar_select %p23, %s25, %s16
    %p27 = scmp.ge.s32.totalorder %s26, 2
    %s28 = scalar_select %p27, 0, %s26
    %s29 = ssub.s32 %s16, %s28
    %s30 = ssub.s32 %s17, %s24
    %s31 = sor.u32 %s29, %s30
    %p32 = scmp.eq.s32.totalorder %s31, 0
    %s34 = sadd.s32 %s33, 1
    %s35 = scalar_select %p32, %s33, %s34
    %p38 = pneg %p32
    %p39 = scmp.eq.s32.totalorder %s9, 1
    %p40 = por %p38, %p39
    %p41 = scmp.ne.s32.totalorder %s33, %s36
    %p42 = scmp.eq.s32.totalorder %s9, 0
    %p43 = por %p41, %p42
    %p44 = scmp.ne.s32.totalorder %s33, %s36
    %p45 = scmp.eq.s32.totalorder %s14, 1
    %p46 = por %p44, %p45
    %p47 = scmp.ne.s32.totalorder %s36, %s37
    %p48 = scmp.eq.s32.totalorder %s14, 0
    %p49 = por %p47, %p48
    %p50 = scmp.ne.s32.totalorder %s36, %s37
    %p51 = scmp.eq.s32.totalorder %s15, 1
    %p52 = por %p50, %p51
    %p54 = scmp.ne.s32.totalorder %s37, %s53
    %p55 = scmp.eq.s32.totalorder %s15, 0
    %p56 = por %p54, %p55
    %s58 = sadd.s32 %s57, 1
    %p61 = scmp.eq.s32.totalorder %s9, 1
    %p62 = scmp.ne.s32.totalorder %s57, %s59
    %p63 = scmp.eq.s32.totalorder %s9, 0
    %p64 = por %p62, %p63
    %p65 = scmp.ne.s32.totalorder %s57, %s59
    %p66 = scmp.eq.s32.totalorder %s14, 1
    %p67 = por %p65, %p66
    %p68 = scmp.ne.s32.totalorder %s59, %s60
    %p69 = scmp.eq.s32.totalorder %s14, 0
    %p70 = por %p68, %p69
    %p71 = scmp.ne.s32.totalorder %s59, %s60
    %p72 = scmp.eq.s32.totalorder %s15, 1
    %p73 = por %p71, %p72
    %p75 = scmp.ne.s32.totalorder %s60, %s74
    %p76 = scmp.eq.s32.totalorder %s15, 0
    %p77 = por %p75, %p76
    %s79 = sadd.s32 %s78, 1
    %p82 = scmp.eq.s32.totalorder %s9, 1
    %p83 = scmp.ne.s32.totalorder %s78, %s80
    %p84 = scmp.eq.s32.totalorder %s9, 0
    %p85 = por %p83, %p84
    %p86 = scmp.ne.s32.totalorder %s78, %s80
    %p87 = scmp.eq.s32.totalorder %s14, 1
    %p88 = por %p86, %p87
    %p89 = scmp.ne.s32.totalorder %s80, %s81
    %p90 = scmp.eq.s32.totalorder %s14, 0
    %p91 = por %p89, %p90
    %p92 = scmp.ne.s32.totalorder %s80, %s81
    %p93 = scmp.eq.s32.totalorder %s15, 1
    %p94 = por %p92, %p93
    %p96 = scmp.ne.s32.totalorder %s81, %s95
    %p97 = scmp.eq.s32.totalorder %s15, 0
    %p98 = por %p96, %p97
    %s99 = ssub.s32 %s16, %s28
    %s100 = ssub.s32 %s17, %s24
    %s101 = sor.u32 %s99, %s100
    %p102 = scmp.eq.s32.totalorder %s101, 0
    %s104 = sadd.s32 %s103, 1
    %s105 = scalar_select %p102, %s103, %s104
    %p108 = pneg %p102
    %p109 = scmp.eq.s32.totalorder %s9, 1
    %p110 = por %p108, %p109
    %p111 = scmp.ne.s32.totalorder %s103, %s106
    %p112 = scmp.eq.s32.totalorder %s9, 0
    %p113 = por %p111, %p112
    %p114 = scmp.ne.s32.totalorder %s103, %s106
    %p115 = scmp.eq.s32.totalorder %s14, 1
    %p116 = por %p114, %p115
    %p117 = scmp.ne.s32.totalorder %s106, %s107
    %p118 = scmp.eq.s32.totalorder %s14, 0
    %p119 = por %p117, %p118
    %p120 = scmp.ne.s32.totalorder %s106, %s107
    %p121 = scmp.eq.s32.totalorder %s15, 1
    %p122 = por %p120, %p121
    %p124 = scmp.ne.s32.totalorder %s107, %s123
    %p125 = scmp.eq.s32.totalorder %s15, 0
    %p126 = por %p124, %p125
    %p127 = scmp.le.s32.totalorder 1, %s9
    %p128 = scmp.lt.s32.totalorder %s9, 3
    %p129 = pnand %p127, %p128
    %p130 = pneg %p129
    // Predicated region
    $region9: #{final_decoder_forward.9} parent=5 // pred_check
      _
    $region10: #{final_decoder_forward.9} parent=5 // pred_check_branch
      %132 = sbr.rel (%p129) target = $region12
    $region11: #{final_decoder_forward.9} parent=5 // pred_region
      %s133 = ssub.s32 %s9, 1
      // Predicated region
      $region13: #{final_decoder_forward.9} parent=11 // pred_check
        %p134 = pneg %p70
      $region14: #{final_decoder_forward.9} parent=11 // pred_check_branch
        %136 = sbr.rel (%p134) target = $region16
      $region15: #{final_decoder_forward.9} parent=11 // pred_region
        _
      $region16: #{final_decoder_forward.9} parent=11 // pred_fallthru
        _
      // Predicated region
      $region17: #{final_decoder_forward.9} parent=11 // pred_check
        %p137 = pneg %p91
      $region18: #{final_decoder_forward.9} parent=11 // pred_check_branch
        %139 = sbr.rel (%p137) target = $region20
      $region19: #{final_decoder_forward.9} parent=11 // pred_region
        _
      $region20: #{final_decoder_forward.9} parent=11 // pred_fallthru
        _
    $region12: #{final_decoder_forward.9} parent=5 // pred_fallthru
      _
    %p140 = scmp.lt.s32.totalorder %s9, 2
    // Predicated region
    $region21: #{final_decoder_forward.9} parent=5 // pred_check
      %p141 = pneg %p140
    $region22: #{final_decoder_forward.9} parent=5 // pred_check_branch
      %143 = sbr.rel (%p141) target = $region24
    $region23: #{final_decoder_forward.9} parent=5 // pred_region
      // Predicated region
      $region25: #{final_decoder_forward.9} parent=23 // pred_check
        %p144 = pneg %p43
      $region26: #{final_decoder_forward.9} parent=23 // pred_check_branch
        %146 = sbr.rel (%p144) target = $region28
      $region27: #{final_decoder_forward.9} parent=23 // pred_region
        %s147 = smul.u32 128, %s17
        %p148 = scmp.lt.s32.totalorder %s16, 1
        %s149 = scalar_select %p148, %s16, 1
        %p150 = scmp.lt.s32.totalorder %s147, 127
        %s151 = scalar_select %p150, %s147, 127
        %s152 = smul.addr %s149, 128
        %s153 = sadd.s32 %s151, %s152
        %s154 = smul.addr %s153, 4
        %s155 = scalar_lea.vmem %s0, %s154
        %s156 = smul.u32 128, %s17
      $region28: #{final_decoder_forward.9} parent=23 // pred_fallthru
        _
    $region24: #{final_decoder_forward.9} parent=5 // pred_fallthru
      _
    %p157 = scmp.le.s32.totalorder 1, %s9
    %p158 = scmp.lt.s32.totalorder %s9, 3
    %p159 = pnand %p157, %p158
    %p160 = pneg %p159
    // Predicated region
    $region29: #{final_decoder_forward.9} parent=5 // pred_check
      _
    $region30: #{final_decoder_forward.9} parent=5 // pred_check_branch
      %162 = sbr.rel (%p159) target = $region32
    $region31: #{final_decoder_forward.9} parent=5 // pred_region
      %s163 = ssub.s32 %s9, 1
      %s164 = smul.u32 128, %s19
      %p165 = scmp.lt.s32.totalorder %s18, 1
      %s166 = scalar_select %p165, %s18, 1
      %p167 = scmp.lt.s32.totalorder %s164, 127
      %s168 = scalar_select %p167, %s164, 127
      %s169 = smul.addr %s166, 128
      %s170 = sadd.s32 %s168, %s169
      %s171 = smul.addr %s170, 4
      %s172 = scalar_lea.vmem %s0, %s171
      %p173 = pneg %p49
      %p174 = pneg %p46
      %p175 = pneg %p70
      %p176 = pneg %p67
      %p177 = pneg %p91
      %p178 = pneg %p88
      %p179 = pneg %p119
      %p180 = pneg %p116
      %s181 = smul.u32 128, %s19
      %p182 = scmp.lt.s32.totalorder %s18, 1
      %s183 = scalar_select %p182, %s18, 1
      %p184 = scmp.lt.s32.totalorder %s181, 127
      %s185 = scalar_select %p184, %s181, 127
      %s186 = smul.addr %s183, 128
      %s187 = sadd.s32 %s185, %s186
      %s188 = smul.addr %s187, 8
      %s189 = scalar_lea.vmem %s3, %s188
      %s190 = smul.u32 128, %s19
      %p191 = scmp.lt.s32.totalorder %s18, 1
      %s192 = scalar_select %p191, %s18, 1
      %p193 = scmp.lt.s32.totalorder %s190, 127
      %s194 = scalar_select %p193, %s190, 127
      %s195 = smul.addr %s192, 128
      %s196 = sadd.s32 %s194, %s195
      %s197 = smul.addr %s196, 4
      %s198 = scalar_lea.vmem %s0, %s197
      %s199 = smul.u32 128, %s19
      %s200 = smul.u32 128, %s19
      %p201 = scmp.lt.s32.totalorder %s18, 1
      %s202 = scalar_select %p201, %s18, 1
      %p203 = scmp.lt.s32.totalorder %s200, 127
      %s204 = scalar_select %p203, %s200, 127
      %s205 = smul.addr %s202, 128
      %s206 = sadd.s32 %s204, %s205
      %s207 = smul.addr %s206, 8
      %s208 = scalar_lea.vmem %s3, %s207
      %s209 = smul.u32 128, %s19
      %v211 = vld [vmem:[%s198] sm:$0xf]
      %v212 = vld [vmem:[%s198 + $0x4] sm:$0xf]
      %v213 = vld [vmem:[%s198 + $0x8] sm:$0xf]
      %v214 = vld [vmem:[%s198 + $0xc] sm:$0xf]
      %v215 = vld [vmem:[%s198 + $0x10] sm:$0xf]
      %v216 = vld [vmem:[%s198 + $0x14] sm:$0xf]
      %v217 = vld [vmem:[%s198 + $0x18] sm:$0xf]
      %v218 = vld [vmem:[%s198 + $0x1c] sm:$0xf]
      %v219 = vld [vmem:[%s198 + $0x20] sm:$0xf]
      %v220 = vld [vmem:[%s198 + $0x24] sm:$0xf]
      %v221 = vld [vmem:[%s198 + $0x28] sm:$0xf]
      %v222 = vld [vmem:[%s198 + $0x2c] sm:$0xf]
      %v223 = vld [vmem:[%s198 + $0x30] sm:$0xf]
      %v224 = vld [vmem:[%s198 + $0x34] sm:$0xf]
      %v225 = vld [vmem:[%s198 + $0x38] sm:$0xf]
      %v226 = vld [vmem:[%s198 + $0x3c] sm:$0xf]
      %v227 = vld [vmem:[%s198 + $0x40] sm:$0xf]
      %v228 = vld [vmem:[%s198 + $0x44] sm:$0xf]
      %v229 = vld [vmem:[%s198 + $0x48] sm:$0xf]
      %v230 = vld [vmem:[%s198 + $0x4c] sm:$0xf]
      %v231 = vld [vmem:[%s198 + $0x50] sm:$0xf]
      %v232 = vld [vmem:[%s198 + $0x54] sm:$0xf]
      %v233 = vld [vmem:[%s198 + $0x58] sm:$0xf]
      %v234 = vld [vmem:[%s198 + $0x5c] sm:$0xf]
      %v235 = vld [vmem:[%s198 + $0x60] sm:$0xf]
      %v236 = vld [vmem:[%s198 + $0x64] sm:$0xf]
      %v237 = vld [vmem:[%s198 + $0x68] sm:$0xf]
      %v238 = vld [vmem:[%s198 + $0x6c] sm:$0xf]
      %v239 = vld [vmem:[%s198 + $0x70] sm:$0xf]
      %v240 = vld [vmem:[%s198 + $0x74] sm:$0xf]
      %v241 = vld [vmem:[%s198 + $0x78] sm:$0xf]
      %v242 = vld [vmem:[%s198 + $0x7c] sm:$0xf]
      %v243 = vld [vmem:[%s198 + $0x80] sm:$0xf]
      %v244 = vld [vmem:[%s198 + $0x84] sm:$0xf]
      %v245 = vld [vmem:[%s198 + $0x88] sm:$0xf]
      %v246 = vld [vmem:[%s198 + $0x8c] sm:$0xf]
      %v247 = vld [vmem:[%s198 + $0x90] sm:$0xf]
      %v248 = vld [vmem:[%s198 + $0x94] sm:$0xf]
      %v249 = vld [vmem:[%s198 + $0x98] sm:$0xf]
      %v250 = vld [vmem:[%s198 + $0x9c] sm:$0xf]
      %v251 = vld [vmem:[%s198 + $0xa0] sm:$0xf]
      %v252 = vld [vmem:[%s198 + $0xa4] sm:$0xf]
      %v253 = vld [vmem:[%s198 + $0xa8] sm:$0xf]
      %v254 = vld [vmem:[%s198 + $0xac] sm:$0xf]
      %v255 = vld [vmem:[%s198 + $0xb0] sm:$0xf]
      %v256 = vld [vmem:[%s198 + $0xb4] sm:$0xf]
      %v257 = vld [vmem:[%s198 + $0xb8] sm:$0xf]
      %v258 = vld [vmem:[%s198 + $0xbc] sm:$0xf]
      %v259 = vld [vmem:[%s198 + $0xc0] sm:$0xf]
      %v260 = vld [vmem:[%s198 + $0xc4] sm:$0xf]
      %v261 = vld [vmem:[%s198 + $0xc8] sm:$0xf]
      %v262 = vld [vmem:[%s198 + $0xcc] sm:$0xf]
      %v263 = vld [vmem:[%s198 + $0xd0] sm:$0xf]
      %v264 = vld [vmem:[%s198 + $0xd4] sm:$0xf]
      %v265 = vld [vmem:[%s198 + $0xd8] sm:$0xf]
      %v266 = vld [vmem:[%s198 + $0xdc] sm:$0xf]
      %v267 = vld [vmem:[%s198 + $0xe0] sm:$0xf]
      %v268 = vld [vmem:[%s198 + $0xe4] sm:$0xf]
      %v269 = vld [vmem:[%s198 + $0xe8] sm:$0xf]
      %v270 = vld [vmem:[%s198 + $0xec] sm:$0xf]
      %v271 = vld [vmem:[%s198 + $0xf0] sm:$0xf]
      %v272 = vld [vmem:[%s198 + $0xf4] sm:$0xf]
      %v273 = vld [vmem:[%s198 + $0xf8] sm:$0xf]
      %v274 = vld [vmem:[%s198 + $0xfc] sm:$0xf]
      %v275 = vld [vmem:[%s198 + $0x100] sm:$0xf]
      %v276 = vld [vmem:[%s198 + $0x104] sm:$0xf]
      %v277 = vld [vmem:[%s198 + $0x108] sm:$0xf]
      %v278 = vld [vmem:[%s198 + $0x10c] sm:$0xf]
      %v279 = vld [vmem:[%s198 + $0x110] sm:$0xf]
      %v280 = vld [vmem:[%s198 + $0x114] sm:$0xf]
      %v281 = vld [vmem:[%s198 + $0x118] sm:$0xf]
      %v282 = vld [vmem:[%s198 + $0x11c] sm:$0xf]
      %v283 = vld [vmem:[%s198 + $0x120] sm:$0xf]
      %v284 = vld [vmem:[%s198 + $0x124] sm:$0xf]
      %v285 = vld [vmem:[%s198 + $0x128] sm:$0xf]
      %v286 = vld [vmem:[%s198 + $0x12c] sm:$0xf]
      %v287 = vld [vmem:[%s198 + $0x130] sm:$0xf]
      %v288 = vld [vmem:[%s198 + $0x134] sm:$0xf]
      %v289 = vld [vmem:[%s198 + $0x138] sm:$0xf]
      %v290 = vld [vmem:[%s198 + $0x13c] sm:$0xf]
      %v291 = vld [vmem:[%s198 + $0x140] sm:$0xf]
      %v292 = vld [vmem:[%s198 + $0x144] sm:$0xf]
      %v293 = vld [vmem:[%s198 + $0x148] sm:$0xf]
      %v294 = vld [vmem:[%s198 + $0x14c] sm:$0xf]
      %v295 = vld [vmem:[%s198 + $0x150] sm:$0xf]
      %v296 = vld [vmem:[%s198 + $0x154] sm:$0xf]
      %v297 = vld [vmem:[%s198 + $0x158] sm:$0xf]
      %v298 = vld [vmem:[%s198 + $0x15c] sm:$0xf]
      %v299 = vld [vmem:[%s198 + $0x160] sm:$0xf]
      %v300 = vld [vmem:[%s198 + $0x164] sm:$0xf]
      %v301 = vld [vmem:[%s198 + $0x168] sm:$0xf]
      %v302 = vld [vmem:[%s198 + $0x16c] sm:$0xf]
      %v303 = vld [vmem:[%s198 + $0x170] sm:$0xf]
      %v304 = vld [vmem:[%s198 + $0x174] sm:$0xf]
      %v305 = vld [vmem:[%s198 + $0x178] sm:$0xf]
      %v306 = vld [vmem:[%s198 + $0x17c] sm:$0xf]
      %v307 = vld [vmem:[%s198 + $0x180] sm:$0xf]
      %v308 = vld [vmem:[%s198 + $0x184] sm:$0xf]
      %v309 = vld [vmem:[%s198 + $0x188] sm:$0xf]
      %v310 = vld [vmem:[%s198 + $0x18c] sm:$0xf]
      %v311 = vld [vmem:[%s198 + $0x190] sm:$0xf]
      %v312 = vld [vmem:[%s198 + $0x194] sm:$0xf]
      %v313 = vld [vmem:[%s198 + $0x198] sm:$0xf]
      %v314 = vld [vmem:[%s198 + $0x19c] sm:$0xf]
      %v315 = vld [vmem:[%s198 + $0x1a0] sm:$0xf]
      %v316 = vld [vmem:[%s198 + $0x1a4] sm:$0xf]
      %v317 = vld [vmem:[%s198 + $0x1a8] sm:$0xf]
      %v318 = vld [vmem:[%s198 + $0x1ac] sm:$0xf]
      %v319 = vld [vmem:[%s198 + $0x1b0] sm:$0xf]
      %v320 = vld [vmem:[%s198 + $0x1b4] sm:$0xf]
      %v321 = vld [vmem:[%s198 + $0x1b8] sm:$0xf]
      %v322 = vld [vmem:[%s198 + $0x1bc] sm:$0xf]
      %v323 = vld [vmem:[%s198 + $0x1c0] sm:$0xf]
      %v324 = vld [vmem:[%s198 + $0x1c4] sm:$0xf]
      %v325 = vld [vmem:[%s198 + $0x1c8] sm:$0xf]
      %v326 = vld [vmem:[%s198 + $0x1cc] sm:$0xf]
      %v327 = vld [vmem:[%s198 + $0x1d0] sm:$0xf]
      %v328 = vld [vmem:[%s198 + $0x1d4] sm:$0xf]
      %v329 = vld [vmem:[%s198 + $0x1d8] sm:$0xf]
      %v330 = vld [vmem:[%s198 + $0x1dc] sm:$0xf]
      %v331 = vld [vmem:[%s198 + $0x1e0] sm:$0xf]
      %v332 = vld [vmem:[%s198 + $0x1e4] sm:$0xf]
      %v333 = vld [vmem:[%s198 + $0x1e8] sm:$0xf]
      %v334 = vld [vmem:[%s198 + $0x1ec] sm:$0xf]
      %v335 = vld [vmem:[%s198 + $0x1f0] sm:$0xf]
      %v336 = vld [vmem:[%s198 + $0x1f4] sm:$0xf]
      %v337 = vld [vmem:[%s198 + $0x1f8] sm:$0xf]
      %v338 = vld [vmem:[%s198 + $0x1fc] sm:$0xf]
      %v339 = vld [vmem:[%s1] sm:$0x3]
      %v340 = vld [vmem:[%s2] sm:$0x1]
      %v342 = vlaneseq
      %v343 = vshrl.u32 %v342, 7
      %v344 = vsub.s32 0, %v343
      %v345 = vrot.slane %v340, %v344
      %v475 = vunpack.c.l.b16 %v211
      %v476 = vunpack.c.l.b16 %v212
      %v477 = vunpack.c.l.b16 %v213
      %v478 = vunpack.c.l.b16 %v214
      %v479 = vunpack.c.l.b16 %v215
      %v480 = vunpack.c.l.b16 %v216
      %v481 = vunpack.c.l.b16 %v217
      %v482 = vunpack.c.l.b16 %v218
      %v483 = vunpack.c.l.b16 %v219
      %v484 = vunpack.c.l.b16 %v220
      %v485 = vunpack.c.l.b16 %v221
      %v486 = vunpack.c.l.b16 %v222
      %v487 = vunpack.c.l.b16 %v223
      %v488 = vunpack.c.l.b16 %v224
      %v489 = vunpack.c.l.b16 %v225
      %v490 = vunpack.c.l.b16 %v226
      %v491 = vunpack.c.l.b16 %v227
      %v492 = vunpack.c.l.b16 %v228
      %v493 = vunpack.c.l.b16 %v229
      %v494 = vunpack.c.l.b16 %v230
      %v495 = vunpack.c.l.b16 %v231
      %v496 = vunpack.c.l.b16 %v232
      %v497 = vunpack.c.l.b16 %v233
      %v498 = vunpack.c.l.b16 %v234
      %v499 = vunpack.c.l.b16 %v235
      %v500 = vunpack.c.l.b16 %v236
      %v501 = vunpack.c.l.b16 %v237
      %v502 = vunpack.c.l.b16 %v238
      %v503 = vunpack.c.l.b16 %v239
      %v504 = vunpack.c.l.b16 %v240
      %v505 = vunpack.c.l.b16 %v241
      %v506 = vunpack.c.l.b16 %v242
      %v507 = vunpack.c.l.b16 %v243
      %v508 = vunpack.c.l.b16 %v244
      %v509 = vunpack.c.l.b16 %v245
      %v510 = vunpack.c.l.b16 %v246
      %v511 = vunpack.c.l.b16 %v247
      %v512 = vunpack.c.l.b16 %v248
      %v513 = vunpack.c.l.b16 %v249
      %v514 = vunpack.c.l.b16 %v250
      %v515 = vunpack.c.l.b16 %v251
      %v516 = vunpack.c.l.b16 %v252
      %v517 = vunpack.c.l.b16 %v253
      %v518 = vunpack.c.l.b16 %v254
      %v519 = vunpack.c.l.b16 %v255
      %v520 = vunpack.c.l.b16 %v256
      %v521 = vunpack.c.l.b16 %v257
      %v522 = vunpack.c.l.b16 %v258
      %v523 = vunpack.c.l.b16 %v259
      %v524 = vunpack.c.l.b16 %v260
      %v525 = vunpack.c.l.b16 %v261
      %v526 = vunpack.c.l.b16 %v262
      %v527 = vunpack.c.l.b16 %v263
      %v528 = vunpack.c.l.b16 %v264
      %v529 = vunpack.c.l.b16 %v265
      %v530 = vunpack.c.l.b16 %v266
      %v531 = vunpack.c.l.b16 %v267
      %v532 = vunpack.c.l.b16 %v268
      %v533 = vunpack.c.l.b16 %v269
      %v534 = vunpack.c.l.b16 %v270
      %v535 = vunpack.c.l.b16 %v271
      %v536 = vunpack.c.l.b16 %v272
      %v537 = vunpack.c.l.b16 %v273
      %v538 = vunpack.c.l.b16 %v274
      %v539 = vunpack.c.l.b16 %v275
      %v540 = vunpack.c.l.b16 %v276
      %v541 = vunpack.c.l.b16 %v277
      %v542 = vunpack.c.l.b16 %v278
      %v543 = vunpack.c.l.b16 %v279
      %v544 = vunpack.c.l.b16 %v280
      %v545 = vunpack.c.l.b16 %v281
      %v546 = vunpack.c.l.b16 %v282
      %v547 = vunpack.c.l.b16 %v283
      %v548 = vunpack.c.l.b16 %v284
      %v549 = vunpack.c.l.b16 %v285
      %v550 = vunpack.c.l.b16 %v286
      %v551 = vunpack.c.l.b16 %v287
      %v552 = vunpack.c.l.b16 %v288
      %v553 = vunpack.c.l.b16 %v289
      %v554 = vunpack.c.l.b16 %v290
      %v555 = vunpack.c.l.b16 %v291
      %v556 = vunpack.c.l.b16 %v292
      %v557 = vunpack.c.l.b16 %v293
      %v558 = vunpack.c.l.b16 %v294
      %v559 = vunpack.c.l.b16 %v295
      %v560 = vunpack.c.l.b16 %v296
      %v561 = vunpack.c.l.b16 %v297
      %v562 = vunpack.c.l.b16 %v298
      %v563 = vunpack.c.l.b16 %v299
      %v564 = vunpack.c.l.b16 %v300
      %v565 = vunpack.c.l.b16 %v301
      %v566 = vunpack.c.l.b16 %v302
      %v567 = vunpack.c.l.b16 %v303
      %v568 = vunpack.c.l.b16 %v304
      %v569 = vunpack.c.l.b16 %v305
      %v570 = vunpack.c.l.b16 %v306
      %v571 = vunpack.c.l.b16 %v307
      %v572 = vunpack.c.l.b16 %v308
      %v573 = vunpack.c.l.b16 %v309
      %v574 = vunpack.c.l.b16 %v310
      %v575 = vunpack.c.l.b16 %v311
      %v576 = vunpack.c.l.b16 %v312
      %v577 = vunpack.c.l.b16 %v313
      %v578 = vunpack.c.l.b16 %v314
      %v579 = vunpack.c.l.b16 %v315
      %v580 = vunpack.c.l.b16 %v316
      %v581 = vunpack.c.l.b16 %v317
      %v582 = vunpack.c.l.b16 %v318
      %v583 = vunpack.c.l.b16 %v319
      %v584 = vunpack.c.l.b16 %v320
      %v585 = vunpack.c.l.b16 %v321
      %v586 = vunpack.c.l.b16 %v322
      %v587 = vunpack.c.l.b16 %v323
      %v588 = vunpack.c.l.b16 %v324
      %v589 = vunpack.c.l.b16 %v325
      %v590 = vunpack.c.l.b16 %v326
      %v591 = vunpack.c.l.b16 %v327
      %v592 = vunpack.c.l.b16 %v328
      %v593 = vunpack.c.l.b16 %v329
      %v594 = vunpack.c.l.b16 %v330
      %v595 = vunpack.c.l.b16 %v331
      %v596 = vunpack.c.l.b16 %v332
      %v597 = vunpack.c.l.b16 %v333
      %v598 = vunpack.c.l.b16 %v334
      %v599 = vunpack.c.l.b16 %v335
      %v600 = vunpack.c.l.b16 %v336
      %v601 = vunpack.c.l.b16 %v337
      %v602 = vunpack.c.l.b16 %v338
      %v603 = vpack.c.b16 %v476, %v475
      %v604 = vpack.c.b16 %v478, %v477
      %v605 = vpack.c.b16 %v480, %v479
      %v606 = vpack.c.b16 %v482, %v481
      %v607 = vpack.c.b16 %v484, %v483
      %v608 = vpack.c.b16 %v486, %v485
      %v609 = vpack.c.b16 %v488, %v487
      %v610 = vpack.c.b16 %v490, %v489
      %v611 = vpack.c.b16 %v492, %v491
      %v612 = vpack.c.b16 %v494, %v493
      %v613 = vpack.c.b16 %v496, %v495
      %v614 = vpack.c.b16 %v498, %v497
      %v615 = vpack.c.b16 %v500, %v499
      %v616 = vpack.c.b16 %v502, %v501
      %v617 = vpack.c.b16 %v504, %v503
      %v618 = vpack.c.b16 %v506, %v505
      %v619 = vpack.c.b16 %v508, %v507
      %v620 = vpack.c.b16 %v510, %v509
      %v621 = vpack.c.b16 %v512, %v511
      %v622 = vpack.c.b16 %v514, %v513
      %v623 = vpack.c.b16 %v516, %v515
      %v624 = vpack.c.b16 %v518, %v517
      %v625 = vpack.c.b16 %v520, %v519
      %v626 = vpack.c.b16 %v522, %v521
      %v627 = vpack.c.b16 %v524, %v523
      %v628 = vpack.c.b16 %v526, %v525
      %v629 = vpack.c.b16 %v528, %v527
      %v630 = vpack.c.b16 %v530, %v529
      %v631 = vpack.c.b16 %v532, %v531
      %v632 = vpack.c.b16 %v534, %v533
      %v633 = vpack.c.b16 %v536, %v535
      %v634 = vpack.c.b16 %v538, %v537
      %v635 = vpack.c.b16 %v540, %v539
      %v636 = vpack.c.b16 %v542, %v541
      %v637 = vpack.c.b16 %v544, %v543
      %v638 = vpack.c.b16 %v546, %v545
      %v639 = vpack.c.b16 %v548, %v547
      %v640 = vpack.c.b16 %v550, %v549
      %v641 = vpack.c.b16 %v552, %v551
      %v642 = vpack.c.b16 %v554, %v553
      %v643 = vpack.c.b16 %v556, %v555
      %v644 = vpack.c.b16 %v558, %v557
      %v645 = vpack.c.b16 %v560, %v559
      %v646 = vpack.c.b16 %v562, %v561
      %v647 = vpack.c.b16 %v564, %v563
      %v648 = vpack.c.b16 %v566, %v565
      %v649 = vpack.c.b16 %v568, %v567
      %v650 = vpack.c.b16 %v570, %v569
      %v651 = vpack.c.b16 %v572, %v571
      %v652 = vpack.c.b16 %v574, %v573
      %v653 = vpack.c.b16 %v576, %v575
      %v654 = vpack.c.b16 %v578, %v577
      %v655 = vpack.c.b16 %v580, %v579
      %v656 = vpack.c.b16 %v582, %v581
      %v657 = vpack.c.b16 %v584, %v583
      %v658 = vpack.c.b16 %v586, %v585
      %v659 = vpack.c.b16 %v588, %v587
      %v660 = vpack.c.b16 %v590, %v589
      %v661 = vpack.c.b16 %v592, %v591
      %v662 = vpack.c.b16 %v594, %v593
      %v663 = vpack.c.b16 %v596, %v595
      %v664 = vpack.c.b16 %v598, %v597
      %v665 = vpack.c.b16 %v600, %v599
      %v666 = vpack.c.b16 %v602, %v601
      %vm667 = vcmask 31744
      %v669 = vsel %vm667, %v603, 0
      %v672 = vsel %vm667, %v604, 0
      %v675 = vsel %vm667, %v605, 0
      %v678 = vsel %vm667, %v606, 0
      %v681 = vsel %vm667, %v607, 0
      %v684 = vsel %vm667, %v608, 0
      %v687 = vsel %vm667, %v609, 0
      %v690 = vsel %vm667, %v610, 0
      %v693 = vsel %vm667, %v611, 0
      %v696 = vsel %vm667, %v612, 0
      %v699 = vsel %vm667, %v613, 0
      %v702 = vsel %vm667, %v614, 0
      %v705 = vsel %vm667, %v615, 0
      %v708 = vsel %vm667, %v616, 0
      %v711 = vsel %vm667, %v617, 0
      %v714 = vsel %vm667, %v618, 0
      %v717 = vsel %vm667, %v619, 0
      %v720 = vsel %vm667, %v620, 0
      %v723 = vsel %vm667, %v621, 0
      %v726 = vsel %vm667, %v622, 0
      %v729 = vsel %vm667, %v623, 0
      %v732 = vsel %vm667, %v624, 0
      %v735 = vsel %vm667, %v625, 0
      %v738 = vsel %vm667, %v626, 0
      %v741 = vsel %vm667, %v627, 0
      %v744 = vsel %vm667, %v628, 0
      %v747 = vsel %vm667, %v629, 0
      %v750 = vsel %vm667, %v630, 0
      %v753 = vsel %vm667, %v631, 0
      %v756 = vsel %vm667, %v632, 0
      %v759 = vsel %vm667, %v633, 0
      %v762 = vsel %vm667, %v634, 0
      %v765 = vsel %vm667, %v635, 0
      %v768 = vsel %vm667, %v636, 0
      %v771 = vsel %vm667, %v637, 0
      %v774 = vsel %vm667, %v638, 0
      %v777 = vsel %vm667, %v639, 0
      %v780 = vsel %vm667, %v640, 0
      %v783 = vsel %vm667, %v641, 0
      %v786 = vsel %vm667, %v642, 0
      %v789 = vsel %vm667, %v643, 0
      %v792 = vsel %vm667, %v644, 0
      %v795 = vsel %vm667, %v645, 0
      %v798 = vsel %vm667, %v646, 0
      %v801 = vsel %vm667, %v647, 0
      %v804 = vsel %vm667, %v648, 0
      %v807 = vsel %vm667, %v649, 0
      %v810 = vsel %vm667, %v650, 0
      %v813 = vsel %vm667, %v651, 0
      %v816 = vsel %vm667, %v652, 0
      %v819 = vsel %vm667, %v653, 0
      %v822 = vsel %vm667, %v654, 0
      %v825 = vsel %vm667, %v655, 0
      %v828 = vsel %vm667, %v656, 0
      %v831 = vsel %vm667, %v657, 0
      %v834 = vsel %vm667, %v658, 0
      %v837 = vsel %vm667, %v659, 0
      %v840 = vsel %vm667, %v660, 0
      %v843 = vsel %vm667, %v661, 0
      %v846 = vsel %vm667, %v662, 0
      %v849 = vsel %vm667, %v663, 0
      %v852 = vsel %vm667, %v664, 0
      %v855 = vsel %vm667, %v665, 0
      %v858 = vsel %vm667, %v666, 0
      %vm860 = vcmask 1041408
      %v862 = vsel %vm860, %v339, 0
      %864 = vmatprep.subr.bf16.mxu0 0
      %865 = vmatpush1.bf16.msra.mxu0 %v862
      %866 = vmatprep.subr.bf16.mxu0 0
      %867 = vmatpush1.bf16.msra.mxu0 0
      %868 = vmatprep.subr.bf16.mxu0 0
      %869 = vmatpush1.bf16.msra.mxu0 0
      %870 = vmatprep.subr.bf16.mxu0 0
      %871 = vmatpush1.bf16.msra.mxu0 0
      %872 = vmatprep.subr.bf16.mxu0 0
      %873 = vmatpush1.bf16.msra.mxu0 0
      %874 = vmatprep.subr.bf16.mxu0 0
      %875 = vmatpush1.bf16.msra.mxu0 0
      %876 = vmatprep.subr.bf16.mxu0 0
      %877 = vmatpush1.bf16.msra.mxu0 0
      %878 = vmatprep.subr.bf16.mxu0 0
      %879 = vmatpush1.bf16.msra.mxu0 0
      %880 = vmatprep.subr.bf16.mxu0 0
      %881 = vmatpush1.bf16.msra.mxu0 0
      %882 = vmatprep.subr.bf16.mxu0 0
      %883 = vmatpush1.bf16.msra.mxu0 0
      %884 = vmatprep.subr.bf16.mxu0 0
      %885 = vmatpush1.bf16.msra.mxu0 0
      %886 = vmatprep.subr.bf16.mxu0 0
      %887 = vmatpush1.bf16.msra.mxu0 0
      %888 = vmatprep.subr.bf16.mxu0 0
      %889 = vmatpush1.bf16.msra.mxu0 0
      %890 = vmatprep.subr.bf16.mxu0 0
      %891 = vmatpush1.bf16.msra.mxu0 0
      %892 = vmatprep.subr.bf16.mxu0 0
      %893 = vmatpush1.bf16.msra.mxu0 0
      %894 = vmatprep.subr.bf16.mxu0 0
      %895 = vmatpush1.bf16.msra.mxu0 0
      %896 = vmatprep.mubr.bf16.mxu0 0
      %897 = vmatmul.mubr.bf16.gmra.mrb[0].mxu0 %v669
      %v898 = vpop.f32.mrb[0].mxu0
      %v899 = vadd.f32 %v345, %v898
      %v900 = vpop.f32.mrb[0].mxu0
      %v901 = vpop.f32.mrb[0].mxu0
      %v902 = vadd.f32 %v345, %v901
      %v903 = vpop.f32.mrb[0].mxu0
      %904 = vmatprep.mubr.bf16.mxu0 0
      %905 = vmatmul.mubr.bf16.gmra.mrb[0].mxu0 %v672
      %v906 = vpop.f32.mrb[0].mxu0
      %v907 = vadd.f32 %v345, %v906
      %v908 = vpop.f32.mrb[0].mxu0
      %v909 = vpop.f32.mrb[0].mxu0
      %v910 = vadd.f32 %v345, %v909
      %v911 = vpop.f32.mrb[0].mxu0
      %912 = vmatprep.mubr.bf16.mxu0 0
      %913 = vmatmul.mubr.bf16.gmra.mrb[0].mxu0 %v675
      %v914 = vpop.f32.mrb[0].mxu0
      %v915 = vadd.f32 %v345, %v914
      %v916 = vpop.f32.mrb[0].mxu0
      %v917 = vpop.f32.mrb[0].mxu0
      %v918 = vadd.f32 %v345, %v917
      %v919 = vpop.f32.mrb[0].mxu0
      %920 = vmatprep.mubr.bf16.mxu0 0
      %921 = vmatmul.mubr.bf16.gmra.mrb[0].mxu0 %v678
      %v922 = vpop.f32.mrb[0].mxu0
      %v923 = vadd.f32 %v345, %v922
      %v924 = vpop.f32.mrb[0].mxu0
      %v925 = vpop.f32.mrb[0].mxu0
      %v926 = vadd.f32 %v345, %v925
      %v927 = vpop.f32.mrb[0].mxu0
      %928 = vmatprep.mubr.bf16.mxu0 0
      %929 = vmatmul.mubr.bf16.gmra.mrb[0].mxu0 %v681
      %v930 = vpop.f32.mrb[0].mxu0
      %v931 = vadd.f32 %v345, %v930
      %v932 = vpop.f32.mrb[0].mxu0
      %v933 = vpop.f32.mrb[0].mxu0
      %v934 = vadd.f32 %v345, %v933
      %v935 = vpop.f32.mrb[0].mxu0
      %936 = vmatprep.mubr.bf16.mxu0 0
      %937 = vmatmul.mubr.bf16.gmra.mrb[0].mxu0 %v684
      %v938 = vpop.f32.mrb[0].mxu0
      %v939 = vadd.f32 %v345, %v938
      %v940 = vpop.f32.mrb[0].mxu0
      %v941 = vpop.f32.mrb[0].mxu0
      %v942 = vadd.f32 %v345, %v941
      %v943 = vpop.f32.mrb[0].mxu0
      %944 = vmatprep.mubr.bf16.mxu0 0
      %945 = vmatmul.mubr.bf16.gmra.mrb[0].mxu0 %v687
      %v946 = vpop.f32.mrb[0].mxu0
      %v947 = vadd.f32 %v345, %v946
      %v948 = vpop.f32.mrb[0].mxu0
      %v949 = vpop.f32.mrb[0].mxu0
      %v950 = vadd.f32 %v345, %v949
      %v951 = vpop.f32.mrb[0].mxu0
      %952 = vmatprep.mubr.bf16.mxu0 0
      %953 = vmatmul.mubr.bf16.gmra.mrb[0].mxu0 %v690
      %v954 = vpop.f32.mrb[0].mxu0
      %v955 = vadd.f32 %v345, %v954
      %v956 = vpop.f32.mrb[0].mxu0
      %v957 = vpop.f32.mrb[0].mxu0
      %v958 = vadd.f32 %v345, %v957
      %v959 = vpop.f32.mrb[0].mxu0
      %960 = vmatprep.mubr.bf16.mxu0 0
      %961 = vmatmul.mubr.bf16.gmra.mrb[0].mxu0 %v693
      %v962 = vpop.f32.mrb[0].mxu0
      %v963 = vadd.f32 %v345, %v962
      %v964 = vpop.f32.mrb[0].mxu0
      %v965 = vpop.f32.mrb[0].mxu0
      %v966 = vadd.f32 %v345, %v965
      %v967 = vpop.f32.mrb[0].mxu0
      %968 = vmatprep.mubr.bf16.mxu0 0
      %969 = vmatmul.mubr.bf16.gmra.mrb[0].mxu0 %v696
      %v970 = vpop.f32.mrb[0].mxu0
      %v971 = vadd.f32 %v345, %v970
      %v972 = vpop.f32.mrb[0].mxu0
      %v973 = vpop.f32.mrb[0].mxu0
      %v974 = vadd.f32 %v345, %v973
      %v975 = vpop.f32.mrb[0].mxu0
      %976 = vmatprep.mubr.bf16.mxu0 0
      %977 = vmatmul.mubr.bf16.gmra.mrb[0].mxu0 %v699
      %v978 = vpop.f32.mrb[0].mxu0
      %v979 = vadd.f32 %v345, %v978
      %v980 = vpop.f32.mrb[0].mxu0
      %v981 = vpop.f32.mrb[0].mxu0
      %v982 = vadd.f32 %v345, %v981
      %v983 = vpop.f32.mrb[0].mxu0
      %984 = vmatprep.mubr.bf16.mxu0 0
      %985 = vmatmul.mubr.bf16.gmra.mrb[0].mxu0 %v702
      %v986 = vpop.f32.mrb[0].mxu0
      %v987 = vadd.f32 %v345, %v986
      %v988 = vpop.f32.mrb[0].mxu0
      %v989 = vpop.f32.mrb[0].mxu0
      %v990 = vadd.f32 %v345, %v989
      %v991 = vpop.f32.mrb[0].mxu0
      %992 = vmatprep.mubr.bf16.mxu0 0
      %993 = vmatmul.mubr.bf16.gmra.mrb[0].mxu0 %v705
      %v994 = vpop.f32.mrb[0].mxu0
      %v995 = vadd.f32 %v345, %v994
      %v996 = vpop.f32.mrb[0].mxu0
      %v997 = vpop.f32.mrb[0].mxu0
      %v998 = vadd.f32 %v345, %v997
      %v999 = vpop.f32.mrb[0].mxu0
      %1000 = vmatprep.mubr.bf16.mxu0 0
      %1001 = vmatmul.mubr.bf16.gmra.mrb[0].mxu0 %v708
      %v1002 = vpop.f32.mrb[0].mxu0
      %v1003 = vadd.f32 %v345, %v1002
      %v1004 = vpop.f32.mrb[0].mxu0
      %v1005 = vpop.f32.mrb[0].mxu0
      %v1006 = vadd.f32 %v345, %v1005
      %v1007 = vpop.f32.mrb[0].mxu0
      %1008 = vmatprep.mubr.bf16.mxu0 0
      %1009 = vmatmul.mubr.bf16.gmra.mrb[0].mxu0 %v711
      %v1010 = vpop.f32.mrb[0].mxu0
      %v1011 = vadd.f32 %v345, %v1010
      %v1012 = vpop.f32.mrb[0].mxu0
      %v1013 = vpop.f32.mrb[0].mxu0
      %v1014 = vadd.f32 %v345, %v1013
      %v1015 = vpop.f32.mrb[0].mxu0
      %1016 = vmatprep.mubr.bf16.mxu0 0
      %1017 = vmatmul.mubr.bf16.gmra.mrb[0].mxu0 %v714
      %v1018 = vpop.f32.mrb[0].mxu0
      %v1019 = vadd.f32 %v345, %v1018
      %v1020 = vpop.f32.mrb[0].mxu0
      %v1021 = vpop.f32.mrb[0].mxu0
      %v1022 = vadd.f32 %v345, %v1021
      %v1023 = vpop.f32.mrb[0].mxu0
      %1024 = vmatprep.mubr.bf16.mxu0 0
      %1025 = vmatmul.mubr.bf16.gmra.mrb[0].mxu0 %v717
      %v1026 = vpop.f32.mrb[0].mxu0
      %v1027 = vadd.f32 %v345, %v1026
      %v1028 = vpop.f32.mrb[0].mxu0
      %v1029 = vpop.f32.mrb[0].mxu0
      %v1030 = vadd.f32 %v345, %v1029
      %v1031 = vpop.f32.mrb[0].mxu0
      %1032 = vmatprep.mubr.bf16.mxu0 0
      %1033 = vmatmul.mubr.bf16.gmra.mrb[0].mxu0 %v720
      %v1034 = vpop.f32.mrb[0].mxu0
      %v1035 = vadd.f32 %v345, %v1034
      %v1036 = vpop.f32.mrb[0].mxu0
      %v1037 = vpop.f32.mrb[0].mxu0
      %v1038 = vadd.f32 %v345, %v1037
      %v1039 = vpop.f32.mrb[0].mxu0
      %1040 = vmatprep.mubr.bf16.mxu0 0
      %1041 = vmatmul.mubr.bf16.gmra.mrb[0].mxu0 %v723
      %v1042 = vpop.f32.mrb[0].mxu0
      %v1043 = vadd.f32 %v345, %v1042
      %v1044 = vpop.f32.mrb[0].mxu0
      %v1045 = vpop.f32.mrb[0].mxu0
      %v1046 = vadd.f32 %v345, %v1045
      %v1047 = vpop.f32.mrb[0].mxu0
      %1048 = vmatprep.mubr.bf16.mxu0 0
      %1049 = vmatmul.mubr.bf16.gmra.mrb[0].mxu0 %v726
      %v1050 = vpop.f32.mrb[0].mxu0
      %v1051 = vadd.f32 %v345, %v1050
      %v1052 = vpop.f32.mrb[0].mxu0
      %v1053 = vpop.f32.mrb[0].mxu0
      %v1054 = vadd.f32 %v345, %v1053
      %v1055 = vpop.f32.mrb[0].mxu0
      %1056 = vmatprep.mubr.bf16.mxu0 0
      %1057 = vmatmul.mubr.bf16.gmra.mrb[0].mxu0 %v729
      %v1058 = vpop.f32.mrb[0].mxu0
      %v1059 = vadd.f32 %v345, %v1058
      %v1060 = vpop.f32.mrb[0].mxu0
      %v1061 = vpop.f32.mrb[0].mxu0
      %v1062 = vadd.f32 %v345, %v1061
      %v1063 = vpop.f32.mrb[0].mxu0
      %1064 = vmatprep.mubr.bf16.mxu0 0
      %1065 = vmatmul.mubr.bf16.gmra.mrb[0].mxu0 %v732
      %v1066 = vpop.f32.mrb[0].mxu0
      %v1067 = vadd.f32 %v345, %v1066
      %v1068 = vpop.f32.mrb[0].mxu0
      %v1069 = vpop.f32.mrb[0].mxu0
      %v1070 = vadd.f32 %v345, %v1069
      %v1071 = vpop.f32.mrb[0].mxu0
      %1072 = vmatprep.mubr.bf16.mxu0 0
      %1073 = vmatmul.mubr.bf16.gmra.mrb[0].mxu0 %v735
      %v1074 = vpop.f32.mrb[0].mxu0
      %v1075 = vadd.f32 %v345, %v1074
      %v1076 = vpop.f32.mrb[0].mxu0
      %v1077 = vpop.f32.mrb[0].mxu0
      %v1078 = vadd.f32 %v345, %v1077
      %v1079 = vpop.f32.mrb[0].mxu0
      %1080 = vmatprep.mubr.bf16.mxu0 0
      %1081 = vmatmul.mubr.bf16.gmra.mrb[0].mxu0 %v738
      %v1082 = vpop.f32.mrb[0].mxu0
      %v1083 = vadd.f32 %v345, %v1082
      %v1084 = vpop.f32.mrb[0].mxu0
      %v1085 = vpop.f32.mrb[0].mxu0
      %v1086 = vadd.f32 %v345, %v1085
      %v1087 = vpop.f32.mrb[0].mxu0
      %1088 = vmatprep.mubr.bf16.mxu0 0
      %1089 = vmatmul.mubr.bf16.gmra.mrb[0].mxu0 %v741
      %v1090 = vpop.f32.mrb[0].mxu0
      %v1091 = vadd.f32 %v345, %v1090
      %v1092 = vpop.f32.mrb[0].mxu0
      %v1093 = vpop.f32.mrb[0].mxu0
      %v1094 = vadd.f32 %v345, %v1093
      %v1095 = vpop.f32.mrb[0].mxu0
      %1096 = vmatprep.mubr.bf16.mxu0 0
      %1097 = vmatmul.mubr.bf16.gmra.mrb[0].mxu0 %v744
      %v1098 = vpop.f32.mrb[0].mxu0
      %v1099 = vadd.f32 %v345, %v1098
      %v1100 = vpop.f32.mrb[0].mxu0
      %v1101 = vpop.f32.mrb[0].mxu0
      %v1102 = vadd.f32 %v345, %v1101
      %v1103 = vpop.f32.mrb[0].mxu0
      %1104 = vmatprep.mubr.bf16.mxu0 0
      %1105 = vmatmul.mubr.bf16.gmra.mrb[0].mxu0 %v747
      %v1106 = vpop.f32.mrb[0].mxu0
      %v1107 = vadd.f32 %v345, %v1106
      %v1108 = vpop.f32.mrb[0].mxu0
      %v1109 = vpop.f32.mrb[0].mxu0
      %v1110 = vadd.f32 %v345, %v1109
      %v1111 = vpop.f32.mrb[0].mxu0
      %1112 = vmatprep.mubr.bf16.mxu0 0
      %1113 = vmatmul.mubr.bf16.gmra.mrb[0].mxu0 %v750
      %v1114 = vpop.f32.mrb[0].mxu0
      %v1115 = vadd.f32 %v345, %v1114
      %v1116 = vpop.f32.mrb[0].mxu0
      %v1117 = vpop.f32.mrb[0].mxu0
      %v1118 = vadd.f32 %v345, %v1117
      %v1119 = vpop.f32.mrb[0].mxu0
      %1120 = vmatprep.mubr.bf16.mxu0 0
      %1121 = vmatmul.mubr.bf16.gmra.mrb[0].mxu0 %v753
      %v1122 = vpop.f32.mrb[0].mxu0
      %v1123 = vadd.f32 %v345, %v1122
      %v1124 = vpop.f32.mrb[0].mxu0
      %v1125 = vpop.f32.mrb[0].mxu0
      %v1126 = vadd.f32 %v345, %v1125
      %v1127 = vpop.f32.mrb[0].mxu0
      %1128 = vmatprep.mubr.bf16.mxu0 0
      %1129 = vmatmul.mubr.bf16.gmra.mrb[0].mxu0 %v756
      %v1130 = vpop.f32.mrb[0].mxu0
      %v1131 = vadd.f32 %v345, %v1130
      %v1132 = vpop.f32.mrb[0].mxu0
      %v1133 = vpop.f32.mrb[0].mxu0
      %v1134 = vadd.f32 %v345, %v1133
      %v1135 = vpop.f32.mrb[0].mxu0
      %1136 = vmatprep.mubr.bf16.mxu0 0
      %1137 = vmatmul.mubr.bf16.gmra.mrb[0].mxu0 %v759
      %v1138 = vpop.f32.mrb[0].mxu0
      %v1139 = vadd.f32 %v345, %v1138
      %v1140 = vpop.f32.mrb[0].mxu0
      %v1141 = vpop.f32.mrb[0].mxu0
      %v1142 = vadd.f32 %v345, %v1141
      %v1143 = vpop.f32.mrb[0].mxu0
      %1144 = vmatprep.mubr.bf16.mxu0 0
      %1145 = vmatmul.mubr.bf16.gmra.mrb[0].mxu0 %v762
      %v1146 = vpop.f32.mrb[0].mxu0
      %v1147 = vadd.f32 %v345, %v1146
      %v1148 = vpop.f32.mrb[0].mxu0
      %v1149 = vpop.f32.mrb[0].mxu0
      %v1150 = vadd.f32 %v345, %v1149
      %v1151 = vpop.f32.mrb[0].mxu0
      %1152 = vmatprep.mubr.bf16.mxu0 0
      %1153 = vmatmul.mubr.bf16.gmra.mrb[0].mxu0 %v765
      %v1154 = vpop.f32.mrb[0].mxu0
      %v1155 = vadd.f32 %v345, %v1154
      %v1156 = vpop.f32.mrb[0].mxu0
      %v1157 = vpop.f32.mrb[0].mxu0
      %v1158 = vadd.f32 %v345, %v1157
      %v1159 = vpop.f32.mrb[0].mxu0
      %1160 = vmatprep.mubr.bf16.mxu0 0
      %1161 = vmatmul.mubr.bf16.gmra.mrb[0].mxu0 %v768
      %v1162 = vpop.f32.mrb[0].mxu0
      %v1163 = vadd.f32 %v345, %v1162
      %v1164 = vpop.f32.mrb[0].mxu0
      %v1165 = vpop.f32.mrb[0].mxu0
      %v1166 = vadd.f32 %v345, %v1165
      %v1167 = vpop.f32.mrb[0].mxu0
      %1168 = vmatprep.mubr.bf16.mxu0 0
      %1169 = vmatmul.mubr.bf16.gmra.mrb[0].mxu0 %v771
      %v1170 = vpop.f32.mrb[0].mxu0
      %v1171 = vadd.f32 %v345, %v1170
      %v1172 = vpop.f32.mrb[0].mxu0
      %v1173 = vpop.f32.mrb[0].mxu0
      %v1174 = vadd.f32 %v345, %v1173
      %v1175 = vpop.f32.mrb[0].mxu0
      %1176 = vmatprep.mubr.bf16.mxu0 0
      %1177 = vmatmul.mubr.bf16.gmra.mrb[0].mxu0 %v774
      %v1178 = vpop.f32.mrb[0].mxu0
      %v1179 = vadd.f32 %v345, %v1178
      %v1180 = vpop.f32.mrb[0].mxu0
      %v1181 = vpop.f32.mrb[0].mxu0
      %v1182 = vadd.f32 %v345, %v1181
      %v1183 = vpop.f32.mrb[0].mxu0
      %1184 = vmatprep.mubr.bf16.mxu0 0
      %1185 = vmatmul.mubr.bf16.gmra.mrb[0].mxu0 %v777
      %v1186 = vpop.f32.mrb[0].mxu0
      %v1187 = vadd.f32 %v345, %v1186
      %v1188 = vpop.f32.mrb[0].mxu0
      %v1189 = vpop.f32.mrb[0].mxu0
      %v1190 = vadd.f32 %v345, %v1189
      %v1191 = vpop.f32.mrb[0].mxu0
      %1192 = vmatprep.mubr.bf16.mxu0 0
      %1193 = vmatmul.mubr.bf16.gmra.mrb[0].mxu0 %v780
      %v1194 = vpop.f32.mrb[0].mxu0
      %v1195 = vadd.f32 %v345, %v1194
      %v1196 = vpop.f32.mrb[0].mxu0
      %v1197 = vpop.f32.mrb[0].mxu0
      %v1198 = vadd.f32 %v345, %v1197
      %v1199 = vpop.f32.mrb[0].mxu0
      %1200 = vmatprep.mubr.bf16.mxu0 0
      %1201 = vmatmul.mubr.bf16.gmra.mrb[0].mxu0 %v783
      %v1202 = vpop.f32.mrb[0].mxu0
      %v1203 = vadd.f32 %v345, %v1202
      %v1204 = vpop.f32.mrb[0].mxu0
      %v1205 = vpop.f32.mrb[0].mxu0
      %v1206 = vadd.f32 %v345, %v1205
      %v1207 = vpop.f32.mrb[0].mxu0
      %1208 = vmatprep.mubr.bf16.mxu0 0
      %1209 = vmatmul.mubr.bf16.gmra.mrb[0].mxu0 %v786
      %v1210 = vpop.f32.mrb[0].mxu0
      %v1211 = vadd.f32 %v345, %v1210
      %v1212 = vpop.f32.mrb[0].mxu0
      %v1213 = vpop.f32.mrb[0].mxu0
      %v1214 = vadd.f32 %v345, %v1213
      %v1215 = vpop.f32.mrb[0].mxu0
      %1216 = vmatprep.mubr.bf16.mxu0 0
      %1217 = vmatmul.mubr.bf16.gmra.mrb[0].mxu0 %v789
      %v1218 = vpop.f32.mrb[0].mxu0
      %v1219 = vadd.f32 %v345, %v1218
      %v1220 = vpop.f32.mrb[0].mxu0
      %v1221 = vpop.f32.mrb[0].mxu0
      %v1222 = vadd.f32 %v345, %v1221
      %v1223 = vpop.f32.mrb[0].mxu0
      %1224 = vmatprep.mubr.bf16.mxu0 0
      %1225 = vmatmul.mubr.bf16.gmra.mrb[0].mxu0 %v792
      %v1226 = vpop.f32.mrb[0].mxu0
      %v1227 = vadd.f32 %v345, %v1226
      %v1228 = vpop.f32.mrb[0].mxu0
      %v1229 = vpop.f32.mrb[0].mxu0
      %v1230 = vadd.f32 %v345, %v1229
      %v1231 = vpop.f32.mrb[0].mxu0
      %1232 = vmatprep.mubr.bf16.mxu0 0
      %1233 = vmatmul.mubr.bf16.gmra.mrb[0].mxu0 %v795
      %v1234 = vpop.f32.mrb[0].mxu0
      %v1235 = vadd.f32 %v345, %v1234
      %v1236 = vpop.f32.mrb[0].mxu0
      %v1237 = vpop.f32.mrb[0].mxu0
      %v1238 = vadd.f32 %v345, %v1237
      %v1239 = vpop.f32.mrb[0].mxu0
      %1240 = vmatprep.mubr.bf16.mxu0 0
      %1241 = vmatmul.mubr.bf16.gmra.mrb[0].mxu0 %v798
      %v1242 = vpop.f32.mrb[0].mxu0
      %v1243 = vadd.f32 %v345, %v1242
      %v1244 = vpop.f32.mrb[0].mxu0
      %v1245 = vpop.f32.mrb[0].mxu0
      %v1246 = vadd.f32 %v345, %v1245
      %v1247 = vpop.f32.mrb[0].mxu0
      %1248 = vmatprep.mubr.bf16.mxu0 0
      %1249 = vmatmul.mubr.bf16.gmra.mrb[0].mxu0 %v801
      %v1250 = vpop.f32.mrb[0].mxu0
      %v1251 = vadd.f32 %v345, %v1250
      %v1252 = vpop.f32.mrb[0].mxu0
      %v1253 = vpop.f32.mrb[0].mxu0
      %v1254 = vadd.f32 %v345, %v1253
      %v1255 = vpop.f32.mrb[0].mxu0
      %1256 = vmatprep.mubr.bf16.mxu0 0
      %1257 = vmatmul.mubr.bf16.gmra.mrb[0].mxu0 %v804
      %v1258 = vpop.f32.mrb[0].mxu0
      %v1259 = vadd.f32 %v345, %v1258
      %v1260 = vpop.f32.mrb[0].mxu0
      %v1261 = vpop.f32.mrb[0].mxu0
      %v1262 = vadd.f32 %v345, %v1261
      %v1263 = vpop.f32.mrb[0].mxu0
      %1264 = vmatprep.mubr.bf16.mxu0 0
      %1265 = vmatmul.mubr.bf16.gmra.mrb[0].mxu0 %v807
      %v1266 = vpop.f32.mrb[0].mxu0
      %v1267 = vadd.f32 %v345, %v1266
      %v1268 = vpop.f32.mrb[0].mxu0
      %v1269 = vpop.f32.mrb[0].mxu0
      %v1270 = vadd.f32 %v345, %v1269
      %v1271 = vpop.f32.mrb[0].mxu0
      %1272 = vmatprep.mubr.bf16.mxu0 0
      %1273 = vmatmul.mubr.bf16.gmra.mrb[0].mxu0 %v810
      %v1274 = vpop.f32.mrb[0].mxu0
      %v1275 = vadd.f32 %v345, %v1274
      %v1276 = vpop.f32.mrb[0].mxu0
      %v1277 = vpop.f32.mrb[0].mxu0
      %v1278 = vadd.f32 %v345, %v1277
      %v1279 = vpop.f32.mrb[0].mxu0
      %1280 = vmatprep.mubr.bf16.mxu0 0
      %1281 = vmatmul.mubr.bf16.gmra.mrb[0].mxu0 %v813
      %v1282 = vpop.f32.mrb[0].mxu0
      %v1283 = vadd.f32 %v345, %v1282
      %v1284 = vpop.f32.mrb[0].mxu0
      %v1285 = vpop.f32.mrb[0].mxu0
      %v1286 = vadd.f32 %v345, %v1285
      %v1287 = vpop.f32.mrb[0].mxu0
      %1288 = vmatprep.mubr.bf16.mxu0 0
      %1289 = vmatmul.mubr.bf16.gmra.mrb[0].mxu0 %v816
      %v1290 = vpop.f32.mrb[0].mxu0
      %v1291 = vadd.f32 %v345, %v1290
      %v1292 = vpop.f32.mrb[0].mxu0
      %v1293 = vpop.f32.mrb[0].mxu0
      %v1294 = vadd.f32 %v345, %v1293
      %v1295 = vpop.f32.mrb[0].mxu0
      %1296 = vmatprep.mubr.bf16.mxu0 0
      %1297 = vmatmul.mubr.bf16.gmra.mrb[0].mxu0 %v819
      %v1298 = vpop.f32.mrb[0].mxu0
      %v1299 = vadd.f32 %v345, %v1298
      %v1300 = vpop.f32.mrb[0].mxu0
      %v1301 = vpop.f32.mrb[0].mxu0
      %v1302 = vadd.f32 %v345, %v1301
      %v1303 = vpop.f32.mrb[0].mxu0
      %1304 = vmatprep.mubr.bf16.mxu0 0
      %1305 = vmatmul.mubr.bf16.gmra.mrb[0].mxu0 %v822
      %v1306 = vpop.f32.mrb[0].mxu0
      %v1307 = vadd.f32 %v345, %v1306
      %v1308 = vpop.f32.mrb[0].mxu0
      %v1309 = vpop.f32.mrb[0].mxu0
      %v1310 = vadd.f32 %v345, %v1309
      %v1311 = vpop.f32.mrb[0].mxu0
      %1312 = vmatprep.mubr.bf16.mxu0 0
      %1313 = vmatmul.mubr.bf16.gmra.mrb[0].mxu0 %v825
      %v1314 = vpop.f32.mrb[0].mxu0
      %v1315 = vadd.f32 %v345, %v1314
      %v1316 = vpop.f32.mrb[0].mxu0
      %v1317 = vpop.f32.mrb[0].mxu0
      %v1318 = vadd.f32 %v345, %v1317
      %v1319 = vpop.f32.mrb[0].mxu0
      %1320 = vmatprep.mubr.bf16.mxu0 0
      %1321 = vmatmul.mubr.bf16.gmra.mrb[0].mxu0 %v828
      %v1322 = vpop.f32.mrb[0].mxu0
      %v1323 = vadd.f32 %v345, %v1322
      %v1324 = vpop.f32.mrb[0].mxu0
      %v1325 = vpop.f32.mrb[0].mxu0
      %v1326 = vadd.f32 %v345, %v1325
      %v1327 = vpop.f32.mrb[0].mxu0
      %1328 = vmatprep.mubr.bf16.mxu0 0
      %1329 = vmatmul.mubr.bf16.gmra.mrb[0].mxu0 %v831
      %v1330 = vpop.f32.mrb[0].mxu0
      %v1331 = vadd.f32 %v345, %v1330
      %v1332 = vpop.f32.mrb[0].mxu0
      %v1333 = vpop.f32.mrb[0].mxu0
      %v1334 = vadd.f32 %v345, %v1333
      %v1335 = vpop.f32.mrb[0].mxu0
      %1336 = vmatprep.mubr.bf16.mxu0 0
      %1337 = vmatmul.mubr.bf16.gmra.mrb[0].mxu0 %v834
      %v1338 = vpop.f32.mrb[0].mxu0
      %v1339 = vadd.f32 %v345, %v1338
      %v1340 = vpop.f32.mrb[0].mxu0
      %v1341 = vpop.f32.mrb[0].mxu0
      %v1342 = vadd.f32 %v345, %v1341
      %v1343 = vpop.f32.mrb[0].mxu0
      %1344 = vmatprep.mubr.bf16.mxu0 0
      %1345 = vmatmul.mubr.bf16.gmra.mrb[0].mxu0 %v837
      %v1346 = vpop.f32.mrb[0].mxu0
      %v1347 = vadd.f32 %v345, %v1346
      %v1348 = vpop.f32.mrb[0].mxu0
      %v1349 = vpop.f32.mrb[0].mxu0
      %v1350 = vadd.f32 %v345, %v1349
      %v1351 = vpop.f32.mrb[0].mxu0
      %1352 = vmatprep.mubr.bf16.mxu0 0
      %1353 = vmatmul.mubr.bf16.gmra.mrb[0].mxu0 %v840
      %v1354 = vpop.f32.mrb[0].mxu0
      %v1355 = vadd.f32 %v345, %v1354
      %v1356 = vpop.f32.mrb[0].mxu0
      %v1357 = vpop.f32.mrb[0].mxu0
      %v1358 = vadd.f32 %v345, %v1357
      %v1359 = vpop.f32.mrb[0].mxu0
      %1360 = vmatprep.mubr.bf16.mxu0 0
      %1361 = vmatmul.mubr.bf16.gmra.mrb[0].mxu0 %v843
      %v1362 = vpop.f32.mrb[0].mxu0
      %v1363 = vadd.f32 %v345, %v1362
      %v1364 = vpop.f32.mrb[0].mxu0
      %v1365 = vpop.f32.mrb[0].mxu0
      %v1366 = vadd.f32 %v345, %v1365
      %v1367 = vpop.f32.mrb[0].mxu0
      %1368 = vmatprep.mubr.bf16.mxu0 0
      %1369 = vmatmul.mubr.bf16.gmra.mrb[0].mxu0 %v846
      %v1370 = vpop.f32.mrb[0].mxu0
      %v1371 = vadd.f32 %v345, %v1370
      %v1372 = vpop.f32.mrb[0].mxu0
      %v1373 = vpop.f32.mrb[0].mxu0
      %v1374 = vadd.f32 %v345, %v1373
      %v1375 = vpop.f32.mrb[0].mxu0
      %1376 = vmatprep.mubr.bf16.mxu0 0
      %1377 = vmatmul.mubr.bf16.gmra.mrb[0].mxu0 %v849
      %v1378 = vpop.f32.mrb[0].mxu0
      %v1379 = vadd.f32 %v345, %v1378
      %v1380 = vpop.f32.mrb[0].mxu0
      %v1381 = vpop.f32.mrb[0].mxu0
      %v1382 = vadd.f32 %v345, %v1381
      %v1383 = vpop.f32.mrb[0].mxu0
      %1384 = vmatprep.mubr.bf16.mxu0 0
      %1385 = vmatmul.mubr.bf16.gmra.mrb[0].mxu0 %v852
      %v1386 = vpop.f32.mrb[0].mxu0
      %v1387 = vadd.f32 %v345, %v1386
      %v1388 = vpop.f32.mrb[0].mxu0
      %v1389 = vpop.f32.mrb[0].mxu0
      %v1390 = vadd.f32 %v345, %v1389
      %v1391 = vpop.f32.mrb[0].mxu0
      %1392 = vmatprep.mubr.bf16.mxu0 0
      %1393 = vmatmul.mubr.bf16.gmra.mrb[0].mxu0 %v855
      %v1394 = vpop.f32.mrb[0].mxu0
      %v1395 = vadd.f32 %v345, %v1394
      %v1396 = vpop.f32.mrb[0].mxu0
      %v1397 = vpop.f32.mrb[0].mxu0
      %v1398 = vadd.f32 %v345, %v1397
      %v1399 = vpop.f32.mrb[0].mxu0
      %1400 = vmatprep.mubr.bf16.mxu0 0
      %1401 = vmatmul.mubr.bf16.gmra.mrb[0].mxu0 %v858
      %v1402 = vpop.f32.mrb[0].mxu0
      %v1403 = vadd.f32 %v345, %v1402
      %v1404 = vpop.f32.mrb[0].mxu0
      %v1405 = vpop.f32.mrb[0].mxu0
      %v1406 = vadd.f32 %v345, %v1405
      %v1407 = vpop.f32.mrb[0].mxu0
      %1408 = vdwg.mxu0
      %1409 = vst.msk [vmem:[%s208] sm:$0xff] %vm667, %v899
      %1410 = vst.msk [vmem:[%s208 + $0x8] sm:$0xff] %vm667, %v902
      %1411 = vst.msk [vmem:[%s208 + $0x10] sm:$0xff] %vm667, %v907
      %1412 = vst.msk [vmem:[%s208 + $0x18] sm:$0xff] %vm667, %v910
      %1413 = vst.msk [vmem:[%s208 + $0x20] sm:$0xff] %vm667, %v915
      %1414 = vst.msk [vmem:[%s208 + $0x28] sm:$0xff] %vm667, %v918
      %1415 = vst.msk [vmem:[%s208 + $0x30] sm:$0xff] %vm667, %v923
      %1416 = vst.msk [vmem:[%s208 + $0x38] sm:$0xff] %vm667, %v926
      %1417 = vst.msk [vmem:[%s208 + $0x40] sm:$0xff] %vm667, %v931
      %1418 = vst.msk [vmem:[%s208 + $0x48] sm:$0xff] %vm667, %v934
      %1419 = vst.msk [vmem:[%s208 + $0x50] sm:$0xff] %vm667, %v939
      %1420 = vst.msk [vmem:[%s208 + $0x58] sm:$0xff] %vm667, %v942
      %1421 = vst.msk [vmem:[%s208 + $0x60] sm:$0xff] %vm667, %v947
      %1422 = vst.msk [vmem:[%s208 + $0x68] sm:$0xff] %vm667, %v950
      %1423 = vst.msk [vmem:[%s208 + $0x70] sm:$0xff] %vm667, %v955
      %1424 = vst.msk [vmem:[%s208 + $0x78] sm:$0xff] %vm667, %v958
      %1425 = vst.msk [vmem:[%s208 + $0x80] sm:$0xff] %vm667, %v963
      %1426 = vst.msk [vmem:[%s208 + $0x88] sm:$0xff] %vm667, %v966
      %1427 = vst.msk [vmem:[%s208 + $0x90] sm:$0xff] %vm667, %v971
      %1428 = vst.msk [vmem:[%s208 + $0x98] sm:$0xff] %vm667, %v974
      %1429 = vst.msk [vmem:[%s208 + $0xa0] sm:$0xff] %vm667, %v979
      %1430 = vst.msk [vmem:[%s208 + $0xa8] sm:$0xff] %vm667, %v982
      %1431 = vst.msk [vmem:[%s208 + $0xb0] sm:$0xff] %vm667, %v987
      %1432 = vst.msk [vmem:[%s208 + $0xb8] sm:$0xff] %vm667, %v990
      %1433 = vst.msk [vmem:[%s208 + $0xc0] sm:$0xff] %vm667, %v995
      %1434 = vst.msk [vmem:[%s208 + $0xc8] sm:$0xff] %vm667, %v998
      %1435 = vst.msk [vmem:[%s208 + $0xd0] sm:$0xff] %vm667, %v1003
      %1436 = vst.msk [vmem:[%s208 + $0xd8] sm:$0xff] %vm667, %v1006
      %1437 = vst.msk [vmem:[%s208 + $0xe0] sm:$0xff] %vm667, %v1011
      %1438 = vst.msk [vmem:[%s208 + $0xe8] sm:$0xff] %vm667, %v1014
      %1439 = vst.msk [vmem:[%s208 + $0xf0] sm:$0xff] %vm667, %v1019
      %1440 = vst.msk [vmem:[%s208 + $0xf8] sm:$0xff] %vm667, %v1022
      %1441 = vst.msk [vmem:[%s208 + $0x100] sm:$0xff] %vm667, %v1027
      %1442 = vst.msk [vmem:[%s208 + $0x108] sm:$0xff] %vm667, %v1030
      %1443 = vst.msk [vmem:[%s208 + $0x110] sm:$0xff] %vm667, %v1035
      %1444 = vst.msk [vmem:[%s208 + $0x118] sm:$0xff] %vm667, %v1038
      %1445 = vst.msk [vmem:[%s208 + $0x120] sm:$0xff] %vm667, %v1043
      %1446 = vst.msk [vmem:[%s208 + $0x128] sm:$0xff] %vm667, %v1046
      %1447 = vst.msk [vmem:[%s208 + $0x130] sm:$0xff] %vm667, %v1051
      %1448 = vst.msk [vmem:[%s208 + $0x138] sm:$0xff] %vm667, %v1054
      %1449 = vst.msk [vmem:[%s208 + $0x140] sm:$0xff] %vm667, %v1059
      %1450 = vst.msk [vmem:[%s208 + $0x148] sm:$0xff] %vm667, %v1062
      %1451 = vst.msk [vmem:[%s208 + $0x150] sm:$0xff] %vm667, %v1067
      %1452 = vst.msk [vmem:[%s208 + $0x158] sm:$0xff] %vm667, %v1070
      %1453 = vst.msk [vmem:[%s208 + $0x160] sm:$0xff] %vm667, %v1075
      %1454 = vst.msk [vmem:[%s208 + $0x168] sm:$0xff] %vm667, %v1078
      %1455 = vst.msk [vmem:[%s208 + $0x170] sm:$0xff] %vm667, %v1083
      %1456 = vst.msk [vmem:[%s208 + $0x178] sm:$0xff] %vm667, %v1086
      %1457 = vst.msk [vmem:[%s208 + $0x180] sm:$0xff] %vm667, %v1091
      %1458 = vst.msk [vmem:[%s208 + $0x188] sm:$0xff] %vm667, %v1094
      %1459 = vst.msk [vmem:[%s208 + $0x190] sm:$0xff] %vm667, %v1099
      %1460 = vst.msk [vmem:[%s208 + $0x198] sm:$0xff] %vm667, %v1102
      %1461 = vst.msk [vmem:[%s208 + $0x1a0] sm:$0xff] %vm667, %v1107
      %1462 = vst.msk [vmem:[%s208 + $0x1a8] sm:$0xff] %vm667, %v1110
      %1463 = vst.msk [vmem:[%s208 + $0x1b0] sm:$0xff] %vm667, %v1115
      %1464 = vst.msk [vmem:[%s208 + $0x1b8] sm:$0xff] %vm667, %v1118
      %1465 = vst.msk [vmem:[%s208 + $0x1c0] sm:$0xff] %vm667, %v1123
      %1466 = vst.msk [vmem:[%s208 + $0x1c8] sm:$0xff] %vm667, %v1126
      %1467 = vst.msk [vmem:[%s208 + $0x1d0] sm:$0xff] %vm667, %v1131
      %1468 = vst.msk [vmem:[%s208 + $0x1d8] sm:$0xff] %vm667, %v1134
      %1469 = vst.msk [vmem:[%s208 + $0x1e0] sm:$0xff] %vm667, %v1139
      %1470 = vst.msk [vmem:[%s208 + $0x1e8] sm:$0xff] %vm667, %v1142
      %1471 = vst.msk [vmem:[%s208 + $0x1f0] sm:$0xff] %vm667, %v1147
      %1472 = vst.msk [vmem:[%s208 + $0x1f8] sm:$0xff] %vm667, %v1150
      %1473 = vst.msk [vmem:[%s208 + $0x200] sm:$0xff] %vm667, %v1155
      %1474 = vst.msk [vmem:[%s208 + $0x208] sm:$0xff] %vm667, %v1158
      %1475 = vst.msk [vmem:[%s208 + $0x210] sm:$0xff] %vm667, %v1163
      %1476 = vst.msk [vmem:[%s208 + $0x218] sm:$0xff] %vm667, %v1166
      %1477 = vst.msk [vmem:[%s208 + $0x220] sm:$0xff] %vm667, %v1171
      %1478 = vst.msk [vmem:[%s208 + $0x228] sm:$0xff] %vm667, %v1174
      %1479 = vst.msk [vmem:[%s208 + $0x230] sm:$0xff] %vm667, %v1179
      %1480 = vst.msk [vmem:[%s208 + $0x238] sm:$0xff] %vm667, %v1182
      %1481 = vst.msk [vmem:[%s208 + $0x240] sm:$0xff] %vm667, %v1187
      %1482 = vst.msk [vmem:[%s208 + $0x248] sm:$0xff] %vm667, %v1190
      %1483 = vst.msk [vmem:[%s208 + $0x250] sm:$0xff] %vm667, %v1195
      %1484 = vst.msk [vmem:[%s208 + $0x258] sm:$0xff] %vm667, %v1198
      %1485 = vst.msk [vmem:[%s208 + $0x260] sm:$0xff] %vm667, %v1203
      %1486 = vst.msk [vmem:[%s208 + $0x268] sm:$0xff] %vm667, %v1206
      %1487 = vst.msk [vmem:[%s208 + $0x270] sm:$0xff] %vm667, %v1211
      %1488 = vst.msk [vmem:[%s208 + $0x278] sm:$0xff] %vm667, %v1214
      %1489 = vst.msk [vmem:[%s208 + $0x280] sm:$0xff] %vm667, %v1219
      %1490 = vst.msk [vmem:[%s208 + $0x288] sm:$0xff] %vm667, %v1222
      %1491 = vst.msk [vmem:[%s208 + $0x290] sm:$0xff] %vm667, %v1227
      %1492 = vst.msk [vmem:[%s208 + $0x298] sm:$0xff] %vm667, %v1230
      %1493 = vst.msk [vmem:[%s208 + $0x2a0] sm:$0xff] %vm667, %v1235
      %1494 = vst.msk [vmem:[%s208 + $0x2a8] sm:$0xff] %vm667, %v1238
      %1495 = vst.msk [vmem:[%s208 + $0x2b0] sm:$0xff] %vm667, %v1243
      %1496 = vst.msk [vmem:[%s208 + $0x2b8] sm:$0xff] %vm667, %v1246
      %1497 = vst.msk [vmem:[%s208 + $0x2c0] sm:$0xff] %vm667, %v1251
      %1498 = vst.msk [vmem:[%s208 + $0x2c8] sm:$0xff] %vm667, %v1254
      %1499 = vst.msk [vmem:[%s208 + $0x2d0] sm:$0xff] %vm667, %v1259
      %1500 = vst.msk [vmem:[%s208 + $0x2d8] sm:$0xff] %vm667, %v1262
      %1501 = vst.msk [vmem:[%s208 + $0x2e0] sm:$0xff] %vm667, %v1267
      %1502 = vst.msk [vmem:[%s208 + $0x2e8] sm:$0xff] %vm667, %v1270
      %1503 = vst.msk [vmem:[%s208 + $0x2f0] sm:$0xff] %vm667, %v1275
      %1504 = vst.msk [vmem:[%s208 + $0x2f8] sm:$0xff] %vm667, %v1278
      %1505 = vst.msk [vmem:[%s208 + $0x300] sm:$0xff] %vm667, %v1283
      %1506 = vst.msk [vmem:[%s208 + $0x308] sm:$0xff] %vm667, %v1286
      %1507 = vst.msk [vmem:[%s208 + $0x310] sm:$0xff] %vm667, %v1291
      %1508 = vst.msk [vmem:[%s208 + $0x318] sm:$0xff] %vm667, %v1294
      %1509 = vst.msk [vmem:[%s208 + $0x320] sm:$0xff] %vm667, %v1299
      %1510 = vst.msk [vmem:[%s208 + $0x328] sm:$0xff] %vm667, %v1302
      %1511 = vst.msk [vmem:[%s208 + $0x330] sm:$0xff] %vm667, %v1307
      %1512 = vst.msk [vmem:[%s208 + $0x338] sm:$0xff] %vm667, %v1310
      %1513 = vst.msk [vmem:[%s208 + $0x340] sm:$0xff] %vm667, %v1315
      %1514 = vst.msk [vmem:[%s208 + $0x348] sm:$0xff] %vm667, %v1318
      %1515 = vst.msk [vmem:[%s208 + $0x350] sm:$0xff] %vm667, %v1323
      %1516 = vst.msk [vmem:[%s208 + $0x358] sm:$0xff] %vm667, %v1326
      %1517 = vst.msk [vmem:[%s208 + $0x360] sm:$0xff] %vm667, %v1331
      %1518 = vst.msk [vmem:[%s208 + $0x368] sm:$0xff] %vm667, %v1334
      %1519 = vst.msk [vmem:[%s208 + $0x370] sm:$0xff] %vm667, %v1339
      %1520 = vst.msk [vmem:[%s208 + $0x378] sm:$0xff] %vm667, %v1342
      %1521 = vst.msk [vmem:[%s208 + $0x380] sm:$0xff] %vm667, %v1347
      %1522 = vst.msk [vmem:[%s208 + $0x388] sm:$0xff] %vm667, %v1350
      %1523 = vst.msk [vmem:[%s208 + $0x390] sm:$0xff] %vm667, %v1355
      %1524 = vst.msk [vmem:[%s208 + $0x398] sm:$0xff] %vm667, %v1358
      %1525 = vst.msk [vmem:[%s208 + $0x3a0] sm:$0xff] %vm667, %v1363
      %1526 = vst.msk [vmem:[%s208 + $0x3a8] sm:$0xff] %vm667, %v1366
      %1527 = vst.msk [vmem:[%s208 + $0x3b0] sm:$0xff] %vm667, %v1371
      %1528 = vst.msk [vmem:[%s208 + $0x3b8] sm:$0xff] %vm667, %v1374
      %1529 = vst.msk [vmem:[%s208 + $0x3c0] sm:$0xff] %vm667, %v1379
      %1530 = vst.msk [vmem:[%s208 + $0x3c8] sm:$0xff] %vm667, %v1382
      %1531 = vst.msk [vmem:[%s208 + $0x3d0] sm:$0xff] %vm667, %v1387
      %1532 = vst.msk [vmem:[%s208 + $0x3d8] sm:$0xff] %vm667, %v1390
      %1533 = vst.msk [vmem:[%s208 + $0x3e0] sm:$0xff] %vm667, %v1395
      %1534 = vst.msk [vmem:[%s208 + $0x3e8] sm:$0xff] %vm667, %v1398
      %1535 = vst.msk [vmem:[%s208 + $0x3f0] sm:$0xff] %vm667, %v1403
      %1536 = vst.msk [vmem:[%s208 + $0x3f8] sm:$0xff] %vm667, %v1406
      %s1537 = smul.u32 128, %s19
      %p1538 = scmp.lt.s32.totalorder %s18, 1
      %s1539 = scalar_select %p1538, %s18, 1
      %p1540 = scmp.lt.s32.totalorder %s1537, 127
      %s1541 = scalar_select %p1540, %s1537, 127
      %s1542 = smul.addr %s1539, 128
      %s1543 = sadd.s32 %s1541, %s1542
      %s1544 = smul.addr %s1543, 8
      %s1545 = scalar_lea.vmem %s3, %s1544
      // Predicated region
      $region33: #{final_decoder_forward.9} parent=31 // pred_check
        %p1546 = pneg %p116
      $region34: #{final_decoder_forward.9} parent=31 // pred_check_branch
        %1548 = sbr.rel (%p1546) target = $region36
      $region35: #{final_decoder_forward.9} parent=31 // pred_region
        %s1549 = smul.u32 128, %s19
      $region36: #{final_decoder_forward.9} parent=31 // pred_fallthru
        _
    $region32: #{final_decoder_forward.9} parent=5 // pred_fallthru
      _
    %p1550 = scmp.le.s32.totalorder 2, %s9
    // Predicated region
    $region37: #{final_decoder_forward.9} parent=5 // pred_check
      %p1551 = pneg %p1550
    $region38: #{final_decoder_forward.9} parent=5 // pred_check_branch
      %1553 = sbr.rel (%p1551) target = $region40
    $region39: #{final_decoder_forward.9} parent=5 // pred_region
      %s1554 = ssub.s32 %s9, 2
      // Predicated region
      $region41: #{final_decoder_forward.9} parent=39 // pred_check
        %p1555 = pneg %p122
      $region42: #{final_decoder_forward.9} parent=39 // pred_check_branch
        %1557 = sbr.rel (%p1555) target = $region44
      $region43: #{final_decoder_forward.9} parent=39 // pred_region
        %s1558 = smul.u32 128, %s21
        %p1559 = scmp.lt.s32.totalorder %s20, 1
        %s1560 = scalar_select %p1559, %s20, 1
        %p1561 = scmp.lt.s32.totalorder %s1558, 127
        %s1562 = scalar_select %p1561, %s1558, 127
        %s1563 = smul.addr %s1560, 128
        %s1564 = sadd.s32 %s1562, %s1563
        %s1565 = smul.addr %s1564, 8
        %s1566 = scalar_lea.vmem %s3, %s1565
      $region44: #{final_decoder_forward.9} parent=39 // pred_fallthru
        _
    $region40: #{final_decoder_forward.9} parent=5 // pred_fallthru
      _
  $region6: #{final_decoder_forward.9} parent=0 // loop_footer
    %s13 = sadd.s32 1, %s9
  $region7: #{final_decoder_forward.9} parent=0 // loop_footer_branch
    %8 = sbr.rel target = $region3
  $region8: #{final_decoder_forward.9} parent=0 // loop_exit
    _

// kernel: final_decoder_forward.8
$region0: #{final_decoder_forward.8}
  #allocation0 [shape = 'u32[]', space=smem, size = 0x4, offset = 0x4, fixed_abs, tag = 'smem constant byte address 0x4 - core index']
  #allocation1 [shape = 'u32[144,128]{1,0:T(1,128)}', space=vmem, size = 0x12000, scoped, tag = 'internal scratch']
  %s0 = inlined_call_operand.vmem [shape: bf16[2,1024,36], index: 0, kind: input, shape index: {}]
  %s1 = inlined_call_operand.vmem [shape: bf16[36,4], index: 1, kind: input, shape index: {}]
  %s2 = inlined_call_operand.vmem [shape: f32[1,4], index: 2, kind: input, shape index: {}]
  %s3 = inlined_call_operand.vmem [shape: bf16[2,1024,4], index: 3, kind: output, shape index: {}]
  %s4 = sld [smem:[#allocation0]]
  $region45: #{final_decoder_forward.8} parent=0
    _
  %s6 = ssub.s32 1, %s4
  %s7 = scalar_select 0, %s6, %s4
  loop: start=0, step=1, limit=4
  $region2: #{final_decoder_forward.8} parent=0 // loop_pre_header
    _
  $region3: #{final_decoder_forward.8} parent=0 // loop_header
    %s9 = sphi 0, %s13
    %p10 = scmp.ge.s32.totalorder %s9, 4
    %s16 = sphi 0, %s28
    %s17 = sphi 0, %s24
    %s18 = sphi 0, %s16
    %s19 = sphi 0, %s17
    %s20 = sphi 0, %s18
    %s21 = sphi 0, %s19
    %s33 = sphi 0, %s35
    %s36 = sphi 0, %s33
    %s37 = sphi 0, %s36
    %s53 = sphi 0, %s37
    %s57 = sphi 0, %s57
    %s59 = sphi 0, %s57
    %s60 = sphi 0, %s59
    %s74 = sphi 0, %s60
    %s78 = sphi 0, %s78
    %s80 = sphi 0, %s78
    %s81 = sphi 0, %s80
    %s95 = sphi 0, %s81
    %s103 = sphi 0, %s105
    %s106 = sphi 0, %s103
    %s107 = sphi 0, %s106
    %s123 = sphi 0, %s107
  $region4: #{final_decoder_forward.8} parent=0 // loop_header_branch
    %12 = sbr.rel (%p10) target = $region8
  $region5: #{final_decoder_forward.8} parent=0 // loop_body
    %s14 = ssub.s32 %s9, 1
    %s15 = ssub.s32 %s9, 2
    %s22 = sadd.s32 1, %s17
    %p23 = scmp.ge.s32.totalorder %s22, 1
    %s24 = scalar_select %p23, 0, %s22
    %s25 = sadd.s32 1, %s16
    %s26 = scalar_select %p23, %s25, %s16
    %p27 = scmp.ge.s32.totalorder %s26, 2
    %s28 = scalar_select %p27, 0, %s26
    %s29 = ssub.s32 %s16, %s28
    %s30 = ssub.s32 %s17, %s24
    %s31 = sor.u32 %s29, %s30
    %p32 = scmp.eq.s32.totalorder %s31, 0
    %s34 = sadd.s32 %s33, 1
    %s35 = scalar_select %p32, %s33, %s34
    %p38 = pneg %p32
    %p39 = scmp.eq.s32.totalorder %s9, 1
    %p40 = por %p38, %p39
    %p41 = scmp.ne.s32.totalorder %s33, %s36
    %p42 = scmp.eq.s32.totalorder %s9, 0
    %p43 = por %p41, %p42
    %p44 = scmp.ne.s32.totalorder %s33, %s36
    %p45 = scmp.eq.s32.totalorder %s14, 1
    %p46 = por %p44, %p45
    %p47 = scmp.ne.s32.totalorder %s36, %s37
    %p48 = scmp.eq.s32.totalorder %s14, 0
    %p49 = por %p47, %p48
    %p50 = scmp.ne.s32.totalorder %s36, %s37
    %p51 = scmp.eq.s32.totalorder %s15, 1
    %p52 = por %p50, %p51
    %p54 = scmp.ne.s32.totalorder %s37, %s53
    %p55 = scmp.eq.s32.totalorder %s15, 0
    %p56 = por %p54, %p55
    %s58 = sadd.s32 %s57, 1
    %p61 = scmp.eq.s32.totalorder %s9, 1
    %p62 = scmp.ne.s32.totalorder %s57, %s59
    %p63 = scmp.eq.s32.totalorder %s9, 0
    %p64 = por %p62, %p63
    %p65 = scmp.ne.s32.totalorder %s57, %s59
    %p66 = scmp.eq.s32.totalorder %s14, 1
    %p67 = por %p65, %p66
    %p68 = scmp.ne.s32.totalorder %s59, %s60
    %p69 = scmp.eq.s32.totalorder %s14, 0
    %p70 = por %p68, %p69
    %p71 = scmp.ne.s32.totalorder %s59, %s60
    %p72 = scmp.eq.s32.totalorder %s15, 1
    %p73 = por %p71, %p72
    %p75 = scmp.ne.s32.totalorder %s60, %s74
    %p76 = scmp.eq.s32.totalorder %s15, 0
    %p77 = por %p75, %p76
    %s79 = sadd.s32 %s78, 1
    %p82 = scmp.eq.s32.totalorder %s9, 1
    %p83 = scmp.ne.s32.totalorder %s78, %s80
    %p84 = scmp.eq.s32.totalorder %s9, 0
    %p85 = por %p83, %p84
    %p86 = scmp.ne.s32.totalorder %s78, %s80
    %p87 = scmp.eq.s32.totalorder %s14, 1
    %p88 = por %p86, %p87
    %p89 = scmp.ne.s32.totalorder %s80, %s81
    %p90 = scmp.eq.s32.totalorder %s14, 0
    %p91 = por %p89, %p90
    %p92 = scmp.ne.s32.totalorder %s80, %s81
    %p93 = scmp.eq.s32.totalorder %s15, 1
    %p94 = por %p92, %p93
    %p96 = scmp.ne.s32.totalorder %s81, %s95
    %p97 = scmp.eq.s32.totalorder %s15, 0
    %p98 = por %p96, %p97
    %s99 = ssub.s32 %s16, %s28
    %s100 = ssub.s32 %s17, %s24
    %s101 = sor.u32 %s99, %s100
    %p102 = scmp.eq.s32.totalorder %s101, 0
    %s104 = sadd.s32 %s103, 1
    %s105 = scalar_select %p102, %s103, %s104
    %p108 = pneg %p102
    %p109 = scmp.eq.s32.totalorder %s9, 1
    %p110 = por %p108, %p109
    %p111 = scmp.ne.s32.totalorder %s103, %s106
    %p112 = scmp.eq.s32.totalorder %s9, 0
    %p113 = por %p111, %p112
    %p114 = scmp.ne.s32.totalorder %s103, %s106
    %p115 = scmp.eq.s32.totalorder %s14, 1
    %p116 = por %p114, %p115
    %p117 = scmp.ne.s32.totalorder %s106, %s107
    %p118 = scmp.eq.s32.totalorder %s14, 0
    %p119 = por %p117, %p118
    %p120 = scmp.ne.s32.totalorder %s106, %s107
    %p121 = scmp.eq.s32.totalorder %s15, 1
    %p122 = por %p120, %p121
    %p124 = scmp.ne.s32.totalorder %s107, %s123
    %p125 = scmp.eq.s32.totalorder %s15, 0
    %p126 = por %p124, %p125
    %p127 = scmp.le.s32.totalorder 1, %s9
    %p128 = scmp.lt.s32.totalorder %s9, 3
    %p129 = pnand %p127, %p128
    %p130 = pneg %p129
    // Predicated region
    $region9: #{final_decoder_forward.8} parent=5 // pred_check
      _
    $region10: #{final_decoder_forward.8} parent=5 // pred_check_branch
      %132 = sbr.rel (%p129) target = $region12
    $region11: #{final_decoder_forward.8} parent=5 // pred_region
      %s133 = ssub.s32 %s9, 1
      // Predicated region
      $region13: #{final_decoder_forward.8} parent=11 // pred_check
        %p134 = pneg %p70
      $region14: #{final_decoder_forward.8} parent=11 // pred_check_branch
        %136 = sbr.rel (%p134) target = $region16
      $region15: #{final_decoder_forward.8} parent=11 // pred_region
        _
      $region16: #{final_decoder_forward.8} parent=11 // pred_fallthru
        _
      // Predicated region
      $region17: #{final_decoder_forward.8} parent=11 // pred_check
        %p137 = pneg %p91
      $region18: #{final_decoder_forward.8} parent=11 // pred_check_branch
        %139 = sbr.rel (%p137) target = $region20
      $region19: #{final_decoder_forward.8} parent=11 // pred_region
        _
      $region20: #{final_decoder_forward.8} parent=11 // pred_fallthru
        _
    $region12: #{final_decoder_forward.8} parent=5 // pred_fallthru
      _
    %p140 = scmp.lt.s32.totalorder %s9, 2
    // Predicated region
    $region21: #{final_decoder_forward.8} parent=5 // pred_check
      %p141 = pneg %p140
    $region22: #{final_decoder_forward.8} parent=5 // pred_check_branch
      %143 = sbr.rel (%p141) target = $region24
    $region23: #{final_decoder_forward.8} parent=5 // pred_region
      // Predicated region
      $region25: #{final_decoder_forward.8} parent=23 // pred_check
        %p144 = pneg %p43
      $region26: #{final_decoder_forward.8} parent=23 // pred_check_branch
        %146 = sbr.rel (%p144) target = $region28
      $region27: #{final_decoder_forward.8} parent=23 // pred_region
        %s147 = smul.u32 128, %s17
        %p148 = scmp.lt.s32.totalorder %s16, 1
        %s149 = scalar_select %p148, %s16, 1
        %p150 = scmp.lt.s32.totalorder %s147, 127
        %s151 = scalar_select %p150, %s147, 127
        %s152 = smul.addr %s149, 128
        %s153 = sadd.s32 %s151, %s152
        %s154 = smul.addr %s153, 4
        %s155 = scalar_lea.vmem %s0, %s154
        %s156 = smul.u32 128, %s17
      $region28: #{final_decoder_forward.8} parent=23 // pred_fallthru
        _
    $region24: #{final_decoder_forward.8} parent=5 // pred_fallthru
      _
    %p157 = scmp.le.s32.totalorder 1, %s9
    %p158 = scmp.lt.s32.totalorder %s9, 3
    %p159 = pnand %p157, %p158
    %p160 = pneg %p159
    // Predicated region
    $region29: #{final_decoder_forward.8} parent=5 // pred_check
      _
    $region30: #{final_decoder_forward.8} parent=5 // pred_check_branch
      %162 = sbr.rel (%p159) target = $region32
    $region31: #{final_decoder_forward.8} parent=5 // pred_region
      %s163 = ssub.s32 %s9, 1
      %s164 = smul.u32 128, %s19
      %p165 = scmp.lt.s32.totalorder %s18, 1
      %s166 = scalar_select %p165, %s18, 1
      %p167 = scmp.lt.s32.totalorder %s164, 127
      %s168 = scalar_select %p167, %s164, 127
      %s169 = smul.addr %s166, 128
      %s170 = sadd.s32 %s168, %s169
      %s171 = smul.addr %s170, 4
      %s172 = scalar_lea.vmem %s0, %s171
      %p173 = pneg %p49
      %p174 = pneg %p46
      %p175 = pneg %p70
      %p176 = pneg %p67
      %p177 = pneg %p91
      %p178 = pneg %p88
      %p179 = pneg %p119
      %p180 = pneg %p116
      %s181 = smul.u32 128, %s19
      %p182 = scmp.lt.s32.totalorder %s18, 1
      %s183 = scalar_select %p182, %s18, 1
      %p184 = scmp.lt.s32.totalorder %s181, 127
      %s185 = scalar_select %p184, %s181, 127
      %s186 = smul.addr %s183, 128
      %s187 = sadd.s32 %s185, %s186
      %s188 = smul.addr %s187, 4
      %s189 = scalar_lea.vmem %s3, %s188
      %s190 = smul.u32 128, %s19
      %p191 = scmp.lt.s32.totalorder %s18, 1
      %s192 = scalar_select %p191, %s18, 1
      %p193 = scmp.lt.s32.totalorder %s190, 127
      %s194 = scalar_select %p193, %s190, 127
      %s195 = smul.addr %s192, 128
      %s196 = sadd.s32 %s194, %s195
      %s197 = smul.addr %s196, 4
      %s198 = scalar_lea.vmem %s0, %s197
      %s199 = smul.u32 128, %s19
      %s200 = smul.u32 128, %s19
      %p201 = scmp.lt.s32.totalorder %s18, 1
      %s202 = scalar_select %p201, %s18, 1
      %p203 = scmp.lt.s32.totalorder %s200, 127
      %s204 = scalar_select %p203, %s200, 127
      %s205 = smul.addr %s202, 128
      %s206 = sadd.s32 %s204, %s205
      %s207 = smul.addr %s206, 4
      %s208 = scalar_lea.vmem %s3, %s207
      %s209 = smul.u32 128, %s19
      %v211 = vld [vmem:[%s198] sm:$0xf]
      %v212 = vld [vmem:[%s198 + $0x4] sm:$0xf]
      %v213 = vld [vmem:[%s198 + $0x8] sm:$0xf]
      %v214 = vld [vmem:[%s198 + $0xc] sm:$0xf]
      %v215 = vld [vmem:[%s198 + $0x10] sm:$0xf]
      %v216 = vld [vmem:[%s198 + $0x14] sm:$0xf]
      %v217 = vld [vmem:[%s198 + $0x18] sm:$0xf]
      %v218 = vld [vmem:[%s198 + $0x1c] sm:$0xf]
      %v219 = vld [vmem:[%s198 + $0x20] sm:$0xf]
      %v220 = vld [vmem:[%s198 + $0x24] sm:$0xf]
      %v221 = vld [vmem:[%s198 + $0x28] sm:$0xf]
      %v222 = vld [vmem:[%s198 + $0x2c] sm:$0xf]
      %v223 = vld [vmem:[%s198 + $0x30] sm:$0xf]
      %v224 = vld [vmem:[%s198 + $0x34] sm:$0xf]
      %v225 = vld [vmem:[%s198 + $0x38] sm:$0xf]
      %v226 = vld [vmem:[%s198 + $0x3c] sm:$0xf]
      %v227 = vld [vmem:[%s198 + $0x40] sm:$0xf]
      %v228 = vld [vmem:[%s198 + $0x44] sm:$0xf]
      %v229 = vld [vmem:[%s198 + $0x48] sm:$0xf]
      %v230 = vld [vmem:[%s198 + $0x4c] sm:$0xf]
      %v231 = vld [vmem:[%s198 + $0x50] sm:$0xf]
      %v232 = vld [vmem:[%s198 + $0x54] sm:$0xf]
      %v233 = vld [vmem:[%s198 + $0x58] sm:$0xf]
      %v234 = vld [vmem:[%s198 + $0x5c] sm:$0xf]
      %v235 = vld [vmem:[%s198 + $0x60] sm:$0xf]
      %v236 = vld [vmem:[%s198 + $0x64] sm:$0xf]
      %v237 = vld [vmem:[%s198 + $0x68] sm:$0xf]
      %v238 = vld [vmem:[%s198 + $0x6c] sm:$0xf]
      %v239 = vld [vmem:[%s198 + $0x70] sm:$0xf]
      %v240 = vld [vmem:[%s198 + $0x74] sm:$0xf]
      %v241 = vld [vmem:[%s198 + $0x78] sm:$0xf]
      %v242 = vld [vmem:[%s198 + $0x7c] sm:$0xf]
      %v243 = vld [vmem:[%s198 + $0x80] sm:$0xf]
      %v244 = vld [vmem:[%s198 + $0x84] sm:$0xf]
      %v245 = vld [vmem:[%s198 + $0x88] sm:$0xf]
      %v246 = vld [vmem:[%s198 + $0x8c] sm:$0xf]
      %v247 = vld [vmem:[%s198 + $0x90] sm:$0xf]
      %v248 = vld [vmem:[%s198 + $0x94] sm:$0xf]
      %v249 = vld [vmem:[%s198 + $0x98] sm:$0xf]
      %v250 = vld [vmem:[%s198 + $0x9c] sm:$0xf]
      %v251 = vld [vmem:[%s198 + $0xa0] sm:$0xf]
      %v252 = vld [vmem:[%s198 + $0xa4] sm:$0xf]
      %v253 = vld [vmem:[%s198 + $0xa8] sm:$0xf]
      %v254 = vld [vmem:[%s198 + $0xac] sm:$0xf]
      %v255 = vld [vmem:[%s198 + $0xb0] sm:$0xf]
      %v256 = vld [vmem:[%s198 + $0xb4] sm:$0xf]
      %v257 = vld [vmem:[%s198 + $0xb8] sm:$0xf]
      %v258 = vld [vmem:[%s198 + $0xbc] sm:$0xf]
      %v259 = vld [vmem:[%s198 + $0xc0] sm:$0xf]
      %v260 = vld [vmem:[%s198 + $0xc4] sm:$0xf]
      %v261 = vld [vmem:[%s198 + $0xc8] sm:$0xf]
      %v262 = vld [vmem:[%s198 + $0xcc] sm:$0xf]
      %v263 = vld [vmem:[%s198 + $0xd0] sm:$0xf]
      %v264 = vld [vmem:[%s198 + $0xd4] sm:$0xf]
      %v265 = vld [vmem:[%s198 + $0xd8] sm:$0xf]
      %v266 = vld [vmem:[%s198 + $0xdc] sm:$0xf]
      %v267 = vld [vmem:[%s198 + $0xe0] sm:$0xf]
      %v268 = vld [vmem:[%s198 + $0xe4] sm:$0xf]
      %v269 = vld [vmem:[%s198 + $0xe8] sm:$0xf]
      %v270 = vld [vmem:[%s198 + $0xec] sm:$0xf]
      %v271 = vld [vmem:[%s198 + $0xf0] sm:$0xf]
      %v272 = vld [vmem:[%s198 + $0xf4] sm:$0xf]
      %v273 = vld [vmem:[%s198 + $0xf8] sm:$0xf]
      %v274 = vld [vmem:[%s198 + $0xfc] sm:$0xf]
      %v275 = vld [vmem:[%s198 + $0x100] sm:$0xf]
      %v276 = vld [vmem:[%s198 + $0x104] sm:$0xf]
      %v277 = vld [vmem:[%s198 + $0x108] sm:$0xf]
      %v278 = vld [vmem:[%s198 + $0x10c] sm:$0xf]
      %v279 = vld [vmem:[%s198 + $0x110] sm:$0xf]
      %v280 = vld [vmem:[%s198 + $0x114] sm:$0xf]
      %v281 = vld [vmem:[%s198 + $0x118] sm:$0xf]
      %v282 = vld [vmem:[%s198 + $0x11c] sm:$0xf]
      %v283 = vld [vmem:[%s198 + $0x120] sm:$0xf]
      %v284 = vld [vmem:[%s198 + $0x124] sm:$0xf]
      %v285 = vld [vmem:[%s198 + $0x128] sm:$0xf]
      %v286 = vld [vmem:[%s198 + $0x12c] sm:$0xf]
      %v287 = vld [vmem:[%s198 + $0x130] sm:$0xf]
      %v288 = vld [vmem:[%s198 + $0x134] sm:$0xf]
      %v289 = vld [vmem:[%s198 + $0x138] sm:$0xf]
      %v290 = vld [vmem:[%s198 + $0x13c] sm:$0xf]
      %v291 = vld [vmem:[%s198 + $0x140] sm:$0xf]
      %v292 = vld [vmem:[%s198 + $0x144] sm:$0xf]
      %v293 = vld [vmem:[%s198 + $0x148] sm:$0xf]
      %v294 = vld [vmem:[%s198 + $0x14c] sm:$0xf]
      %v295 = vld [vmem:[%s198 + $0x150] sm:$0xf]
      %v296 = vld [vmem:[%s198 + $0x154] sm:$0xf]
      %v297 = vld [vmem:[%s198 + $0x158] sm:$0xf]
      %v298 = vld [vmem:[%s198 + $0x15c] sm:$0xf]
      %v299 = vld [vmem:[%s198 + $0x160] sm:$0xf]
      %v300 = vld [vmem:[%s198 + $0x164] sm:$0xf]
      %v301 = vld [vmem:[%s198 + $0x168] sm:$0xf]
      %v302 = vld [vmem:[%s198 + $0x16c] sm:$0xf]
      %v303 = vld [vmem:[%s198 + $0x170] sm:$0xf]
      %v304 = vld [vmem:[%s198 + $0x174] sm:$0xf]
      %v305 = vld [vmem:[%s198 + $0x178] sm:$0xf]
      %v306 = vld [vmem:[%s198 + $0x17c] sm:$0xf]
      %v307 = vld [vmem:[%s198 + $0x180] sm:$0xf]
      %v308 = vld [vmem:[%s198 + $0x184] sm:$0xf]
      %v309 = vld [vmem:[%s198 + $0x188] sm:$0xf]
      %v310 = vld [vmem:[%s198 + $0x18c] sm:$0xf]
      %v311 = vld [vmem:[%s198 + $0x190] sm:$0xf]
      %v312 = vld [vmem:[%s198 + $0x194] sm:$0xf]
      %v313 = vld [vmem:[%s198 + $0x198] sm:$0xf]
      %v314 = vld [vmem:[%s198 + $0x19c] sm:$0xf]
      %v315 = vld [vmem:[%s198 + $0x1a0] sm:$0xf]
      %v316 = vld [vmem:[%s198 + $0x1a4] sm:$0xf]
      %v317 = vld [vmem:[%s198 + $0x1a8] sm:$0xf]
      %v318 = vld [vmem:[%s198 + $0x1ac] sm:$0xf]
      %v319 = vld [vmem:[%s198 + $0x1b0] sm:$0xf]
      %v320 = vld [vmem:[%s198 + $0x1b4] sm:$0xf]
      %v321 = vld [vmem:[%s198 + $0x1b8] sm:$0xf]
      %v322 = vld [vmem:[%s198 + $0x1bc] sm:$0xf]
      %v323 = vld [vmem:[%s198 + $0x1c0] sm:$0xf]
      %v324 = vld [vmem:[%s198 + $0x1c4] sm:$0xf]
      %v325 = vld [vmem:[%s198 + $0x1c8] sm:$0xf]
      %v326 = vld [vmem:[%s198 + $0x1cc] sm:$0xf]
      %v327 = vld [vmem:[%s198 + $0x1d0] sm:$0xf]
      %v328 = vld [vmem:[%s198 + $0x1d4] sm:$0xf]
      %v329 = vld [vmem:[%s198 + $0x1d8] sm:$0xf]
      %v330 = vld [vmem:[%s198 + $0x1dc] sm:$0xf]
      %v331 = vld [vmem:[%s198 + $0x1e0] sm:$0xf]
      %v332 = vld [vmem:[%s198 + $0x1e4] sm:$0xf]
      %v333 = vld [vmem:[%s198 + $0x1e8] sm:$0xf]
      %v334 = vld [vmem:[%s198 + $0x1ec] sm:$0xf]
      %v335 = vld [vmem:[%s198 + $0x1f0] sm:$0xf]
      %v336 = vld [vmem:[%s198 + $0x1f4] sm:$0xf]
      %v337 = vld [vmem:[%s198 + $0x1f8] sm:$0xf]
      %v338 = vld [vmem:[%s198 + $0x1fc] sm:$0xf]
      %v339 = vld [vmem:[%s1] sm:$0xf]
      %v340 = vld [vmem:[%s1 + $0x4] sm:$0xf]
      %v341 = vld [vmem:[%s1 + $0x8] sm:$0xf]
      %v342 = vld [vmem:[%s1 + $0xc] sm:$0xf]
      %v343 = vld [vmem:[%s1 + $0x10] sm:$0x3]
      %v344 = vld [vmem:[%s2] sm:$0x1]
      %v346 = vlaneseq
      %v347 = vshrl.u32 %v346, 7
      %v348 = vsub.s32 0, %v347
      %v349 = vrot.slane %v344, %v348
      %v479 = vunpack.c.l.b16 %v211
      %v480 = vunpack.c.l.b16 %v212
      %v481 = vunpack.c.l.b16 %v213
      %v482 = vunpack.c.l.b16 %v214
      %v483 = vunpack.c.l.b16 %v215
      %v484 = vunpack.c.l.b16 %v216
      %v485 = vunpack.c.l.b16 %v217
      %v486 = vunpack.c.l.b16 %v218
      %v487 = vunpack.c.l.b16 %v219
      %v488 = vunpack.c.l.b16 %v220
      %v489 = vunpack.c.l.b16 %v221
      %v490 = vunpack.c.l.b16 %v222
      %v491 = vunpack.c.l.b16 %v223
      %v492 = vunpack.c.l.b16 %v224
      %v493 = vunpack.c.l.b16 %v225
      %v494 = vunpack.c.l.b16 %v226
      %v495 = vunpack.c.l.b16 %v227
      %v496 = vunpack.c.l.b16 %v228
      %v497 = vunpack.c.l.b16 %v229
      %v498 = vunpack.c.l.b16 %v230
      %v499 = vunpack.c.l.b16 %v231
      %v500 = vunpack.c.l.b16 %v232
      %v501 = vunpack.c.l.b16 %v233
      %v502 = vunpack.c.l.b16 %v234
      %v503 = vunpack.c.l.b16 %v235
      %v504 = vunpack.c.l.b16 %v236
      %v505 = vunpack.c.l.b16 %v237
      %v506 = vunpack.c.l.b16 %v238
      %v507 = vunpack.c.l.b16 %v239
      %v508 = vunpack.c.l.b16 %v240
      %v509 = vunpack.c.l.b16 %v241
      %v510 = vunpack.c.l.b16 %v242
      %v511 = vunpack.c.l.b16 %v243
      %v512 = vunpack.c.l.b16 %v244
      %v513 = vunpack.c.l.b16 %v245
      %v514 = vunpack.c.l.b16 %v246
      %v515 = vunpack.c.l.b16 %v247
      %v516 = vunpack.c.l.b16 %v248
      %v517 = vunpack.c.l.b16 %v249
      %v518 = vunpack.c.l.b16 %v250
      %v519 = vunpack.c.l.b16 %v251
      %v520 = vunpack.c.l.b16 %v252
      %v521 = vunpack.c.l.b16 %v253
      %v522 = vunpack.c.l.b16 %v254
      %v523 = vunpack.c.l.b16 %v255
      %v524 = vunpack.c.l.b16 %v256
      %v525 = vunpack.c.l.b16 %v257
      %v526 = vunpack.c.l.b16 %v258
      %v527 = vunpack.c.l.b16 %v259
      %v528 = vunpack.c.l.b16 %v260
      %v529 = vunpack.c.l.b16 %v261
      %v530 = vunpack.c.l.b16 %v262
      %v531 = vunpack.c.l.b16 %v263
      %v532 = vunpack.c.l.b16 %v264
      %v533 = vunpack.c.l.b16 %v265
      %v534 = vunpack.c.l.b16 %v266
      %v535 = vunpack.c.l.b16 %v267
      %v536 = vunpack.c.l.b16 %v268
      %v537 = vunpack.c.l.b16 %v269
      %v538 = vunpack.c.l.b16 %v270
      %v539 = vunpack.c.l.b16 %v271
      %v540 = vunpack.c.l.b16 %v272
      %v541 = vunpack.c.l.b16 %v273
      %v542 = vunpack.c.l.b16 %v274
      %v543 = vunpack.c.l.b16 %v275
      %v544 = vunpack.c.l.b16 %v276
      %v545 = vunpack.c.l.b16 %v277
      %v546 = vunpack.c.l.b16 %v278
      %v547 = vunpack.c.l.b16 %v279
      %v548 = vunpack.c.l.b16 %v280
      %v549 = vunpack.c.l.b16 %v281
      %v550 = vunpack.c.l.b16 %v282
      %v551 = vunpack.c.l.b16 %v283
      %v552 = vunpack.c.l.b16 %v284
      %v553 = vunpack.c.l.b16 %v285
      %v554 = vunpack.c.l.b16 %v286
      %v555 = vunpack.c.l.b16 %v287
      %v556 = vunpack.c.l.b16 %v288
      %v557 = vunpack.c.l.b16 %v289
      %v558 = vunpack.c.l.b16 %v290
      %v559 = vunpack.c.l.b16 %v291
      %v560 = vunpack.c.l.b16 %v292
      %v561 = vunpack.c.l.b16 %v293
      %v562 = vunpack.c.l.b16 %v294
      %v563 = vunpack.c.l.b16 %v295
      %v564 = vunpack.c.l.b16 %v296
      %v565 = vunpack.c.l.b16 %v297
      %v566 = vunpack.c.l.b16 %v298
      %v567 = vunpack.c.l.b16 %v299
      %v568 = vunpack.c.l.b16 %v300
      %v569 = vunpack.c.l.b16 %v301
      %v570 = vunpack.c.l.b16 %v302
      %v571 = vunpack.c.l.b16 %v303
      %v572 = vunpack.c.l.b16 %v304
      %v573 = vunpack.c.l.b16 %v305
      %v574 = vunpack.c.l.b16 %v306
      %v575 = vunpack.c.l.b16 %v307
      %v576 = vunpack.c.l.b16 %v308
      %v577 = vunpack.c.l.b16 %v309
      %v578 = vunpack.c.l.b16 %v310
      %v579 = vunpack.c.l.b16 %v311
      %v580 = vunpack.c.l.b16 %v312
      %v581 = vunpack.c.l.b16 %v313
      %v582 = vunpack.c.l.b16 %v314
      %v583 = vunpack.c.l.b16 %v315
      %v584 = vunpack.c.l.b16 %v316
      %v585 = vunpack.c.l.b16 %v317
      %v586 = vunpack.c.l.b16 %v318
      %v587 = vunpack.c.l.b16 %v319
      %v588 = vunpack.c.l.b16 %v320
      %v589 = vunpack.c.l.b16 %v321
      %v590 = vunpack.c.l.b16 %v322
      %v591 = vunpack.c.l.b16 %v323
      %v592 = vunpack.c.l.b16 %v324
      %v593 = vunpack.c.l.b16 %v325
      %v594 = vunpack.c.l.b16 %v326
      %v595 = vunpack.c.l.b16 %v327
      %v596 = vunpack.c.l.b16 %v328
      %v597 = vunpack.c.l.b16 %v329
      %v598 = vunpack.c.l.b16 %v330
      %v599 = vunpack.c.l.b16 %v331
      %v600 = vunpack.c.l.b16 %v332
      %v601 = vunpack.c.l.b16 %v333
      %v602 = vunpack.c.l.b16 %v334
      %v603 = vunpack.c.l.b16 %v335
      %v604 = vunpack.c.l.b16 %v336
      %v605 = vunpack.c.l.b16 %v337
      %v606 = vunpack.c.l.b16 %v338
      %v607 = vpack.c.b16 %v480, %v479
      %v608 = vpack.c.b16 %v482, %v481
      %v609 = vpack.c.b16 %v484, %v483
      %v610 = vpack.c.b16 %v486, %v485
      %v611 = vpack.c.b16 %v488, %v487
      %v612 = vpack.c.b16 %v490, %v489
      %v613 = vpack.c.b16 %v492, %v491
      %v614 = vpack.c.b16 %v494, %v493
      %v615 = vpack.c.b16 %v496, %v495
      %v616 = vpack.c.b16 %v498, %v497
      %v617 = vpack.c.b16 %v500, %v499
      %v618 = vpack.c.b16 %v502, %v501
      %v619 = vpack.c.b16 %v504, %v503
      %v620 = vpack.c.b16 %v506, %v505
      %v621 = vpack.c.b16 %v508, %v507
      %v622 = vpack.c.b16 %v510, %v509
      %v623 = vpack.c.b16 %v512, %v511
      %v624 = vpack.c.b16 %v514, %v513
      %v625 = vpack.c.b16 %v516, %v515
      %v626 = vpack.c.b16 %v518, %v517
      %v627 = vpack.c.b16 %v520, %v519
      %v628 = vpack.c.b16 %v522, %v521
      %v629 = vpack.c.b16 %v524, %v523
      %v630 = vpack.c.b16 %v526, %v525
      %v631 = vpack.c.b16 %v528, %v527
      %v632 = vpack.c.b16 %v530, %v529
      %v633 = vpack.c.b16 %v532, %v531
      %v634 = vpack.c.b16 %v534, %v533
      %v635 = vpack.c.b16 %v536, %v535
      %v636 = vpack.c.b16 %v538, %v537
      %v637 = vpack.c.b16 %v540, %v539
      %v638 = vpack.c.b16 %v542, %v541
      %v639 = vpack.c.b16 %v544, %v543
      %v640 = vpack.c.b16 %v546, %v545
      %v641 = vpack.c.b16 %v548, %v547
      %v642 = vpack.c.b16 %v550, %v549
      %v643 = vpack.c.b16 %v552, %v551
      %v644 = vpack.c.b16 %v554, %v553
      %v645 = vpack.c.b16 %v556, %v555
      %v646 = vpack.c.b16 %v558, %v557
      %v647 = vpack.c.b16 %v560, %v559
      %v648 = vpack.c.b16 %v562, %v561
      %v649 = vpack.c.b16 %v564, %v563
      %v650 = vpack.c.b16 %v566, %v565
      %v651 = vpack.c.b16 %v568, %v567
      %v652 = vpack.c.b16 %v570, %v569
      %v653 = vpack.c.b16 %v572, %v571
      %v654 = vpack.c.b16 %v574, %v573
      %v655 = vpack.c.b16 %v576, %v575
      %v656 = vpack.c.b16 %v578, %v577
      %v657 = vpack.c.b16 %v580, %v579
      %v658 = vpack.c.b16 %v582, %v581
      %v659 = vpack.c.b16 %v584, %v583
      %v660 = vpack.c.b16 %v586, %v585
      %v661 = vpack.c.b16 %v588, %v587
      %v662 = vpack.c.b16 %v590, %v589
      %v663 = vpack.c.b16 %v592, %v591
      %v664 = vpack.c.b16 %v594, %v593
      %v665 = vpack.c.b16 %v596, %v595
      %v666 = vpack.c.b16 %v598, %v597
      %v667 = vpack.c.b16 %v600, %v599
      %v668 = vpack.c.b16 %v602, %v601
      %v669 = vpack.c.b16 %v604, %v603
      %v670 = vpack.c.b16 %v606, %v605
      %v676 = vunpack.c.l.b16 %v339
      %v677 = vunpack.c.l.b16 %v340
      %v678 = vunpack.c.l.b16 %v341
      %v679 = vunpack.c.l.b16 %v342
      %v680 = vunpack.c.l.b16 %v343
      %v681 = vpack.c.b16 %v677, %v676
      %v682 = vpack.c.b16 %v679, %v678
      %v683 = vpack.c.b16 %v680, %v680
      %vm686 = vcmask 293888
      %v688 = vsel %vm686, %v607, 0
      %v691 = vsel %vm686, %v608, 0
      %v694 = vsel %vm686, %v609, 0
      %v697 = vsel %vm686, %v610, 0
      %v700 = vsel %vm686, %v611, 0
      %v703 = vsel %vm686, %v612, 0
      %v706 = vsel %vm686, %v613, 0
      %v709 = vsel %vm686, %v614, 0
      %v712 = vsel %vm686, %v615, 0
      %v715 = vsel %vm686, %v616, 0
      %v718 = vsel %vm686, %v617, 0
      %v721 = vsel %vm686, %v618, 0
      %v724 = vsel %vm686, %v619, 0
      %v727 = vsel %vm686, %v620, 0
      %v730 = vsel %vm686, %v621, 0
      %v733 = vsel %vm686, %v622, 0
      %v736 = vsel %vm686, %v623, 0
      %v739 = vsel %vm686, %v624, 0
      %v742 = vsel %vm686, %v625, 0
      %v745 = vsel %vm686, %v626, 0
      %v748 = vsel %vm686, %v627, 0
      %v751 = vsel %vm686, %v628, 0
      %v754 = vsel %vm686, %v629, 0
      %v757 = vsel %vm686, %v630, 0
      %v760 = vsel %vm686, %v631, 0
      %v763 = vsel %vm686, %v632, 0
      %v766 = vsel %vm686, %v633, 0
      %v769 = vsel %vm686, %v634, 0
      %v772 = vsel %vm686, %v635, 0
      %v775 = vsel %vm686, %v636, 0
      %v778 = vsel %vm686, %v637, 0
      %v781 = vsel %vm686, %v638, 0
      %v784 = vsel %vm686, %v639, 0
      %v787 = vsel %vm686, %v640, 0
      %v790 = vsel %vm686, %v641, 0
      %v793 = vsel %vm686, %v642, 0
      %v796 = vsel %vm686, %v643, 0
      %v799 = vsel %vm686, %v644, 0
      %v802 = vsel %vm686, %v645, 0
      %v805 = vsel %vm686, %v646, 0
      %v808 = vsel %vm686, %v647, 0
      %v811 = vsel %vm686, %v648, 0
      %v814 = vsel %vm686, %v649, 0
      %v817 = vsel %vm686, %v650, 0
      %v820 = vsel %vm686, %v651, 0
      %v823 = vsel %vm686, %v652, 0
      %v826 = vsel %vm686, %v653, 0
      %v829 = vsel %vm686, %v654, 0
      %v832 = vsel %vm686, %v655, 0
      %v835 = vsel %vm686, %v656, 0
      %v838 = vsel %vm686, %v657, 0
      %v841 = vsel %vm686, %v658, 0
      %v844 = vsel %vm686, %v659, 0
      %v847 = vsel %vm686, %v660, 0
      %v850 = vsel %vm686, %v661, 0
      %v853 = vsel %vm686, %v662, 0
      %v856 = vsel %vm686, %v663, 0
      %v859 = vsel %vm686, %v664, 0
      %v862 = vsel %vm686, %v665, 0
      %v865 = vsel %vm686, %v666, 0
      %v868 = vsel %vm686, %v667, 0
      %v871 = vsel %vm686, %v668, 0
      %v874 = vsel %vm686, %v669, 0
      %v877 = vsel %vm686, %v670, 0
      %vm879 = vcmask 1041408
      %v881 = vsel %vm879, %v683, 0
      %883 = vmatprep.subr.bf16.mxu0 0
      %884 = vmatpush1.bf16.msra.mxu0 %v681
      %885 = vmatprep.subr.bf16.mxu0 0
      %886 = vmatpush1.bf16.msra.mxu0 %v682
      %887 = vmatprep.subr.bf16.mxu0 0
      %888 = vmatpush1.bf16.msra.mxu0 %v881
      %889 = vmatprep.subr.bf16.mxu0 0
      %890 = vmatpush1.bf16.msra.mxu0 0
      %891 = vmatprep.subr.bf16.mxu0 0
      %892 = vmatpush1.bf16.msra.mxu0 0
      %893 = vmatprep.subr.bf16.mxu0 0
      %894 = vmatpush1.bf16.msra.mxu0 0
      %895 = vmatprep.subr.bf16.mxu0 0
      %896 = vmatpush1.bf16.msra.mxu0 0
      %897 = vmatprep.subr.bf16.mxu0 0
      %898 = vmatpush1.bf16.msra.mxu0 0
      %899 = vmatprep.subr.bf16.mxu0 0
      %900 = vmatpush1.bf16.msra.mxu0 0
      %901 = vmatprep.subr.bf16.mxu0 0
      %902 = vmatpush1.bf16.msra.mxu0 0
      %903 = vmatprep.subr.bf16.mxu0 0
      %904 = vmatpush1.bf16.msra.mxu0 0
      %905 = vmatprep.subr.bf16.mxu0 0
      %906 = vmatpush1.bf16.msra.mxu0 0
      %907 = vmatprep.subr.bf16.mxu0 0
      %908 = vmatpush1.bf16.msra.mxu0 0
      %909 = vmatprep.subr.bf16.mxu0 0
      %910 = vmatpush1.bf16.msra.mxu0 0
      %911 = vmatprep.subr.bf16.mxu0 0
      %912 = vmatpush1.bf16.msra.mxu0 0
      %913 = vmatprep.subr.bf16.mxu0 0
      %914 = vmatpush1.bf16.msra.mxu0 0
      %915 = vmatprep.mubr.bf16.mxu0 0
      %916 = vmatmul.mubr.bf16.gmra.mrb[0].mxu0 %v688
      %v917 = vpop.f32.mrb[0].mxu0
      %v918 = vadd.f32 %v349, %v917
      %v919 = vpop.f32.mrb[0].mxu0
      %v920 = vpop.f32.mrb[0].mxu0
      %v921 = vadd.f32 %v349, %v920
      %v922 = vpop.f32.mrb[0].mxu0
      %923 = vmatprep.mubr.bf16.mxu0 0
      %924 = vmatmul.mubr.bf16.gmra.mrb[0].mxu0 %v691
      %v925 = vpop.f32.mrb[0].mxu0
      %v926 = vadd.f32 %v349, %v925
      %v927 = vpop.f32.mrb[0].mxu0
      %v928 = vpop.f32.mrb[0].mxu0
      %v929 = vadd.f32 %v349, %v928
      %v930 = vpop.f32.mrb[0].mxu0
      %931 = vmatprep.mubr.bf16.mxu0 0
      %932 = vmatmul.mubr.bf16.gmra.mrb[0].mxu0 %v694
      %v933 = vpop.f32.mrb[0].mxu0
      %v934 = vadd.f32 %v349, %v933
      %v935 = vpop.f32.mrb[0].mxu0
      %v936 = vpop.f32.mrb[0].mxu0
      %v937 = vadd.f32 %v349, %v936
      %v938 = vpop.f32.mrb[0].mxu0
      %939 = vmatprep.mubr.bf16.mxu0 0
      %940 = vmatmul.mubr.bf16.gmra.mrb[0].mxu0 %v697
      %v941 = vpop.f32.mrb[0].mxu0
      %v942 = vadd.f32 %v349, %v941
      %v943 = vpop.f32.mrb[0].mxu0
      %v944 = vpop.f32.mrb[0].mxu0
      %v945 = vadd.f32 %v349, %v944
      %v946 = vpop.f32.mrb[0].mxu0
      %947 = vmatprep.mubr.bf16.mxu0 0
      %948 = vmatmul.mubr.bf16.gmra.mrb[0].mxu0 %v700
      %v949 = vpop.f32.mrb[0].mxu0
      %v950 = vadd.f32 %v349, %v949
      %v951 = vpop.f32.mrb[0].mxu0
      %v952 = vpop.f32.mrb[0].mxu0
      %v953 = vadd.f32 %v349, %v952
      %v954 = vpop.f32.mrb[0].mxu0
      %955 = vmatprep.mubr.bf16.mxu0 0
      %956 = vmatmul.mubr.bf16.gmra.mrb[0].mxu0 %v703
      %v957 = vpop.f32.mrb[0].mxu0
      %v958 = vadd.f32 %v349, %v957
      %v959 = vpop.f32.mrb[0].mxu0
      %v960 = vpop.f32.mrb[0].mxu0
      %v961 = vadd.f32 %v349, %v960
      %v962 = vpop.f32.mrb[0].mxu0
      %963 = vmatprep.mubr.bf16.mxu0 0
      %964 = vmatmul.mubr.bf16.gmra.mrb[0].mxu0 %v706
      %v965 = vpop.f32.mrb[0].mxu0
      %v966 = vadd.f32 %v349, %v965
      %v967 = vpop.f32.mrb[0].mxu0
      %v968 = vpop.f32.mrb[0].mxu0
      %v969 = vadd.f32 %v349, %v968
      %v970 = vpop.f32.mrb[0].mxu0
      %971 = vmatprep.mubr.bf16.mxu0 0
      %972 = vmatmul.mubr.bf16.gmra.mrb[0].mxu0 %v709
      %v973 = vpop.f32.mrb[0].mxu0
      %v974 = vadd.f32 %v349, %v973
      %v975 = vpop.f32.mrb[0].mxu0
      %v976 = vpop.f32.mrb[0].mxu0
      %v977 = vadd.f32 %v349, %v976
      %v978 = vpop.f32.mrb[0].mxu0
      %979 = vmatprep.mubr.bf16.mxu0 0
      %980 = vmatmul.mubr.bf16.gmra.mrb[0].mxu0 %v712
      %v981 = vpop.f32.mrb[0].mxu0
      %v982 = vadd.f32 %v349, %v981
      %v983 = vpop.f32.mrb[0].mxu0
      %v984 = vpop.f32.mrb[0].mxu0
      %v985 = vadd.f32 %v349, %v984
      %v986 = vpop.f32.mrb[0].mxu0
      %987 = vmatprep.mubr.bf16.mxu0 0
      %988 = vmatmul.mubr.bf16.gmra.mrb[0].mxu0 %v715
      %v989 = vpop.f32.mrb[0].mxu0
      %v990 = vadd.f32 %v349, %v989
      %v991 = vpop.f32.mrb[0].mxu0
      %v992 = vpop.f32.mrb[0].mxu0
      %v993 = vadd.f32 %v349, %v992
      %v994 = vpop.f32.mrb[0].mxu0
      %995 = vmatprep.mubr.bf16.mxu0 0
      %996 = vmatmul.mubr.bf16.gmra.mrb[0].mxu0 %v718
      %v997 = vpop.f32.mrb[0].mxu0
      %v998 = vadd.f32 %v349, %v997
      %v999 = vpop.f32.mrb[0].mxu0
      %v1000 = vpop.f32.mrb[0].mxu0
      %v1001 = vadd.f32 %v349, %v1000
      %v1002 = vpop.f32.mrb[0].mxu0
      %1003 = vmatprep.mubr.bf16.mxu0 0
      %1004 = vmatmul.mubr.bf16.gmra.mrb[0].mxu0 %v721
      %v1005 = vpop.f32.mrb[0].mxu0
      %v1006 = vadd.f32 %v349, %v1005
      %v1007 = vpop.f32.mrb[0].mxu0
      %v1008 = vpop.f32.mrb[0].mxu0
      %v1009 = vadd.f32 %v349, %v1008
      %v1010 = vpop.f32.mrb[0].mxu0
      %1011 = vmatprep.mubr.bf16.mxu0 0
      %1012 = vmatmul.mubr.bf16.gmra.mrb[0].mxu0 %v724
      %v1013 = vpop.f32.mrb[0].mxu0
      %v1014 = vadd.f32 %v349, %v1013
      %v1015 = vpop.f32.mrb[0].mxu0
      %v1016 = vpop.f32.mrb[0].mxu0
      %v1017 = vadd.f32 %v349, %v1016
      %v1018 = vpop.f32.mrb[0].mxu0
      %1019 = vmatprep.mubr.bf16.mxu0 0
      %1020 = vmatmul.mubr.bf16.gmra.mrb[0].mxu0 %v727
      %v1021 = vpop.f32.mrb[0].mxu0
      %v1022 = vadd.f32 %v349, %v1021
      %v1023 = vpop.f32.mrb[0].mxu0
      %v1024 = vpop.f32.mrb[0].mxu0
      %v1025 = vadd.f32 %v349, %v1024
      %v1026 = vpop.f32.mrb[0].mxu0
      %1027 = vmatprep.mubr.bf16.mxu0 0
      %1028 = vmatmul.mubr.bf16.gmra.mrb[0].mxu0 %v730
      %v1029 = vpop.f32.mrb[0].mxu0
      %v1030 = vadd.f32 %v349, %v1029
      %v1031 = vpop.f32.mrb[0].mxu0
      %v1032 = vpop.f32.mrb[0].mxu0
      %v1033 = vadd.f32 %v349, %v1032
      %v1034 = vpop.f32.mrb[0].mxu0
      %1035 = vmatprep.mubr.bf16.mxu0 0
      %1036 = vmatmul.mubr.bf16.gmra.mrb[0].mxu0 %v733
      %v1037 = vpop.f32.mrb[0].mxu0
      %v1038 = vadd.f32 %v349, %v1037
      %v1039 = vpop.f32.mrb[0].mxu0
      %v1040 = vpop.f32.mrb[0].mxu0
      %v1041 = vadd.f32 %v349, %v1040
      %v1042 = vpop.f32.mrb[0].mxu0
      %1043 = vmatprep.mubr.bf16.mxu0 0
      %1044 = vmatmul.mubr.bf16.gmra.mrb[0].mxu0 %v736
      %v1045 = vpop.f32.mrb[0].mxu0
      %v1046 = vadd.f32 %v349, %v1045
      %v1047 = vpop.f32.mrb[0].mxu0
      %v1048 = vpop.f32.mrb[0].mxu0
      %v1049 = vadd.f32 %v349, %v1048
      %v1050 = vpop.f32.mrb[0].mxu0
      %1051 = vmatprep.mubr.bf16.mxu0 0
      %1052 = vmatmul.mubr.bf16.gmra.mrb[0].mxu0 %v739
      %v1053 = vpop.f32.mrb[0].mxu0
      %v1054 = vadd.f32 %v349, %v1053
      %v1055 = vpop.f32.mrb[0].mxu0
      %v1056 = vpop.f32.mrb[0].mxu0
      %v1057 = vadd.f32 %v349, %v1056
      %v1058 = vpop.f32.mrb[0].mxu0
      %1059 = vmatprep.mubr.bf16.mxu0 0
      %1060 = vmatmul.mubr.bf16.gmra.mrb[0].mxu0 %v742
      %v1061 = vpop.f32.mrb[0].mxu0
      %v1062 = vadd.f32 %v349, %v1061
      %v1063 = vpop.f32.mrb[0].mxu0
      %v1064 = vpop.f32.mrb[0].mxu0
      %v1065 = vadd.f32 %v349, %v1064
      %v1066 = vpop.f32.mrb[0].mxu0
      %1067 = vmatprep.mubr.bf16.mxu0 0
      %1068 = vmatmul.mubr.bf16.gmra.mrb[0].mxu0 %v745
      %v1069 = vpop.f32.mrb[0].mxu0
      %v1070 = vadd.f32 %v349, %v1069
      %v1071 = vpop.f32.mrb[0].mxu0
      %v1072 = vpop.f32.mrb[0].mxu0
      %v1073 = vadd.f32 %v349, %v1072
      %v1074 = vpop.f32.mrb[0].mxu0
      %1075 = vmatprep.mubr.bf16.mxu0 0
      %1076 = vmatmul.mubr.bf16.gmra.mrb[0].mxu0 %v748
      %v1077 = vpop.f32.mrb[0].mxu0
      %v1078 = vadd.f32 %v349, %v1077
      %v1079 = vpop.f32.mrb[0].mxu0
      %v1080 = vpop.f32.mrb[0].mxu0
      %v1081 = vadd.f32 %v349, %v1080
      %v1082 = vpop.f32.mrb[0].mxu0
      %1083 = vmatprep.mubr.bf16.mxu0 0
      %1084 = vmatmul.mubr.bf16.gmra.mrb[0].mxu0 %v751
      %v1085 = vpop.f32.mrb[0].mxu0
      %v1086 = vadd.f32 %v349, %v1085
      %v1087 = vpop.f32.mrb[0].mxu0
      %v1088 = vpop.f32.mrb[0].mxu0
      %v1089 = vadd.f32 %v349, %v1088
      %v1090 = vpop.f32.mrb[0].mxu0
      %1091 = vmatprep.mubr.bf16.mxu0 0
      %1092 = vmatmul.mubr.bf16.gmra.mrb[0].mxu0 %v754
      %v1093 = vpop.f32.mrb[0].mxu0
      %v1094 = vadd.f32 %v349, %v1093
      %v1095 = vpop.f32.mrb[0].mxu0
      %v1096 = vpop.f32.mrb[0].mxu0
      %v1097 = vadd.f32 %v349, %v1096
      %v1098 = vpop.f32.mrb[0].mxu0
      %1099 = vmatprep.mubr.bf16.mxu0 0
      %1100 = vmatmul.mubr.bf16.gmra.mrb[0].mxu0 %v757
      %v1101 = vpop.f32.mrb[0].mxu0
      %v1102 = vadd.f32 %v349, %v1101
      %v1103 = vpop.f32.mrb[0].mxu0
      %v1104 = vpop.f32.mrb[0].mxu0
      %v1105 = vadd.f32 %v349, %v1104
      %v1106 = vpop.f32.mrb[0].mxu0
      %1107 = vmatprep.mubr.bf16.mxu0 0
      %1108 = vmatmul.mubr.bf16.gmra.mrb[0].mxu0 %v760
      %v1109 = vpop.f32.mrb[0].mxu0
      %v1110 = vadd.f32 %v349, %v1109
      %v1111 = vpop.f32.mrb[0].mxu0
      %v1112 = vpop.f32.mrb[0].mxu0
      %v1113 = vadd.f32 %v349, %v1112
      %v1114 = vpop.f32.mrb[0].mxu0
      %1115 = vmatprep.mubr.bf16.mxu0 0
      %1116 = vmatmul.mubr.bf16.gmra.mrb[0].mxu0 %v763
      %v1117 = vpop.f32.mrb[0].mxu0
      %v1118 = vadd.f32 %v349, %v1117
      %v1119 = vpop.f32.mrb[0].mxu0
      %v1120 = vpop.f32.mrb[0].mxu0
      %v1121 = vadd.f32 %v349, %v1120
      %v1122 = vpop.f32.mrb[0].mxu0
      %1123 = vmatprep.mubr.bf16.mxu0 0
      %1124 = vmatmul.mubr.bf16.gmra.mrb[0].mxu0 %v766
      %v1125 = vpop.f32.mrb[0].mxu0
      %v1126 = vadd.f32 %v349, %v1125
      %v1127 = vpop.f32.mrb[0].mxu0
      %v1128 = vpop.f32.mrb[0].mxu0
      %v1129 = vadd.f32 %v349, %v1128
      %v1130 = vpop.f32.mrb[0].mxu0
      %1131 = vmatprep.mubr.bf16.mxu0 0
      %1132 = vmatmul.mubr.bf16.gmra.mrb[0].mxu0 %v769
      %v1133 = vpop.f32.mrb[0].mxu0
      %v1134 = vadd.f32 %v349, %v1133
      %v1135 = vpop.f32.mrb[0].mxu0
      %v1136 = vpop.f32.mrb[0].mxu0
      %v1137 = vadd.f32 %v349, %v1136
      %v1138 = vpop.f32.mrb[0].mxu0
      %1139 = vmatprep.mubr.bf16.mxu0 0
      %1140 = vmatmul.mubr.bf16.gmra.mrb[0].mxu0 %v772
      %v1141 = vpop.f32.mrb[0].mxu0
      %v1142 = vadd.f32 %v349, %v1141
      %v1143 = vpop.f32.mrb[0].mxu0
      %v1144 = vpop.f32.mrb[0].mxu0
      %v1145 = vadd.f32 %v349, %v1144
      %v1146 = vpop.f32.mrb[0].mxu0
      %1147 = vmatprep.mubr.bf16.mxu0 0
      %1148 = vmatmul.mubr.bf16.gmra.mrb[0].mxu0 %v775
      %v1149 = vpop.f32.mrb[0].mxu0
      %v1150 = vadd.f32 %v349, %v1149
      %v1151 = vpop.f32.mrb[0].mxu0
      %v1152 = vpop.f32.mrb[0].mxu0
      %v1153 = vadd.f32 %v349, %v1152
      %v1154 = vpop.f32.mrb[0].mxu0
      %1155 = vmatprep.mubr.bf16.mxu0 0
      %1156 = vmatmul.mubr.bf16.gmra.mrb[0].mxu0 %v778
      %v1157 = vpop.f32.mrb[0].mxu0
      %v1158 = vadd.f32 %v349, %v1157
      %v1159 = vpop.f32.mrb[0].mxu0
      %v1160 = vpop.f32.mrb[0].mxu0
      %v1161 = vadd.f32 %v349, %v1160
      %v1162 = vpop.f32.mrb[0].mxu0
      %1163 = vmatprep.mubr.bf16.mxu0 0
      %1164 = vmatmul.mubr.bf16.gmra.mrb[0].mxu0 %v781
      %v1165 = vpop.f32.mrb[0].mxu0
      %v1166 = vadd.f32 %v349, %v1165
      %v1167 = vpop.f32.mrb[0].mxu0
      %v1168 = vpop.f32.mrb[0].mxu0
      %v1169 = vadd.f32 %v349, %v1168
      %v1170 = vpop.f32.mrb[0].mxu0
      %1171 = vmatprep.mubr.bf16.mxu0 0
      %1172 = vmatmul.mubr.bf16.gmra.mrb[0].mxu0 %v784
      %v1173 = vpop.f32.mrb[0].mxu0
      %v1174 = vadd.f32 %v349, %v1173
      %v1175 = vpop.f32.mrb[0].mxu0
      %v1176 = vpop.f32.mrb[0].mxu0
      %v1177 = vadd.f32 %v349, %v1176
      %v1178 = vpop.f32.mrb[0].mxu0
      %1179 = vmatprep.mubr.bf16.mxu0 0
      %1180 = vmatmul.mubr.bf16.gmra.mrb[0].mxu0 %v787
      %v1181 = vpop.f32.mrb[0].mxu0
      %v1182 = vadd.f32 %v349, %v1181
      %v1183 = vpop.f32.mrb[0].mxu0
      %v1184 = vpop.f32.mrb[0].mxu0
      %v1185 = vadd.f32 %v349, %v1184
      %v1186 = vpop.f32.mrb[0].mxu0
      %1187 = vmatprep.mubr.bf16.mxu0 0
      %1188 = vmatmul.mubr.bf16.gmra.mrb[0].mxu0 %v790
      %v1189 = vpop.f32.mrb[0].mxu0
      %v1190 = vadd.f32 %v349, %v1189
      %v1191 = vpop.f32.mrb[0].mxu0
      %v1192 = vpop.f32.mrb[0].mxu0
      %v1193 = vadd.f32 %v349, %v1192
      %v1194 = vpop.f32.mrb[0].mxu0
      %1195 = vmatprep.mubr.bf16.mxu0 0
      %1196 = vmatmul.mubr.bf16.gmra.mrb[0].mxu0 %v793
      %v1197 = vpop.f32.mrb[0].mxu0
      %v1198 = vadd.f32 %v349, %v1197
      %v1199 = vpop.f32.mrb[0].mxu0
      %v1200 = vpop.f32.mrb[0].mxu0
      %v1201 = vadd.f32 %v349, %v1200
      %v1202 = vpop.f32.mrb[0].mxu0
      %1203 = vmatprep.mubr.bf16.mxu0 0
      %1204 = vmatmul.mubr.bf16.gmra.mrb[0].mxu0 %v796
      %v1205 = vpop.f32.mrb[0].mxu0
      %v1206 = vadd.f32 %v349, %v1205
      %v1207 = vpop.f32.mrb[0].mxu0
      %v1208 = vpop.f32.mrb[0].mxu0
      %v1209 = vadd.f32 %v349, %v1208
      %v1210 = vpop.f32.mrb[0].mxu0
      %1211 = vmatprep.mubr.bf16.mxu0 0
      %1212 = vmatmul.mubr.bf16.gmra.mrb[0].mxu0 %v799
      %v1213 = vpop.f32.mrb[0].mxu0
      %v1214 = vadd.f32 %v349, %v1213
      %v1215 = vpop.f32.mrb[0].mxu0
      %v1216 = vpop.f32.mrb[0].mxu0
      %v1217 = vadd.f32 %v349, %v1216
      %v1218 = vpop.f32.mrb[0].mxu0
      %1219 = vmatprep.mubr.bf16.mxu0 0
      %1220 = vmatmul.mubr.bf16.gmra.mrb[0].mxu0 %v802
      %v1221 = vpop.f32.mrb[0].mxu0
      %v1222 = vadd.f32 %v349, %v1221
      %v1223 = vpop.f32.mrb[0].mxu0
      %v1224 = vpop.f32.mrb[0].mxu0
      %v1225 = vadd.f32 %v349, %v1224
      %v1226 = vpop.f32.mrb[0].mxu0
      %1227 = vmatprep.mubr.bf16.mxu0 0
      %1228 = vmatmul.mubr.bf16.gmra.mrb[0].mxu0 %v805
      %v1229 = vpop.f32.mrb[0].mxu0
      %v1230 = vadd.f32 %v349, %v1229
      %v1231 = vpop.f32.mrb[0].mxu0
      %v1232 = vpop.f32.mrb[0].mxu0
      %v1233 = vadd.f32 %v349, %v1232
      %v1234 = vpop.f32.mrb[0].mxu0
      %1235 = vmatprep.mubr.bf16.mxu0 0
      %1236 = vmatmul.mubr.bf16.gmra.mrb[0].mxu0 %v808
      %v1237 = vpop.f32.mrb[0].mxu0
      %v1238 = vadd.f32 %v349, %v1237
      %v1239 = vpop.f32.mrb[0].mxu0
      %v1240 = vpop.f32.mrb[0].mxu0
      %v1241 = vadd.f32 %v349, %v1240
      %v1242 = vpop.f32.mrb[0].mxu0
      %1243 = vmatprep.mubr.bf16.mxu0 0
      %1244 = vmatmul.mubr.bf16.gmra.mrb[0].mxu0 %v811
      %v1245 = vpop.f32.mrb[0].mxu0
      %v1246 = vadd.f32 %v349, %v1245
      %v1247 = vpop.f32.mrb[0].mxu0
      %v1248 = vpop.f32.mrb[0].mxu0
      %v1249 = vadd.f32 %v349, %v1248
      %v1250 = vpop.f32.mrb[0].mxu0
      %1251 = vmatprep.mubr.bf16.mxu0 0
      %1252 = vmatmul.mubr.bf16.gmra.mrb[0].mxu0 %v814
      %v1253 = vpop.f32.mrb[0].mxu0
      %v1254 = vadd.f32 %v349, %v1253
      %v1255 = vpop.f32.mrb[0].mxu0
      %v1256 = vpop.f32.mrb[0].mxu0
      %v1257 = vadd.f32 %v349, %v1256
      %v1258 = vpop.f32.mrb[0].mxu0
      %1259 = vmatprep.mubr.bf16.mxu0 0
      %1260 = vmatmul.mubr.bf16.gmra.mrb[0].mxu0 %v817
      %v1261 = vpop.f32.mrb[0].mxu0
      %v1262 = vadd.f32 %v349, %v1261
      %v1263 = vpop.f32.mrb[0].mxu0
      %v1264 = vpop.f32.mrb[0].mxu0
      %v1265 = vadd.f32 %v349, %v1264
      %v1266 = vpop.f32.mrb[0].mxu0
      %1267 = vmatprep.mubr.bf16.mxu0 0
      %1268 = vmatmul.mubr.bf16.gmra.mrb[0].mxu0 %v820
      %v1269 = vpop.f32.mrb[0].mxu0
      %v1270 = vadd.f32 %v349, %v1269
      %v1271 = vpop.f32.mrb[0].mxu0
      %v1272 = vpop.f32.mrb[0].mxu0
      %v1273 = vadd.f32 %v349, %v1272
      %v1274 = vpop.f32.mrb[0].mxu0
      %1275 = vmatprep.mubr.bf16.mxu0 0
      %1276 = vmatmul.mubr.bf16.gmra.mrb[0].mxu0 %v823
      %v1277 = vpop.f32.mrb[0].mxu0
      %v1278 = vadd.f32 %v349, %v1277
      %v1279 = vpop.f32.mrb[0].mxu0
      %v1280 = vpop.f32.mrb[0].mxu0
      %v1281 = vadd.f32 %v349, %v1280
      %v1282 = vpop.f32.mrb[0].mxu0
      %1283 = vmatprep.mubr.bf16.mxu0 0
      %1284 = vmatmul.mubr.bf16.gmra.mrb[0].mxu0 %v826
      %v1285 = vpop.f32.mrb[0].mxu0
      %v1286 = vadd.f32 %v349, %v1285
      %v1287 = vpop.f32.mrb[0].mxu0
      %v1288 = vpop.f32.mrb[0].mxu0
      %v1289 = vadd.f32 %v349, %v1288
      %v1290 = vpop.f32.mrb[0].mxu0
      %1291 = vmatprep.mubr.bf16.mxu0 0
      %1292 = vmatmul.mubr.bf16.gmra.mrb[0].mxu0 %v829
      %v1293 = vpop.f32.mrb[0].mxu0
      %v1294 = vadd.f32 %v349, %v1293
      %v1295 = vpop.f32.mrb[0].mxu0
      %v1296 = vpop.f32.mrb[0].mxu0
      %v1297 = vadd.f32 %v349, %v1296
      %v1298 = vpop.f32.mrb[0].mxu0
      %1299 = vmatprep.mubr.bf16.mxu0 0
      %1300 = vmatmul.mubr.bf16.gmra.mrb[0].mxu0 %v832
      %v1301 = vpop.f32.mrb[0].mxu0
      %v1302 = vadd.f32 %v349, %v1301
      %v1303 = vpop.f32.mrb[0].mxu0
      %v1304 = vpop.f32.mrb[0].mxu0
      %v1305 = vadd.f32 %v349, %v1304
      %v1306 = vpop.f32.mrb[0].mxu0
      %1307 = vmatprep.mubr.bf16.mxu0 0
      %1308 = vmatmul.mubr.bf16.gmra.mrb[0].mxu0 %v835
      %v1309 = vpop.f32.mrb[0].mxu0
      %v1310 = vadd.f32 %v349, %v1309
      %v1311 = vpop.f32.mrb[0].mxu0
      %v1312 = vpop.f32.mrb[0].mxu0
      %v1313 = vadd.f32 %v349, %v1312
      %v1314 = vpop.f32.mrb[0].mxu0
      %1315 = vmatprep.mubr.bf16.mxu0 0
      %1316 = vmatmul.mubr.bf16.gmra.mrb[0].mxu0 %v838
      %v1317 = vpop.f32.mrb[0].mxu0
      %v1318 = vadd.f32 %v349, %v1317
      %v1319 = vpop.f32.mrb[0].mxu0
      %v1320 = vpop.f32.mrb[0].mxu0
      %v1321 = vadd.f32 %v349, %v1320
      %v1322 = vpop.f32.mrb[0].mxu0
      %1323 = vmatprep.mubr.bf16.mxu0 0
      %1324 = vmatmul.mubr.bf16.gmra.mrb[0].mxu0 %v841
      %v1325 = vpop.f32.mrb[0].mxu0
      %v1326 = vadd.f32 %v349, %v1325
      %v1327 = vpop.f32.mrb[0].mxu0
      %v1328 = vpop.f32.mrb[0].mxu0
      %v1329 = vadd.f32 %v349, %v1328
      %v1330 = vpop.f32.mrb[0].mxu0
      %1331 = vmatprep.mubr.bf16.mxu0 0
      %1332 = vmatmul.mubr.bf16.gmra.mrb[0].mxu0 %v844
      %v1333 = vpop.f32.mrb[0].mxu0
      %v1334 = vadd.f32 %v349, %v1333
      %v1335 = vpop.f32.mrb[0].mxu0
      %v1336 = vpop.f32.mrb[0].mxu0
      %v1337 = vadd.f32 %v349, %v1336
      %v1338 = vpop.f32.mrb[0].mxu0
      %1339 = vmatprep.mubr.bf16.mxu0 0
      %1340 = vmatmul.mubr.bf16.gmra.mrb[0].mxu0 %v847
      %v1341 = vpop.f32.mrb[0].mxu0
      %v1342 = vadd.f32 %v349, %v1341
      %v1343 = vpop.f32.mrb[0].mxu0
      %v1344 = vpop.f32.mrb[0].mxu0
      %v1345 = vadd.f32 %v349, %v1344
      %v1346 = vpop.f32.mrb[0].mxu0
      %1347 = vmatprep.mubr.bf16.mxu0 0
      %1348 = vmatmul.mubr.bf16.gmra.mrb[0].mxu0 %v850
      %v1349 = vpop.f32.mrb[0].mxu0
      %v1350 = vadd.f32 %v349, %v1349
      %v1351 = vpop.f32.mrb[0].mxu0
      %v1352 = vpop.f32.mrb[0].mxu0
      %v1353 = vadd.f32 %v349, %v1352
      %v1354 = vpop.f32.mrb[0].mxu0
      %1355 = vmatprep.mubr.bf16.mxu0 0
      %1356 = vmatmul.mubr.bf16.gmra.mrb[0].mxu0 %v853
      %v1357 = vpop.f32.mrb[0].mxu0
      %v1358 = vadd.f32 %v349, %v1357
      %v1359 = vpop.f32.mrb[0].mxu0
      %v1360 = vpop.f32.mrb[0].mxu0
      %v1361 = vadd.f32 %v349, %v1360
      %v1362 = vpop.f32.mrb[0].mxu0
      %1363 = vmatprep.mubr.bf16.mxu0 0
      %1364 = vmatmul.mubr.bf16.gmra.mrb[0].mxu0 %v856
      %v1365 = vpop.f32.mrb[0].mxu0
      %v1366 = vadd.f32 %v349, %v1365
      %v1367 = vpop.f32.mrb[0].mxu0
      %v1368 = vpop.f32.mrb[0].mxu0
      %v1369 = vadd.f32 %v349, %v1368
      %v1370 = vpop.f32.mrb[0].mxu0
      %1371 = vmatprep.mubr.bf16.mxu0 0
      %1372 = vmatmul.mubr.bf16.gmra.mrb[0].mxu0 %v859
      %v1373 = vpop.f32.mrb[0].mxu0
      %v1374 = vadd.f32 %v349, %v1373
      %v1375 = vpop.f32.mrb[0].mxu0
      %v1376 = vpop.f32.mrb[0].mxu0
      %v1377 = vadd.f32 %v349, %v1376
      %v1378 = vpop.f32.mrb[0].mxu0
      %1379 = vmatprep.mubr.bf16.mxu0 0
      %1380 = vmatmul.mubr.bf16.gmra.mrb[0].mxu0 %v862
      %v1381 = vpop.f32.mrb[0].mxu0
      %v1382 = vadd.f32 %v349, %v1381
      %v1383 = vpop.f32.mrb[0].mxu0
      %v1384 = vpop.f32.mrb[0].mxu0
      %v1385 = vadd.f32 %v349, %v1384
      %v1386 = vpop.f32.mrb[0].mxu0
      %1387 = vmatprep.mubr.bf16.mxu0 0
      %1388 = vmatmul.mubr.bf16.gmra.mrb[0].mxu0 %v865
      %v1389 = vpop.f32.mrb[0].mxu0
      %v1390 = vadd.f32 %v349, %v1389
      %v1391 = vpop.f32.mrb[0].mxu0
      %v1392 = vpop.f32.mrb[0].mxu0
      %v1393 = vadd.f32 %v349, %v1392
      %v1394 = vpop.f32.mrb[0].mxu0
      %1395 = vmatprep.mubr.bf16.mxu0 0
      %1396 = vmatmul.mubr.bf16.gmra.mrb[0].mxu0 %v868
      %v1397 = vpop.f32.mrb[0].mxu0
      %v1398 = vadd.f32 %v349, %v1397
      %v1399 = vpop.f32.mrb[0].mxu0
      %v1400 = vpop.f32.mrb[0].mxu0
      %v1401 = vadd.f32 %v349, %v1400
      %v1402 = vpop.f32.mrb[0].mxu0
      %1403 = vmatprep.mubr.bf16.mxu0 0
      %1404 = vmatmul.mubr.bf16.gmra.mrb[0].mxu0 %v871
      %v1405 = vpop.f32.mrb[0].mxu0
      %v1406 = vadd.f32 %v349, %v1405
      %v1407 = vpop.f32.mrb[0].mxu0
      %v1408 = vpop.f32.mrb[0].mxu0
      %v1409 = vadd.f32 %v349, %v1408
      %v1410 = vpop.f32.mrb[0].mxu0
      %1411 = vmatprep.mubr.bf16.mxu0 0
      %1412 = vmatmul.mubr.bf16.gmra.mrb[0].mxu0 %v874
      %v1413 = vpop.f32.mrb[0].mxu0
      %v1414 = vadd.f32 %v349, %v1413
      %v1415 = vpop.f32.mrb[0].mxu0
      %v1416 = vpop.f32.mrb[0].mxu0
      %v1417 = vadd.f32 %v349, %v1416
      %v1418 = vpop.f32.mrb[0].mxu0
      %1419 = vmatprep.mubr.bf16.mxu0 0
      %1420 = vmatmul.mubr.bf16.gmra.mrb[0].mxu0 %v877
      %v1421 = vpop.f32.mrb[0].mxu0
      %v1422 = vadd.f32 %v349, %v1421
      %v1423 = vpop.f32.mrb[0].mxu0
      %v1424 = vpop.f32.mrb[0].mxu0
      %v1425 = vadd.f32 %v349, %v1424
      %v1426 = vpop.f32.mrb[0].mxu0
      %1427 = vdwg.mxu0
      %v1428 = vxor.u32 %v918, 2147483648
      %v1429 = vxor.u32 %v921, 2147483648
      %v1430 = vxor.u32 %v926, 2147483648
      %v1431 = vxor.u32 %v929, 2147483648
      %v1432 = vxor.u32 %v934, 2147483648
      %v1433 = vxor.u32 %v937, 2147483648
      %v1434 = vxor.u32 %v942, 2147483648
      %v1435 = vxor.u32 %v945, 2147483648
      %v1436 = vxor.u32 %v950, 2147483648
      %v1437 = vxor.u32 %v953, 2147483648
      %v1438 = vxor.u32 %v958, 2147483648
      %v1439 = vxor.u32 %v961, 2147483648
      %v1440 = vxor.u32 %v966, 2147483648
      %v1441 = vxor.u32 %v969, 2147483648
      %v1442 = vxor.u32 %v974, 2147483648
      %v1443 = vxor.u32 %v977, 2147483648
      %v1444 = vxor.u32 %v982, 2147483648
      %v1445 = vxor.u32 %v985, 2147483648
      %v1446 = vxor.u32 %v990, 2147483648
      %v1447 = vxor.u32 %v993, 2147483648
      %v1448 = vxor.u32 %v998, 2147483648
      %v1449 = vxor.u32 %v1001, 2147483648
      %v1450 = vxor.u32 %v1006, 2147483648
      %v1451 = vxor.u32 %v1009, 2147483648
      %v1452 = vxor.u32 %v1014, 2147483648
      %v1453 = vxor.u32 %v1017, 2147483648
      %v1454 = vxor.u32 %v1022, 2147483648
      %v1455 = vxor.u32 %v1025, 2147483648
      %v1456 = vxor.u32 %v1030, 2147483648
      %v1457 = vxor.u32 %v1033, 2147483648
      %v1458 = vxor.u32 %v1038, 2147483648
      %v1459 = vxor.u32 %v1041, 2147483648
      %v1460 = vxor.u32 %v1046, 2147483648
      %v1461 = vxor.u32 %v1049, 2147483648
      %v1462 = vxor.u32 %v1054, 2147483648
      %v1463 = vxor.u32 %v1057, 2147483648
      %v1464 = vxor.u32 %v1062, 2147483648
      %v1465 = vxor.u32 %v1065, 2147483648
      %v1466 = vxor.u32 %v1070, 2147483648
      %v1467 = vxor.u32 %v1073, 2147483648
      %v1468 = vxor.u32 %v1078, 2147483648
      %v1469 = vxor.u32 %v1081, 2147483648
      %v1470 = vxor.u32 %v1086, 2147483648
      %v1471 = vxor.u32 %v1089, 2147483648
      %v1472 = vxor.u32 %v1094, 2147483648
      %v1473 = vxor.u32 %v1097, 2147483648
      %v1474 = vxor.u32 %v1102, 2147483648
      %v1475 = vxor.u32 %v1105, 2147483648
      %v1476 = vxor.u32 %v1110, 2147483648
      %v1477 = vxor.u32 %v1113, 2147483648
      %v1478 = vxor.u32 %v1118, 2147483648
      %v1479 = vxor.u32 %v1121, 2147483648
      %v1480 = vxor.u32 %v1126, 2147483648
      %v1481 = vxor.u32 %v1129, 2147483648
      %v1482 = vxor.u32 %v1134, 2147483648
      %v1483 = vxor.u32 %v1137, 2147483648
      %v1484 = vxor.u32 %v1142, 2147483648
      %v1485 = vxor.u32 %v1145, 2147483648
      %v1486 = vxor.u32 %v1150, 2147483648
      %v1487 = vxor.u32 %v1153, 2147483648
      %v1488 = vxor.u32 %v1158, 2147483648
      %v1489 = vxor.u32 %v1161, 2147483648
      %v1490 = vxor.u32 %v1166, 2147483648
      %v1491 = vxor.u32 %v1169, 2147483648
      %v1492 = vxor.u32 %v1174, 2147483648
      %v1493 = vxor.u32 %v1177, 2147483648
      %v1494 = vxor.u32 %v1182, 2147483648
      %v1495 = vxor.u32 %v1185, 2147483648
      %v1496 = vxor.u32 %v1190, 2147483648
      %v1497 = vxor.u32 %v1193, 2147483648
      %v1498 = vxor.u32 %v1198, 2147483648
      %v1499 = vxor.u32 %v1201, 2147483648
      %v1500 = vxor.u32 %v1206, 2147483648
      %v1501 = vxor.u32 %v1209, 2147483648
      %v1502 = vxor.u32 %v1214, 2147483648
      %v1503 = vxor.u32 %v1217, 2147483648
      %v1504 = vxor.u32 %v1222, 2147483648
      %v1505 = vxor.u32 %v1225, 2147483648
      %v1506 = vxor.u32 %v1230, 2147483648
      %v1507 = vxor.u32 %v1233, 2147483648
      %v1508 = vxor.u32 %v1238, 2147483648
      %v1509 = vxor.u32 %v1241, 2147483648
      %v1510 = vxor.u32 %v1246, 2147483648
      %v1511 = vxor.u32 %v1249, 2147483648
      %v1512 = vxor.u32 %v1254, 2147483648
      %v1513 = vxor.u32 %v1257, 2147483648
      %v1514 = vxor.u32 %v1262, 2147483648
      %v1515 = vxor.u32 %v1265, 2147483648
      %v1516 = vxor.u32 %v1270, 2147483648
      %v1517 = vxor.u32 %v1273, 2147483648
      %v1518 = vxor.u32 %v1278, 2147483648
      %v1519 = vxor.u32 %v1281, 2147483648
      %v1520 = vxor.u32 %v1286, 2147483648
      %v1521 = vxor.u32 %v1289, 2147483648
      %v1522 = vxor.u32 %v1294, 2147483648
      %v1523 = vxor.u32 %v1297, 2147483648
      %v1524 = vxor.u32 %v1302, 2147483648
      %v1525 = vxor.u32 %v1305, 2147483648
      %v1526 = vxor.u32 %v1310, 2147483648
      %v1527 = vxor.u32 %v1313, 2147483648
      %v1528 = vxor.u32 %v1318, 2147483648
      %v1529 = vxor.u32 %v1321, 2147483648
      %v1530 = vxor.u32 %v1326, 2147483648
      %v1531 = vxor.u32 %v1329, 2147483648
      %v1532 = vxor.u32 %v1334, 2147483648
      %v1533 = vxor.u32 %v1337, 2147483648
      %v1534 = vxor.u32 %v1342, 2147483648
      %v1535 = vxor.u32 %v1345, 2147483648
      %v1536 = vxor.u32 %v1350, 2147483648
      %v1537 = vxor.u32 %v1353, 2147483648
      %v1538 = vxor.u32 %v1358, 2147483648
      %v1539 = vxor.u32 %v1361, 2147483648
      %v1540 = vxor.u32 %v1366, 2147483648
      %v1541 = vxor.u32 %v1369, 2147483648
      %v1542 = vxor.u32 %v1374, 2147483648
      %v1543 = vxor.u32 %v1377, 2147483648
      %v1544 = vxor.u32 %v1382, 2147483648
      %v1545 = vxor.u32 %v1385, 2147483648
      %v1546 = vxor.u32 %v1390, 2147483648
      %v1547 = vxor.u32 %v1393, 2147483648
      %v1548 = vxor.u32 %v1398, 2147483648
      %v1549 = vxor.u32 %v1401, 2147483648
      %v1550 = vxor.u32 %v1406, 2147483648
      %v1551 = vxor.u32 %v1409, 2147483648
      %v1552 = vxor.u32 %v1414, 2147483648
      %v1553 = vxor.u32 %v1417, 2147483648
      %v1554 = vxor.u32 %v1422, 2147483648
      %v1555 = vxor.u32 %v1425, 2147483648
      %v1556 = vmul.f32 %v1428, 1.442695
      %v1557 = vpow.pop %v1556
      %v1558 = vmul.f32 %v1429, 1.442695
      %v1559 = vpow.pop %v1558
      %v1560 = vmul.f32 %v1430, 1.442695
      %v1561 = vpow.pop %v1560
      %v1562 = vmul.f32 %v1431, 1.442695
      %v1563 = vpow.pop %v1562
      %v1564 = vmul.f32 %v1432, 1.442695
      %v1565 = vpow.pop %v1564
      %v1566 = vmul.f32 %v1433, 1.442695
      %v1567 = vpow.pop %v1566
      %v1568 = vmul.f32 %v1434, 1.442695
      %v1569 = vpow.pop %v1568
      %v1570 = vmul.f32 %v1435, 1.442695
      %v1571 = vpow.pop %v1570
      %v1572 = vmul.f32 %v1436, 1.442695
      %v1573 = vpow.pop %v1572
      %v1574 = vmul.f32 %v1437, 1.442695
      %v1575 = vpow.pop %v1574
      %v1576 = vmul.f32 %v1438, 1.442695
      %v1577 = vpow.pop %v1576
      %v1578 = vmul.f32 %v1439, 1.442695
      %v1579 = vpow.pop %v1578
      %v1580 = vmul.f32 %v1440, 1.442695
      %v1581 = vpow.pop %v1580
      %v1582 = vmul.f32 %v1441, 1.442695
      %v1583 = vpow.pop %v1582
      %v1584 = vmul.f32 %v1442, 1.442695
      %v1585 = vpow.pop %v1584
      %v1586 = vmul.f32 %v1443, 1.442695
      %v1587 = vpow.pop %v1586
      %v1588 = vmul.f32 %v1444, 1.442695
      %v1589 = vpow.pop %v1588
      %v1590 = vmul.f32 %v1445, 1.442695
      %v1591 = vpow.pop %v1590
      %v1592 = vmul.f32 %v1446, 1.442695
      %v1593 = vpow.pop %v1592
      %v1594 = vmul.f32 %v1447, 1.442695
      %v1595 = vpow.pop %v1594
      %v1596 = vmul.f32 %v1448, 1.442695
      %v1597 = vpow.pop %v1596
      %v1598 = vmul.f32 %v1449, 1.442695
      %v1599 = vpow.pop %v1598
      %v1600 = vmul.f32 %v1450, 1.442695
      %v1601 = vpow.pop %v1600
      %v1602 = vmul.f32 %v1451, 1.442695
      %v1603 = vpow.pop %v1602
      %v1604 = vmul.f32 %v1452, 1.442695
      %v1605 = vpow.pop %v1604
      %v1606 = vmul.f32 %v1453, 1.442695
      %v1607 = vpow.pop %v1606
      %v1608 = vmul.f32 %v1454, 1.442695
      %v1609 = vpow.pop %v1608
      %v1610 = vmul.f32 %v1455, 1.442695
      %v1611 = vpow.pop %v1610
      %v1612 = vmul.f32 %v1456, 1.442695
      %v1613 = vpow.pop %v1612
      %v1614 = vmul.f32 %v1457, 1.442695
      %v1615 = vpow.pop %v1614
      %v1616 = vmul.f32 %v1458, 1.442695
      %v1617 = vpow.pop %v1616
      %v1618 = vmul.f32 %v1459, 1.442695
      %v1619 = vpow.pop %v1618
      %v1620 = vmul.f32 %v1460, 1.442695
      %v1621 = vpow.pop %v1620
      %v1622 = vmul.f32 %v1461, 1.442695
      %v1623 = vpow.pop %v1622
      %v1624 = vmul.f32 %v1462, 1.442695
      %v1625 = vpow.pop %v1624
      %v1626 = vmul.f32 %v1463, 1.442695
      %v1627 = vpow.pop %v1626
      %v1628 = vmul.f32 %v1464, 1.442695
      %v1629 = vpow.pop %v1628
      %v1630 = vmul.f32 %v1465, 1.442695
      %v1631 = vpow.pop %v1630
      %v1632 = vmul.f32 %v1466, 1.442695
      %v1633 = vpow.pop %v1632
      %v1634 = vmul.f32 %v1467, 1.442695
      %v1635 = vpow.pop %v1634
      %v1636 = vmul.f32 %v1468, 1.442695
      %v1637 = vpow.pop %v1636
      %v1638 = vmul.f32 %v1469, 1.442695
      %v1639 = vpow.pop %v1638
      %v1640 = vmul.f32 %v1470, 1.442695
      %v1641 = vpow.pop %v1640
      %v1642 = vmul.f32 %v1471, 1.442695
      %v1643 = vpow.pop %v1642
      %v1644 = vmul.f32 %v1472, 1.442695
      %v1645 = vpow.pop %v1644
      %v1646 = vmul.f32 %v1473, 1.442695
      %v1647 = vpow.pop %v1646
      %v1648 = vmul.f32 %v1474, 1.442695
      %v1649 = vpow.pop %v1648
      %v1650 = vmul.f32 %v1475, 1.442695
      %v1651 = vpow.pop %v1650
      %v1652 = vmul.f32 %v1476, 1.442695
      %v1653 = vpow.pop %v1652
      %v1654 = vmul.f32 %v1477, 1.442695
      %v1655 = vpow.pop %v1654
      %v1656 = vmul.f32 %v1478, 1.442695
      %v1657 = vpow.pop %v1656
      %v1658 = vmul.f32 %v1479, 1.442695
      %v1659 = vpow.pop %v1658
      %v1660 = vmul.f32 %v1480, 1.442695
      %v1661 = vpow.pop %v1660
      %v1662 = vmul.f32 %v1481, 1.442695
      %v1663 = vpow.pop %v1662
      %v1664 = vmul.f32 %v1482, 1.442695
      %v1665 = vpow.pop %v1664
      %v1666 = vmul.f32 %v1483, 1.442695
      %v1667 = vpow.pop %v1666
      %v1668 = vmul.f32 %v1484, 1.442695
      %v1669 = vpow.pop %v1668
      %v1670 = vmul.f32 %v1485, 1.442695
      %v1671 = vpow.pop %v1670
      %v1672 = vmul.f32 %v1486, 1.442695
      %v1673 = vpow.pop %v1672
      %v1674 = vmul.f32 %v1487, 1.442695
      %v1675 = vpow.pop %v1674
      %v1676 = vmul.f32 %v1488, 1.442695
      %v1677 = vpow.pop %v1676
      %v1678 = vmul.f32 %v1489, 1.442695
      %v1679 = vpow.pop %v1678
      %v1680 = vmul.f32 %v1490, 1.442695
      %v1681 = vpow.pop %v1680
      %v1682 = vmul.f32 %v1491, 1.442695
      %v1683 = vpow.pop %v1682
      %v1684 = vmul.f32 %v1492, 1.442695
      %v1685 = vpow.pop %v1684
      %v1686 = vmul.f32 %v1493, 1.442695
      %v1687 = vpow.pop %v1686
      %v1688 = vmul.f32 %v1494, 1.442695
      %v1689 = vpow.pop %v1688
      %v1690 = vmul.f32 %v1495, 1.442695
      %v1691 = vpow.pop %v1690
      %v1692 = vmul.f32 %v1496, 1.442695
      %v1693 = vpow.pop %v1692
      %v1694 = vmul.f32 %v1497, 1.442695
      %v1695 = vpow.pop %v1694
      %v1696 = vmul.f32 %v1498, 1.442695
      %v1697 = vpow.pop %v1696
      %v1698 = vmul.f32 %v1499, 1.442695
      %v1699 = vpow.pop %v1698
      %v1700 = vmul.f32 %v1500, 1.442695
      %v1701 = vpow.pop %v1700
      %v1702 = vmul.f32 %v1501, 1.442695
      %v1703 = vpow.pop %v1702
      %v1704 = vmul.f32 %v1502, 1.442695
      %v1705 = vpow.pop %v1704
      %v1706 = vmul.f32 %v1503, 1.442695
      %v1707 = vpow.pop %v1706
      %v1708 = vmul.f32 %v1504, 1.442695
      %v1709 = vpow.pop %v1708
      %v1710 = vmul.f32 %v1505, 1.442695
      %v1711 = vpow.pop %v1710
      %v1712 = vmul.f32 %v1506, 1.442695
      %v1713 = vpow.pop %v1712
      %v1714 = vmul.f32 %v1507, 1.442695
      %v1715 = vpow.pop %v1714
      %v1716 = vmul.f32 %v1508, 1.442695
      %v1717 = vpow.pop %v1716
      %v1718 = vmul.f32 %v1509, 1.442695
      %v1719 = vpow.pop %v1718
      %v1720 = vmul.f32 %v1510, 1.442695
      %v1721 = vpow.pop %v1720
      %v1722 = vmul.f32 %v1511, 1.442695
      %v1723 = vpow.pop %v1722
      %v1724 = vmul.f32 %v1512, 1.442695
      %v1725 = vpow.pop %v1724
      %v1726 = vmul.f32 %v1513, 1.442695
      %v1727 = vpow.pop %v1726
      %v1728 = vmul.f32 %v1514, 1.442695
      %v1729 = vpow.pop %v1728
      %v1730 = vmul.f32 %v1515, 1.442695
      %v1731 = vpow.pop %v1730
      %v1732 = vmul.f32 %v1516, 1.442695
      %v1733 = vpow.pop %v1732
      %v1734 = vmul.f32 %v1517, 1.442695
      %v1735 = vpow.pop %v1734
      %v1736 = vmul.f32 %v1518, 1.442695
      %v1737 = vpow.pop %v1736
      %v1738 = vmul.f32 %v1519, 1.442695
      %v1739 = vpow.pop %v1738
      %v1740 = vmul.f32 %v1520, 1.442695
      %v1741 = vpow.pop %v1740
      %v1742 = vmul.f32 %v1521, 1.442695
      %v1743 = vpow.pop %v1742
      %v1744 = vmul.f32 %v1522, 1.442695
      %v1745 = vpow.pop %v1744
      %v1746 = vmul.f32 %v1523, 1.442695
      %v1747 = vpow.pop %v1746
      %v1748 = vmul.f32 %v1524, 1.442695
      %v1749 = vpow.pop %v1748
      %v1750 = vmul.f32 %v1525, 1.442695
      %v1751 = vpow.pop %v1750
      %v1752 = vmul.f32 %v1526, 1.442695
      %v1753 = vpow.pop %v1752
      %v1754 = vmul.f32 %v1527, 1.442695
      %v1755 = vpow.pop %v1754
      %v1756 = vmul.f32 %v1528, 1.442695
      %v1757 = vpow.pop %v1756
      %v1758 = vmul.f32 %v1529, 1.442695
      %v1759 = vpow.pop %v1758
      %v1760 = vmul.f32 %v1530, 1.442695
      %v1761 = vpow.pop %v1760
      %v1762 = vmul.f32 %v1531, 1.442695
      %v1763 = vpow.pop %v1762
      %v1764 = vmul.f32 %v1532, 1.442695
      %v1765 = vpow.pop %v1764
      %v1766 = vmul.f32 %v1533, 1.442695
      %v1767 = vpow.pop %v1766
      %v1768 = vmul.f32 %v1534, 1.442695
      %v1769 = vpow.pop %v1768
      %v1770 = vmul.f32 %v1535, 1.442695
      %v1771 = vpow.pop %v1770
      %v1772 = vmul.f32 %v1536, 1.442695
      %v1773 = vpow.pop %v1772
      %v1774 = vmul.f32 %v1537, 1.442695
      %v1775 = vpow.pop %v1774
      %v1776 = vmul.f32 %v1538, 1.442695
      %v1777 = vpow.pop %v1776
      %v1778 = vmul.f32 %v1539, 1.442695
      %v1779 = vpow.pop %v1778
      %v1780 = vmul.f32 %v1540, 1.442695
      %v1781 = vpow.pop %v1780
      %v1782 = vmul.f32 %v1541, 1.442695
      %v1783 = vpow.pop %v1782
      %v1784 = vmul.f32 %v1542, 1.442695
      %v1785 = vpow.pop %v1784
      %v1786 = vmul.f32 %v1543, 1.442695
      %v1787 = vpow.pop %v1786
      %v1788 = vmul.f32 %v1544, 1.442695
      %v1789 = vpow.pop %v1788
      %v1790 = vmul.f32 %v1545, 1.442695
      %v1791 = vpow.pop %v1790
      %v1792 = vmul.f32 %v1546, 1.442695
      %v1793 = vpow.pop %v1792
      %v1794 = vmul.f32 %v1547, 1.442695
      %v1795 = vpow.pop %v1794
      %v1796 = vmul.f32 %v1548, 1.442695
      %v1797 = vpow.pop %v1796
      %v1798 = vmul.f32 %v1549, 1.442695
      %v1799 = vpow.pop %v1798
      %v1800 = vmul.f32 %v1550, 1.442695
      %v1801 = vpow.pop %v1800
      %v1802 = vmul.f32 %v1551, 1.442695
      %v1803 = vpow.pop %v1802
      %v1804 = vmul.f32 %v1552, 1.442695
      %v1805 = vpow.pop %v1804
      %v1806 = vmul.f32 %v1553, 1.442695
      %v1807 = vpow.pop %v1806
      %v1808 = vmul.f32 %v1554, 1.442695
      %v1809 = vpow.pop %v1808
      %v1810 = vmul.f32 %v1555, 1.442695
      %v1811 = vpow.pop %v1810
      %v1812 = vadd.f32 %v1557, 1.0
      %v1813 = vadd.f32 %v1559, 1.0
      %v1814 = vadd.f32 %v1561, 1.0
      %v1815 = vadd.f32 %v1563, 1.0
      %v1816 = vadd.f32 %v1565, 1.0
      %v1817 = vadd.f32 %v1567, 1.0
      %v1818 = vadd.f32 %v1569, 1.0
      %v1819 = vadd.f32 %v1571, 1.0
      %v1820 = vadd.f32 %v1573, 1.0
      %v1821 = vadd.f32 %v1575, 1.0
      %v1822 = vadd.f32 %v1577, 1.0
      %v1823 = vadd.f32 %v1579, 1.0
      %v1824 = vadd.f32 %v1581, 1.0
      %v1825 = vadd.f32 %v1583, 1.0
      %v1826 = vadd.f32 %v1585, 1.0
      %v1827 = vadd.f32 %v1587, 1.0
      %v1828 = vadd.f32 %v1589, 1.0
      %v1829 = vadd.f32 %v1591, 1.0
      %v1830 = vadd.f32 %v1593, 1.0
      %v1831 = vadd.f32 %v1595, 1.0
      %v1832 = vadd.f32 %v1597, 1.0
      %v1833 = vadd.f32 %v1599, 1.0
      %v1834 = vadd.f32 %v1601, 1.0
      %v1835 = vadd.f32 %v1603, 1.0
      %v1836 = vadd.f32 %v1605, 1.0
      %v1837 = vadd.f32 %v1607, 1.0
      %v1838 = vadd.f32 %v1609, 1.0
      %v1839 = vadd.f32 %v1611, 1.0
      %v1840 = vadd.f32 %v1613, 1.0
      %v1841 = vadd.f32 %v1615, 1.0
      %v1842 = vadd.f32 %v1617, 1.0
      %v1843 = vadd.f32 %v1619, 1.0
      %v1844 = vadd.f32 %v1621, 1.0
      %v1845 = vadd.f32 %v1623, 1.0
      %v1846 = vadd.f32 %v1625, 1.0
      %v1847 = vadd.f32 %v1627, 1.0
      %v1848 = vadd.f32 %v1629, 1.0
      %v1849 = vadd.f32 %v1631, 1.0
      %v1850 = vadd.f32 %v1633, 1.0
      %v1851 = vadd.f32 %v1635, 1.0
      %v1852 = vadd.f32 %v1637, 1.0
      %v1853 = vadd.f32 %v1639, 1.0
      %v1854 = vadd.f32 %v1641, 1.0
      %v1855 = vadd.f32 %v1643, 1.0
      %v1856 = vadd.f32 %v1645, 1.0
      %v1857 = vadd.f32 %v1647, 1.0
      %v1858 = vadd.f32 %v1649, 1.0
      %v1859 = vadd.f32 %v1651, 1.0
      %v1860 = vadd.f32 %v1653, 1.0
      %v1861 = vadd.f32 %v1655, 1.0
      %v1862 = vadd.f32 %v1657, 1.0
      %v1863 = vadd.f32 %v1659, 1.0
      %v1864 = vadd.f32 %v1661, 1.0
      %v1865 = vadd.f32 %v1663, 1.0
      %v1866 = vadd.f32 %v1665, 1.0
      %v1867 = vadd.f32 %v1667, 1.0
      %v1868 = vadd.f32 %v1669, 1.0
      %v1869 = vadd.f32 %v1671, 1.0
      %v1870 = vadd.f32 %v1673, 1.0
      %v1871 = vadd.f32 %v1675, 1.0
      %v1872 = vadd.f32 %v1677, 1.0
      %v1873 = vadd.f32 %v1679, 1.0
      %v1874 = vadd.f32 %v1681, 1.0
      %v1875 = vadd.f32 %v1683, 1.0
      %v1876 = vadd.f32 %v1685, 1.0
      %v1877 = vadd.f32 %v1687, 1.0
      %v1878 = vadd.f32 %v1689, 1.0
      %v1879 = vadd.f32 %v1691, 1.0
      %v1880 = vadd.f32 %v1693, 1.0
      %v1881 = vadd.f32 %v1695, 1.0
      %v1882 = vadd.f32 %v1697, 1.0
      %v1883 = vadd.f32 %v1699, 1.0
      %v1884 = vadd.f32 %v1701, 1.0
      %v1885 = vadd.f32 %v1703, 1.0
      %v1886 = vadd.f32 %v1705, 1.0
      %v1887 = vadd.f32 %v1707, 1.0
      %v1888 = vadd.f32 %v1709, 1.0
      %v1889 = vadd.f32 %v1711, 1.0
      %v1890 = vadd.f32 %v1713, 1.0
      %v1891 = vadd.f32 %v1715, 1.0
      %v1892 = vadd.f32 %v1717, 1.0
      %v1893 = vadd.f32 %v1719, 1.0
      %v1894 = vadd.f32 %v1721, 1.0
      %v1895 = vadd.f32 %v1723, 1.0
      %v1896 = vadd.f32 %v1725, 1.0
      %v1897 = vadd.f32 %v1727, 1.0
      %v1898 = vadd.f32 %v1729, 1.0
      %v1899 = vadd.f32 %v1731, 1.0
      %v1900 = vadd.f32 %v1733, 1.0
      %v1901 = vadd.f32 %v1735, 1.0
      %v1902 = vadd.f32 %v1737, 1.0
      %v1903 = vadd.f32 %v1739, 1.0
      %v1904 = vadd.f32 %v1741, 1.0
      %v1905 = vadd.f32 %v1743, 1.0
      %v1906 = vadd.f32 %v1745, 1.0
      %v1907 = vadd.f32 %v1747, 1.0
      %v1908 = vadd.f32 %v1749, 1.0
      %v1909 = vadd.f32 %v1751, 1.0
      %v1910 = vadd.f32 %v1753, 1.0
      %v1911 = vadd.f32 %v1755, 1.0
      %v1912 = vadd.f32 %v1757, 1.0
      %v1913 = vadd.f32 %v1759, 1.0
      %v1914 = vadd.f32 %v1761, 1.0
      %v1915 = vadd.f32 %v1763, 1.0
      %v1916 = vadd.f32 %v1765, 1.0
      %v1917 = vadd.f32 %v1767, 1.0
      %v1918 = vadd.f32 %v1769, 1.0
      %v1919 = vadd.f32 %v1771, 1.0
      %v1920 = vadd.f32 %v1773, 1.0
      %v1921 = vadd.f32 %v1775, 1.0
      %v1922 = vadd.f32 %v1777, 1.0
      %v1923 = vadd.f32 %v1779, 1.0
      %v1924 = vadd.f32 %v1781, 1.0
      %v1925 = vadd.f32 %v1783, 1.0
      %v1926 = vadd.f32 %v1785, 1.0
      %v1927 = vadd.f32 %v1787, 1.0
      %v1928 = vadd.f32 %v1789, 1.0
      %v1929 = vadd.f32 %v1791, 1.0
      %v1930 = vadd.f32 %v1793, 1.0
      %v1931 = vadd.f32 %v1795, 1.0
      %v1932 = vadd.f32 %v1797, 1.0
      %v1933 = vadd.f32 %v1799, 1.0
      %v1934 = vadd.f32 %v1801, 1.0
      %v1935 = vadd.f32 %v1803, 1.0
      %v1936 = vadd.f32 %v1805, 1.0
      %v1937 = vadd.f32 %v1807, 1.0
      %v1938 = vadd.f32 %v1809, 1.0
      %v1939 = vadd.f32 %v1811, 1.0
      %v1940 = vrcp.pop %v1812
      %v1941 = vmul.f32 1.0, %v1940
      %v1942 = vrcp.pop %v1813
      %v1943 = vmul.f32 1.0, %v1942
      %v1944 = vrcp.pop %v1814
      %v1945 = vmul.f32 1.0, %v1944
      %v1946 = vrcp.pop %v1815
      %v1947 = vmul.f32 1.0, %v1946
      %v1948 = vrcp.pop %v1816
      %v1949 = vmul.f32 1.0, %v1948
      %v1950 = vrcp.pop %v1817
      %v1951 = vmul.f32 1.0, %v1950
      %v1952 = vrcp.pop %v1818
      %v1953 = vmul.f32 1.0, %v1952
      %v1954 = vrcp.pop %v1819
      %v1955 = vmul.f32 1.0, %v1954
      %v1956 = vrcp.pop %v1820
      %v1957 = vmul.f32 1.0, %v1956
      %v1958 = vrcp.pop %v1821
      %v1959 = vmul.f32 1.0, %v1958
      %v1960 = vrcp.pop %v1822
      %v1961 = vmul.f32 1.0, %v1960
      %v1962 = vrcp.pop %v1823
      %v1963 = vmul.f32 1.0, %v1962
      %v1964 = vrcp.pop %v1824
      %v1965 = vmul.f32 1.0, %v1964
      %v1966 = vrcp.pop %v1825
      %v1967 = vmul.f32 1.0, %v1966
      %v1968 = vrcp.pop %v1826
      %v1969 = vmul.f32 1.0, %v1968
      %v1970 = vrcp.pop %v1827
      %v1971 = vmul.f32 1.0, %v1970
      %v1972 = vrcp.pop %v1828
      %v1973 = vmul.f32 1.0, %v1972
      %v1974 = vrcp.pop %v1829
      %v1975 = vmul.f32 1.0, %v1974
      %v1976 = vrcp.pop %v1830
      %v1977 = vmul.f32 1.0, %v1976
      %v1978 = vrcp.pop %v1831
      %v1979 = vmul.f32 1.0, %v1978
      %v1980 = vrcp.pop %v1832
      %v1981 = vmul.f32 1.0, %v1980
      %v1982 = vrcp.pop %v1833
      %v1983 = vmul.f32 1.0, %v1982
      %v1984 = vrcp.pop %v1834
      %v1985 = vmul.f32 1.0, %v1984
      %v1986 = vrcp.pop %v1835
      %v1987 = vmul.f32 1.0, %v1986
      %v1988 = vrcp.pop %v1836
      %v1989 = vmul.f32 1.0, %v1988
      %v1990 = vrcp.pop %v1837
      %v1991 = vmul.f32 1.0, %v1990
      %v1992 = vrcp.pop %v1838
      %v1993 = vmul.f32 1.0, %v1992
      %v1994 = vrcp.pop %v1839
      %v1995 = vmul.f32 1.0, %v1994
      %v1996 = vrcp.pop %v1840
      %v1997 = vmul.f32 1.0, %v1996
      %v1998 = vrcp.pop %v1841
      %v1999 = vmul.f32 1.0, %v1998
      %v2000 = vrcp.pop %v1842
      %v2001 = vmul.f32 1.0, %v2000
      %v2002 = vrcp.pop %v1843
      %v2003 = vmul.f32 1.0, %v2002
      %v2004 = vrcp.pop %v1844
      %v2005 = vmul.f32 1.0, %v2004
      %v2006 = vrcp.pop %v1845
      %v2007 = vmul.f32 1.0, %v2006
      %v2008 = vrcp.pop %v1846
      %v2009 = vmul.f32 1.0, %v2008
      %v2010 = vrcp.pop %v1847
      %v2011 = vmul.f32 1.0, %v2010
      %v2012 = vrcp.pop %v1848
      %v2013 = vmul.f32 1.0, %v2012
      %v2014 = vrcp.pop %v1849
      %v2015 = vmul.f32 1.0, %v2014
      %v2016 = vrcp.pop %v1850
      %v2017 = vmul.f32 1.0, %v2016
      %v2018 = vrcp.pop %v1851
      %v2019 = vmul.f32 1.0, %v2018
      %v2020 = vrcp.pop %v1852
      %v2021 = vmul.f32 1.0, %v2020
      %v2022 = vrcp.pop %v1853
      %v2023 = vmul.f32 1.0, %v2022
      %v2024 = vrcp.pop %v1854
      %v2025 = vmul.f32 1.0, %v2024
      %v2026 = vrcp.pop %v1855
      %v2027 = vmul.f32 1.0, %v2026
      %v2028 = vrcp.pop %v1856
      %v2029 = vmul.f32 1.0, %v2028
      %v2030 = vrcp.pop %v1857
      %v2031 = vmul.f32 1.0, %v2030
      %v2032 = vrcp.pop %v1858
      %v2033 = vmul.f32 1.0, %v2032
      %v2034 = vrcp.pop %v1859
      %v2035 = vmul.f32 1.0, %v2034
      %v2036 = vrcp.pop %v1860
      %v2037 = vmul.f32 1.0, %v2036
      %v2038 = vrcp.pop %v1861
      %v2039 = vmul.f32 1.0, %v2038
      %v2040 = vrcp.pop %v1862
      %v2041 = vmul.f32 1.0, %v2040
      %v2042 = vrcp.pop %v1863
      %v2043 = vmul.f32 1.0, %v2042
      %v2044 = vrcp.pop %v1864
      %v2045 = vmul.f32 1.0, %v2044
      %v2046 = vrcp.pop %v1865
      %v2047 = vmul.f32 1.0, %v2046
      %v2048 = vrcp.pop %v1866
      %v2049 = vmul.f32 1.0, %v2048
      %v2050 = vrcp.pop %v1867
      %v2051 = vmul.f32 1.0, %v2050
      %v2052 = vrcp.pop %v1868
      %v2053 = vmul.f32 1.0, %v2052
      %v2054 = vrcp.pop %v1869
      %v2055 = vmul.f32 1.0, %v2054
      %v2056 = vrcp.pop %v1870
      %v2057 = vmul.f32 1.0, %v2056
      %v2058 = vrcp.pop %v1871
      %v2059 = vmul.f32 1.0, %v2058
      %v2060 = vrcp.pop %v1872
      %v2061 = vmul.f32 1.0, %v2060
      %v2062 = vrcp.pop %v1873
      %v2063 = vmul.f32 1.0, %v2062
      %v2064 = vrcp.pop %v1874
      %v2065 = vmul.f32 1.0, %v2064
      %v2066 = vrcp.pop %v1875
      %v2067 = vmul.f32 1.0, %v2066
      %v2068 = vrcp.pop %v1876
      %v2069 = vmul.f32 1.0, %v2068
      %v2070 = vrcp.pop %v1877
      %v2071 = vmul.f32 1.0, %v2070
      %v2072 = vrcp.pop %v1878
      %v2073 = vmul.f32 1.0, %v2072
      %v2074 = vrcp.pop %v1879
      %v2075 = vmul.f32 1.0, %v2074
      %v2076 = vrcp.pop %v1880
      %v2077 = vmul.f32 1.0, %v2076
      %v2078 = vrcp.pop %v1881
      %v2079 = vmul.f32 1.0, %v2078
      %v2080 = vrcp.pop %v1882
      %v2081 = vmul.f32 1.0, %v2080
      %v2082 = vrcp.pop %v1883
      %v2083 = vmul.f32 1.0, %v2082
      %v2084 = vrcp.pop %v1884
      %v2085 = vmul.f32 1.0, %v2084
      %v2086 = vrcp.pop %v1885
      %v2087 = vmul.f32 1.0, %v2086
      %v2088 = vrcp.pop %v1886
      %v2089 = vmul.f32 1.0, %v2088
      %v2090 = vrcp.pop %v1887
      %v2091 = vmul.f32 1.0, %v2090
      %v2092 = vrcp.pop %v1888
      %v2093 = vmul.f32 1.0, %v2092
      %v2094 = vrcp.pop %v1889
      %v2095 = vmul.f32 1.0, %v2094
      %v2096 = vrcp.pop %v1890
      %v2097 = vmul.f32 1.0, %v2096
      %v2098 = vrcp.pop %v1891
      %v2099 = vmul.f32 1.0, %v2098
      %v2100 = vrcp.pop %v1892
      %v2101 = vmul.f32 1.0, %v2100
      %v2102 = vrcp.pop %v1893
      %v2103 = vmul.f32 1.0, %v2102
      %v2104 = vrcp.pop %v1894
      %v2105 = vmul.f32 1.0, %v2104
      %v2106 = vrcp.pop %v1895
      %v2107 = vmul.f32 1.0, %v2106
      %v2108 = vrcp.pop %v1896
      %v2109 = vmul.f32 1.0, %v2108
      %v2110 = vrcp.pop %v1897
      %v2111 = vmul.f32 1.0, %v2110
      %v2112 = vrcp.pop %v1898
      %v2113 = vmul.f32 1.0, %v2112
      %v2114 = vrcp.pop %v1899
      %v2115 = vmul.f32 1.0, %v2114
      %v2116 = vrcp.pop %v1900
      %v2117 = vmul.f32 1.0, %v2116
      %v2118 = vrcp.pop %v1901
      %v2119 = vmul.f32 1.0, %v2118
      %v2120 = vrcp.pop %v1902
      %v2121 = vmul.f32 1.0, %v2120
      %v2122 = vrcp.pop %v1903
      %v2123 = vmul.f32 1.0, %v2122
      %v2124 = vrcp.pop %v1904
      %v2125 = vmul.f32 1.0, %v2124
      %v2126 = vrcp.pop %v1905
      %v2127 = vmul.f32 1.0, %v2126
      %v2128 = vrcp.pop %v1906
      %v2129 = vmul.f32 1.0, %v2128
      %v2130 = vrcp.pop %v1907
      %v2131 = vmul.f32 1.0, %v2130
      %v2132 = vrcp.pop %v1908
      %v2133 = vmul.f32 1.0, %v2132
      %v2134 = vrcp.pop %v1909
      %v2135 = vmul.f32 1.0, %v2134
      %v2136 = vrcp.pop %v1910
      %v2137 = vmul.f32 1.0, %v2136
      %v2138 = vrcp.pop %v1911
      %v2139 = vmul.f32 1.0, %v2138
      %v2140 = vrcp.pop %v1912
      %v2141 = vmul.f32 1.0, %v2140
      %v2142 = vrcp.pop %v1913
      %v2143 = vmul.f32 1.0, %v2142
      %v2144 = vrcp.pop %v1914
      %v2145 = vmul.f32 1.0, %v2144
      %v2146 = vrcp.pop %v1915
      %v2147 = vmul.f32 1.0, %v2146
      %v2148 = vrcp.pop %v1916
      %v2149 = vmul.f32 1.0, %v2148
      %v2150 = vrcp.pop %v1917
      %v2151 = vmul.f32 1.0, %v2150
      %v2152 = vrcp.pop %v1918
      %v2153 = vmul.f32 1.0, %v2152
      %v2154 = vrcp.pop %v1919
      %v2155 = vmul.f32 1.0, %v2154
      %v2156 = vrcp.pop %v1920
      %v2157 = vmul.f32 1.0, %v2156
      %v2158 = vrcp.pop %v1921
      %v2159 = vmul.f32 1.0, %v2158
      %v2160 = vrcp.pop %v1922
      %v2161 = vmul.f32 1.0, %v2160
      %v2162 = vrcp.pop %v1923
      %v2163 = vmul.f32 1.0, %v2162
      %v2164 = vrcp.pop %v1924
      %v2165 = vmul.f32 1.0, %v2164
      %v2166 = vrcp.pop %v1925
      %v2167 = vmul.f32 1.0, %v2166
      %v2168 = vrcp.pop %v1926
      %v2169 = vmul.f32 1.0, %v2168
      %v2170 = vrcp.pop %v1927
      %v2171 = vmul.f32 1.0, %v2170
      %v2172 = vrcp.pop %v1928
      %v2173 = vmul.f32 1.0, %v2172
      %v2174 = vrcp.pop %v1929
      %v2175 = vmul.f32 1.0, %v2174
      %v2176 = vrcp.pop %v1930
      %v2177 = vmul.f32 1.0, %v2176
      %v2178 = vrcp.pop %v1931
      %v2179 = vmul.f32 1.0, %v2178
      %v2180 = vrcp.pop %v1932
      %v2181 = vmul.f32 1.0, %v2180
      %v2182 = vrcp.pop %v1933
      %v2183 = vmul.f32 1.0, %v2182
      %v2184 = vrcp.pop %v1934
      %v2185 = vmul.f32 1.0, %v2184
      %v2186 = vrcp.pop %v1935
      %v2187 = vmul.f32 1.0, %v2186
      %v2188 = vrcp.pop %v1936
      %v2189 = vmul.f32 1.0, %v2188
      %v2190 = vrcp.pop %v1937
      %v2191 = vmul.f32 1.0, %v2190
      %v2192 = vrcp.pop %v1938
      %v2193 = vmul.f32 1.0, %v2192
      %v2194 = vrcp.pop %v1939
      %v2195 = vmul.f32 1.0, %v2194
      %v2196 = vmul.f32 %v918, %v1941
      %v2197 = vmul.f32 %v921, %v1943
      %v2198 = vmul.f32 %v926, %v1945
      %v2199 = vmul.f32 %v929, %v1947
      %v2200 = vmul.f32 %v934, %v1949
      %v2201 = vmul.f32 %v937, %v1951
      %v2202 = vmul.f32 %v942, %v1953
      %v2203 = vmul.f32 %v945, %v1955
      %v2204 = vmul.f32 %v950, %v1957
      %v2205 = vmul.f32 %v953, %v1959
      %v2206 = vmul.f32 %v958, %v1961
      %v2207 = vmul.f32 %v961, %v1963
      %v2208 = vmul.f32 %v966, %v1965
      %v2209 = vmul.f32 %v969, %v1967
      %v2210 = vmul.f32 %v974, %v1969
      %v2211 = vmul.f32 %v977, %v1971
      %v2212 = vmul.f32 %v982, %v1973
      %v2213 = vmul.f32 %v985, %v1975
      %v2214 = vmul.f32 %v990, %v1977
      %v2215 = vmul.f32 %v993, %v1979
      %v2216 = vmul.f32 %v998, %v1981
      %v2217 = vmul.f32 %v1001, %v1983
      %v2218 = vmul.f32 %v1006, %v1985
      %v2219 = vmul.f32 %v1009, %v1987
      %v2220 = vmul.f32 %v1014, %v1989
      %v2221 = vmul.f32 %v1017, %v1991
      %v2222 = vmul.f32 %v1022, %v1993
      %v2223 = vmul.f32 %v1025, %v1995
      %v2224 = vmul.f32 %v1030, %v1997
      %v2225 = vmul.f32 %v1033, %v1999
      %v2226 = vmul.f32 %v1038, %v2001
      %v2227 = vmul.f32 %v1041, %v2003
      %v2228 = vmul.f32 %v1046, %v2005
      %v2229 = vmul.f32 %v1049, %v2007
      %v2230 = vmul.f32 %v1054, %v2009
      %v2231 = vmul.f32 %v1057, %v2011
      %v2232 = vmul.f32 %v1062, %v2013
      %v2233 = vmul.f32 %v1065, %v2015
      %v2234 = vmul.f32 %v1070, %v2017
      %v2235 = vmul.f32 %v1073, %v2019
      %v2236 = vmul.f32 %v1078, %v2021
      %v2237 = vmul.f32 %v1081, %v2023
      %v2238 = vmul.f32 %v1086, %v2025
      %v2239 = vmul.f32 %v1089, %v2027
      %v2240 = vmul.f32 %v1094, %v2029
      %v2241 = vmul.f32 %v1097, %v2031
      %v2242 = vmul.f32 %v1102, %v2033
      %v2243 = vmul.f32 %v1105, %v2035
      %v2244 = vmul.f32 %v1110, %v2037
      %v2245 = vmul.f32 %v1113, %v2039
      %v2246 = vmul.f32 %v1118, %v2041
      %v2247 = vmul.f32 %v1121, %v2043
      %v2248 = vmul.f32 %v1126, %v2045
      %v2249 = vmul.f32 %v1129, %v2047
      %v2250 = vmul.f32 %v1134, %v2049
      %v2251 = vmul.f32 %v1137, %v2051
      %v2252 = vmul.f32 %v1142, %v2053
      %v2253 = vmul.f32 %v1145, %v2055
      %v2254 = vmul.f32 %v1150, %v2057
      %v2255 = vmul.f32 %v1153, %v2059
      %v2256 = vmul.f32 %v1158, %v2061
      %v2257 = vmul.f32 %v1161, %v2063
      %v2258 = vmul.f32 %v1166, %v2065
      %v2259 = vmul.f32 %v1169, %v2067
      %v2260 = vmul.f32 %v1174, %v2069
      %v2261 = vmul.f32 %v1177, %v2071
      %v2262 = vmul.f32 %v1182, %v2073
      %v2263 = vmul.f32 %v1185, %v2075
      %v2264 = vmul.f32 %v1190, %v2077
      %v2265 = vmul.f32 %v1193, %v2079
      %v2266 = vmul.f32 %v1198, %v2081
      %v2267 = vmul.f32 %v1201, %v2083
      %v2268 = vmul.f32 %v1206, %v2085
      %v2269 = vmul.f32 %v1209, %v2087
      %v2270 = vmul.f32 %v1214, %v2089
      %v2271 = vmul.f32 %v1217, %v2091
      %v2272 = vmul.f32 %v1222, %v2093
      %v2273 = vmul.f32 %v1225, %v2095
      %v2274 = vmul.f32 %v1230, %v2097
      %v2275 = vmul.f32 %v1233, %v2099
      %v2276 = vmul.f32 %v1238, %v2101
      %v2277 = vmul.f32 %v1241, %v2103
      %v2278 = vmul.f32 %v1246, %v2105
      %v2279 = vmul.f32 %v1249, %v2107
      %v2280 = vmul.f32 %v1254, %v2109
      %v2281 = vmul.f32 %v1257, %v2111
      %v2282 = vmul.f32 %v1262, %v2113
      %v2283 = vmul.f32 %v1265, %v2115
      %v2284 = vmul.f32 %v1270, %v2117
      %v2285 = vmul.f32 %v1273, %v2119
      %v2286 = vmul.f32 %v1278, %v2121
      %v2287 = vmul.f32 %v1281, %v2123
      %v2288 = vmul.f32 %v1286, %v2125
      %v2289 = vmul.f32 %v1289, %v2127
      %v2290 = vmul.f32 %v1294, %v2129
      %v2291 = vmul.f32 %v1297, %v2131
      %v2292 = vmul.f32 %v1302, %v2133
      %v2293 = vmul.f32 %v1305, %v2135
      %v2294 = vmul.f32 %v1310, %v2137
      %v2295 = vmul.f32 %v1313, %v2139
      %v2296 = vmul.f32 %v1318, %v2141
      %v2297 = vmul.f32 %v1321, %v2143
      %v2298 = vmul.f32 %v1326, %v2145
      %v2299 = vmul.f32 %v1329, %v2147
      %v2300 = vmul.f32 %v1334, %v2149
      %v2301 = vmul.f32 %v1337, %v2151
      %v2302 = vmul.f32 %v1342, %v2153
      %v2303 = vmul.f32 %v1345, %v2155
      %v2304 = vmul.f32 %v1350, %v2157
      %v2305 = vmul.f32 %v1353, %v2159
      %v2306 = vmul.f32 %v1358, %v2161
      %v2307 = vmul.f32 %v1361, %v2163
      %v2308 = vmul.f32 %v1366, %v2165
      %v2309 = vmul.f32 %v1369, %v2167
      %v2310 = vmul.f32 %v1374, %v2169
      %v2311 = vmul.f32 %v1377, %v2171
      %v2312 = vmul.f32 %v1382, %v2173
      %v2313 = vmul.f32 %v1385, %v2175
      %v2314 = vmul.f32 %v1390, %v2177
      %v2315 = vmul.f32 %v1393, %v2179
      %v2316 = vmul.f32 %v1398, %v2181
      %v2317 = vmul.f32 %v1401, %v2183
      %v2318 = vmul.f32 %v1406, %v2185
      %v2319 = vmul.f32 %v1409, %v2187
      %v2320 = vmul.f32 %v1414, %v2189
      %v2321 = vmul.f32 %v1417, %v2191
      %v2322 = vmul.f32 %v1422, %v2193
      %v2323 = vmul.f32 %v1425, %v2195
      %v2324 = vpack.c.bf16 %v2197, %v2196
      %v2325 = vpack.c.bf16 %v2199, %v2198
      %v2326 = vpack.c.bf16 %v2201, %v2200
      %v2327 = vpack.c.bf16 %v2203, %v2202
      %v2328 = vpack.c.bf16 %v2205, %v2204
      %v2329 = vpack.c.bf16 %v2207, %v2206
      %v2330 = vpack.c.bf16 %v2209, %v2208
      %v2331 = vpack.c.bf16 %v2211, %v2210
      %v2332 = vpack.c.bf16 %v2213, %v2212
      %v2333 = vpack.c.bf16 %v2215, %v2214
      %v2334 = vpack.c.bf16 %v2217, %v2216
      %v2335 = vpack.c.bf16 %v2219, %v2218
      %v2336 = vpack.c.bf16 %v2221, %v2220
      %v2337 = vpack.c.bf16 %v2223, %v2222
      %v2338 = vpack.c.bf16 %v2225, %v2224
      %v2339 = vpack.c.bf16 %v2227, %v2226
      %v2340 = vpack.c.bf16 %v2229, %v2228
      %v2341 = vpack.c.bf16 %v2231, %v2230
      %v2342 = vpack.c.bf16 %v2233, %v2232
      %v2343 = vpack.c.bf16 %v2235, %v2234
      %v2344 = vpack.c.bf16 %v2237, %v2236
      %v2345 = vpack.c.bf16 %v2239, %v2238
      %v2346 = vpack.c.bf16 %v2241, %v2240
      %v2347 = vpack.c.bf16 %v2243, %v2242
      %v2348 = vpack.c.bf16 %v2245, %v2244
      %v2349 = vpack.c.bf16 %v2247, %v2246
      %v2350 = vpack.c.bf16 %v2249, %v2248
      %v2351 = vpack.c.bf16 %v2251, %v2250
      %v2352 = vpack.c.bf16 %v2253, %v2252
      %v2353 = vpack.c.bf16 %v2255, %v2254
      %v2354 = vpack.c.bf16 %v2257, %v2256
      %v2355 = vpack.c.bf16 %v2259, %v2258
      %v2356 = vpack.c.bf16 %v2261, %v2260
      %v2357 = vpack.c.bf16 %v2263, %v2262
      %v2358 = vpack.c.bf16 %v2265, %v2264
      %v2359 = vpack.c.bf16 %v2267, %v2266
      %v2360 = vpack.c.bf16 %v2269, %v2268
      %v2361 = vpack.c.bf16 %v2271, %v2270
      %v2362 = vpack.c.bf16 %v2273, %v2272
      %v2363 = vpack.c.bf16 %v2275, %v2274
      %v2364 = vpack.c.bf16 %v2277, %v2276
      %v2365 = vpack.c.bf16 %v2279, %v2278
      %v2366 = vpack.c.bf16 %v2281, %v2280
      %v2367 = vpack.c.bf16 %v2283, %v2282
      %v2368 = vpack.c.bf16 %v2285, %v2284
      %v2369 = vpack.c.bf16 %v2287, %v2286
      %v2370 = vpack.c.bf16 %v2289, %v2288
      %v2371 = vpack.c.bf16 %v2291, %v2290
      %v2372 = vpack.c.bf16 %v2293, %v2292
      %v2373 = vpack.c.bf16 %v2295, %v2294
      %v2374 = vpack.c.bf16 %v2297, %v2296
      %v2375 = vpack.c.bf16 %v2299, %v2298
      %v2376 = vpack.c.bf16 %v2301, %v2300
      %v2377 = vpack.c.bf16 %v2303, %v2302
      %v2378 = vpack.c.bf16 %v2305, %v2304
      %v2379 = vpack.c.bf16 %v2307, %v2306
      %v2380 = vpack.c.bf16 %v2309, %v2308
      %v2381 = vpack.c.bf16 %v2311, %v2310
      %v2382 = vpack.c.bf16 %v2313, %v2312
      %v2383 = vpack.c.bf16 %v2315, %v2314
      %v2384 = vpack.c.bf16 %v2317, %v2316
      %v2385 = vpack.c.bf16 %v2319, %v2318
      %v2386 = vpack.c.bf16 %v2321, %v2320
      %v2387 = vpack.c.bf16 %v2323, %v2322
      %v2452 = vunpack.c.l.b16 %v2324
      %v2453 = vunpack.c.h.b16 %v2324
      %v2454 = vunpack.c.l.b16 %v2325
      %v2455 = vunpack.c.h.b16 %v2325
      %v2456 = vunpack.c.l.b16 %v2326
      %v2457 = vunpack.c.h.b16 %v2326
      %v2458 = vunpack.c.l.b16 %v2327
      %v2459 = vunpack.c.h.b16 %v2327
      %v2460 = vunpack.c.l.b16 %v2328
      %v2461 = vunpack.c.h.b16 %v2328
      %v2462 = vunpack.c.l.b16 %v2329
      %v2463 = vunpack.c.h.b16 %v2329
      %v2464 = vunpack.c.l.b16 %v2330
      %v2465 = vunpack.c.h.b16 %v2330
      %v2466 = vunpack.c.l.b16 %v2331
      %v2467 = vunpack.c.h.b16 %v2331
      %v2468 = vunpack.c.l.b16 %v2332
      %v2469 = vunpack.c.h.b16 %v2332
      %v2470 = vunpack.c.l.b16 %v2333
      %v2471 = vunpack.c.h.b16 %v2333
      %v2472 = vunpack.c.l.b16 %v2334
      %v2473 = vunpack.c.h.b16 %v2334
      %v2474 = vunpack.c.l.b16 %v2335
      %v2475 = vunpack.c.h.b16 %v2335
      %v2476 = vunpack.c.l.b16 %v2336
      %v2477 = vunpack.c.h.b16 %v2336
      %v2478 = vunpack.c.l.b16 %v2337
      %v2479 = vunpack.c.h.b16 %v2337
      %v2480 = vunpack.c.l.b16 %v2338
      %v2481 = vunpack.c.h.b16 %v2338
      %v2482 = vunpack.c.l.b16 %v2339
      %v2483 = vunpack.c.h.b16 %v2339
      %v2484 = vunpack.c.l.b16 %v2340
      %v2485 = vunpack.c.h.b16 %v2340
      %v2486 = vunpack.c.l.b16 %v2341
      %v2487 = vunpack.c.h.b16 %v2341
      %v2488 = vunpack.c.l.b16 %v2342
      %v2489 = vunpack.c.h.b16 %v2342
      %v2490 = vunpack.c.l.b16 %v2343
      %v2491 = vunpack.c.h.b16 %v2343
      %v2492 = vunpack.c.l.b16 %v2344
      %v2493 = vunpack.c.h.b16 %v2344
      %v2494 = vunpack.c.l.b16 %v2345
      %v2495 = vunpack.c.h.b16 %v2345
      %v2496 = vunpack.c.l.b16 %v2346
      %v2497 = vunpack.c.h.b16 %v2346
      %v2498 = vunpack.c.l.b16 %v2347
      %v2499 = vunpack.c.h.b16 %v2347
      %v2500 = vunpack.c.l.b16 %v2348
      %v2501 = vunpack.c.h.b16 %v2348
      %v2502 = vunpack.c.l.b16 %v2349
      %v2503 = vunpack.c.h.b16 %v2349
      %v2504 = vunpack.c.l.b16 %v2350
      %v2505 = vunpack.c.h.b16 %v2350
      %v2506 = vunpack.c.l.b16 %v2351
      %v2507 = vunpack.c.h.b16 %v2351
      %v2508 = vunpack.c.l.b16 %v2352
      %v2509 = vunpack.c.h.b16 %v2352
      %v2510 = vunpack.c.l.b16 %v2353
      %v2511 = vunpack.c.h.b16 %v2353
      %v2512 = vunpack.c.l.b16 %v2354
      %v2513 = vunpack.c.h.b16 %v2354
      %v2514 = vunpack.c.l.b16 %v2355
      %v2515 = vunpack.c.h.b16 %v2355
      %v2516 = vunpack.c.l.b16 %v2356
      %v2517 = vunpack.c.h.b16 %v2356
      %v2518 = vunpack.c.l.b16 %v2357
      %v2519 = vunpack.c.h.b16 %v2357
      %v2520 = vunpack.c.l.b16 %v2358
      %v2521 = vunpack.c.h.b16 %v2358
      %v2522 = vunpack.c.l.b16 %v2359
      %v2523 = vunpack.c.h.b16 %v2359
      %v2524 = vunpack.c.l.b16 %v2360
      %v2525 = vunpack.c.h.b16 %v2360
      %v2526 = vunpack.c.l.b16 %v2361
      %v2527 = vunpack.c.h.b16 %v2361
      %v2528 = vunpack.c.l.b16 %v2362
      %v2529 = vunpack.c.h.b16 %v2362
      %v2530 = vunpack.c.l.b16 %v2363
      %v2531 = vunpack.c.h.b16 %v2363
      %v2532 = vunpack.c.l.b16 %v2364
      %v2533 = vunpack.c.h.b16 %v2364
      %v2534 = vunpack.c.l.b16 %v2365
      %v2535 = vunpack.c.h.b16 %v2365
      %v2536 = vunpack.c.l.b16 %v2366
      %v2537 = vunpack.c.h.b16 %v2366
      %v2538 = vunpack.c.l.b16 %v2367
      %v2539 = vunpack.c.h.b16 %v2367
      %v2540 = vunpack.c.l.b16 %v2368
      %v2541 = vunpack.c.h.b16 %v2368
      %v2542 = vunpack.c.l.b16 %v2369
      %v2543 = vunpack.c.h.b16 %v2369
      %v2544 = vunpack.c.l.b16 %v2370
      %v2545 = vunpack.c.h.b16 %v2370
      %v2546 = vunpack.c.l.b16 %v2371
      %v2547 = vunpack.c.h.b16 %v2371
      %v2548 = vunpack.c.l.b16 %v2372
      %v2549 = vunpack.c.h.b16 %v2372
      %v2550 = vunpack.c.l.b16 %v2373
      %v2551 = vunpack.c.h.b16 %v2373
      %v2552 = vunpack.c.l.b16 %v2374
      %v2553 = vunpack.c.h.b16 %v2374
      %v2554 = vunpack.c.l.b16 %v2375
      %v2555 = vunpack.c.h.b16 %v2375
      %v2556 = vunpack.c.l.b16 %v2376
      %v2557 = vunpack.c.h.b16 %v2376
      %v2558 = vunpack.c.l.b16 %v2377
      %v2559 = vunpack.c.h.b16 %v2377
      %v2560 = vunpack.c.l.b16 %v2378
      %v2561 = vunpack.c.h.b16 %v2378
      %v2562 = vunpack.c.l.b16 %v2379
      %v2563 = vunpack.c.h.b16 %v2379
      %v2564 = vunpack.c.l.b16 %v2380
      %v2565 = vunpack.c.h.b16 %v2380
      %v2566 = vunpack.c.l.b16 %v2381
      %v2567 = vunpack.c.h.b16 %v2381
      %v2568 = vunpack.c.l.b16 %v2382
      %v2569 = vunpack.c.h.b16 %v2382
      %v2570 = vunpack.c.l.b16 %v2383
      %v2571 = vunpack.c.h.b16 %v2383
      %v2572 = vunpack.c.l.b16 %v2384
      %v2573 = vunpack.c.h.b16 %v2384
      %v2574 = vunpack.c.l.b16 %v2385
      %v2575 = vunpack.c.h.b16 %v2385
      %v2576 = vunpack.c.l.b16 %v2386
      %v2577 = vunpack.c.h.b16 %v2386
      %v2578 = vunpack.c.l.b16 %v2387
      %v2579 = vunpack.c.h.b16 %v2387
      %v2580 = vpack.c.b16 %v2452, %v2452
      %v2581 = vpack.c.b16 %v2453, %v2453
      %v2582 = vpack.c.b16 %v2454, %v2454
      %v2583 = vpack.c.b16 %v2455, %v2455
      %v2584 = vpack.c.b16 %v2456, %v2456
      %v2585 = vpack.c.b16 %v2457, %v2457
      %v2586 = vpack.c.b16 %v2458, %v2458
      %v2587 = vpack.c.b16 %v2459, %v2459
      %v2588 = vpack.c.b16 %v2460, %v2460
      %v2589 = vpack.c.b16 %v2461, %v2461
      %v2590 = vpack.c.b16 %v2462, %v2462
      %v2591 = vpack.c.b16 %v2463, %v2463
      %v2592 = vpack.c.b16 %v2464, %v2464
      %v2593 = vpack.c.b16 %v2465, %v2465
      %v2594 = vpack.c.b16 %v2466, %v2466
      %v2595 = vpack.c.b16 %v2467, %v2467
      %v2596 = vpack.c.b16 %v2468, %v2468
      %v2597 = vpack.c.b16 %v2469, %v2469
      %v2598 = vpack.c.b16 %v2470, %v2470
      %v2599 = vpack.c.b16 %v2471, %v2471
      %v2600 = vpack.c.b16 %v2472, %v2472
      %v2601 = vpack.c.b16 %v2473, %v2473
      %v2602 = vpack.c.b16 %v2474, %v2474
      %v2603 = vpack.c.b16 %v2475, %v2475
      %v2604 = vpack.c.b16 %v2476, %v2476
      %v2605 = vpack.c.b16 %v2477, %v2477
      %v2606 = vpack.c.b16 %v2478, %v2478
      %v2607 = vpack.c.b16 %v2479, %v2479
      %v2608 = vpack.c.b16 %v2480, %v2480
      %v2609 = vpack.c.b16 %v2481, %v2481
      %v2610 = vpack.c.b16 %v2482, %v2482
      %v2611 = vpack.c.b16 %v2483, %v2483
      %v2612 = vpack.c.b16 %v2484, %v2484
      %v2613 = vpack.c.b16 %v2485, %v2485
      %v2614 = vpack.c.b16 %v2486, %v2486
      %v2615 = vpack.c.b16 %v2487, %v2487
      %v2616 = vpack.c.b16 %v2488, %v2488
      %v2617 = vpack.c.b16 %v2489, %v2489
      %v2618 = vpack.c.b16 %v2490, %v2490
      %v2619 = vpack.c.b16 %v2491, %v2491
      %v2620 = vpack.c.b16 %v2492, %v2492
      %v2621 = vpack.c.b16 %v2493, %v2493
      %v2622 = vpack.c.b16 %v2494, %v2494
      %v2623 = vpack.c.b16 %v2495, %v2495
      %v2624 = vpack.c.b16 %v2496, %v2496
      %v2625 = vpack.c.b16 %v2497, %v2497
      %v2626 = vpack.c.b16 %v2498, %v2498
      %v2627 = vpack.c.b16 %v2499, %v2499
      %v2628 = vpack.c.b16 %v2500, %v2500
      %v2629 = vpack.c.b16 %v2501, %v2501
      %v2630 = vpack.c.b16 %v2502, %v2502
      %v2631 = vpack.c.b16 %v2503, %v2503
      %v2632 = vpack.c.b16 %v2504, %v2504
      %v2633 = vpack.c.b16 %v2505, %v2505
      %v2634 = vpack.c.b16 %v2506, %v2506
      %v2635 = vpack.c.b16 %v2507, %v2507
      %v2636 = vpack.c.b16 %v2508, %v2508
      %v2637 = vpack.c.b16 %v2509, %v2509
      %v2638 = vpack.c.b16 %v2510, %v2510
      %v2639 = vpack.c.b16 %v2511, %v2511
      %v2640 = vpack.c.b16 %v2512, %v2512
      %v2641 = vpack.c.b16 %v2513, %v2513
      %v2642 = vpack.c.b16 %v2514, %v2514
      %v2643 = vpack.c.b16 %v2515, %v2515
      %v2644 = vpack.c.b16 %v2516, %v2516
      %v2645 = vpack.c.b16 %v2517, %v2517
      %v2646 = vpack.c.b16 %v2518, %v2518
      %v2647 = vpack.c.b16 %v2519, %v2519
      %v2648 = vpack.c.b16 %v2520, %v2520
      %v2649 = vpack.c.b16 %v2521, %v2521
      %v2650 = vpack.c.b16 %v2522, %v2522
      %v2651 = vpack.c.b16 %v2523, %v2523
      %v2652 = vpack.c.b16 %v2524, %v2524
      %v2653 = vpack.c.b16 %v2525, %v2525
      %v2654 = vpack.c.b16 %v2526, %v2526
      %v2655 = vpack.c.b16 %v2527, %v2527
      %v2656 = vpack.c.b16 %v2528, %v2528
      %v2657 = vpack.c.b16 %v2529, %v2529
      %v2658 = vpack.c.b16 %v2530, %v2530
      %v2659 = vpack.c.b16 %v2531, %v2531
      %v2660 = vpack.c.b16 %v2532, %v2532
      %v2661 = vpack.c.b16 %v2533, %v2533
      %v2662 = vpack.c.b16 %v2534, %v2534
      %v2663 = vpack.c.b16 %v2535, %v2535
      %v2664 = vpack.c.b16 %v2536, %v2536
      %v2665 = vpack.c.b16 %v2537, %v2537
      %v2666 = vpack.c.b16 %v2538, %v2538
      %v2667 = vpack.c.b16 %v2539, %v2539
      %v2668 = vpack.c.b16 %v2540, %v2540
      %v2669 = vpack.c.b16 %v2541, %v2541
      %v2670 = vpack.c.b16 %v2542, %v2542
      %v2671 = vpack.c.b16 %v2543, %v2543
      %v2672 = vpack.c.b16 %v2544, %v2544
      %v2673 = vpack.c.b16 %v2545, %v2545
      %v2674 = vpack.c.b16 %v2546, %v2546
      %v2675 = vpack.c.b16 %v2547, %v2547
      %v2676 = vpack.c.b16 %v2548, %v2548
      %v2677 = vpack.c.b16 %v2549, %v2549
      %v2678 = vpack.c.b16 %v2550, %v2550
      %v2679 = vpack.c.b16 %v2551, %v2551
      %v2680 = vpack.c.b16 %v2552, %v2552
      %v2681 = vpack.c.b16 %v2553, %v2553
      %v2682 = vpack.c.b16 %v2554, %v2554
      %v2683 = vpack.c.b16 %v2555, %v2555
      %v2684 = vpack.c.b16 %v2556, %v2556
      %v2685 = vpack.c.b16 %v2557, %v2557
      %v2686 = vpack.c.b16 %v2558, %v2558
      %v2687 = vpack.c.b16 %v2559, %v2559
      %v2688 = vpack.c.b16 %v2560, %v2560
      %v2689 = vpack.c.b16 %v2561, %v2561
      %v2690 = vpack.c.b16 %v2562, %v2562
      %v2691 = vpack.c.b16 %v2563, %v2563
      %v2692 = vpack.c.b16 %v2564, %v2564
      %v2693 = vpack.c.b16 %v2565, %v2565
      %v2694 = vpack.c.b16 %v2566, %v2566
      %v2695 = vpack.c.b16 %v2567, %v2567
      %v2696 = vpack.c.b16 %v2568, %v2568
      %v2697 = vpack.c.b16 %v2569, %v2569
      %v2698 = vpack.c.b16 %v2570, %v2570
      %v2699 = vpack.c.b16 %v2571, %v2571
      %v2700 = vpack.c.b16 %v2572, %v2572
      %v2701 = vpack.c.b16 %v2573, %v2573
      %v2702 = vpack.c.b16 %v2574, %v2574
      %v2703 = vpack.c.b16 %v2575, %v2575
      %v2704 = vpack.c.b16 %v2576, %v2576
      %v2705 = vpack.c.b16 %v2577, %v2577
      %v2706 = vpack.c.b16 %v2578, %v2578
      %v2707 = vpack.c.b16 %v2579, %v2579
      %vm2836 = vcmask 27648
      %2837 = vst.msk [vmem:[%s208] sm:$0xf] %vm2836, %v2580
      %2838 = vst.msk [vmem:[%s208 + $0x4] sm:$0xf] %vm2836, %v2581
      %2839 = vst.msk [vmem:[%s208 + $0x8] sm:$0xf] %vm2836, %v2582
      %2840 = vst.msk [vmem:[%s208 + $0xc] sm:$0xf] %vm2836, %v2583
      %2841 = vst.msk [vmem:[%s208 + $0x10] sm:$0xf] %vm2836, %v2584
      %2842 = vst.msk [vmem:[%s208 + $0x14] sm:$0xf] %vm2836, %v2585
      %2843 = vst.msk [vmem:[%s208 + $0x18] sm:$0xf] %vm2836, %v2586
      %2844 = vst.msk [vmem:[%s208 + $0x1c] sm:$0xf] %vm2836, %v2587
      %2845 = vst.msk [vmem:[%s208 + $0x20] sm:$0xf] %vm2836, %v2588
      %2846 = vst.msk [vmem:[%s208 + $0x24] sm:$0xf] %vm2836, %v2589
      %2847 = vst.msk [vmem:[%s208 + $0x28] sm:$0xf] %vm2836, %v2590
      %2848 = vst.msk [vmem:[%s208 + $0x2c] sm:$0xf] %vm2836, %v2591
      %2849 = vst.msk [vmem:[%s208 + $0x30] sm:$0xf] %vm2836, %v2592
      %2850 = vst.msk [vmem:[%s208 + $0x34] sm:$0xf] %vm2836, %v2593
      %2851 = vst.msk [vmem:[%s208 + $0x38] sm:$0xf] %vm2836, %v2594
      %2852 = vst.msk [vmem:[%s208 + $0x3c] sm:$0xf] %vm2836, %v2595
      %2853 = vst.msk [vmem:[%s208 + $0x40] sm:$0xf] %vm2836, %v2596
      %2854 = vst.msk [vmem:[%s208 + $0x44] sm:$0xf] %vm2836, %v2597
      %2855 = vst.msk [vmem:[%s208 + $0x48] sm:$0xf] %vm2836, %v2598
      %2856 = vst.msk [vmem:[%s208 + $0x4c] sm:$0xf] %vm2836, %v2599
      %2857 = vst.msk [vmem:[%s208 + $0x50] sm:$0xf] %vm2836, %v2600
      %2858 = vst.msk [vmem:[%s208 + $0x54] sm:$0xf] %vm2836, %v2601
      %2859 = vst.msk [vmem:[%s208 + $0x58] sm:$0xf] %vm2836, %v2602
      %2860 = vst.msk [vmem:[%s208 + $0x5c] sm:$0xf] %vm2836, %v2603
      %2861 = vst.msk [vmem:[%s208 + $0x60] sm:$0xf] %vm2836, %v2604
      %2862 = vst.msk [vmem:[%s208 + $0x64] sm:$0xf] %vm2836, %v2605
      %2863 = vst.msk [vmem:[%s208 + $0x68] sm:$0xf] %vm2836, %v2606
      %2864 = vst.msk [vmem:[%s208 + $0x6c] sm:$0xf] %vm2836, %v2607
      %2865 = vst.msk [vmem:[%s208 + $0x70] sm:$0xf] %vm2836, %v2608
      %2866 = vst.msk [vmem:[%s208 + $0x74] sm:$0xf] %vm2836, %v2609
      %2867 = vst.msk [vmem:[%s208 + $0x78] sm:$0xf] %vm2836, %v2610
      %2868 = vst.msk [vmem:[%s208 + $0x7c] sm:$0xf] %vm2836, %v2611
      %2869 = vst.msk [vmem:[%s208 + $0x80] sm:$0xf] %vm2836, %v2612
      %2870 = vst.msk [vmem:[%s208 + $0x84] sm:$0xf] %vm2836, %v2613
      %2871 = vst.msk [vmem:[%s208 + $0x88] sm:$0xf] %vm2836, %v2614
      %2872 = vst.msk [vmem:[%s208 + $0x8c] sm:$0xf] %vm2836, %v2615
      %2873 = vst.msk [vmem:[%s208 + $0x90] sm:$0xf] %vm2836, %v2616
      %2874 = vst.msk [vmem:[%s208 + $0x94] sm:$0xf] %vm2836, %v2617
      %2875 = vst.msk [vmem:[%s208 + $0x98] sm:$0xf] %vm2836, %v2618
      %2876 = vst.msk [vmem:[%s208 + $0x9c] sm:$0xf] %vm2836, %v2619
      %2877 = vst.msk [vmem:[%s208 + $0xa0] sm:$0xf] %vm2836, %v2620
      %2878 = vst.msk [vmem:[%s208 + $0xa4] sm:$0xf] %vm2836, %v2621
      %2879 = vst.msk [vmem:[%s208 + $0xa8] sm:$0xf] %vm2836, %v2622
      %2880 = vst.msk [vmem:[%s208 + $0xac] sm:$0xf] %vm2836, %v2623
      %2881 = vst.msk [vmem:[%s208 + $0xb0] sm:$0xf] %vm2836, %v2624
      %2882 = vst.msk [vmem:[%s208 + $0xb4] sm:$0xf] %vm2836, %v2625
      %2883 = vst.msk [vmem:[%s208 + $0xb8] sm:$0xf] %vm2836, %v2626
      %2884 = vst.msk [vmem:[%s208 + $0xbc] sm:$0xf] %vm2836, %v2627
      %2885 = vst.msk [vmem:[%s208 + $0xc0] sm:$0xf] %vm2836, %v2628
      %2886 = vst.msk [vmem:[%s208 + $0xc4] sm:$0xf] %vm2836, %v2629
      %2887 = vst.msk [vmem:[%s208 + $0xc8] sm:$0xf] %vm2836, %v2630
      %2888 = vst.msk [vmem:[%s208 + $0xcc] sm:$0xf] %vm2836, %v2631
      %2889 = vst.msk [vmem:[%s208 + $0xd0] sm:$0xf] %vm2836, %v2632
      %2890 = vst.msk [vmem:[%s208 + $0xd4] sm:$0xf] %vm2836, %v2633
      %2891 = vst.msk [vmem:[%s208 + $0xd8] sm:$0xf] %vm2836, %v2634
      %2892 = vst.msk [vmem:[%s208 + $0xdc] sm:$0xf] %vm2836, %v2635
      %2893 = vst.msk [vmem:[%s208 + $0xe0] sm:$0xf] %vm2836, %v2636
      %2894 = vst.msk [vmem:[%s208 + $0xe4] sm:$0xf] %vm2836, %v2637
      %2895 = vst.msk [vmem:[%s208 + $0xe8] sm:$0xf] %vm2836, %v2638
      %2896 = vst.msk [vmem:[%s208 + $0xec] sm:$0xf] %vm2836, %v2639
      %2897 = vst.msk [vmem:[%s208 + $0xf0] sm:$0xf] %vm2836, %v2640
      %2898 = vst.msk [vmem:[%s208 + $0xf4] sm:$0xf] %vm2836, %v2641
      %2899 = vst.msk [vmem:[%s208 + $0xf8] sm:$0xf] %vm2836, %v2642
      %2900 = vst.msk [vmem:[%s208 + $0xfc] sm:$0xf] %vm2836, %v2643
      %2901 = vst.msk [vmem:[%s208 + $0x100] sm:$0xf] %vm2836, %v2644
      %2902 = vst.msk [vmem:[%s208 + $0x104] sm:$0xf] %vm2836, %v2645
      %2903 = vst.msk [vmem:[%s208 + $0x108] sm:$0xf] %vm2836, %v2646
      %2904 = vst.msk [vmem:[%s208 + $0x10c] sm:$0xf] %vm2836, %v2647
      %2905 = vst.msk [vmem:[%s208 + $0x110] sm:$0xf] %vm2836, %v2648
      %2906 = vst.msk [vmem:[%s208 + $0x114] sm:$0xf] %vm2836, %v2649
      %2907 = vst.msk [vmem:[%s208 + $0x118] sm:$0xf] %vm2836, %v2650
      %2908 = vst.msk [vmem:[%s208 + $0x11c] sm:$0xf] %vm2836, %v2651
      %2909 = vst.msk [vmem:[%s208 + $0x120] sm:$0xf] %vm2836, %v2652
      %2910 = vst.msk [vmem:[%s208 + $0x124] sm:$0xf] %vm2836, %v2653
      %2911 = vst.msk [vmem:[%s208 + $0x128] sm:$0xf] %vm2836, %v2654
      %2912 = vst.msk [vmem:[%s208 + $0x12c] sm:$0xf] %vm2836, %v2655
      %2913 = vst.msk [vmem:[%s208 + $0x130] sm:$0xf] %vm2836, %v2656
      %2914 = vst.msk [vmem:[%s208 + $0x134] sm:$0xf] %vm2836, %v2657
      %2915 = vst.msk [vmem:[%s208 + $0x138] sm:$0xf] %vm2836, %v2658
      %2916 = vst.msk [vmem:[%s208 + $0x13c] sm:$0xf] %vm2836, %v2659
      %2917 = vst.msk [vmem:[%s208 + $0x140] sm:$0xf] %vm2836, %v2660
      %2918 = vst.msk [vmem:[%s208 + $0x144] sm:$0xf] %vm2836, %v2661
      %2919 = vst.msk [vmem:[%s208 + $0x148] sm:$0xf] %vm2836, %v2662
      %2920 = vst.msk [vmem:[%s208 + $0x14c] sm:$0xf] %vm2836, %v2663
      %2921 = vst.msk [vmem:[%s208 + $0x150] sm:$0xf] %vm2836, %v2664
      %2922 = vst.msk [vmem:[%s208 + $0x154] sm:$0xf] %vm2836, %v2665
      %2923 = vst.msk [vmem:[%s208 + $0x158] sm:$0xf] %vm2836, %v2666
      %2924 = vst.msk [vmem:[%s208 + $0x15c] sm:$0xf] %vm2836, %v2667
      %2925 = vst.msk [vmem:[%s208 + $0x160] sm:$0xf] %vm2836, %v2668
      %2926 = vst.msk [vmem:[%s208 + $0x164] sm:$0xf] %vm2836, %v2669
      %2927 = vst.msk [vmem:[%s208 + $0x168] sm:$0xf] %vm2836, %v2670
      %2928 = vst.msk [vmem:[%s208 + $0x16c] sm:$0xf] %vm2836, %v2671
      %2929 = vst.msk [vmem:[%s208 + $0x170] sm:$0xf] %vm2836, %v2672
      %2930 = vst.msk [vmem:[%s208 + $0x174] sm:$0xf] %vm2836, %v2673
      %2931 = vst.msk [vmem:[%s208 + $0x178] sm:$0xf] %vm2836, %v2674
      %2932 = vst.msk [vmem:[%s208 + $0x17c] sm:$0xf] %vm2836, %v2675
      %2933 = vst.msk [vmem:[%s208 + $0x180] sm:$0xf] %vm2836, %v2676
      %2934 = vst.msk [vmem:[%s208 + $0x184] sm:$0xf] %vm2836, %v2677
      %2935 = vst.msk [vmem:[%s208 + $0x188] sm:$0xf] %vm2836, %v2678
      %2936 = vst.msk [vmem:[%s208 + $0x18c] sm:$0xf] %vm2836, %v2679
      %2937 = vst.msk [vmem:[%s208 + $0x190] sm:$0xf] %vm2836, %v2680
      %2938 = vst.msk [vmem:[%s208 + $0x194] sm:$0xf] %vm2836, %v2681
      %2939 = vst.msk [vmem:[%s208 + $0x198] sm:$0xf] %vm2836, %v2682
      %2940 = vst.msk [vmem:[%s208 + $0x19c] sm:$0xf] %vm2836, %v2683
      %2941 = vst.msk [vmem:[%s208 + $0x1a0] sm:$0xf] %vm2836, %v2684
      %2942 = vst.msk [vmem:[%s208 + $0x1a4] sm:$0xf] %vm2836, %v2685
      %2943 = vst.msk [vmem:[%s208 + $0x1a8] sm:$0xf] %vm2836, %v2686
      %2944 = vst.msk [vmem:[%s208 + $0x1ac] sm:$0xf] %vm2836, %v2687
      %2945 = vst.msk [vmem:[%s208 + $0x1b0] sm:$0xf] %vm2836, %v2688
      %2946 = vst.msk [vmem:[%s208 + $0x1b4] sm:$0xf] %vm2836, %v2689
      %2947 = vst.msk [vmem:[%s208 + $0x1b8] sm:$0xf] %vm2836, %v2690
      %2948 = vst.msk [vmem:[%s208 + $0x1bc] sm:$0xf] %vm2836, %v2691
      %2949 = vst.msk [vmem:[%s208 + $0x1c0] sm:$0xf] %vm2836, %v2692
      %2950 = vst.msk [vmem:[%s208 + $0x1c4] sm:$0xf] %vm2836, %v2693
      %2951 = vst.msk [vmem:[%s208 + $0x1c8] sm:$0xf] %vm2836, %v2694
      %2952 = vst.msk [vmem:[%s208 + $0x1cc] sm:$0xf] %vm2836, %v2695
      %2953 = vst.msk [vmem:[%s208 + $0x1d0] sm:$0xf] %vm2836, %v2696
      %2954 = vst.msk [vmem:[%s208 + $0x1d4] sm:$0xf] %vm2836, %v2697
      %2955 = vst.msk [vmem:[%s208 + $0x1d8] sm:$0xf] %vm2836, %v2698
      %2956 = vst.msk [vmem:[%s208 + $0x1dc] sm:$0xf] %vm2836, %v2699
      %2957 = vst.msk [vmem:[%s208 + $0x1e0] sm:$0xf] %vm2836, %v2700
      %2958 = vst.msk [vmem:[%s208 + $0x1e4] sm:$0xf] %vm2836, %v2701
      %2959 = vst.msk [vmem:[%s208 + $0x1e8] sm:$0xf] %vm2836, %v2702
      %2960 = vst.msk [vmem:[%s208 + $0x1ec] sm:$0xf] %vm2836, %v2703
      %2961 = vst.msk [vmem:[%s208 + $0x1f0] sm:$0xf] %vm2836, %v2704
      %2962 = vst.msk [vmem:[%s208 + $0x1f4] sm:$0xf] %vm2836, %v2705
      %2963 = vst.msk [vmem:[%s208 + $0x1f8] sm:$0xf] %vm2836, %v2706
      %2964 = vst.msk [vmem:[%s208 + $0x1fc] sm:$0xf] %vm2836, %v2707
      %s2965 = smul.u32 128, %s19
      %p2966 = scmp.lt.s32.totalorder %s18, 1
      %s2967 = scalar_select %p2966, %s18, 1
      %p2968 = scmp.lt.s32.totalorder %s2965, 127
      %s2969 = scalar_select %p2968, %s2965, 127
      %s2970 = smul.addr %s2967, 128
      %s2971 = sadd.s32 %s2969, %s2970
      %s2972 = smul.addr %s2971, 4
      %s2973 = scalar_lea.vmem %s3, %s2972
      // Predicated region
      $region33: #{final_decoder_forward.8} parent=31 // pred_check
        %p2974 = pneg %p116
      $region34: #{final_decoder_forward.8} parent=31 // pred_check_branch
        %2976 = sbr.rel (%p2974) target = $region36
      $region35: #{final_decoder_forward.8} parent=31 // pred_region
        %s2977 = smul.u32 128, %s19
      $region36: #{final_decoder_forward.8} parent=31 // pred_fallthru
        _
    $region32: #{final_decoder_forward.8} parent=5 // pred_fallthru
      _
    %p2978 = scmp.le.s32.totalorder 2, %s9
    // Predicated region
    $region37: #{final_decoder_forward.8} parent=5 // pred_check
      %p2979 = pneg %p2978
    $region38: #{final_decoder_forward.8} parent=5 // pred_check_branch
      %2981 = sbr.rel (%p2979) target = $region40
    $region39: #{final_decoder_forward.8} parent=5 // pred_region
      %s2982 = ssub.s32 %s9, 2
      // Predicated region
      $region41: #{final_decoder_forward.8} parent=39 // pred_check
        %p2983 = pneg %p122
      $region42: #{final_decoder_forward.8} parent=39 // pred_check_branch
        %2985 = sbr.rel (%p2983) target = $region44
      $region43: #{final_decoder_forward.8} parent=39 // pred_region
        %s2986 = smul.u32 128, %s21
        %p2987 = scmp.lt.s32.totalorder %s20, 1
        %s2988 = scalar_select %p2987, %s20, 1
        %p2989 = scmp.lt.s32.totalorder %s2986, 127
        %s2990 = scalar_select %p2989, %s2986, 127
        %s2991 = smul.addr %s2988, 128
        %s2992 = sadd.s32 %s2990, %s2991
        %s2993 = smul.addr %s2992, 4
        %s2994 = scalar_lea.vmem %s3, %s2993
      $region44: #{final_decoder_forward.8} parent=39 // pred_fallthru
        _
    $region40: #{final_decoder_forward.8} parent=5 // pred_fallthru
      _
  $region6: #{final_decoder_forward.8} parent=0 // loop_footer
    %s13 = sadd.s32 1, %s9
  $region7: #{final_decoder_forward.8} parent=0 // loop_footer_branch
    %8 = sbr.rel target = $region3
  $region8: #{final_decoder_forward.8} parent=0 // loop_exit
    _

</llo_original>
